<compile_context>
chip_gen: v6e
topology: v6e:2x2x1
jax: 0.10.0
libtpu: 0.0.40
codegen_flags: <defaults>
</compile_context>

<pallas_src>
import math
import functools

import jax
import jax.numpy as jnp
from jax.experimental import pallas as pl
from jax.experimental.pallas import tpu as pltpu


VMEM_SPEC = pl.BlockSpec(memory_space=pltpu.MemorySpace.VMEM)
NEG_INF = -1e30


# ----------------------------------------------------------------------------
# In-kernel math helpers (pure jnp, safe to trace inside Mosaic kernels)
# ----------------------------------------------------------------------------

def _layer_norm(v, g, b, eps=1e-5):
    mu = jnp.mean(v, axis=-1, keepdims=True)
    var = jnp.mean(jnp.square(v - mu), axis=-1, keepdims=True)
    return (v - mu) * jax.lax.rsqrt(var + eps) * g + b


def _erf_approx(z):
    # Abramowitz & Stegun 7.1.26 (max abs err ~1.5e-7); matches torch exact-erf GELU ~f32.
    a1, a2, a3, a4, a5 = 0.254829592, -0.284496736, 1.421413741, -1.453152027, 1.061405429
    pp = 0.3275911
    sgn = jnp.where(z >= 0.0, 1.0, -1.0)
    az = jnp.abs(z)
    t = 1.0 / (1.0 + pp * az)
    poly = ((((a5 * t + a4) * t + a3) * t + a2) * t + a1) * t
    return sgn * (1.0 - poly * jnp.exp(-az * az))


def _gelu_exact(v):
    return 0.5 * v * (1.0 + _erf_approx(v * 0.7071067811865475))


def _rotate_rows(src, tgt, eps=1e-6):
    """Rotation-trick transform per row (forward value == tgt up to fp error).

    Kept in exact f32 division (not approx reciprocal) so the quantized forward value
    stays numerically equal to the selected code vector, like the torch reference.
    """
    ns = jnp.sqrt(jnp.sum(src * src, axis=-1, keepdims=True))
    nt = jnp.sqrt(jnp.sum(tgt * tgt, axis=-1, keepdims=True))
    u = src / jnp.maximum(ns, eps)
    q = tgt / jnp.maximum(nt, eps)
    w = u + q
    w = w / jnp.maximum(jnp.sqrt(jnp.sum(w * w, axis=-1, keepdims=True)), eps)
    out = (
        src
        - 2.0 * jnp.sum(src * w, axis=-1, keepdims=True) * w
        + 2.0 * jnp.sum(src * u, axis=-1, keepdims=True) * q
    )
    return out * (nt / jnp.maximum(ns, eps))


def _mean_2d(x):
    """Full mean of a 2-D value as a (1, 1) array (keepdims reductions only)."""
    s = jnp.sum(jnp.sum(x, axis=-1, keepdims=True), axis=0, keepdims=True)
    return s * (1.0 / float(x.shape[0] * x.shape[1]))


# ----------------------------------------------------------------------------
# Single fused forward kernel
# ----------------------------------------------------------------------------

def fused_forward_kernel(
        # ---- inputs ----
        patches_ref,                     # (M, p^2) f32, already x*2-1 patchified
        enc_w_ref, enc_b_ref,            # (p^2, dim), (1, dim)
        codebook_ref, cb_sq_ref,         # (K, dim), (1, K) precomputed squared norms
        start_ref,                       # (1, dim)
        cos_ref, sin_ref,                # (M, inner) RoPE tables tiled per batch & head
        rot_ref,                         # (inner, inner) bf16 block-diag rotate-half matrix
        ln1g_ref, ln1b_ref,              # (L, 1, dim)
        wq_ref, wk_ref, wv_ref,          # (L, dim, inner) bf16
        wo_ref,                          # (L, inner, dim) bf16
        ln2g_ref, ln2b_ref,              # (L, 1, dim)
        ffw1_ref, ffb1_ref,              # (L, dim, 4*dim) bf16, (L, 1, 4*dim) f32
        ffw2_ref, ffb2_ref,              # (L, 4*dim, dim) bf16, (L, 1, dim) f32
        flng_ref, flnb_ref,              # (1, dim)
        projw_ref, projb_ref,            # (dim, dim) bf16, (1, dim)
        dec_w_ref, dec_b_ref,            # (dim, p^2), (1, p^2)
        # ---- outputs ----
        pix_ref,                         # (M, p^2) f32
        total_ref, ce_ref, recon_ref, commit_ref, ar_ref,   # (1, 1) f32 each
        *, batch, seq, heads, dim_head, depth):
    b = batch
    n = seq
    M = b * n
    dh = dim_head
    inner = heads * dh
    P = heads * M                                          # packed attention rows
    scale = float(dh) ** -0.5
    log2n = n.bit_length() - 1                             # n asserted power of two in wrapper

    # ------------------ encode: patch -> dim linear (f32) ------------------
    patches = patches_ref[...]
    enc = jnp.dot(patches, enc_w_ref[...],
                  preferred_element_type=jnp.float32) + enc_b_ref[...]          # (M, dim)

    # ------------------ VQ nearest neighbour + rotation trick ------------------
    cb = codebook_ref[...]                                                       # (K, dim)
    K = cb.shape[0]
    cross = jax.lax.dot_general(enc, cb, (((1,), (1,)), ((), ())),
                                preferred_element_type=jnp.float32)              # (M, K)
    d = jnp.sum(enc * enc, axis=-1, keepdims=True) - 2.0 * cross + cb_sq_ref[...]
    lane = jax.lax.broadcasted_iota(jnp.int32, d.shape, 1).astype(jnp.float32)
    dmin = jnp.min(d, axis=-1, keepdims=True)
    codef = jnp.min(jnp.where(d <= dmin, lane, float(K)),
                    axis=-1, keepdims=True)                 # first argmin (torch tie-break)
    onehot = (lane == codef).astype(jnp.float32)            # (M, K) — reused for CE below
    quant_raw = jnp.dot(onehot, cb, preferred_element_type=jnp.float32)          # (M, dim)
    quantized = _rotate_rows(enc, quant_raw)
    commit_loss = _mean_2d(jnp.square(quant_raw - enc))                          # (1, 1)

    # ------------------ shift-right with start token (in-kernel, no XLA glue) ------------------
    start = start_ref[...]                                                       # (1, dim)
    parts = []
    for bb in range(b):
        parts.append(start)
        parts.append(quantized[bb * n: bb * n + n - 1])
    x = jnp.concatenate(parts, axis=0)                                           # (M, dim)

    # ------------------ decoder stack (packed-head attention) ------------------
    cosM = cos_ref[...]                                                          # (M, inner)
    sinM = sin_ref[...]
    Rb = rot_ref[...]                                                            # bf16

    # block-diagonal causal additive bias, generated once from iota and hoisted out of the
    # layer loop.  Packed row r = head*M + batch*n + pos  =>  group = r >> log2(n),
    # pos = r & (n-1); attend iff same group and key pos <= query pos.
    ri = jax.lax.broadcasted_iota(jnp.int32, (P, 1), 0)
    ci = jax.lax.broadcasted_iota(jnp.int32, (1, P), 1)
    rg, rp = jnp.right_shift(ri, log2n), jnp.bitwise_and(ri, n - 1)
    cg, cp = jnp.right_shift(ci, log2n), jnp.bitwise_and(ci, n - 1)
    allowed = (rg == cg) & (cp <= rp)                                            # (P, P) bool
    bias = jnp.where(allowed, jnp.float32(0.0), jnp.float32(NEG_INF))            # (P, P) f32

    def rope(t):
        # x*cos + rotate_half(x)*sin, rotate_half as one block-diag (inner,inner) matmul
        return t * cosM + jnp.dot(t.astype(jnp.bfloat16), Rb,
                                  preferred_element_type=jnp.float32) * sinM

    def pack(t):
        # (M, inner) -> (heads*M, dh), rows grouped (head, batch, pos)
        return jnp.concatenate([t[:, h * dh:(h + 1) * dh] for h in range(heads)], axis=0)

    for l in range(depth):
        # --- pre-norm attention block ---
        h1 = _layer_norm(x, ln1g_ref[l], ln1b_ref[l]).astype(jnp.bfloat16)
        q = jnp.dot(h1, wq_ref[l], preferred_element_type=jnp.float32)           # (M, inner)
        k = jnp.dot(h1, wk_ref[l], preferred_element_type=jnp.float32)
        v = jnp.dot(h1, wv_ref[l], preferred_element_type=jnp.float32)
        q = rope(q) * scale                       # fold 1/sqrt(dh) into q (not into (P,P) scores)
        k = rope(k)
        qp = pack(q).astype(jnp.bfloat16)                                        # (P, dh)
        kp = pack(k).astype(jnp.bfloat16)
        vp = pack(v).astype(jnp.bfloat16)
        s = jax.lax.dot_general(qp, kp, (((1,), (1,)), ((), ())),
                                preferred_element_type=jnp.float32) + bias       # (P, P)
        m = jnp.max(s, axis=-1, keepdims=True)
        e = jnp.exp(s - m)
        pattn = e * pl.reciprocal(jnp.sum(e, axis=-1, keepdims=True), approx=True)
        o = jnp.dot(pattn.astype(jnp.bfloat16), vp,
                    preferred_element_type=jnp.float32)                          # (P, dh)
        o = jnp.concatenate([o[h * M:(h + 1) * M] for h in range(heads)], axis=1)  # (M, inner)
        x = x + jnp.dot(o.astype(jnp.bfloat16), wo_ref[l],
                        preferred_element_type=jnp.float32)

        # --- pre-norm feedforward block ---
        h2 = _layer_norm(x, ln2g_ref[l], ln2b_ref[l])
        f = jnp.dot(h2.astype(jnp.bfloat16), ffw1_ref[l],
                    preferred_element_type=jnp.float32) + ffb1_ref[l]
        f = _gelu_exact(f)
        x = x + jnp.dot(f.astype(jnp.bfloat16), ffw2_ref[l],
                        preferred_element_type=jnp.float32) + ffb2_ref[l]

    x = _layer_norm(x, flng_ref[...], flnb_ref[...])
    pred = jnp.dot(x.astype(jnp.bfloat16), projw_ref[...],
                   preferred_element_type=jnp.float32) + projb_ref[...]          # (M, dim)

    # ------------------ cross entropy on -cdist(pred, codebook) (f32, in-kernel mean) ----------
    cross2 = jax.lax.dot_general(pred, cb, (((1,), (1,)), ((), ())),
                                 preferred_element_type=jnp.float32)
    d2 = jnp.maximum(jnp.sum(pred * pred, axis=-1, keepdims=True)
                     - 2.0 * cross2 + cb_sq_ref[...], 0.0)
    logits = -jnp.sqrt(d2)                                                        # (M, K)
    lm = jnp.max(logits, axis=-1, keepdims=True)
    lse = jnp.log(jnp.sum(jnp.exp(logits - lm), axis=-1, keepdims=True)) + lm
    picked = jnp.sum(onehot * logits, axis=-1, keepdims=True)
    ce_loss = jnp.sum(lse - picked, axis=0, keepdims=True) * (1.0 / float(M))     # (1, 1)

    # ------------------ rotation-trick reconstruction + remaining losses ------------------
    rot_pred = _rotate_rows(pred, quant_raw)
    pix = jnp.dot(rot_pred, dec_w_ref[...],
                  preferred_element_type=jnp.float32) + dec_b_ref[...]            # (M, p^2)
    # mse((pix+1)/2, image) == mean(0.25*(pix - (2*image_patch-1))^2)
    recon_loss = _mean_2d(0.25 * jnp.square(pix - patches))
    ar_commit_loss = _mean_2d(jnp.square(pred - quantized))
    total = ce_loss + recon_loss + commit_loss + ar_commit_loss   # all loss weights == 1.0

    pix_ref[...] = pix
    total_ref[...] = total
    ce_ref[...] = ce_loss
    recon_ref[...] = recon_loss
    commit_ref[...] = commit_loss
    ar_ref[...] = ar_commit_loss


# ----------------------------------------------------------------------------
# JAX glue: RoPE tables, rotate-half matrix, full forward pass
# ----------------------------------------------------------------------------

def build_rope_tables(n, dh, b, heads):
    half = dh // 2
    inv_freq = 1.0 / (10000.0 ** (jnp.arange(half, dtype=jnp.float32) * 2.0 / dh))
    t = jnp.arange(n, dtype=jnp.float32)
    freqs = jnp.einsum("i,j->ij", t, inv_freq)                    # (n, half)
    freqs = jnp.stack((freqs, freqs), axis=-1).reshape(n, dh)     # interleaved
    cos = jnp.tile(jnp.cos(freqs), (b, heads))                    # (b*n, heads*dh)
    sin = jnp.tile(jnp.sin(freqs), (b, heads))
    return cos, sin


def rope_rotation_matrix(dh, heads):
    # per-head R with x@R == interleaved rotate_half(x), block-diag over heads
    i = jnp.arange(dh)
    row, col = i[:, None], i[None, :]
    r = jnp.where((row == col + 1) & (col % 2 == 0), -1.0, 0.0)
    r = r + jnp.where((col == row + 1) & (row % 2 == 0), 1.0, 0.0)
    return jnp.kron(jnp.eye(heads, dtype=jnp.float32), r.astype(jnp.float32))


def vq_ar_autoencoder_forward(params, image, *, patch_size, dim_head):
    b, _, H, W = image.shape
    p = patch_size
    h, w = H // p, W // p
    n = h * w
    M = b * n
    dim = params["enc_w"].shape[1]
    p2 = p * p
    depth = params["wq"].shape[0]
    heads = params["wq"].shape[2] // dim_head
    assert n > 0 and (n & (n - 1)) == 0, "seq length must be a power of two for the in-kernel mask"

    # patchify (pure layout transform, left to XLA)
    x = image * 2.0 - 1.0
    patches = x[:, 0].reshape(b, h, p, w, p).transpose(0, 1, 3, 2, 4).reshape(M, p2)

    cos, sin = build_rope_tables(n, dim_head, b, heads)            # (M, inner) each, hoisted
    rot = rope_rotation_matrix(dim_head, heads).astype(jnp.bfloat16)
    cb_sq = jnp.sum(jnp.square(params["codebook"]), axis=-1)[None, :]   # shared by VQ & CE

    bf = lambda a: a.astype(jnp.bfloat16)                          # decoder matmul weights -> bf16

    kernel = functools.partial(
        fused_forward_kernel,
        batch=b, seq=n, heads=heads, dim_head=dim_head, depth=depth)

    out_shapes = (
        jax.ShapeDtypeStruct((M, p2), jnp.float32),   # pixel patches
        jax.ShapeDtypeStruct((1, 1), jnp.float32),    # total loss
        jax.ShapeDtypeStruct((1, 1), jnp.float32),    # ce loss
        jax.ShapeDtypeStruct((1, 1), jnp.float32),    # recon loss
        jax.ShapeDtypeStruct((1, 1), jnp.float32),    # vq commit loss
        jax.ShapeDtypeStruct((1, 1), jnp.float32),    # ar commit loss
    )

    pixels, total, ce, recon, commit, arc = pl.pallas_call(
        kernel,
        out_shape=out_shapes,
        in_specs=[VMEM_SPEC] * 27,
        out_specs=(VMEM_SPEC,) * 6,
    )(patches,
      params["enc_w"], params["enc_b"].reshape(1, dim),
      params["codebook"], cb_sq, params["start_token"].reshape(1, dim),
      cos, sin, rot,
      params["ln1_g"], params["ln1_b"],
      bf(params["wq"]), bf(params["wk"]), bf(params["wv"]), bf(params["wo"]),
      params["ln2_g"], params["ln2_b"],
      bf(params["ff_w1"]), params["ff_b1"], bf(params["ff_w2"]), params["ff_b2"],
      params["final_ln_g"].reshape(1, dim), params["final_ln_b"].reshape(1, dim),
      bf(params["proj_w"]), params["proj_b"].reshape(1, dim),
      params["dec_w"], params["dec_b"].reshape(1, p2))

    dec_pix = pixels.reshape(b, h, w, p, p).transpose(0, 1, 3, 2, 4).reshape(b, 1, H, W)
    recon_image = (dec_pix + 1.0) * 0.5

    total_loss = total[0, 0]
    losses = (ce[0, 0], recon[0, 0], commit[0, 0], arc[0, 0])
    return total_loss, (image, recon_image), losses


# ----------------------------------------------------------------------------
# Deterministic parameter initialization (torch Linear-style uniform), per-layer
# weights stacked along a leading depth axis.
# ----------------------------------------------------------------------------

def init_params(key, *, dim, patch_size, codebook_size, depth, heads, dim_head):
    p2 = patch_size * patch_size
    inner = heads * dim_head
    keys = iter(jax.random.split(key, 16 + 8 * depth))

    def lin_w(k, fan_in, fan_out):
        bound = 1.0 / math.sqrt(fan_in)
        return jax.random.uniform(k, (fan_in, fan_out), jnp.float32, -bound, bound)

    def lin_b(k, fan_in, fan_out):
        bound = 1.0 / math.sqrt(fan_in)
        return jax.random.uniform(k, (fan_out,), jnp.float32, -bound, bound)

    params = {
        "enc_w": lin_w(next(keys), p2, dim),
        "enc_b": lin_b(next(keys), p2, dim),
        "codebook": jax.random.normal(next(keys), (codebook_size, dim), jnp.float32),
        "start_token": jnp.zeros((dim,), jnp.float32),
        "final_ln_g": jnp.ones((dim,), jnp.float32),
        "final_ln_b": jnp.zeros((dim,), jnp.float32),
        "proj_w": lin_w(next(keys), dim, dim),
        "proj_b": lin_b(next(keys), dim, dim),
        "dec_w": lin_w(next(keys), dim, p2),
        "dec_b": lin_b(next(keys), dim, p2),
    }

    wq, wk, wv, wo, ffw1, ffb1, ffw2, ffb2 = ([] for _ in range(8))
    for _ in range(depth):
        wq.append(lin_w(next(keys), dim, inner))
        wk.append(lin_w(next(keys), dim, inner))
        wv.append(lin_w(next(keys), dim, inner))
        wo.append(lin_w(next(keys), inner, dim))
        ffw1.append(lin_w(next(keys), dim, 4 * dim))
        ffb1.append(lin_b(next(keys), dim, 4 * dim))
        ffw2.append(lin_w(next(keys), 4 * dim, dim))
        ffb2.append(lin_b(next(keys), 4 * dim, dim))

    params.update({
        "ln1_g": jnp.ones((depth, 1, dim), jnp.float32),
        "ln1_b": jnp.zeros((depth, 1, dim), jnp.float32),
        "ln2_g": jnp.ones((depth, 1, dim), jnp.float32),
        "ln2_b": jnp.zeros((depth, 1, dim), jnp.float32),
        "wq": jnp.stack(wq),                     # (L, dim, inner)
        "wk": jnp.stack(wk),
        "wv": jnp.stack(wv),
        "wo": jnp.stack(wo),                     # (L, inner, dim)
        "ff_w1": jnp.stack(ffw1),                # (L, dim, 4*dim)
        "ff_b1": jnp.stack(ffb1)[:, None, :],    # (L, 1, 4*dim)
        "ff_w2": jnp.stack(ffw2),                # (L, 4*dim, dim)
        "ff_b2": jnp.stack(ffb2)[:, None, :],    # (L, 1, dim)
    })
    return params


if __name__ == "__main__":
    image_size = 16
    patch_size = 4          # seq_length = (16/4)^2 = 16, patch dim = 16
    dim = 32
    codebook_size = 64
    depth = 2
    dim_head = 16
    heads = 4
    batch = 2

    key = jax.random.PRNGKey(0)
    k_img, k_params = jax.random.split(key)
    image = jax.random.uniform(k_img, (batch, 1, image_size, image_size), jnp.float32)
    params = init_params(
        k_params,
        dim=dim,
        patch_size=patch_size,
        codebook_size=codebook_size,
        depth=depth,
        heads=heads,
        dim_head=dim_head,
    )

    fwd = jax.jit(
        functools.partial(
            vq_ar_autoencoder_forward,
            patch_size=patch_size,
            dim_head=dim_head,
        )
    )
    total_loss, (img, recon_image), (ce, recon, commit, ar_commit) = fwd(params, image)
    jax.block_until_ready(total_loss)
    assert recon_image.shape == image.shape
    assert bool(jnp.isfinite(total_loss))
    print("KERNEL_OK")
</pallas_src>

<mosaic_0001>
module attributes {stable_mosaic.version = 11 : i64} {
  func.func @fused_forward_kernel(%arg0: memref<32x16xf32, #tpu.memory_space<vmem>>, %arg1: memref<16x32xf32, #tpu.memory_space<vmem>>, %arg2: memref<1x32xf32, #tpu.memory_space<vmem>>, %arg3: memref<64x32xf32, #tpu.memory_space<vmem>>, %arg4: memref<1x64xf32, #tpu.memory_space<vmem>>, %arg5: memref<1x32xf32, #tpu.memory_space<vmem>>, %arg6: memref<32x64xf32, #tpu.memory_space<vmem>>, %arg7: memref<32x64xf32, #tpu.memory_space<vmem>>, %arg8: memref<64x64xbf16, #tpu.memory_space<vmem>>, %arg9: memref<2x1x32xf32, #tpu.memory_space<vmem>>, %arg10: memref<2x1x32xf32, #tpu.memory_space<vmem>>, %arg11: memref<2x32x64xbf16, #tpu.memory_space<vmem>>, %arg12: memref<2x32x64xbf16, #tpu.memory_space<vmem>>, %arg13: memref<2x32x64xbf16, #tpu.memory_space<vmem>>, %arg14: memref<2x64x32xbf16, #tpu.memory_space<vmem>>, %arg15: memref<2x1x32xf32, #tpu.memory_space<vmem>>, %arg16: memref<2x1x32xf32, #tpu.memory_space<vmem>>, %arg17: memref<2x32x128xbf16, #tpu.memory_space<vmem>>, %arg18: memref<2x1x128xf32, #tpu.memory_space<vmem>>, %arg19: memref<2x128x32xbf16, #tpu.memory_space<vmem>>, %arg20: memref<2x1x32xf32, #tpu.memory_space<vmem>>, %arg21: memref<1x32xf32, #tpu.memory_space<vmem>>, %arg22: memref<1x32xf32, #tpu.memory_space<vmem>>, %arg23: memref<32x32xbf16, #tpu.memory_space<vmem>>, %arg24: memref<1x32xf32, #tpu.memory_space<vmem>>, %arg25: memref<32x16xf32, #tpu.memory_space<vmem>>, %arg26: memref<1x16xf32, #tpu.memory_space<vmem>>, %arg27: memref<32x16xf32, #tpu.memory_space<vmem>>, %arg28: memref<1x1xf32, #tpu.memory_space<vmem>>, %arg29: memref<1x1xf32, #tpu.memory_space<vmem>>, %arg30: memref<1x1xf32, #tpu.memory_space<vmem>>, %arg31: memref<1x1xf32, #tpu.memory_space<vmem>>, %arg32: memref<1x1xf32, #tpu.memory_space<vmem>>) attributes {dimension_semantics = [], scalar_prefetch = 0 : i64, scratch_operands = 0 : i64, tpu.core_type = #tpu.core_type<tc>} {
    %c0 = arith.constant 0 : index
    %c0_0 = arith.constant 0 : index
    %0 = vector.load %arg0[%c0, %c0_0] : memref<32x16xf32, #tpu.memory_space<vmem>>, vector<32x16xf32>
    %c0_1 = arith.constant 0 : index
    %c0_2 = arith.constant 0 : index
    %1 = vector.load %arg1[%c0_1, %c0_2] : memref<16x32xf32, #tpu.memory_space<vmem>>, vector<16x32xf32>
    %cst = arith.constant dense<0.000000e+00> : vector<32x32xf32>
    %2 = tpu.matmul %0, %1, %cst {dimension_numbers = #tpu.dot_dimension_numbers<[1], [0], [0], [1], [0, 0, 1, 1], [], []>} : vector<32x16xf32>, vector<16x32xf32>, vector<32x32xf32> -> vector<32x32xf32>
    %c0_3 = arith.constant 0 : index
    %c0_4 = arith.constant 0 : index
    %3 = vector.load %arg2[%c0_3, %c0_4] : memref<1x32xf32, #tpu.memory_space<vmem>>, vector<1x32xf32>
    %4 = vector.broadcast %3 : vector<1x32xf32> to vector<32x32xf32>
    %5 = arith.addf %2, %4 : vector<32x32xf32>
    %c0_5 = arith.constant 0 : index
    %c0_6 = arith.constant 0 : index
    %6 = vector.load %arg3[%c0_5, %c0_6] : memref<64x32xf32, #tpu.memory_space<vmem>>, vector<64x32xf32>
    %cst_7 = arith.constant dense<0.000000e+00> : vector<32x64xf32>
    %7 = tpu.matmul %5, %6, %cst_7 {dimension_numbers = #tpu.dot_dimension_numbers<[1], [1], [0], [0], [0, 0, 1, 0], [], []>} : vector<32x32xf32>, vector<64x32xf32>, vector<32x64xf32> -> vector<32x64xf32>
    %8 = arith.mulf %5, %5 : vector<32x32xf32>
    %cst_8 = arith.constant dense<0.000000e+00> : vector<32xf32>
    %9 = vector.multi_reduction <add>, %8, %cst_8 [1] : vector<32x32xf32> to vector<32xf32>
    %10 = vector.shape_cast %9 : vector<32xf32> to vector<32x1xf32>
    %cst_9 = arith.constant 2.000000e+00 : f32
    %11 = vector.broadcast %cst_9 : f32 to vector<32x64xf32>
    %12 = arith.mulf %11, %7 : vector<32x64xf32>
    %13 = vector.broadcast %10 : vector<32x1xf32> to vector<32x64xf32>
    %14 = arith.subf %13, %12 : vector<32x64xf32>
    %c0_10 = arith.constant 0 : index
    %c0_11 = arith.constant 0 : index
    %15 = vector.load %arg4[%c0_10, %c0_11] : memref<1x64xf32, #tpu.memory_space<vmem>>, vector<1x64xf32>
    %16 = vector.broadcast %15 : vector<1x64xf32> to vector<32x64xf32>
    %17 = arith.addf %14, %16 : vector<32x64xf32>
    %18 = tpu.iota {dimensions = array<i32: 1>} : vector<32x64xi32>
    %19 = arith.sitofp %18 : vector<32x64xi32> to vector<32x64xf32>
    %cst_12 = arith.constant dense<0x7F800000> : vector<32xf32>
    %20 = vector.multi_reduction <minimumf>, %17, %cst_12 [1] : vector<32x64xf32> to vector<32xf32>
    %21 = vector.shape_cast %20 : vector<32xf32> to vector<32x1xf32>
    %22 = vector.broadcast %21 : vector<32x1xf32> to vector<32x64xf32>
    %23 = arith.cmpf ole, %17, %22 : vector<32x64xf32>
    %cst_13 = arith.constant 6.400000e+01 : f32
    %24 = vector.broadcast %cst_13 : f32 to vector<32x64xf32>
    %25 = arith.select %23, %19, %24 : vector<32x64xi1>, vector<32x64xf32>
    %cst_14 = arith.constant dense<0x7F800000> : vector<32xf32>
    %26 = vector.multi_reduction <minimumf>, %25, %cst_14 [1] : vector<32x64xf32> to vector<32xf32>
    %27 = vector.shape_cast %26 : vector<32xf32> to vector<32x1xf32>
    %28 = vector.broadcast %27 : vector<32x1xf32> to vector<32x64xf32>
    %29 = arith.cmpf oeq, %19, %28 : vector<32x64xf32>
    %30 = arith.extui %29 : vector<32x64xi1> to vector<32x64xi32>
    %31 = arith.sitofp %30 : vector<32x64xi32> to vector<32x64xf32>
    %cst_15 = arith.constant dense<0.000000e+00> : vector<32x32xf32>
    %32 = tpu.matmul %31, %6, %cst_15 {dimension_numbers = #tpu.dot_dimension_numbers<[1], [0], [0], [1], [0, 0, 1, 1], [], []>} : vector<32x64xf32>, vector<64x32xf32>, vector<32x32xf32> -> vector<32x32xf32>
    %33 = arith.mulf %5, %5 : vector<32x32xf32>
    %cst_16 = arith.constant dense<0.000000e+00> : vector<32xf32>
    %34 = vector.multi_reduction <add>, %33, %cst_16 [1] : vector<32x32xf32> to vector<32xf32>
    %35 = vector.shape_cast %34 : vector<32xf32> to vector<32x1xf32>
    %36 = math.sqrt %35 : vector<32x1xf32>
    %37 = arith.mulf %32, %32 : vector<32x32xf32>
    %cst_17 = arith.constant dense<0.000000e+00> : vector<32xf32>
    %38 = vector.multi_reduction <add>, %37, %cst_17 [1] : vector<32x32xf32> to vector<32xf32>
    %39 = vector.shape_cast %38 : vector<32xf32> to vector<32x1xf32>
    %40 = math.sqrt %39 : vector<32x1xf32>
    %cst_18 = arith.constant 9.99999997E-7 : f32
    %41 = vector.broadcast %cst_18 : f32 to vector<32x1xf32>
    %42 = arith.maximumf %36, %41 : vector<32x1xf32>
    %43 = vector.broadcast %42 : vector<32x1xf32> to vector<32x32xf32>
    %44 = arith.divf %5, %43 : vector<32x32xf32>
    %cst_19 = arith.constant 9.99999997E-7 : f32
    %45 = vector.broadcast %cst_19 : f32 to vector<32x1xf32>
    %46 = arith.maximumf %40, %45 : vector<32x1xf32>
    %47 = vector.broadcast %46 : vector<32x1xf32> to vector<32x32xf32>
    %48 = arith.divf %32, %47 : vector<32x32xf32>
    %49 = arith.addf %44, %48 : vector<32x32xf32>
    %50 = arith.mulf %49, %49 : vector<32x32xf32>
    %cst_20 = arith.constant dense<0.000000e+00> : vector<32xf32>
    %51 = vector.multi_reduction <add>, %50, %cst_20 [1] : vector<32x32xf32> to vector<32xf32>
    %52 = vector.shape_cast %51 : vector<32xf32> to vector<32x1xf32>
    %53 = math.sqrt %52 : vector<32x1xf32>
    %cst_21 = arith.constant 9.99999997E-7 : f32
    %54 = vector.broadcast %cst_21 : f32 to vector<32x1xf32>
    %55 = arith.maximumf %53, %54 : vector<32x1xf32>
    %56 = vector.broadcast %55 : vector<32x1xf32> to vector<32x32xf32>
    %57 = arith.divf %49, %56 : vector<32x32xf32>
    %58 = arith.mulf %5, %57 : vector<32x32xf32>
    %cst_22 = arith.constant dense<0.000000e+00> : vector<32xf32>
    %59 = vector.multi_reduction <add>, %58, %cst_22 [1] : vector<32x32xf32> to vector<32xf32>
    %60 = vector.shape_cast %59 : vector<32xf32> to vector<32x1xf32>
    %cst_23 = arith.constant 2.000000e+00 : f32
    %61 = vector.broadcast %cst_23 : f32 to vector<32x1xf32>
    %62 = arith.mulf %61, %60 : vector<32x1xf32>
    %63 = vector.broadcast %62 : vector<32x1xf32> to vector<32x32xf32>
    %64 = arith.mulf %63, %57 : vector<32x32xf32>
    %65 = arith.subf %5, %64 : vector<32x32xf32>
    %66 = arith.mulf %5, %44 : vector<32x32xf32>
    %cst_24 = arith.constant dense<0.000000e+00> : vector<32xf32>
    %67 = vector.multi_reduction <add>, %66, %cst_24 [1] : vector<32x32xf32> to vector<32xf32>
    %68 = vector.shape_cast %67 : vector<32xf32> to vector<32x1xf32>
    %cst_25 = arith.constant 2.000000e+00 : f32
    %69 = vector.broadcast %cst_25 : f32 to vector<32x1xf32>
    %70 = arith.mulf %69, %68 : vector<32x1xf32>
    %71 = vector.broadcast %70 : vector<32x1xf32> to vector<32x32xf32>
    %72 = arith.mulf %71, %48 : vector<32x32xf32>
    %73 = arith.addf %65, %72 : vector<32x32xf32>
    %cst_26 = arith.constant 9.99999997E-7 : f32
    %74 = vector.broadcast %cst_26 : f32 to vector<32x1xf32>
    %75 = arith.maximumf %36, %74 : vector<32x1xf32>
    %76 = arith.divf %40, %75 : vector<32x1xf32>
    %77 = vector.broadcast %76 : vector<32x1xf32> to vector<32x32xf32>
    %78 = arith.mulf %73, %77 : vector<32x32xf32>
    %79 = arith.subf %32, %5 : vector<32x32xf32>
    %80 = arith.mulf %79, %79 : vector<32x32xf32>
    %cst_27 = arith.constant dense<0.000000e+00> : vector<32xf32>
    %81 = vector.multi_reduction <add>, %80, %cst_27 [1] : vector<32x32xf32> to vector<32xf32>
    %82 = vector.shape_cast %81 : vector<32xf32> to vector<32x1xf32>
    %cst_28 = arith.constant dense<0.000000e+00> : vector<1xf32>
    %83 = vector.multi_reduction <add>, %82, %cst_28 [0] : vector<32x1xf32> to vector<1xf32>
    %84 = vector.shape_cast %83 : vector<1xf32> to vector<1x1xf32>
    %cst_29 = arith.constant 9.765625E-4 : f32
    %85 = vector.broadcast %cst_29 : f32 to vector<1x1xf32>
    %86 = arith.mulf %84, %85 : vector<1x1xf32>
    %c0_30 = arith.constant 0 : index
    %c0_31 = arith.constant 0 : index
    %87 = vector.load %arg5[%c0_30, %c0_31] : memref<1x32xf32, #tpu.memory_space<vmem>>, vector<1x32xf32>
    %88 = vector.extract_strided_slice %78 {offsets = [0, 0], sizes = [15, 32], strides = [1, 1]} : vector<32x32xf32> to vector<15x32xf32>
    %89 = vector.extract_strided_slice %78 {offsets = [16, 0], sizes = [15, 32], strides = [1, 1]} : vector<32x32xf32> to vector<15x32xf32>
    %90 = tpu.concatenate %87, %88, %87, %89 in 0 : vector<1x32xf32>, vector<15x32xf32>, vector<1x32xf32>, vector<15x32xf32> -> vector<32x32xf32>
    %c0_32 = arith.constant 0 : index
    %c0_33 = arith.constant 0 : index
    %91 = vector.load %arg6[%c0_32, %c0_33] : memref<32x64xf32, #tpu.memory_space<vmem>>, vector<32x64xf32>
    %c0_34 = arith.constant 0 : index
    %c0_35 = arith.constant 0 : index
    %92 = vector.load %arg7[%c0_34, %c0_35] : memref<32x64xf32, #tpu.memory_space<vmem>>, vector<32x64xf32>
    %c0_36 = arith.constant 0 : index
    %c0_37 = arith.constant 0 : index
    %93 = vector.load %arg8[%c0_36, %c0_37] : memref<64x64xbf16, #tpu.memory_space<vmem>>, vector<64x64xbf16>
    %94 = tpu.iota {dimensions = array<i32: 0>} : vector<128x1xi32>
    %95 = tpu.iota {dimensions = array<i32: 1>} : vector<1x128xi32>
    %c4_i32 = arith.constant 4 : i32
    %96 = vector.broadcast %c4_i32 : i32 to vector<128x1xi32>
    %97 = arith.shrsi %94, %96 : vector<128x1xi32>
    %c15_i32 = arith.constant 15 : i32
    %98 = vector.broadcast %c15_i32 : i32 to vector<128x1xi32>
    %99 = arith.andi %94, %98 : vector<128x1xi32>
    %c4_i32_38 = arith.constant 4 : i32
    %100 = vector.broadcast %c4_i32_38 : i32 to vector<1x128xi32>
    %101 = arith.shrsi %95, %100 : vector<1x128xi32>
    %c15_i32_39 = arith.constant 15 : i32
    %102 = vector.broadcast %c15_i32_39 : i32 to vector<1x128xi32>
    %103 = arith.andi %95, %102 : vector<1x128xi32>
    %104 = vector.broadcast %97 : vector<128x1xi32> to vector<128x128xi32>
    %105 = vector.broadcast %101 : vector<1x128xi32> to vector<128x128xi32>
    %106 = arith.cmpi eq, %104, %105 : vector<128x128xi32>
    %107 = vector.broadcast %103 : vector<1x128xi32> to vector<128x128xi32>
    %108 = vector.broadcast %99 : vector<128x1xi32> to vector<128x128xi32>
    %109 = arith.cmpi sle, %107, %108 : vector<128x128xi32>
    %110 = arith.andi %106, %109 : vector<128x128xi1>
    %cst_40 = arith.constant 0.000000e+00 : f32
    %cst_41 = arith.constant -1.000000e+30 : f32
    %111 = vector.broadcast %cst_40 : f32 to vector<128x128xf32>
    %112 = vector.broadcast %cst_41 : f32 to vector<128x128xf32>
    %113 = arith.select %110, %111, %112 : vector<128x128xi1>, vector<128x128xf32>
    %c0_42 = arith.constant 0 : index
    %c0_43 = arith.constant 0 : index
    %c0_44 = arith.constant 0 : index
    %114 = vector.load %arg9[%c0_42, %c0_43, %c0_44] : memref<2x1x32xf32, #tpu.memory_space<vmem>>, vector<1x1x32xf32>
    %115 = vector.shape_cast %114 : vector<1x1x32xf32> to vector<1x32xf32>
    %c0_45 = arith.constant 0 : index
    %c0_46 = arith.constant 0 : index
    %c0_47 = arith.constant 0 : index
    %116 = vector.load %arg10[%c0_45, %c0_46, %c0_47] : memref<2x1x32xf32, #tpu.memory_space<vmem>>, vector<1x1x32xf32>
    %117 = vector.shape_cast %116 : vector<1x1x32xf32> to vector<1x32xf32>
    %cst_48 = arith.constant dense<0.000000e+00> : vector<32xf32>
    %118 = vector.multi_reduction <add>, %90, %cst_48 [1] : vector<32x32xf32> to vector<32xf32>
    %119 = vector.shape_cast %118 : vector<32xf32> to vector<32x1xf32>
    %cst_49 = arith.constant 3.200000e+01 : f32
    %120 = vector.broadcast %cst_49 : f32 to vector<32x1xf32>
    %121 = arith.divf %119, %120 : vector<32x1xf32>
    %122 = vector.broadcast %121 : vector<32x1xf32> to vector<32x32xf32>
    %123 = arith.subf %90, %122 : vector<32x32xf32>
    %124 = arith.mulf %123, %123 : vector<32x32xf32>
    %cst_50 = arith.constant dense<0.000000e+00> : vector<32xf32>
    %125 = vector.multi_reduction <add>, %124, %cst_50 [1] : vector<32x32xf32> to vector<32xf32>
    %126 = vector.shape_cast %125 : vector<32xf32> to vector<32x1xf32>
    %cst_51 = arith.constant 3.200000e+01 : f32
    %127 = vector.broadcast %cst_51 : f32 to vector<32x1xf32>
    %128 = arith.divf %126, %127 : vector<32x1xf32>
    %129 = vector.broadcast %121 : vector<32x1xf32> to vector<32x32xf32>
    %130 = arith.subf %90, %129 : vector<32x32xf32>
    %cst_52 = arith.constant 9.99999974E-6 : f32
    %131 = vector.broadcast %cst_52 : f32 to vector<32x1xf32>
    %132 = arith.addf %128, %131 : vector<32x1xf32>
    %133 = math.rsqrt %132 : vector<32x1xf32>
    %134 = vector.broadcast %133 : vector<32x1xf32> to vector<32x32xf32>
    %135 = arith.mulf %130, %134 : vector<32x32xf32>
    %136 = vector.broadcast %115 : vector<1x32xf32> to vector<32x32xf32>
    %137 = arith.mulf %135, %136 : vector<32x32xf32>
    %138 = vector.broadcast %117 : vector<1x32xf32> to vector<32x32xf32>
    %139 = arith.addf %137, %138 : vector<32x32xf32>
    %140 = arith.truncf %139 : vector<32x32xf32> to vector<32x32xbf16>
    %c0_53 = arith.constant 0 : index
    %c0_54 = arith.constant 0 : index
    %c0_55 = arith.constant 0 : index
    %141 = vector.load %arg11[%c0_53, %c0_54, %c0_55] : memref<2x32x64xbf16, #tpu.memory_space<vmem>>, vector<1x32x64xbf16>
    %142 = vector.shape_cast %141 : vector<1x32x64xbf16> to vector<32x64xbf16>
    %cst_56 = arith.constant dense<0.000000e+00> : vector<32x64xf32>
    %143 = tpu.matmul %140, %142, %cst_56 {dimension_numbers = #tpu.dot_dimension_numbers<[1], [0], [0], [1], [0, 0, 1, 1], [], []>} : vector<32x32xbf16>, vector<32x64xbf16>, vector<32x64xf32> -> vector<32x64xf32>
    %c0_57 = arith.constant 0 : index
    %c0_58 = arith.constant 0 : index
    %c0_59 = arith.constant 0 : index
    %144 = vector.load %arg12[%c0_57, %c0_58, %c0_59] : memref<2x32x64xbf16, #tpu.memory_space<vmem>>, vector<1x32x64xbf16>
    %145 = vector.shape_cast %144 : vector<1x32x64xbf16> to vector<32x64xbf16>
    %cst_60 = arith.constant dense<0.000000e+00> : vector<32x64xf32>
    %146 = tpu.matmul %140, %145, %cst_60 {dimension_numbers = #tpu.dot_dimension_numbers<[1], [0], [0], [1], [0, 0, 1, 1], [], []>} : vector<32x32xbf16>, vector<32x64xbf16>, vector<32x64xf32> -> vector<32x64xf32>
    %c0_61 = arith.constant 0 : index
    %c0_62 = arith.constant 0 : index
    %c0_63 = arith.constant 0 : index
    %147 = vector.load %arg13[%c0_61, %c0_62, %c0_63] : memref<2x32x64xbf16, #tpu.memory_space<vmem>>, vector<1x32x64xbf16>
    %148 = vector.shape_cast %147 : vector<1x32x64xbf16> to vector<32x64xbf16>
    %cst_64 = arith.constant dense<0.000000e+00> : vector<32x64xf32>
    %149 = tpu.matmul %140, %148, %cst_64 {dimension_numbers = #tpu.dot_dimension_numbers<[1], [0], [0], [1], [0, 0, 1, 1], [], []>} : vector<32x32xbf16>, vector<32x64xbf16>, vector<32x64xf32> -> vector<32x64xf32>
    %150 = arith.mulf %143, %91 : vector<32x64xf32>
    %151 = arith.truncf %143 : vector<32x64xf32> to vector<32x64xbf16>
    %cst_65 = arith.constant dense<0.000000e+00> : vector<32x64xf32>
    %152 = tpu.matmul %151, %93, %cst_65 {dimension_numbers = #tpu.dot_dimension_numbers<[1], [0], [0], [1], [0, 0, 1, 1], [], []>} : vector<32x64xbf16>, vector<64x64xbf16>, vector<32x64xf32> -> vector<32x64xf32>
    %153 = arith.mulf %152, %92 : vector<32x64xf32>
    %154 = arith.addf %150, %153 : vector<32x64xf32>
    %cst_66 = arith.constant 2.500000e-01 : f32
    %155 = vector.broadcast %cst_66 : f32 to vector<32x64xf32>
    %156 = arith.mulf %154, %155 : vector<32x64xf32>
    %157 = arith.mulf %146, %91 : vector<32x64xf32>
    %158 = arith.truncf %146 : vector<32x64xf32> to vector<32x64xbf16>
    %cst_67 = arith.constant dense<0.000000e+00> : vector<32x64xf32>
    %159 = tpu.matmul %158, %93, %cst_67 {dimension_numbers = #tpu.dot_dimension_numbers<[1], [0], [0], [1], [0, 0, 1, 1], [], []>} : vector<32x64xbf16>, vector<64x64xbf16>, vector<32x64xf32> -> vector<32x64xf32>
    %160 = arith.mulf %159, %92 : vector<32x64xf32>
    %161 = arith.addf %157, %160 : vector<32x64xf32>
    %162 = vector.extract_strided_slice %156 {offsets = [0, 0], sizes = [32, 16], strides = [1, 1]} : vector<32x64xf32> to vector<32x16xf32>
    %163 = vector.extract_strided_slice %156 {offsets = [0, 16], sizes = [32, 16], strides = [1, 1]} : vector<32x64xf32> to vector<32x16xf32>
    %164 = vector.extract_strided_slice %156 {offsets = [0, 32], sizes = [32, 16], strides = [1, 1]} : vector<32x64xf32> to vector<32x16xf32>
    %165 = vector.extract_strided_slice %156 {offsets = [0, 48], sizes = [32, 16], strides = [1, 1]} : vector<32x64xf32> to vector<32x16xf32>
    %166 = tpu.concatenate %162, %163, %164, %165 in 0 : vector<32x16xf32>, vector<32x16xf32>, vector<32x16xf32>, vector<32x16xf32> -> vector<128x16xf32>
    %167 = arith.truncf %166 : vector<128x16xf32> to vector<128x16xbf16>
    %168 = vector.extract_strided_slice %161 {offsets = [0, 0], sizes = [32, 16], strides = [1, 1]} : vector<32x64xf32> to vector<32x16xf32>
    %169 = vector.extract_strided_slice %161 {offsets = [0, 16], sizes = [32, 16], strides = [1, 1]} : vector<32x64xf32> to vector<32x16xf32>
    %170 = vector.extract_strided_slice %161 {offsets = [0, 32], sizes = [32, 16], strides = [1, 1]} : vector<32x64xf32> to vector<32x16xf32>
    %171 = vector.extract_strided_slice %161 {offsets = [0, 48], sizes = [32, 16], strides = [1, 1]} : vector<32x64xf32> to vector<32x16xf32>
    %172 = tpu.concatenate %168, %169, %170, %171 in 0 : vector<32x16xf32>, vector<32x16xf32>, vector<32x16xf32>, vector<32x16xf32> -> vector<128x16xf32>
    %173 = arith.truncf %172 : vector<128x16xf32> to vector<128x16xbf16>
    %174 = vector.extract_strided_slice %149 {offsets = [0, 0], sizes = [32, 16], strides = [1, 1]} : vector<32x64xf32> to vector<32x16xf32>
    %175 = vector.extract_strided_slice %149 {offsets = [0, 16], sizes = [32, 16], strides = [1, 1]} : vector<32x64xf32> to vector<32x16xf32>
    %176 = vector.extract_strided_slice %149 {offsets = [0, 32], sizes = [32, 16], strides = [1, 1]} : vector<32x64xf32> to vector<32x16xf32>
    %177 = vector.extract_strided_slice %149 {offsets = [0, 48], sizes = [32, 16], strides = [1, 1]} : vector<32x64xf32> to vector<32x16xf32>
    %178 = tpu.concatenate %174, %175, %176, %177 in 0 : vector<32x16xf32>, vector<32x16xf32>, vector<32x16xf32>, vector<32x16xf32> -> vector<128x16xf32>
    %179 = arith.truncf %178 : vector<128x16xf32> to vector<128x16xbf16>
    %cst_68 = arith.constant dense<0.000000e+00> : vector<128x128xf32>
    %180 = tpu.matmul %167, %173, %cst_68 {dimension_numbers = #tpu.dot_dimension_numbers<[1], [1], [0], [0], [0, 0, 1, 0], [], []>} : vector<128x16xbf16>, vector<128x16xbf16>, vector<128x128xf32> -> vector<128x128xf32>
    %181 = arith.addf %180, %113 : vector<128x128xf32>
    %cst_69 = arith.constant dense<0xFF800000> : vector<128xf32>
    %182 = vector.multi_reduction <maximumf>, %181, %cst_69 [1] : vector<128x128xf32> to vector<128xf32>
    %183 = vector.shape_cast %182 : vector<128xf32> to vector<128x1xf32>
    %184 = vector.broadcast %183 : vector<128x1xf32> to vector<128x128xf32>
    %185 = arith.subf %181, %184 : vector<128x128xf32>
    %186 = math.exp %185 : vector<128x128xf32>
    %cst_70 = arith.constant dense<0.000000e+00> : vector<128xf32>
    %187 = vector.multi_reduction <add>, %186, %cst_70 [1] : vector<128x128xf32> to vector<128xf32>
    %188 = vector.shape_cast %187 : vector<128xf32> to vector<128x1xf32>
    %189 = tpu.reciprocal %188 {approx = true} : vector<128x1xf32> -> vector<128x1xf32>
    %190 = vector.broadcast %189 : vector<128x1xf32> to vector<128x128xf32>
    %191 = arith.mulf %186, %190 : vector<128x128xf32>
    %192 = arith.truncf %191 : vector<128x128xf32> to vector<128x128xbf16>
    %cst_71 = arith.constant dense<0.000000e+00> : vector<128x16xf32>
    %193 = tpu.matmul %192, %179, %cst_71 {dimension_numbers = #tpu.dot_dimension_numbers<[1], [0], [0], [1], [0, 0, 1, 1], [], []>} : vector<128x128xbf16>, vector<128x16xbf16>, vector<128x16xf32> -> vector<128x16xf32>
    %194 = vector.extract_strided_slice %193 {offsets = [0, 0], sizes = [32, 16], strides = [1, 1]} : vector<128x16xf32> to vector<32x16xf32>
    %195 = vector.extract_strided_slice %193 {offsets = [32, 0], sizes = [32, 16], strides = [1, 1]} : vector<128x16xf32> to vector<32x16xf32>
    %196 = vector.extract_strided_slice %193 {offsets = [64, 0], sizes = [32, 16], strides = [1, 1]} : vector<128x16xf32> to vector<32x16xf32>
    %197 = vector.extract_strided_slice %193 {offsets = [96, 0], sizes = [32, 16], strides = [1, 1]} : vector<128x16xf32> to vector<32x16xf32>
    %198 = tpu.concatenate %194, %195, %196, %197 in 1 : vector<32x16xf32>, vector<32x16xf32>, vector<32x16xf32>, vector<32x16xf32> -> vector<32x64xf32>
    %199 = arith.truncf %198 : vector<32x64xf32> to vector<32x64xbf16>
    %c0_72 = arith.constant 0 : index
    %c0_73 = arith.constant 0 : index
    %c0_74 = arith.constant 0 : index
    %200 = vector.load %arg14[%c0_72, %c0_73, %c0_74] : memref<2x64x32xbf16, #tpu.memory_space<vmem>>, vector<1x64x32xbf16>
    %201 = vector.shape_cast %200 : vector<1x64x32xbf16> to vector<64x32xbf16>
    %cst_75 = arith.constant dense<0.000000e+00> : vector<32x32xf32>
    %202 = tpu.matmul %199, %201, %cst_75 {dimension_numbers = #tpu.dot_dimension_numbers<[1], [0], [0], [1], [0, 0, 1, 1], [], []>} : vector<32x64xbf16>, vector<64x32xbf16>, vector<32x32xf32> -> vector<32x32xf32>
    %203 = arith.addf %90, %202 : vector<32x32xf32>
    %c0_76 = arith.constant 0 : index
    %c0_77 = arith.constant 0 : index
    %c0_78 = arith.constant 0 : index
    %204 = vector.load %arg15[%c0_76, %c0_77, %c0_78] : memref<2x1x32xf32, #tpu.memory_space<vmem>>, vector<1x1x32xf32>
    %205 = vector.shape_cast %204 : vector<1x1x32xf32> to vector<1x32xf32>
    %c0_79 = arith.constant 0 : index
    %c0_80 = arith.constant 0 : index
    %c0_81 = arith.constant 0 : index
    %206 = vector.load %arg16[%c0_79, %c0_80, %c0_81] : memref<2x1x32xf32, #tpu.memory_space<vmem>>, vector<1x1x32xf32>
    %207 = vector.shape_cast %206 : vector<1x1x32xf32> to vector<1x32xf32>
    %cst_82 = arith.constant dense<0.000000e+00> : vector<32xf32>
    %208 = vector.multi_reduction <add>, %203, %cst_82 [1] : vector<32x32xf32> to vector<32xf32>
    %209 = vector.shape_cast %208 : vector<32xf32> to vector<32x1xf32>
    %cst_83 = arith.constant 3.200000e+01 : f32
    %210 = vector.broadcast %cst_83 : f32 to vector<32x1xf32>
    %211 = arith.divf %209, %210 : vector<32x1xf32>
    %212 = vector.broadcast %211 : vector<32x1xf32> to vector<32x32xf32>
    %213 = arith.subf %203, %212 : vector<32x32xf32>
    %214 = arith.mulf %213, %213 : vector<32x32xf32>
    %cst_84 = arith.constant dense<0.000000e+00> : vector<32xf32>
    %215 = vector.multi_reduction <add>, %214, %cst_84 [1] : vector<32x32xf32> to vector<32xf32>
    %216 = vector.shape_cast %215 : vector<32xf32> to vector<32x1xf32>
    %cst_85 = arith.constant 3.200000e+01 : f32
    %217 = vector.broadcast %cst_85 : f32 to vector<32x1xf32>
    %218 = arith.divf %216, %217 : vector<32x1xf32>
    %219 = vector.broadcast %211 : vector<32x1xf32> to vector<32x32xf32>
    %220 = arith.subf %203, %219 : vector<32x32xf32>
    %cst_86 = arith.constant 9.99999974E-6 : f32
    %221 = vector.broadcast %cst_86 : f32 to vector<32x1xf32>
    %222 = arith.addf %218, %221 : vector<32x1xf32>
    %223 = math.rsqrt %222 : vector<32x1xf32>
    %224 = vector.broadcast %223 : vector<32x1xf32> to vector<32x32xf32>
    %225 = arith.mulf %220, %224 : vector<32x32xf32>
    %226 = vector.broadcast %205 : vector<1x32xf32> to vector<32x32xf32>
    %227 = arith.mulf %225, %226 : vector<32x32xf32>
    %228 = vector.broadcast %207 : vector<1x32xf32> to vector<32x32xf32>
    %229 = arith.addf %227, %228 : vector<32x32xf32>
    %230 = arith.truncf %229 : vector<32x32xf32> to vector<32x32xbf16>
    %c0_87 = arith.constant 0 : index
    %c0_88 = arith.constant 0 : index
    %c0_89 = arith.constant 0 : index
    %231 = vector.load %arg17[%c0_87, %c0_88, %c0_89] : memref<2x32x128xbf16, #tpu.memory_space<vmem>>, vector<1x32x128xbf16>
    %232 = vector.shape_cast %231 : vector<1x32x128xbf16> to vector<32x128xbf16>
    %cst_90 = arith.constant dense<0.000000e+00> : vector<32x128xf32>
    %233 = tpu.matmul %230, %232, %cst_90 {dimension_numbers = #tpu.dot_dimension_numbers<[1], [0], [0], [1], [0, 0, 1, 1], [], []>} : vector<32x32xbf16>, vector<32x128xbf16>, vector<32x128xf32> -> vector<32x128xf32>
    %c0_91 = arith.constant 0 : index
    %c0_92 = arith.constant 0 : index
    %c0_93 = arith.constant 0 : index
    %234 = vector.load %arg18[%c0_91, %c0_92, %c0_93] : memref<2x1x128xf32, #tpu.memory_space<vmem>>, vector<1x1x128xf32>
    %235 = vector.shape_cast %234 : vector<1x1x128xf32> to vector<1x128xf32>
    %236 = vector.broadcast %235 : vector<1x128xf32> to vector<32x128xf32>
    %237 = arith.addf %233, %236 : vector<32x128xf32>
    %cst_94 = arith.constant 5.000000e-01 : f32
    %238 = vector.broadcast %cst_94 : f32 to vector<32x128xf32>
    %239 = arith.mulf %238, %237 : vector<32x128xf32>
    %cst_95 = arith.constant 0.707106769 : f32
    %240 = vector.broadcast %cst_95 : f32 to vector<32x128xf32>
    %241 = arith.mulf %237, %240 : vector<32x128xf32>
    %cst_96 = arith.constant 0.000000e+00 : f32
    %242 = vector.broadcast %cst_96 : f32 to vector<32x128xf32>
    %243 = arith.cmpf oge, %241, %242 : vector<32x128xf32>
    %cst_97 = arith.constant 1.000000e+00 : f32
    %cst_98 = arith.constant -1.000000e+00 : f32
    %244 = vector.broadcast %cst_97 : f32 to vector<32x128xf32>
    %245 = vector.broadcast %cst_98 : f32 to vector<32x128xf32>
    %246 = arith.select %243, %244, %245 : vector<32x128xi1>, vector<32x128xf32>
    %247 = math.absf %241 : vector<32x128xf32>
    %cst_99 = arith.constant 0.327591091 : f32
    %248 = vector.broadcast %cst_99 : f32 to vector<32x128xf32>
    %249 = arith.mulf %248, %247 : vector<32x128xf32>
    %cst_100 = arith.constant 1.000000e+00 : f32
    %250 = vector.broadcast %cst_100 : f32 to vector<32x128xf32>
    %251 = arith.addf %250, %249 : vector<32x128xf32>
    %cst_101 = arith.constant 1.000000e+00 : f32
    %252 = vector.broadcast %cst_101 : f32 to vector<32x128xf32>
    %253 = arith.divf %252, %251 : vector<32x128xf32>
    %cst_102 = arith.constant 1.06140542 : f32
    %254 = vector.broadcast %cst_102 : f32 to vector<32x128xf32>
    %255 = arith.mulf %254, %253 : vector<32x128xf32>
    %cst_103 = arith.constant -1.45315206 : f32
    %256 = vector.broadcast %cst_103 : f32 to vector<32x128xf32>
    %257 = arith.addf %255, %256 : vector<32x128xf32>
    %258 = arith.mulf %257, %253 : vector<32x128xf32>
    %cst_104 = arith.constant 1.42141378 : f32
    %259 = vector.broadcast %cst_104 : f32 to vector<32x128xf32>
    %260 = arith.addf %258, %259 : vector<32x128xf32>
    %261 = arith.mulf %260, %253 : vector<32x128xf32>
    %cst_105 = arith.constant -0.284496725 : f32
    %262 = vector.broadcast %cst_105 : f32 to vector<32x128xf32>
    %263 = arith.addf %261, %262 : vector<32x128xf32>
    %264 = arith.mulf %263, %253 : vector<32x128xf32>
    %cst_106 = arith.constant 0.254829586 : f32
    %265 = vector.broadcast %cst_106 : f32 to vector<32x128xf32>
    %266 = arith.addf %264, %265 : vector<32x128xf32>
    %267 = arith.mulf %266, %253 : vector<32x128xf32>
    %cst_107 = arith.constant 0.000000e+00 : f32
    %268 = vector.broadcast %cst_107 : f32 to vector<32x128xf32>
    %269 = arith.subf %268, %247 : vector<32x128xf32>
    %270 = arith.mulf %269, %247 : vector<32x128xf32>
    %271 = math.exp %270 : vector<32x128xf32>
    %272 = arith.mulf %267, %271 : vector<32x128xf32>
    %cst_108 = arith.constant 1.000000e+00 : f32
    %273 = vector.broadcast %cst_108 : f32 to vector<32x128xf32>
    %274 = arith.subf %273, %272 : vector<32x128xf32>
    %275 = arith.mulf %246, %274 : vector<32x128xf32>
    %cst_109 = arith.constant 1.000000e+00 : f32
    %276 = vector.broadcast %cst_109 : f32 to vector<32x128xf32>
    %277 = arith.addf %276, %275 : vector<32x128xf32>
    %278 = arith.mulf %239, %277 : vector<32x128xf32>
    %279 = arith.truncf %278 : vector<32x128xf32> to vector<32x128xbf16>
    %c0_110 = arith.constant 0 : index
    %c0_111 = arith.constant 0 : index
    %c0_112 = arith.constant 0 : index
    %280 = vector.load %arg19[%c0_110, %c0_111, %c0_112] : memref<2x128x32xbf16, #tpu.memory_space<vmem>>, vector<1x128x32xbf16>
    %281 = vector.shape_cast %280 : vector<1x128x32xbf16> to vector<128x32xbf16>
    %cst_113 = arith.constant dense<0.000000e+00> : vector<32x32xf32>
    %282 = tpu.matmul %279, %281, %cst_113 {dimension_numbers = #tpu.dot_dimension_numbers<[1], [0], [0], [1], [0, 0, 1, 1], [], []>} : vector<32x128xbf16>, vector<128x32xbf16>, vector<32x32xf32> -> vector<32x32xf32>
    %283 = arith.addf %203, %282 : vector<32x32xf32>
    %c0_114 = arith.constant 0 : index
    %c0_115 = arith.constant 0 : index
    %c0_116 = arith.constant 0 : index
    %284 = vector.load %arg20[%c0_114, %c0_115, %c0_116] : memref<2x1x32xf32, #tpu.memory_space<vmem>>, vector<1x1x32xf32>
    %285 = vector.shape_cast %284 : vector<1x1x32xf32> to vector<1x32xf32>
    %286 = vector.broadcast %285 : vector<1x32xf32> to vector<32x32xf32>
    %287 = arith.addf %283, %286 : vector<32x32xf32>
    %c1 = arith.constant 1 : index
    %c0_117 = arith.constant 0 : index
    %c0_118 = arith.constant 0 : index
    %288 = vector.load %arg9[%c1, %c0_117, %c0_118] : memref<2x1x32xf32, #tpu.memory_space<vmem>>, vector<1x1x32xf32>
    %289 = vector.shape_cast %288 : vector<1x1x32xf32> to vector<1x32xf32>
    %c1_119 = arith.constant 1 : index
    %c0_120 = arith.constant 0 : index
    %c0_121 = arith.constant 0 : index
    %290 = vector.load %arg10[%c1_119, %c0_120, %c0_121] : memref<2x1x32xf32, #tpu.memory_space<vmem>>, vector<1x1x32xf32>
    %291 = vector.shape_cast %290 : vector<1x1x32xf32> to vector<1x32xf32>
    %cst_122 = arith.constant dense<0.000000e+00> : vector<32xf32>
    %292 = vector.multi_reduction <add>, %287, %cst_122 [1] : vector<32x32xf32> to vector<32xf32>
    %293 = vector.shape_cast %292 : vector<32xf32> to vector<32x1xf32>
    %cst_123 = arith.constant 3.200000e+01 : f32
    %294 = vector.broadcast %cst_123 : f32 to vector<32x1xf32>
    %295 = arith.divf %293, %294 : vector<32x1xf32>
    %296 = vector.broadcast %295 : vector<32x1xf32> to vector<32x32xf32>
    %297 = arith.subf %287, %296 : vector<32x32xf32>
    %298 = arith.mulf %297, %297 : vector<32x32xf32>
    %cst_124 = arith.constant dense<0.000000e+00> : vector<32xf32>
    %299 = vector.multi_reduction <add>, %298, %cst_124 [1] : vector<32x32xf32> to vector<32xf32>
    %300 = vector.shape_cast %299 : vector<32xf32> to vector<32x1xf32>
    %cst_125 = arith.constant 3.200000e+01 : f32
    %301 = vector.broadcast %cst_125 : f32 to vector<32x1xf32>
    %302 = arith.divf %300, %301 : vector<32x1xf32>
    %303 = vector.broadcast %295 : vector<32x1xf32> to vector<32x32xf32>
    %304 = arith.subf %287, %303 : vector<32x32xf32>
    %cst_126 = arith.constant 9.99999974E-6 : f32
    %305 = vector.broadcast %cst_126 : f32 to vector<32x1xf32>
    %306 = arith.addf %302, %305 : vector<32x1xf32>
    %307 = math.rsqrt %306 : vector<32x1xf32>
    %308 = vector.broadcast %307 : vector<32x1xf32> to vector<32x32xf32>
    %309 = arith.mulf %304, %308 : vector<32x32xf32>
    %310 = vector.broadcast %289 : vector<1x32xf32> to vector<32x32xf32>
    %311 = arith.mulf %309, %310 : vector<32x32xf32>
    %312 = vector.broadcast %291 : vector<1x32xf32> to vector<32x32xf32>
    %313 = arith.addf %311, %312 : vector<32x32xf32>
    %314 = arith.truncf %313 : vector<32x32xf32> to vector<32x32xbf16>
    %c1_127 = arith.constant 1 : index
    %c0_128 = arith.constant 0 : index
    %c0_129 = arith.constant 0 : index
    %315 = vector.load %arg11[%c1_127, %c0_128, %c0_129] : memref<2x32x64xbf16, #tpu.memory_space<vmem>>, vector<1x32x64xbf16>
    %316 = vector.shape_cast %315 : vector<1x32x64xbf16> to vector<32x64xbf16>
    %cst_130 = arith.constant dense<0.000000e+00> : vector<32x64xf32>
    %317 = tpu.matmul %314, %316, %cst_130 {dimension_numbers = #tpu.dot_dimension_numbers<[1], [0], [0], [1], [0, 0, 1, 1], [], []>} : vector<32x32xbf16>, vector<32x64xbf16>, vector<32x64xf32> -> vector<32x64xf32>
    %c1_131 = arith.constant 1 : index
    %c0_132 = arith.constant 0 : index
    %c0_133 = arith.constant 0 : index
    %318 = vector.load %arg12[%c1_131, %c0_132, %c0_133] : memref<2x32x64xbf16, #tpu.memory_space<vmem>>, vector<1x32x64xbf16>
    %319 = vector.shape_cast %318 : vector<1x32x64xbf16> to vector<32x64xbf16>
    %cst_134 = arith.constant dense<0.000000e+00> : vector<32x64xf32>
    %320 = tpu.matmul %314, %319, %cst_134 {dimension_numbers = #tpu.dot_dimension_numbers<[1], [0], [0], [1], [0, 0, 1, 1], [], []>} : vector<32x32xbf16>, vector<32x64xbf16>, vector<32x64xf32> -> vector<32x64xf32>
    %c1_135 = arith.constant 1 : index
    %c0_136 = arith.constant 0 : index
    %c0_137 = arith.constant 0 : index
    %321 = vector.load %arg13[%c1_135, %c0_136, %c0_137] : memref<2x32x64xbf16, #tpu.memory_space<vmem>>, vector<1x32x64xbf16>
    %322 = vector.shape_cast %321 : vector<1x32x64xbf16> to vector<32x64xbf16>
    %cst_138 = arith.constant dense<0.000000e+00> : vector<32x64xf32>
    %323 = tpu.matmul %314, %322, %cst_138 {dimension_numbers = #tpu.dot_dimension_numbers<[1], [0], [0], [1], [0, 0, 1, 1], [], []>} : vector<32x32xbf16>, vector<32x64xbf16>, vector<32x64xf32> -> vector<32x64xf32>
    %324 = arith.mulf %317, %91 : vector<32x64xf32>
    %325 = arith.truncf %317 : vector<32x64xf32> to vector<32x64xbf16>
    %cst_139 = arith.constant dense<0.000000e+00> : vector<32x64xf32>
    %326 = tpu.matmul %325, %93, %cst_139 {dimension_numbers = #tpu.dot_dimension_numbers<[1], [0], [0], [1], [0, 0, 1, 1], [], []>} : vector<32x64xbf16>, vector<64x64xbf16>, vector<32x64xf32> -> vector<32x64xf32>
    %327 = arith.mulf %326, %92 : vector<32x64xf32>
    %328 = arith.addf %324, %327 : vector<32x64xf32>
    %cst_140 = arith.constant 2.500000e-01 : f32
    %329 = vector.broadcast %cst_140 : f32 to vector<32x64xf32>
    %330 = arith.mulf %328, %329 : vector<32x64xf32>
    %331 = arith.mulf %320, %91 : vector<32x64xf32>
    %332 = arith.truncf %320 : vector<32x64xf32> to vector<32x64xbf16>
    %cst_141 = arith.constant dense<0.000000e+00> : vector<32x64xf32>
    %333 = tpu.matmul %332, %93, %cst_141 {dimension_numbers = #tpu.dot_dimension_numbers<[1], [0], [0], [1], [0, 0, 1, 1], [], []>} : vector<32x64xbf16>, vector<64x64xbf16>, vector<32x64xf32> -> vector<32x64xf32>
    %334 = arith.mulf %333, %92 : vector<32x64xf32>
    %335 = arith.addf %331, %334 : vector<32x64xf32>
    %336 = vector.extract_strided_slice %330 {offsets = [0, 0], sizes = [32, 16], strides = [1, 1]} : vector<32x64xf32> to vector<32x16xf32>
    %337 = vector.extract_strided_slice %330 {offsets = [0, 16], sizes = [32, 16], strides = [1, 1]} : vector<32x64xf32> to vector<32x16xf32>
    %338 = vector.extract_strided_slice %330 {offsets = [0, 32], sizes = [32, 16], strides = [1, 1]} : vector<32x64xf32> to vector<32x16xf32>
    %339 = vector.extract_strided_slice %330 {offsets = [0, 48], sizes = [32, 16], strides = [1, 1]} : vector<32x64xf32> to vector<32x16xf32>
    %340 = tpu.concatenate %336, %337, %338, %339 in 0 : vector<32x16xf32>, vector<32x16xf32>, vector<32x16xf32>, vector<32x16xf32> -> vector<128x16xf32>
    %341 = arith.truncf %340 : vector<128x16xf32> to vector<128x16xbf16>
    %342 = vector.extract_strided_slice %335 {offsets = [0, 0], sizes = [32, 16], strides = [1, 1]} : vector<32x64xf32> to vector<32x16xf32>
    %343 = vector.extract_strided_slice %335 {offsets = [0, 16], sizes = [32, 16], strides = [1, 1]} : vector<32x64xf32> to vector<32x16xf32>
    %344 = vector.extract_strided_slice %335 {offsets = [0, 32], sizes = [32, 16], strides = [1, 1]} : vector<32x64xf32> to vector<32x16xf32>
    %345 = vector.extract_strided_slice %335 {offsets = [0, 48], sizes = [32, 16], strides = [1, 1]} : vector<32x64xf32> to vector<32x16xf32>
    %346 = tpu.concatenate %342, %343, %344, %345 in 0 : vector<32x16xf32>, vector<32x16xf32>, vector<32x16xf32>, vector<32x16xf32> -> vector<128x16xf32>
    %347 = arith.truncf %346 : vector<128x16xf32> to vector<128x16xbf16>
    %348 = vector.extract_strided_slice %323 {offsets = [0, 0], sizes = [32, 16], strides = [1, 1]} : vector<32x64xf32> to vector<32x16xf32>
    %349 = vector.extract_strided_slice %323 {offsets = [0, 16], sizes = [32, 16], strides = [1, 1]} : vector<32x64xf32> to vector<32x16xf32>
    %350 = vector.extract_strided_slice %323 {offsets = [0, 32], sizes = [32, 16], strides = [1, 1]} : vector<32x64xf32> to vector<32x16xf32>
    %351 = vector.extract_strided_slice %323 {offsets = [0, 48], sizes = [32, 16], strides = [1, 1]} : vector<32x64xf32> to vector<32x16xf32>
    %352 = tpu.concatenate %348, %349, %350, %351 in 0 : vector<32x16xf32>, vector<32x16xf32>, vector<32x16xf32>, vector<32x16xf32> -> vector<128x16xf32>
    %353 = arith.truncf %352 : vector<128x16xf32> to vector<128x16xbf16>
    %cst_142 = arith.constant dense<0.000000e+00> : vector<128x128xf32>
    %354 = tpu.matmul %341, %347, %cst_142 {dimension_numbers = #tpu.dot_dimension_numbers<[1], [1], [0], [0], [0, 0, 1, 0], [], []>} : vector<128x16xbf16>, vector<128x16xbf16>, vector<128x128xf32> -> vector<128x128xf32>
    %355 = arith.addf %354, %113 : vector<128x128xf32>
    %cst_143 = arith.constant dense<0xFF800000> : vector<128xf32>
    %356 = vector.multi_reduction <maximumf>, %355, %cst_143 [1] : vector<128x128xf32> to vector<128xf32>
    %357 = vector.shape_cast %356 : vector<128xf32> to vector<128x1xf32>
    %358 = vector.broadcast %357 : vector<128x1xf32> to vector<128x128xf32>
    %359 = arith.subf %355, %358 : vector<128x128xf32>
    %360 = math.exp %359 : vector<128x128xf32>
    %cst_144 = arith.constant dense<0.000000e+00> : vector<128xf32>
    %361 = vector.multi_reduction <add>, %360, %cst_144 [1] : vector<128x128xf32> to vector<128xf32>
    %362 = vector.shape_cast %361 : vector<128xf32> to vector<128x1xf32>
    %363 = tpu.reciprocal %362 {approx = true} : vector<128x1xf32> -> vector<128x1xf32>
    %364 = vector.broadcast %363 : vector<128x1xf32> to vector<128x128xf32>
    %365 = arith.mulf %360, %364 : vector<128x128xf32>
    %366 = arith.truncf %365 : vector<128x128xf32> to vector<128x128xbf16>
    %cst_145 = arith.constant dense<0.000000e+00> : vector<128x16xf32>
    %367 = tpu.matmul %366, %353, %cst_145 {dimension_numbers = #tpu.dot_dimension_numbers<[1], [0], [0], [1], [0, 0, 1, 1], [], []>} : vector<128x128xbf16>, vector<128x16xbf16>, vector<128x16xf32> -> vector<128x16xf32>
    %368 = vector.extract_strided_slice %367 {offsets = [0, 0], sizes = [32, 16], strides = [1, 1]} : vector<128x16xf32> to vector<32x16xf32>
    %369 = vector.extract_strided_slice %367 {offsets = [32, 0], sizes = [32, 16], strides = [1, 1]} : vector<128x16xf32> to vector<32x16xf32>
    %370 = vector.extract_strided_slice %367 {offsets = [64, 0], sizes = [32, 16], strides = [1, 1]} : vector<128x16xf32> to vector<32x16xf32>
    %371 = vector.extract_strided_slice %367 {offsets = [96, 0], sizes = [32, 16], strides = [1, 1]} : vector<128x16xf32> to vector<32x16xf32>
    %372 = tpu.concatenate %368, %369, %370, %371 in 1 : vector<32x16xf32>, vector<32x16xf32>, vector<32x16xf32>, vector<32x16xf32> -> vector<32x64xf32>
    %373 = arith.truncf %372 : vector<32x64xf32> to vector<32x64xbf16>
    %c1_146 = arith.constant 1 : index
    %c0_147 = arith.constant 0 : index
    %c0_148 = arith.constant 0 : index
    %374 = vector.load %arg14[%c1_146, %c0_147, %c0_148] : memref<2x64x32xbf16, #tpu.memory_space<vmem>>, vector<1x64x32xbf16>
    %375 = vector.shape_cast %374 : vector<1x64x32xbf16> to vector<64x32xbf16>
    %cst_149 = arith.constant dense<0.000000e+00> : vector<32x32xf32>
    %376 = tpu.matmul %373, %375, %cst_149 {dimension_numbers = #tpu.dot_dimension_numbers<[1], [0], [0], [1], [0, 0, 1, 1], [], []>} : vector<32x64xbf16>, vector<64x32xbf16>, vector<32x32xf32> -> vector<32x32xf32>
    %377 = arith.addf %287, %376 : vector<32x32xf32>
    %c1_150 = arith.constant 1 : index
    %c0_151 = arith.constant 0 : index
    %c0_152 = arith.constant 0 : index
    %378 = vector.load %arg15[%c1_150, %c0_151, %c0_152] : memref<2x1x32xf32, #tpu.memory_space<vmem>>, vector<1x1x32xf32>
    %379 = vector.shape_cast %378 : vector<1x1x32xf32> to vector<1x32xf32>
    %c1_153 = arith.constant 1 : index
    %c0_154 = arith.constant 0 : index
    %c0_155 = arith.constant 0 : index
    %380 = vector.load %arg16[%c1_153, %c0_154, %c0_155] : memref<2x1x32xf32, #tpu.memory_space<vmem>>, vector<1x1x32xf32>
    %381 = vector.shape_cast %380 : vector<1x1x32xf32> to vector<1x32xf32>
    %cst_156 = arith.constant dense<0.000000e+00> : vector<32xf32>
    %382 = vector.multi_reduction <add>, %377, %cst_156 [1] : vector<32x32xf32> to vector<32xf32>
    %383 = vector.shape_cast %382 : vector<32xf32> to vector<32x1xf32>
    %cst_157 = arith.constant 3.200000e+01 : f32
    %384 = vector.broadcast %cst_157 : f32 to vector<32x1xf32>
    %385 = arith.divf %383, %384 : vector<32x1xf32>
    %386 = vector.broadcast %385 : vector<32x1xf32> to vector<32x32xf32>
    %387 = arith.subf %377, %386 : vector<32x32xf32>
    %388 = arith.mulf %387, %387 : vector<32x32xf32>
    %cst_158 = arith.constant dense<0.000000e+00> : vector<32xf32>
    %389 = vector.multi_reduction <add>, %388, %cst_158 [1] : vector<32x32xf32> to vector<32xf32>
    %390 = vector.shape_cast %389 : vector<32xf32> to vector<32x1xf32>
    %cst_159 = arith.constant 3.200000e+01 : f32
    %391 = vector.broadcast %cst_159 : f32 to vector<32x1xf32>
    %392 = arith.divf %390, %391 : vector<32x1xf32>
    %393 = vector.broadcast %385 : vector<32x1xf32> to vector<32x32xf32>
    %394 = arith.subf %377, %393 : vector<32x32xf32>
    %cst_160 = arith.constant 9.99999974E-6 : f32
    %395 = vector.broadcast %cst_160 : f32 to vector<32x1xf32>
    %396 = arith.addf %392, %395 : vector<32x1xf32>
    %397 = math.rsqrt %396 : vector<32x1xf32>
    %398 = vector.broadcast %397 : vector<32x1xf32> to vector<32x32xf32>
    %399 = arith.mulf %394, %398 : vector<32x32xf32>
    %400 = vector.broadcast %379 : vector<1x32xf32> to vector<32x32xf32>
    %401 = arith.mulf %399, %400 : vector<32x32xf32>
    %402 = vector.broadcast %381 : vector<1x32xf32> to vector<32x32xf32>
    %403 = arith.addf %401, %402 : vector<32x32xf32>
    %404 = arith.truncf %403 : vector<32x32xf32> to vector<32x32xbf16>
    %c1_161 = arith.constant 1 : index
    %c0_162 = arith.constant 0 : index
    %c0_163 = arith.constant 0 : index
    %405 = vector.load %arg17[%c1_161, %c0_162, %c0_163] : memref<2x32x128xbf16, #tpu.memory_space<vmem>>, vector<1x32x128xbf16>
    %406 = vector.shape_cast %405 : vector<1x32x128xbf16> to vector<32x128xbf16>
    %cst_164 = arith.constant dense<0.000000e+00> : vector<32x128xf32>
    %407 = tpu.matmul %404, %406, %cst_164 {dimension_numbers = #tpu.dot_dimension_numbers<[1], [0], [0], [1], [0, 0, 1, 1], [], []>} : vector<32x32xbf16>, vector<32x128xbf16>, vector<32x128xf32> -> vector<32x128xf32>
    %c1_165 = arith.constant 1 : index
    %c0_166 = arith.constant 0 : index
    %c0_167 = arith.constant 0 : index
    %408 = vector.load %arg18[%c1_165, %c0_166, %c0_167] : memref<2x1x128xf32, #tpu.memory_space<vmem>>, vector<1x1x128xf32>
    %409 = vector.shape_cast %408 : vector<1x1x128xf32> to vector<1x128xf32>
    %410 = vector.broadcast %409 : vector<1x128xf32> to vector<32x128xf32>
    %411 = arith.addf %407, %410 : vector<32x128xf32>
    %cst_168 = arith.constant 5.000000e-01 : f32
    %412 = vector.broadcast %cst_168 : f32 to vector<32x128xf32>
    %413 = arith.mulf %412, %411 : vector<32x128xf32>
    %cst_169 = arith.constant 0.707106769 : f32
    %414 = vector.broadcast %cst_169 : f32 to vector<32x128xf32>
    %415 = arith.mulf %411, %414 : vector<32x128xf32>
    %cst_170 = arith.constant 0.000000e+00 : f32
    %416 = vector.broadcast %cst_170 : f32 to vector<32x128xf32>
    %417 = arith.cmpf oge, %415, %416 : vector<32x128xf32>
    %cst_171 = arith.constant 1.000000e+00 : f32
    %cst_172 = arith.constant -1.000000e+00 : f32
    %418 = vector.broadcast %cst_171 : f32 to vector<32x128xf32>
    %419 = vector.broadcast %cst_172 : f32 to vector<32x128xf32>
    %420 = arith.select %417, %418, %419 : vector<32x128xi1>, vector<32x128xf32>
    %421 = math.absf %415 : vector<32x128xf32>
    %cst_173 = arith.constant 0.327591091 : f32
    %422 = vector.broadcast %cst_173 : f32 to vector<32x128xf32>
    %423 = arith.mulf %422, %421 : vector<32x128xf32>
    %cst_174 = arith.constant 1.000000e+00 : f32
    %424 = vector.broadcast %cst_174 : f32 to vector<32x128xf32>
    %425 = arith.addf %424, %423 : vector<32x128xf32>
    %cst_175 = arith.constant 1.000000e+00 : f32
    %426 = vector.broadcast %cst_175 : f32 to vector<32x128xf32>
    %427 = arith.divf %426, %425 : vector<32x128xf32>
    %cst_176 = arith.constant 1.06140542 : f32
    %428 = vector.broadcast %cst_176 : f32 to vector<32x128xf32>
    %429 = arith.mulf %428, %427 : vector<32x128xf32>
    %cst_177 = arith.constant -1.45315206 : f32
    %430 = vector.broadcast %cst_177 : f32 to vector<32x128xf32>
    %431 = arith.addf %429, %430 : vector<32x128xf32>
    %432 = arith.mulf %431, %427 : vector<32x128xf32>
    %cst_178 = arith.constant 1.42141378 : f32
    %433 = vector.broadcast %cst_178 : f32 to vector<32x128xf32>
    %434 = arith.addf %432, %433 : vector<32x128xf32>
    %435 = arith.mulf %434, %427 : vector<32x128xf32>
    %cst_179 = arith.constant -0.284496725 : f32
    %436 = vector.broadcast %cst_179 : f32 to vector<32x128xf32>
    %437 = arith.addf %435, %436 : vector<32x128xf32>
    %438 = arith.mulf %437, %427 : vector<32x128xf32>
    %cst_180 = arith.constant 0.254829586 : f32
    %439 = vector.broadcast %cst_180 : f32 to vector<32x128xf32>
    %440 = arith.addf %438, %439 : vector<32x128xf32>
    %441 = arith.mulf %440, %427 : vector<32x128xf32>
    %cst_181 = arith.constant 0.000000e+00 : f32
    %442 = vector.broadcast %cst_181 : f32 to vector<32x128xf32>
    %443 = arith.subf %442, %421 : vector<32x128xf32>
    %444 = arith.mulf %443, %421 : vector<32x128xf32>
    %445 = math.exp %444 : vector<32x128xf32>
    %446 = arith.mulf %441, %445 : vector<32x128xf32>
    %cst_182 = arith.constant 1.000000e+00 : f32
    %447 = vector.broadcast %cst_182 : f32 to vector<32x128xf32>
    %448 = arith.subf %447, %446 : vector<32x128xf32>
    %449 = arith.mulf %420, %448 : vector<32x128xf32>
    %cst_183 = arith.constant 1.000000e+00 : f32
    %450 = vector.broadcast %cst_183 : f32 to vector<32x128xf32>
    %451 = arith.addf %450, %449 : vector<32x128xf32>
    %452 = arith.mulf %413, %451 : vector<32x128xf32>
    %453 = arith.truncf %452 : vector<32x128xf32> to vector<32x128xbf16>
    %c1_184 = arith.constant 1 : index
    %c0_185 = arith.constant 0 : index
    %c0_186 = arith.constant 0 : index
    %454 = vector.load %arg19[%c1_184, %c0_185, %c0_186] : memref<2x128x32xbf16, #tpu.memory_space<vmem>>, vector<1x128x32xbf16>
    %455 = vector.shape_cast %454 : vector<1x128x32xbf16> to vector<128x32xbf16>
    %cst_187 = arith.constant dense<0.000000e+00> : vector<32x32xf32>
    %456 = tpu.matmul %453, %455, %cst_187 {dimension_numbers = #tpu.dot_dimension_numbers<[1], [0], [0], [1], [0, 0, 1, 1], [], []>} : vector<32x128xbf16>, vector<128x32xbf16>, vector<32x32xf32> -> vector<32x32xf32>
    %457 = arith.addf %377, %456 : vector<32x32xf32>
    %c1_188 = arith.constant 1 : index
    %c0_189 = arith.constant 0 : index
    %c0_190 = arith.constant 0 : index
    %458 = vector.load %arg20[%c1_188, %c0_189, %c0_190] : memref<2x1x32xf32, #tpu.memory_space<vmem>>, vector<1x1x32xf32>
    %459 = vector.shape_cast %458 : vector<1x1x32xf32> to vector<1x32xf32>
    %460 = vector.broadcast %459 : vector<1x32xf32> to vector<32x32xf32>
    %461 = arith.addf %457, %460 : vector<32x32xf32>
    %c0_191 = arith.constant 0 : index
    %c0_192 = arith.constant 0 : index
    %462 = vector.load %arg21[%c0_191, %c0_192] : memref<1x32xf32, #tpu.memory_space<vmem>>, vector<1x32xf32>
    %c0_193 = arith.constant 0 : index
    %c0_194 = arith.constant 0 : index
    %463 = vector.load %arg22[%c0_193, %c0_194] : memref<1x32xf32, #tpu.memory_space<vmem>>, vector<1x32xf32>
    %cst_195 = arith.constant dense<0.000000e+00> : vector<32xf32>
    %464 = vector.multi_reduction <add>, %461, %cst_195 [1] : vector<32x32xf32> to vector<32xf32>
    %465 = vector.shape_cast %464 : vector<32xf32> to vector<32x1xf32>
    %cst_196 = arith.constant 3.200000e+01 : f32
    %466 = vector.broadcast %cst_196 : f32 to vector<32x1xf32>
    %467 = arith.divf %465, %466 : vector<32x1xf32>
    %468 = vector.broadcast %467 : vector<32x1xf32> to vector<32x32xf32>
    %469 = arith.subf %461, %468 : vector<32x32xf32>
    %470 = arith.mulf %469, %469 : vector<32x32xf32>
    %cst_197 = arith.constant dense<0.000000e+00> : vector<32xf32>
    %471 = vector.multi_reduction <add>, %470, %cst_197 [1] : vector<32x32xf32> to vector<32xf32>
    %472 = vector.shape_cast %471 : vector<32xf32> to vector<32x1xf32>
    %cst_198 = arith.constant 3.200000e+01 : f32
    %473 = vector.broadcast %cst_198 : f32 to vector<32x1xf32>
    %474 = arith.divf %472, %473 : vector<32x1xf32>
    %475 = vector.broadcast %467 : vector<32x1xf32> to vector<32x32xf32>
    %476 = arith.subf %461, %475 : vector<32x32xf32>
    %cst_199 = arith.constant 9.99999974E-6 : f32
    %477 = vector.broadcast %cst_199 : f32 to vector<32x1xf32>
    %478 = arith.addf %474, %477 : vector<32x1xf32>
    %479 = math.rsqrt %478 : vector<32x1xf32>
    %480 = vector.broadcast %479 : vector<32x1xf32> to vector<32x32xf32>
    %481 = arith.mulf %476, %480 : vector<32x32xf32>
    %482 = vector.broadcast %462 : vector<1x32xf32> to vector<32x32xf32>
    %483 = arith.mulf %481, %482 : vector<32x32xf32>
    %484 = vector.broadcast %463 : vector<1x32xf32> to vector<32x32xf32>
    %485 = arith.addf %483, %484 : vector<32x32xf32>
    %486 = arith.truncf %485 : vector<32x32xf32> to vector<32x32xbf16>
    %c0_200 = arith.constant 0 : index
    %c0_201 = arith.constant 0 : index
    %487 = vector.load %arg23[%c0_200, %c0_201] : memref<32x32xbf16, #tpu.memory_space<vmem>>, vector<32x32xbf16>
    %cst_202 = arith.constant dense<0.000000e+00> : vector<32x32xf32>
    %488 = tpu.matmul %486, %487, %cst_202 {dimension_numbers = #tpu.dot_dimension_numbers<[1], [0], [0], [1], [0, 0, 1, 1], [], []>} : vector<32x32xbf16>, vector<32x32xbf16>, vector<32x32xf32> -> vector<32x32xf32>
    %c0_203 = arith.constant 0 : index
    %c0_204 = arith.constant 0 : index
    %489 = vector.load %arg24[%c0_203, %c0_204] : memref<1x32xf32, #tpu.memory_space<vmem>>, vector<1x32xf32>
    %490 = vector.broadcast %489 : vector<1x32xf32> to vector<32x32xf32>
    %491 = arith.addf %488, %490 : vector<32x32xf32>
    %cst_205 = arith.constant dense<0.000000e+00> : vector<32x64xf32>
    %492 = tpu.matmul %491, %6, %cst_205 {dimension_numbers = #tpu.dot_dimension_numbers<[1], [1], [0], [0], [0, 0, 1, 0], [], []>} : vector<32x32xf32>, vector<64x32xf32>, vector<32x64xf32> -> vector<32x64xf32>
    %493 = arith.mulf %491, %491 : vector<32x32xf32>
    %cst_206 = arith.constant dense<0.000000e+00> : vector<32xf32>
    %494 = vector.multi_reduction <add>, %493, %cst_206 [1] : vector<32x32xf32> to vector<32xf32>
    %495 = vector.shape_cast %494 : vector<32xf32> to vector<32x1xf32>
    %cst_207 = arith.constant 2.000000e+00 : f32
    %496 = vector.broadcast %cst_207 : f32 to vector<32x64xf32>
    %497 = arith.mulf %496, %492 : vector<32x64xf32>
    %498 = vector.broadcast %495 : vector<32x1xf32> to vector<32x64xf32>
    %499 = arith.subf %498, %497 : vector<32x64xf32>
    %c0_208 = arith.constant 0 : index
    %c0_209 = arith.constant 0 : index
    %500 = vector.load %arg4[%c0_208, %c0_209] : memref<1x64xf32, #tpu.memory_space<vmem>>, vector<1x64xf32>
    %501 = vector.broadcast %500 : vector<1x64xf32> to vector<32x64xf32>
    %502 = arith.addf %499, %501 : vector<32x64xf32>
    %cst_210 = arith.constant 0.000000e+00 : f32
    %503 = vector.broadcast %cst_210 : f32 to vector<32x64xf32>
    %504 = arith.maximumf %502, %503 : vector<32x64xf32>
    %505 = math.sqrt %504 : vector<32x64xf32>
    %cst_211 = arith.constant 0.000000e+00 : f32
    %506 = vector.broadcast %cst_211 : f32 to vector<32x64xf32>
    %507 = arith.subf %506, %505 : vector<32x64xf32>
    %cst_212 = arith.constant dense<0xFF800000> : vector<32xf32>
    %508 = vector.multi_reduction <maximumf>, %507, %cst_212 [1] : vector<32x64xf32> to vector<32xf32>
    %509 = vector.shape_cast %508 : vector<32xf32> to vector<32x1xf32>
    %510 = vector.broadcast %509 : vector<32x1xf32> to vector<32x64xf32>
    %511 = arith.subf %507, %510 : vector<32x64xf32>
    %512 = math.exp %511 : vector<32x64xf32>
    %cst_213 = arith.constant dense<0.000000e+00> : vector<32xf32>
    %513 = vector.multi_reduction <add>, %512, %cst_213 [1] : vector<32x64xf32> to vector<32xf32>
    %514 = vector.shape_cast %513 : vector<32xf32> to vector<32x1xf32>
    %515 = math.log %514 : vector<32x1xf32>
    %516 = arith.addf %515, %509 : vector<32x1xf32>
    %517 = arith.mulf %31, %507 : vector<32x64xf32>
    %cst_214 = arith.constant dense<0.000000e+00> : vector<32xf32>
    %518 = vector.multi_reduction <add>, %517, %cst_214 [1] : vector<32x64xf32> to vector<32xf32>
    %519 = vector.shape_cast %518 : vector<32xf32> to vector<32x1xf32>
    %520 = arith.subf %516, %519 : vector<32x1xf32>
    %cst_215 = arith.constant dense<0.000000e+00> : vector<1xf32>
    %521 = vector.multi_reduction <add>, %520, %cst_215 [0] : vector<32x1xf32> to vector<1xf32>
    %522 = vector.shape_cast %521 : vector<1xf32> to vector<1x1xf32>
    %cst_216 = arith.constant 3.125000e-02 : f32
    %523 = vector.broadcast %cst_216 : f32 to vector<1x1xf32>
    %524 = arith.mulf %522, %523 : vector<1x1xf32>
    %525 = arith.mulf %491, %491 : vector<32x32xf32>
    %cst_217 = arith.constant dense<0.000000e+00> : vector<32xf32>
    %526 = vector.multi_reduction <add>, %525, %cst_217 [1] : vector<32x32xf32> to vector<32xf32>
    %527 = vector.shape_cast %526 : vector<32xf32> to vector<32x1xf32>
    %528 = math.sqrt %527 : vector<32x1xf32>
    %529 = arith.mulf %32, %32 : vector<32x32xf32>
    %cst_218 = arith.constant dense<0.000000e+00> : vector<32xf32>
    %530 = vector.multi_reduction <add>, %529, %cst_218 [1] : vector<32x32xf32> to vector<32xf32>
    %531 = vector.shape_cast %530 : vector<32xf32> to vector<32x1xf32>
    %532 = math.sqrt %531 : vector<32x1xf32>
    %cst_219 = arith.constant 9.99999997E-7 : f32
    %533 = vector.broadcast %cst_219 : f32 to vector<32x1xf32>
    %534 = arith.maximumf %528, %533 : vector<32x1xf32>
    %535 = vector.broadcast %534 : vector<32x1xf32> to vector<32x32xf32>
    %536 = arith.divf %491, %535 : vector<32x32xf32>
    %cst_220 = arith.constant 9.99999997E-7 : f32
    %537 = vector.broadcast %cst_220 : f32 to vector<32x1xf32>
    %538 = arith.maximumf %532, %537 : vector<32x1xf32>
    %539 = vector.broadcast %538 : vector<32x1xf32> to vector<32x32xf32>
    %540 = arith.divf %32, %539 : vector<32x32xf32>
    %541 = arith.addf %536, %540 : vector<32x32xf32>
    %542 = arith.mulf %541, %541 : vector<32x32xf32>
    %cst_221 = arith.constant dense<0.000000e+00> : vector<32xf32>
    %543 = vector.multi_reduction <add>, %542, %cst_221 [1] : vector<32x32xf32> to vector<32xf32>
    %544 = vector.shape_cast %543 : vector<32xf32> to vector<32x1xf32>
    %545 = math.sqrt %544 : vector<32x1xf32>
    %cst_222 = arith.constant 9.99999997E-7 : f32
    %546 = vector.broadcast %cst_222 : f32 to vector<32x1xf32>
    %547 = arith.maximumf %545, %546 : vector<32x1xf32>
    %548 = vector.broadcast %547 : vector<32x1xf32> to vector<32x32xf32>
    %549 = arith.divf %541, %548 : vector<32x32xf32>
    %550 = arith.mulf %491, %549 : vector<32x32xf32>
    %cst_223 = arith.constant dense<0.000000e+00> : vector<32xf32>
    %551 = vector.multi_reduction <add>, %550, %cst_223 [1] : vector<32x32xf32> to vector<32xf32>
    %552 = vector.shape_cast %551 : vector<32xf32> to vector<32x1xf32>
    %cst_224 = arith.constant 2.000000e+00 : f32
    %553 = vector.broadcast %cst_224 : f32 to vector<32x1xf32>
    %554 = arith.mulf %553, %552 : vector<32x1xf32>
    %555 = vector.broadcast %554 : vector<32x1xf32> to vector<32x32xf32>
    %556 = arith.mulf %555, %549 : vector<32x32xf32>
    %557 = arith.subf %491, %556 : vector<32x32xf32>
    %558 = arith.mulf %491, %536 : vector<32x32xf32>
    %cst_225 = arith.constant dense<0.000000e+00> : vector<32xf32>
    %559 = vector.multi_reduction <add>, %558, %cst_225 [1] : vector<32x32xf32> to vector<32xf32>
    %560 = vector.shape_cast %559 : vector<32xf32> to vector<32x1xf32>
    %cst_226 = arith.constant 2.000000e+00 : f32
    %561 = vector.broadcast %cst_226 : f32 to vector<32x1xf32>
    %562 = arith.mulf %561, %560 : vector<32x1xf32>
    %563 = vector.broadcast %562 : vector<32x1xf32> to vector<32x32xf32>
    %564 = arith.mulf %563, %540 : vector<32x32xf32>
    %565 = arith.addf %557, %564 : vector<32x32xf32>
    %cst_227 = arith.constant 9.99999997E-7 : f32
    %566 = vector.broadcast %cst_227 : f32 to vector<32x1xf32>
    %567 = arith.maximumf %528, %566 : vector<32x1xf32>
    %568 = arith.divf %532, %567 : vector<32x1xf32>
    %569 = vector.broadcast %568 : vector<32x1xf32> to vector<32x32xf32>
    %570 = arith.mulf %565, %569 : vector<32x32xf32>
    %c0_228 = arith.constant 0 : index
    %c0_229 = arith.constant 0 : index
    %571 = vector.load %arg25[%c0_228, %c0_229] : memref<32x16xf32, #tpu.memory_space<vmem>>, vector<32x16xf32>
    %cst_230 = arith.constant dense<0.000000e+00> : vector<32x16xf32>
    %572 = tpu.matmul %570, %571, %cst_230 {dimension_numbers = #tpu.dot_dimension_numbers<[1], [0], [0], [1], [0, 0, 1, 1], [], []>} : vector<32x32xf32>, vector<32x16xf32>, vector<32x16xf32> -> vector<32x16xf32>
    %c0_231 = arith.constant 0 : index
    %c0_232 = arith.constant 0 : index
    %573 = vector.load %arg26[%c0_231, %c0_232] : memref<1x16xf32, #tpu.memory_space<vmem>>, vector<1x16xf32>
    %574 = vector.broadcast %573 : vector<1x16xf32> to vector<32x16xf32>
    %575 = arith.addf %572, %574 : vector<32x16xf32>
    %576 = arith.subf %575, %0 : vector<32x16xf32>
    %577 = arith.mulf %576, %576 : vector<32x16xf32>
    %cst_233 = arith.constant 2.500000e-01 : f32
    %578 = vector.broadcast %cst_233 : f32 to vector<32x16xf32>
    %579 = arith.mulf %578, %577 : vector<32x16xf32>
    %cst_234 = arith.constant dense<0.000000e+00> : vector<32xf32>
    %580 = vector.multi_reduction <add>, %579, %cst_234 [1] : vector<32x16xf32> to vector<32xf32>
    %581 = vector.shape_cast %580 : vector<32xf32> to vector<32x1xf32>
    %cst_235 = arith.constant dense<0.000000e+00> : vector<1xf32>
    %582 = vector.multi_reduction <add>, %581, %cst_235 [0] : vector<32x1xf32> to vector<1xf32>
    %583 = vector.shape_cast %582 : vector<1xf32> to vector<1x1xf32>
    %cst_236 = arith.constant 0.001953125 : f32
    %584 = vector.broadcast %cst_236 : f32 to vector<1x1xf32>
    %585 = arith.mulf %583, %584 : vector<1x1xf32>
    %586 = arith.subf %491, %78 : vector<32x32xf32>
    %587 = arith.mulf %586, %586 : vector<32x32xf32>
    %cst_237 = arith.constant dense<0.000000e+00> : vector<32xf32>
    %588 = vector.multi_reduction <add>, %587, %cst_237 [1] : vector<32x32xf32> to vector<32xf32>
    %589 = vector.shape_cast %588 : vector<32xf32> to vector<32x1xf32>
    %cst_238 = arith.constant dense<0.000000e+00> : vector<1xf32>
    %590 = vector.multi_reduction <add>, %589, %cst_238 [0] : vector<32x1xf32> to vector<1xf32>
    %591 = vector.shape_cast %590 : vector<1xf32> to vector<1x1xf32>
    %cst_239 = arith.constant 9.765625E-4 : f32
    %592 = vector.broadcast %cst_239 : f32 to vector<1x1xf32>
    %593 = arith.mulf %591, %592 : vector<1x1xf32>
    %594 = arith.addf %524, %585 : vector<1x1xf32>
    %595 = arith.addf %594, %86 : vector<1x1xf32>
    %596 = arith.addf %595, %593 : vector<1x1xf32>
    %c0_240 = arith.constant 0 : index
    %c0_241 = arith.constant 0 : index
    %597 = vector.load %arg27[%c0_240, %c0_241] : memref<32x16xf32, #tpu.memory_space<vmem>>, vector<32x16xf32>
    tpu.vector_store %arg27[%c0_240, %c0_241], %575 {strides = array<i32>} : memref<32x16xf32, #tpu.memory_space<vmem>>, vector<32x16xf32>,
    %c0_242 = arith.constant 0 : index
    %c0_243 = arith.constant 0 : index
    %598 = vector.load %arg28[%c0_242, %c0_243] : memref<1x1xf32, #tpu.memory_space<vmem>>, vector<1x1xf32>
    tpu.vector_store %arg28[%c0_242, %c0_243], %596 {strides = array<i32>} : memref<1x1xf32, #tpu.memory_space<vmem>>, vector<1x1xf32>,
    %c0_244 = arith.constant 0 : index
    %c0_245 = arith.constant 0 : index
    %599 = vector.load %arg29[%c0_244, %c0_245] : memref<1x1xf32, #tpu.memory_space<vmem>>, vector<1x1xf32>
    tpu.vector_store %arg29[%c0_244, %c0_245], %524 {strides = array<i32>} : memref<1x1xf32, #tpu.memory_space<vmem>>, vector<1x1xf32>,
    %c0_246 = arith.constant 0 : index
    %c0_247 = arith.constant 0 : index
    %600 = vector.load %arg30[%c0_246, %c0_247] : memref<1x1xf32, #tpu.memory_space<vmem>>, vector<1x1xf32>
    tpu.vector_store %arg30[%c0_246, %c0_247], %585 {strides = array<i32>} : memref<1x1xf32, #tpu.memory_space<vmem>>, vector<1x1xf32>,
    %c0_248 = arith.constant 0 : index
    %c0_249 = arith.constant 0 : index
    %601 = vector.load %arg31[%c0_248, %c0_249] : memref<1x1xf32, #tpu.memory_space<vmem>>, vector<1x1xf32>
    tpu.vector_store %arg31[%c0_248, %c0_249], %86 {strides = array<i32>} : memref<1x1xf32, #tpu.memory_space<vmem>>, vector<1x1xf32>,
    %c0_250 = arith.constant 0 : index
    %c0_251 = arith.constant 0 : index
    %602 = vector.load %arg32[%c0_250, %c0_251] : memref<1x1xf32, #tpu.memory_space<vmem>>, vector<1x1xf32>
    tpu.vector_store %arg32[%c0_250, %c0_251], %593 {strides = array<i32>} : memref<1x1xf32, #tpu.memory_space<vmem>>, vector<1x1xf32>,
    return
  }
}

</mosaic_0001>

<llo_original>
// kernel: tile.13
$region0: #{tile.13}
  #allocation0 [shape = 's32[1]{0}', space=sflag, size = 0x4, scoped, tag = 'scoped memory for tile.13']
  %s0 = inlined_call_operand.vmem [shape: f32[16,16], index: 0, kind: input, shape index: {}]
  %s1 = inlined_call_operand.vmem [shape: f32[2,16,4,16], index: 1, kind: output, shape index: {}]
  // Predicated region
  $region2: #{tile.13} parent=0 // pred_check
    _
  $region3: #{tile.13} parent=0 // pred_check_branch
    %3 = sbr.rel (0) target = $region5
  $region4: #{tile.13} parent=0 // pred_region
    _
  $region5: #{tile.13} parent=0 // pred_fallthru
    _
  %v4 = vld [vmem:[%s0] ss:$0 sm:$0xff]
  %5 = vst [vmem:[%s1] sm:$0xf] %v4
  %s6 = scalar_lea.vmem %s1, 64
  %7 = vst [vmem:[%s6] sm:$0xf] %v4
  %s8 = scalar_lea.vmem %s0, 1
  %v9 = vld [vmem:[%s8] ss:$0 sm:$0xff]
  %s10 = scalar_lea.vmem %s1, 4
  %11 = vst [vmem:[%s10] sm:$0xf] %v9
  %s12 = scalar_lea.vmem %s1, 68
  %13 = vst [vmem:[%s12] sm:$0xf] %v9
  %s14 = scalar_lea.vmem %s0, 2
  %v15 = vld [vmem:[%s14] ss:$0 sm:$0xff]
  %s16 = scalar_lea.vmem %s1, 8
  %17 = vst [vmem:[%s16] sm:$0xf] %v15
  %s18 = scalar_lea.vmem %s1, 72
  %19 = vst [vmem:[%s18] sm:$0xf] %v15
  %s20 = scalar_lea.vmem %s0, 3
  %v21 = vld [vmem:[%s20] ss:$0 sm:$0xff]
  %s22 = scalar_lea.vmem %s1, 12
  %23 = vst [vmem:[%s22] sm:$0xf] %v21
  %s24 = scalar_lea.vmem %s1, 76
  %25 = vst [vmem:[%s24] sm:$0xf] %v21
  %s26 = scalar_lea.vmem %s0, 4
  %v27 = vld [vmem:[%s26] ss:$0 sm:$0xff]
  %s28 = scalar_lea.vmem %s1, 16
  %29 = vst [vmem:[%s28] sm:$0xf] %v27
  %s30 = scalar_lea.vmem %s1, 80
  %31 = vst [vmem:[%s30] sm:$0xf] %v27
  %s32 = scalar_lea.vmem %s0, 5
  %v33 = vld [vmem:[%s32] ss:$0 sm:$0xff]
  %s34 = scalar_lea.vmem %s1, 20
  %35 = vst [vmem:[%s34] sm:$0xf] %v33
  %s36 = scalar_lea.vmem %s1, 84
  %37 = vst [vmem:[%s36] sm:$0xf] %v33
  %s38 = scalar_lea.vmem %s0, 6
  %v39 = vld [vmem:[%s38] ss:$0 sm:$0xff]
  %s40 = scalar_lea.vmem %s1, 24
  %41 = vst [vmem:[%s40] sm:$0xf] %v39
  %s42 = scalar_lea.vmem %s1, 88
  %43 = vst [vmem:[%s42] sm:$0xf] %v39
  %s44 = scalar_lea.vmem %s0, 7
  %v45 = vld [vmem:[%s44] ss:$0 sm:$0xff]
  %s46 = scalar_lea.vmem %s1, 28
  %47 = vst [vmem:[%s46] sm:$0xf] %v45
  %s48 = scalar_lea.vmem %s1, 92
  %49 = vst [vmem:[%s48] sm:$0xf] %v45
  %s50 = scalar_lea.vmem %s0, 8
  %v51 = vld [vmem:[%s50] ss:$0 sm:$0xff]
  %s52 = scalar_lea.vmem %s1, 32
  %53 = vst [vmem:[%s52] sm:$0xf] %v51
  %s54 = scalar_lea.vmem %s1, 96
  %55 = vst [vmem:[%s54] sm:$0xf] %v51
  %s56 = scalar_lea.vmem %s0, 8
  %s57 = scalar_lea.vmem %s56, 1
  %v58 = vld [vmem:[%s57] ss:$0 sm:$0xff]
  %s59 = scalar_lea.vmem %s1, 36
  %60 = vst [vmem:[%s59] sm:$0xf] %v58
  %s61 = scalar_lea.vmem %s1, 100
  %62 = vst [vmem:[%s61] sm:$0xf] %v58
  %s63 = scalar_lea.vmem %s0, 8
  %s64 = scalar_lea.vmem %s63, 2
  %v65 = vld [vmem:[%s64] ss:$0 sm:$0xff]
  %s66 = scalar_lea.vmem %s1, 40
  %67 = vst [vmem:[%s66] sm:$0xf] %v65
  %s68 = scalar_lea.vmem %s1, 104
  %69 = vst [vmem:[%s68] sm:$0xf] %v65
  %s70 = scalar_lea.vmem %s0, 8
  %s71 = scalar_lea.vmem %s70, 3
  %v72 = vld [vmem:[%s71] ss:$0 sm:$0xff]
  %s73 = scalar_lea.vmem %s1, 44
  %74 = vst [vmem:[%s73] sm:$0xf] %v72
  %s75 = scalar_lea.vmem %s1, 108
  %76 = vst [vmem:[%s75] sm:$0xf] %v72
  %s77 = scalar_lea.vmem %s0, 8
  %s78 = scalar_lea.vmem %s77, 4
  %v79 = vld [vmem:[%s78] ss:$0 sm:$0xff]
  %s80 = scalar_lea.vmem %s1, 48
  %81 = vst [vmem:[%s80] sm:$0xf] %v79
  %s82 = scalar_lea.vmem %s1, 112
  %83 = vst [vmem:[%s82] sm:$0xf] %v79
  %s84 = scalar_lea.vmem %s0, 8
  %s85 = scalar_lea.vmem %s84, 5
  %v86 = vld [vmem:[%s85] ss:$0 sm:$0xff]
  %s87 = scalar_lea.vmem %s1, 52
  %88 = vst [vmem:[%s87] sm:$0xf] %v86
  %s89 = scalar_lea.vmem %s1, 116
  %90 = vst [vmem:[%s89] sm:$0xf] %v86
  %s91 = scalar_lea.vmem %s0, 8
  %s92 = scalar_lea.vmem %s91, 6
  %v93 = vld [vmem:[%s92] ss:$0 sm:$0xff]
  %s94 = scalar_lea.vmem %s1, 56
  %95 = vst [vmem:[%s94] sm:$0xf] %v93
  %s96 = scalar_lea.vmem %s1, 120
  %97 = vst [vmem:[%s96] sm:$0xf] %v93
  %s98 = scalar_lea.vmem %s0, 8
  %s99 = scalar_lea.vmem %s98, 7
  %v100 = vld [vmem:[%s99] ss:$0 sm:$0xff]
  %s101 = scalar_lea.vmem %s1, 60
  %102 = vst [vmem:[%s101] sm:$0xf] %v100
  %s103 = scalar_lea.vmem %s1, 124
  %104 = vst [vmem:[%s103] sm:$0xf] %v100

// kernel: tile.14
$region0: #{tile.14}
  %s0 = inlined_call_operand.vmem [shape: f32[2,16,4,16], index: 0, kind: input, shape index: {}]
  %s1 = inlined_call_operand.vmem [shape: f32[32,64], index: 1, kind: output, shape index: {}]
  $region1: #{tile.14} parent=0
    #allocation0 [shape = 'u8[131072]{0}', space=vmem, size = 0x20000, scoped, tag = 'scoped mem for input reshape']
    %s3 = sshll.u32 1, 4
    %s4 = ssub.s32 %s3, 1
    %s5 = smul.addr 4, 31
    %s6 = scalar_lea.vmem %s0, %s5
    %v7 = vld [vmem:[%s6] sm:%s4]
    %s8 = scalar_lea.vmem [#allocation0], 248
    %9 = vst [vmem:[%s8] sm:%s4] %v7
    %s10 = smul.addr 4, 30
    %s11 = scalar_lea.vmem %s0, %s10
    %v12 = vld [vmem:[%s11] sm:%s4]
    %s13 = scalar_lea.vmem [#allocation0], 240
    %14 = vst [vmem:[%s13] sm:%s4] %v12
    %s15 = smul.addr 4, 29
    %s16 = scalar_lea.vmem %s0, %s15
    %v17 = vld [vmem:[%s16] sm:%s4]
    %s18 = scalar_lea.vmem [#allocation0], 232
    %19 = vst [vmem:[%s18] sm:%s4] %v17
    %s20 = smul.addr 4, 28
    %s21 = scalar_lea.vmem %s0, %s20
    %v22 = vld [vmem:[%s21] sm:%s4]
    %s23 = scalar_lea.vmem [#allocation0], 224
    %24 = vst [vmem:[%s23] sm:%s4] %v22
    %s25 = smul.addr 4, 27
    %s26 = scalar_lea.vmem %s0, %s25
    %v27 = vld [vmem:[%s26] sm:%s4]
    %s28 = scalar_lea.vmem [#allocation0], 216
    %29 = vst [vmem:[%s28] sm:%s4] %v27
    %s30 = smul.addr 4, 26
    %s31 = scalar_lea.vmem %s0, %s30
    %v32 = vld [vmem:[%s31] sm:%s4]
    %s33 = scalar_lea.vmem [#allocation0], 208
    %34 = vst [vmem:[%s33] sm:%s4] %v32
    %s35 = smul.addr 4, 25
    %s36 = scalar_lea.vmem %s0, %s35
    %v37 = vld [vmem:[%s36] sm:%s4]
    %s38 = scalar_lea.vmem [#allocation0], 200
    %39 = vst [vmem:[%s38] sm:%s4] %v37
    %s40 = smul.addr 4, 24
    %s41 = scalar_lea.vmem %s0, %s40
    %v42 = vld [vmem:[%s41] sm:%s4]
    %s43 = scalar_lea.vmem [#allocation0], 192
    %44 = vst [vmem:[%s43] sm:%s4] %v42
    %s45 = smul.addr 4, 23
    %s46 = scalar_lea.vmem %s0, %s45
    %v47 = vld [vmem:[%s46] sm:%s4]
    %s48 = scalar_lea.vmem [#allocation0], 184
    %49 = vst [vmem:[%s48] sm:%s4] %v47
    %s50 = smul.addr 4, 22
    %s51 = scalar_lea.vmem %s0, %s50
    %v52 = vld [vmem:[%s51] sm:%s4]
    %s53 = scalar_lea.vmem [#allocation0], 176
    %54 = vst [vmem:[%s53] sm:%s4] %v52
    %s55 = smul.addr 4, 21
    %s56 = scalar_lea.vmem %s0, %s55
    %v57 = vld [vmem:[%s56] sm:%s4]
    %s58 = scalar_lea.vmem [#allocation0], 168
    %59 = vst [vmem:[%s58] sm:%s4] %v57
    %s60 = smul.addr 4, 20
    %s61 = scalar_lea.vmem %s0, %s60
    %v62 = vld [vmem:[%s61] sm:%s4]
    %s63 = scalar_lea.vmem [#allocation0], 160
    %64 = vst [vmem:[%s63] sm:%s4] %v62
    %s65 = smul.addr 4, 19
    %s66 = scalar_lea.vmem %s0, %s65
    %v67 = vld [vmem:[%s66] sm:%s4]
    %s68 = scalar_lea.vmem [#allocation0], 152
    %69 = vst [vmem:[%s68] sm:%s4] %v67
    %s70 = smul.addr 4, 18
    %s71 = scalar_lea.vmem %s0, %s70
    %v72 = vld [vmem:[%s71] sm:%s4]
    %s73 = scalar_lea.vmem [#allocation0], 144
    %74 = vst [vmem:[%s73] sm:%s4] %v72
    %s75 = smul.addr 4, 17
    %s76 = scalar_lea.vmem %s0, %s75
    %v77 = vld [vmem:[%s76] sm:%s4]
    %s78 = scalar_lea.vmem [#allocation0], 136
    %79 = vst [vmem:[%s78] sm:%s4] %v77
    %s80 = smul.addr 4, 16
    %s81 = scalar_lea.vmem %s0, %s80
    %v82 = vld [vmem:[%s81] sm:%s4]
    %s83 = scalar_lea.vmem [#allocation0], 128
    %84 = vst [vmem:[%s83] sm:%s4] %v82
    %s85 = smul.addr 4, 15
    %s86 = scalar_lea.vmem %s0, %s85
    %v87 = vld [vmem:[%s86] sm:%s4]
    %s88 = scalar_lea.vmem [#allocation0], 120
    %89 = vst [vmem:[%s88] sm:%s4] %v87
    %s90 = smul.addr 4, 14
    %s91 = scalar_lea.vmem %s0, %s90
    %v92 = vld [vmem:[%s91] sm:%s4]
    %s93 = scalar_lea.vmem [#allocation0], 112
    %94 = vst [vmem:[%s93] sm:%s4] %v92
    %s95 = smul.addr 4, 13
    %s96 = scalar_lea.vmem %s0, %s95
    %v97 = vld [vmem:[%s96] sm:%s4]
    %s98 = scalar_lea.vmem [#allocation0], 104
    %99 = vst [vmem:[%s98] sm:%s4] %v97
    %s100 = smul.addr 4, 12
    %s101 = scalar_lea.vmem %s0, %s100
    %v102 = vld [vmem:[%s101] sm:%s4]
    %s103 = scalar_lea.vmem [#allocation0], 96
    %104 = vst [vmem:[%s103] sm:%s4] %v102
    %s105 = smul.addr 4, 11
    %s106 = scalar_lea.vmem %s0, %s105
    %v107 = vld [vmem:[%s106] sm:%s4]
    %s108 = scalar_lea.vmem [#allocation0], 88
    %109 = vst [vmem:[%s108] sm:%s4] %v107
    %s110 = smul.addr 4, 10
    %s111 = scalar_lea.vmem %s0, %s110
    %v112 = vld [vmem:[%s111] sm:%s4]
    %s113 = scalar_lea.vmem [#allocation0], 80
    %114 = vst [vmem:[%s113] sm:%s4] %v112
    %s115 = smul.addr 4, 9
    %s116 = scalar_lea.vmem %s0, %s115
    %v117 = vld [vmem:[%s116] sm:%s4]
    %s118 = scalar_lea.vmem [#allocation0], 72
    %119 = vst [vmem:[%s118] sm:%s4] %v117
    %s120 = smul.addr 4, 8
    %s121 = scalar_lea.vmem %s0, %s120
    %v122 = vld [vmem:[%s121] sm:%s4]
    %s123 = scalar_lea.vmem [#allocation0], 64
    %124 = vst [vmem:[%s123] sm:%s4] %v122
    %s125 = smul.addr 4, 7
    %s126 = scalar_lea.vmem %s0, %s125
    %v127 = vld [vmem:[%s126] sm:%s4]
    %s128 = scalar_lea.vmem [#allocation0], 56
    %129 = vst [vmem:[%s128] sm:%s4] %v127
    %s130 = smul.addr 4, 6
    %s131 = scalar_lea.vmem %s0, %s130
    %v132 = vld [vmem:[%s131] sm:%s4]
    %s133 = scalar_lea.vmem [#allocation0], 48
    %134 = vst [vmem:[%s133] sm:%s4] %v132
    %s135 = smul.addr 4, 5
    %s136 = scalar_lea.vmem %s0, %s135
    %v137 = vld [vmem:[%s136] sm:%s4]
    %s138 = scalar_lea.vmem [#allocation0], 40
    %139 = vst [vmem:[%s138] sm:%s4] %v137
    %s140 = smul.addr 4, 4
    %s141 = scalar_lea.vmem %s0, %s140
    %v142 = vld [vmem:[%s141] sm:%s4]
    %s143 = scalar_lea.vmem [#allocation0], 32
    %144 = vst [vmem:[%s143] sm:%s4] %v142
    %s145 = smul.addr 4, 3
    %s146 = scalar_lea.vmem %s0, %s145
    %v147 = vld [vmem:[%s146] sm:%s4]
    %s148 = scalar_lea.vmem [#allocation0], 24
    %149 = vst [vmem:[%s148] sm:%s4] %v147
    %s150 = smul.addr 4, 2
    %s151 = scalar_lea.vmem %s0, %s150
    %v152 = vld [vmem:[%s151] sm:%s4]
    %s153 = scalar_lea.vmem [#allocation0], 16
    %154 = vst [vmem:[%s153] sm:%s4] %v152
    %s155 = scalar_lea.vmem %s0, 4
    %v156 = vld [vmem:[%s155] sm:%s4]
    %s157 = scalar_lea.vmem [#allocation0], 8
    %158 = vst [vmem:[%s157] sm:%s4] %v156
    %v159 = vld [vmem:[%s0] sm:%s4]
    %160 = vst [vmem:[#allocation0] sm:%s4] %v159
    %v161 = vld [vmem:[#allocation0] ss:$8 sm:$0xf]
    %v162 = vld [vmem:[#allocation0] ss:$8 sm:$0xf0]
    %vm163 = vcmask 1047556
    %v164 = vsel %vm163, %v162, %v161
    %vm165 = vcmask 130048
    %166 = vst.msk [vmem:[%s1] sm:$0xff] %vm165, %v164
    %s167 = scalar_lea.vmem [#allocation0], 64
    %v168 = vld [vmem:[%s167] ss:$8 sm:$0xf]
    %s169 = scalar_lea.vmem [#allocation0], 64
    %v170 = vld [vmem:[%s169] ss:$8 sm:$0xf0]
    %vm171 = vcmask 1047556
    %v172 = vsel %vm171, %v170, %v168
    %vm173 = vcmask 130048
    %s174 = scalar_lea.vmem %s1, 8
    %175 = vst.msk [vmem:[%s174] sm:$0xff] %vm173, %v172
    %s176 = scalar_lea.vmem [#allocation0], 128
    %v177 = vld [vmem:[%s176] ss:$8 sm:$0xf]
    %s178 = scalar_lea.vmem [#allocation0], 128
    %v179 = vld [vmem:[%s178] ss:$8 sm:$0xf0]
    %vm180 = vcmask 1047556
    %v181 = vsel %vm180, %v179, %v177
    %vm182 = vcmask 130048
    %s183 = scalar_lea.vmem %s1, 16
    %184 = vst.msk [vmem:[%s183] sm:$0xff] %vm182, %v181
    %s185 = scalar_lea.vmem [#allocation0], 192
    %v186 = vld [vmem:[%s185] ss:$8 sm:$0xf]
    %s187 = scalar_lea.vmem [#allocation0], 192
    %v188 = vld [vmem:[%s187] ss:$8 sm:$0xf0]
    %vm189 = vcmask 1047556
    %v190 = vsel %vm189, %v188, %v186
    %vm191 = vcmask 130048
    %s192 = scalar_lea.vmem %s1, 24
    %193 = vst.msk [vmem:[%s192] sm:$0xff] %vm191, %v190
    %s194 = scalar_lea.vmem [#allocation0], 3
    %v195 = vld [vmem:[%s194] ss:$8 sm:$0xf]
    %s196 = scalar_lea.vmem [#allocation0], 3
    %v197 = vld [vmem:[%s196] ss:$8 sm:$0xf0]
    %vm198 = vcmask 1047556
    %v199 = vsel %vm198, %v197, %v195
    %200 = vrot.lane.b32.xlu0 %v199, 48
    %v201 = vpop.permute.xlu0 %200
    %vm202 = vcmask 523648
    %203 = vst.msk [vmem:[%s1] sm:$0xff] %vm202, %v201
    %s204 = scalar_lea.vmem [#allocation0], 67
    %v205 = vld [vmem:[%s204] ss:$8 sm:$0xf]
    %s206 = scalar_lea.vmem [#allocation0], 67
    %v207 = vld [vmem:[%s206] ss:$8 sm:$0xf0]
    %vm208 = vcmask 1047556
    %v209 = vsel %vm208, %v207, %v205
    %210 = vrot.lane.b32.xlu0 %v209, 48
    %v211 = vpop.permute.xlu0 %210
    %vm212 = vcmask 523648
    %s213 = scalar_lea.vmem %s1, 8
    %214 = vst.msk [vmem:[%s213] sm:$0xff] %vm212, %v211
    %s215 = scalar_lea.vmem [#allocation0], 131
    %v216 = vld [vmem:[%s215] ss:$8 sm:$0xf]
    %s217 = scalar_lea.vmem [#allocation0], 131
    %v218 = vld [vmem:[%s217] ss:$8 sm:$0xf0]
    %vm219 = vcmask 1047556
    %v220 = vsel %vm219, %v218, %v216
    %221 = vrot.lane.b32.xlu0 %v220, 48
    %v222 = vpop.permute.xlu0 %221
    %vm223 = vcmask 523648
    %s224 = scalar_lea.vmem %s1, 16
    %225 = vst.msk [vmem:[%s224] sm:$0xff] %vm223, %v222
    %s226 = scalar_lea.vmem [#allocation0], 195
    %v227 = vld [vmem:[%s226] ss:$8 sm:$0xf]
    %s228 = scalar_lea.vmem [#allocation0], 195
    %v229 = vld [vmem:[%s228] ss:$8 sm:$0xf0]
    %vm230 = vcmask 1047556
    %v231 = vsel %vm230, %v229, %v227
    %232 = vrot.lane.b32.xlu0 %v231, 48
    %v233 = vpop.permute.xlu0 %232
    %vm234 = vcmask 523648
    %s235 = scalar_lea.vmem %s1, 24
    %236 = vst.msk [vmem:[%s235] sm:$0xff] %vm234, %v233
    %s237 = scalar_lea.vmem [#allocation0], 2
    %v238 = vld [vmem:[%s237] ss:$8 sm:$0xf]
    %s239 = scalar_lea.vmem [#allocation0], 2
    %v240 = vld [vmem:[%s239] ss:$8 sm:$0xf0]
    %vm241 = vcmask 1047556
    %v242 = vsel %vm241, %v240, %v238
    %243 = vrot.lane.b32.xlu0 %v242, 32
    %v244 = vpop.permute.xlu0 %243
    %vm245 = vcmask 392448
    %246 = vst.msk [vmem:[%s1] sm:$0xff] %vm245, %v244
    %s247 = scalar_lea.vmem [#allocation0], 66
    %v248 = vld [vmem:[%s247] ss:$8 sm:$0xf]
    %s249 = scalar_lea.vmem [#allocation0], 66
    %v250 = vld [vmem:[%s249] ss:$8 sm:$0xf0]
    %vm251 = vcmask 1047556
    %v252 = vsel %vm251, %v250, %v248
    %253 = vrot.lane.b32.xlu0 %v252, 32
    %v254 = vpop.permute.xlu0 %253
    %vm255 = vcmask 392448
    %s256 = scalar_lea.vmem %s1, 8
    %257 = vst.msk [vmem:[%s256] sm:$0xff] %vm255, %v254
    %s258 = scalar_lea.vmem [#allocation0], 130
    %v259 = vld [vmem:[%s258] ss:$8 sm:$0xf]
    %s260 = scalar_lea.vmem [#allocation0], 130
    %v261 = vld [vmem:[%s260] ss:$8 sm:$0xf0]
    %vm262 = vcmask 1047556
    %v263 = vsel %vm262, %v261, %v259
    %264 = vrot.lane.b32.xlu0 %v263, 32
    %v265 = vpop.permute.xlu0 %264
    %vm266 = vcmask 392448
    %s267 = scalar_lea.vmem %s1, 16
    %268 = vst.msk [vmem:[%s267] sm:$0xff] %vm266, %v265
    %s269 = scalar_lea.vmem [#allocation0], 194
    %v270 = vld [vmem:[%s269] ss:$8 sm:$0xf]
    %s271 = scalar_lea.vmem [#allocation0], 194
    %v272 = vld [vmem:[%s271] ss:$8 sm:$0xf0]
    %vm273 = vcmask 1047556
    %v274 = vsel %vm273, %v272, %v270
    %275 = vrot.lane.b32.xlu0 %v274, 32
    %v276 = vpop.permute.xlu0 %275
    %vm277 = vcmask 392448
    %s278 = scalar_lea.vmem %s1, 24
    %279 = vst.msk [vmem:[%s278] sm:$0xff] %vm277, %v276
    %s280 = scalar_lea.vmem [#allocation0], 1
    %v281 = vld [vmem:[%s280] ss:$8 sm:$0xf]
    %s282 = scalar_lea.vmem [#allocation0], 1
    %v283 = vld [vmem:[%s282] ss:$8 sm:$0xf0]
    %vm284 = vcmask 1047556
    %v285 = vsel %vm284, %v283, %v281
    %286 = vrot.lane.b32.xlu0 %v285, 16
    %v287 = vpop.permute.xlu0 %286
    %vm288 = vcmask 261248
    %289 = vst.msk [vmem:[%s1] sm:$0xff] %vm288, %v287
    %s290 = scalar_lea.vmem [#allocation0], 65
    %v291 = vld [vmem:[%s290] ss:$8 sm:$0xf]
    %s292 = scalar_lea.vmem [#allocation0], 65
    %v293 = vld [vmem:[%s292] ss:$8 sm:$0xf0]
    %vm294 = vcmask 1047556
    %v295 = vsel %vm294, %v293, %v291
    %296 = vrot.lane.b32.xlu0 %v295, 16
    %v297 = vpop.permute.xlu0 %296
    %vm298 = vcmask 261248
    %s299 = scalar_lea.vmem %s1, 8
    %300 = vst.msk [vmem:[%s299] sm:$0xff] %vm298, %v297
    %s301 = scalar_lea.vmem [#allocation0], 129
    %v302 = vld [vmem:[%s301] ss:$8 sm:$0xf]
    %s303 = scalar_lea.vmem [#allocation0], 129
    %v304 = vld [vmem:[%s303] ss:$8 sm:$0xf0]
    %vm305 = vcmask 1047556
    %v306 = vsel %vm305, %v304, %v302
    %307 = vrot.lane.b32.xlu0 %v306, 16
    %v308 = vpop.permute.xlu0 %307
    %vm309 = vcmask 261248
    %s310 = scalar_lea.vmem %s1, 16
    %311 = vst.msk [vmem:[%s310] sm:$0xff] %vm309, %v308
    %s312 = scalar_lea.vmem [#allocation0], 193
    %v313 = vld [vmem:[%s312] ss:$8 sm:$0xf]
    %s314 = scalar_lea.vmem [#allocation0], 193
    %v315 = vld [vmem:[%s314] ss:$8 sm:$0xf0]
    %vm316 = vcmask 1047556
    %v317 = vsel %vm316, %v315, %v313
    %318 = vrot.lane.b32.xlu0 %v317, 16
    %v319 = vpop.permute.xlu0 %318
    %vm320 = vcmask 261248
    %s321 = scalar_lea.vmem %s1, 24
    %322 = vst.msk [vmem:[%s321] sm:$0xff] %vm320, %v319

// kernel: squeeze.6
$region0: #{squeeze.6}
  %s0 = inlined_call_operand.vmem [shape: f32[2,1,16,16], index: 0, kind: input, shape index: {}]
  %s1 = inlined_call_operand.vmem [shape: f32[2,4,4,4,4], index: 1, kind: output, shape index: {}]
  $region1: #{squeeze.6} parent=0
    #allocation0 [shape = 'u8[131072]{0}', space=vmem, size = 0x20000, scoped, tag = 'scoped mem for output reshape']
    %v2 = vld [vmem:[%s0] sm:$0xff]
    %vm3 = vcmask 31744
    %4 = vst.msk [vmem:[#allocation0] ss:$8 sm:$0xf] %vm3, %v2
    %5 = vst.msk [vmem:[#allocation0] ss:$8 sm:$0xf0] %vm3, %v2
    %s6 = scalar_lea.vmem %s0, 8
    %v7 = vld [vmem:[%s6] sm:$0xff]
    %vm8 = vcmask 31744
    %s9 = scalar_lea.vmem [#allocation0], 64
    %10 = vst.msk [vmem:[%s9] ss:$8 sm:$0xf] %vm8, %v7
    %s11 = scalar_lea.vmem [#allocation0], 64
    %12 = vst.msk [vmem:[%s11] ss:$8 sm:$0xf0] %vm8, %v7
    %s13 = scalar_lea.vmem %s0, 16
    %v14 = vld [vmem:[%s13] sm:$0xff]
    %vm15 = vcmask 31744
    %s16 = scalar_lea.vmem [#allocation0], 128
    %17 = vst.msk [vmem:[%s16] ss:$8 sm:$0xf] %vm15, %v14
    %s18 = scalar_lea.vmem [#allocation0], 128
    %19 = vst.msk [vmem:[%s18] ss:$8 sm:$0xf0] %vm15, %v14
    %s20 = scalar_lea.vmem %s0, 24
    %v21 = vld [vmem:[%s20] sm:$0xff]
    %vm22 = vcmask 31744
    %s23 = scalar_lea.vmem [#allocation0], 192
    %24 = vst.msk [vmem:[%s23] ss:$8 sm:$0xf] %vm22, %v21
    %s25 = scalar_lea.vmem [#allocation0], 192
    %26 = vst.msk [vmem:[%s25] ss:$8 sm:$0xf0] %vm22, %v21
    %v27 = vld [vmem:[%s0] sm:$0xff]
    %28 = vrot.lane.b32.xlu0 %v27, 124
    %v29 = vpop.permute.xlu0 %28
    %vm30 = vcmask 31744
    %s31 = scalar_lea.vmem [#allocation0], 1
    %32 = vst.msk [vmem:[%s31] ss:$8 sm:$0xf] %vm30, %v29
    %s33 = scalar_lea.vmem [#allocation0], 1
    %34 = vst.msk [vmem:[%s33] ss:$8 sm:$0xf0] %vm30, %v29
    %s35 = scalar_lea.vmem %s0, 8
    %v36 = vld [vmem:[%s35] sm:$0xff]
    %37 = vrot.lane.b32.xlu0 %v36, 124
    %v38 = vpop.permute.xlu0 %37
    %vm39 = vcmask 31744
    %s40 = scalar_lea.vmem [#allocation0], 65
    %41 = vst.msk [vmem:[%s40] ss:$8 sm:$0xf] %vm39, %v38
    %s42 = scalar_lea.vmem [#allocation0], 65
    %43 = vst.msk [vmem:[%s42] ss:$8 sm:$0xf0] %vm39, %v38
    %s44 = scalar_lea.vmem %s0, 16
    %v45 = vld [vmem:[%s44] sm:$0xff]
    %46 = vrot.lane.b32.xlu0 %v45, 124
    %v47 = vpop.permute.xlu0 %46
    %vm48 = vcmask 31744
    %s49 = scalar_lea.vmem [#allocation0], 129
    %50 = vst.msk [vmem:[%s49] ss:$8 sm:$0xf] %vm48, %v47
    %s51 = scalar_lea.vmem [#allocation0], 129
    %52 = vst.msk [vmem:[%s51] ss:$8 sm:$0xf0] %vm48, %v47
    %s53 = scalar_lea.vmem %s0, 24
    %v54 = vld [vmem:[%s53] sm:$0xff]
    %55 = vrot.lane.b32.xlu0 %v54, 124
    %v56 = vpop.permute.xlu0 %55
    %vm57 = vcmask 31744
    %s58 = scalar_lea.vmem [#allocation0], 193
    %59 = vst.msk [vmem:[%s58] ss:$8 sm:$0xf] %vm57, %v56
    %s60 = scalar_lea.vmem [#allocation0], 193
    %61 = vst.msk [vmem:[%s60] ss:$8 sm:$0xf0] %vm57, %v56
    %v62 = vld [vmem:[%s0] sm:$0xff]
    %63 = vrot.lane.b32.xlu0 %v62, 120
    %v64 = vpop.permute.xlu0 %63
    %vm65 = vcmask 31744
    %s66 = scalar_lea.vmem [#allocation0], 2
    %67 = vst.msk [vmem:[%s66] ss:$8 sm:$0xf] %vm65, %v64
    %s68 = scalar_lea.vmem [#allocation0], 2
    %69 = vst.msk [vmem:[%s68] ss:$8 sm:$0xf0] %vm65, %v64
    %s70 = scalar_lea.vmem %s0, 8
    %v71 = vld [vmem:[%s70] sm:$0xff]
    %72 = vrot.lane.b32.xlu0 %v71, 120
    %v73 = vpop.permute.xlu0 %72
    %vm74 = vcmask 31744
    %s75 = scalar_lea.vmem [#allocation0], 66
    %76 = vst.msk [vmem:[%s75] ss:$8 sm:$0xf] %vm74, %v73
    %s77 = scalar_lea.vmem [#allocation0], 66
    %78 = vst.msk [vmem:[%s77] ss:$8 sm:$0xf0] %vm74, %v73
    %s79 = scalar_lea.vmem %s0, 16
    %v80 = vld [vmem:[%s79] sm:$0xff]
    %81 = vrot.lane.b32.xlu0 %v80, 120
    %v82 = vpop.permute.xlu0 %81
    %vm83 = vcmask 31744
    %s84 = scalar_lea.vmem [#allocation0], 130
    %85 = vst.msk [vmem:[%s84] ss:$8 sm:$0xf] %vm83, %v82
    %s86 = scalar_lea.vmem [#allocation0], 130
    %87 = vst.msk [vmem:[%s86] ss:$8 sm:$0xf0] %vm83, %v82
    %s88 = scalar_lea.vmem %s0, 24
    %v89 = vld [vmem:[%s88] sm:$0xff]
    %90 = vrot.lane.b32.xlu0 %v89, 120
    %v91 = vpop.permute.xlu0 %90
    %vm92 = vcmask 31744
    %s93 = scalar_lea.vmem [#allocation0], 194
    %94 = vst.msk [vmem:[%s93] ss:$8 sm:$0xf] %vm92, %v91
    %s95 = scalar_lea.vmem [#allocation0], 194
    %96 = vst.msk [vmem:[%s95] ss:$8 sm:$0xf0] %vm92, %v91
    %v97 = vld [vmem:[%s0] sm:$0xff]
    %98 = vrot.lane.b32.xlu0 %v97, 116
    %v99 = vpop.permute.xlu0 %98
    %vm100 = vcmask 31744
    %s101 = scalar_lea.vmem [#allocation0], 3
    %102 = vst.msk [vmem:[%s101] ss:$8 sm:$0xf] %vm100, %v99
    %s103 = scalar_lea.vmem [#allocation0], 3
    %104 = vst.msk [vmem:[%s103] ss:$8 sm:$0xf0] %vm100, %v99
    %s105 = scalar_lea.vmem %s0, 8
    %v106 = vld [vmem:[%s105] sm:$0xff]
    %107 = vrot.lane.b32.xlu0 %v106, 116
    %v108 = vpop.permute.xlu0 %107
    %vm109 = vcmask 31744
    %s110 = scalar_lea.vmem [#allocation0], 67
    %111 = vst.msk [vmem:[%s110] ss:$8 sm:$0xf] %vm109, %v108
    %s112 = scalar_lea.vmem [#allocation0], 67
    %113 = vst.msk [vmem:[%s112] ss:$8 sm:$0xf0] %vm109, %v108
    %s114 = scalar_lea.vmem %s0, 16
    %v115 = vld [vmem:[%s114] sm:$0xff]
    %116 = vrot.lane.b32.xlu0 %v115, 116
    %v117 = vpop.permute.xlu0 %116
    %vm118 = vcmask 31744
    %s119 = scalar_lea.vmem [#allocation0], 131
    %120 = vst.msk [vmem:[%s119] ss:$8 sm:$0xf] %vm118, %v117
    %s121 = scalar_lea.vmem [#allocation0], 131
    %122 = vst.msk [vmem:[%s121] ss:$8 sm:$0xf0] %vm118, %v117
    %s123 = scalar_lea.vmem %s0, 24
    %v124 = vld [vmem:[%s123] sm:$0xff]
    %125 = vrot.lane.b32.xlu0 %v124, 116
    %v126 = vpop.permute.xlu0 %125
    %vm127 = vcmask 31744
    %s128 = scalar_lea.vmem [#allocation0], 195
    %129 = vst.msk [vmem:[%s128] ss:$8 sm:$0xf] %vm127, %v126
    %s130 = scalar_lea.vmem [#allocation0], 195
    %131 = vst.msk [vmem:[%s130] ss:$8 sm:$0xf0] %vm127, %v126
    %s133 = sshll.u32 1, 4
    %s134 = ssub.s32 %s133, 1
    %v136 = vld [vmem:[#allocation0] sm:%s134]
    %s137 = sshll.u32 1, 4
    %s138 = ssub.s32 %s137, 1
    %139 = vst [vmem:[%s1] sm:%s138] %v136
    %s140 = scalar_lea.vmem [#allocation0], 8
    %v141 = vld [vmem:[%s140] sm:%s134]
    %s142 = sshll.u32 1, 4
    %s143 = ssub.s32 %s142, 1
    %s144 = scalar_lea.vmem %s1, 4
    %145 = vst [vmem:[%s144] sm:%s143] %v141
    %s146 = scalar_lea.vmem [#allocation0], 16
    %v147 = vld [vmem:[%s146] sm:%s134]
    %s148 = sshll.u32 1, 4
    %s149 = ssub.s32 %s148, 1
    %s150 = smul.addr 4, 2
    %s151 = scalar_lea.vmem %s1, %s150
    %152 = vst [vmem:[%s151] sm:%s149] %v147
    %s153 = scalar_lea.vmem [#allocation0], 24
    %v154 = vld [vmem:[%s153] sm:%s134]
    %s155 = sshll.u32 1, 4
    %s156 = ssub.s32 %s155, 1
    %s157 = smul.addr 4, 3
    %s158 = scalar_lea.vmem %s1, %s157
    %159 = vst [vmem:[%s158] sm:%s156] %v154
    %s160 = scalar_lea.vmem [#allocation0], 32
    %v161 = vld [vmem:[%s160] sm:%s134]
    %s162 = sshll.u32 1, 4
    %s163 = ssub.s32 %s162, 1
    %s164 = smul.addr 4, 4
    %s165 = scalar_lea.vmem %s1, %s164
    %166 = vst [vmem:[%s165] sm:%s163] %v161
    %s167 = scalar_lea.vmem [#allocation0], 40
    %v168 = vld [vmem:[%s167] sm:%s134]
    %s169 = sshll.u32 1, 4
    %s170 = ssub.s32 %s169, 1
    %s171 = smul.addr 4, 5
    %s172 = scalar_lea.vmem %s1, %s171
    %173 = vst [vmem:[%s172] sm:%s170] %v168
    %s174 = scalar_lea.vmem [#allocation0], 48
    %v175 = vld [vmem:[%s174] sm:%s134]
    %s176 = sshll.u32 1, 4
    %s177 = ssub.s32 %s176, 1
    %s178 = smul.addr 4, 6
    %s179 = scalar_lea.vmem %s1, %s178
    %180 = vst [vmem:[%s179] sm:%s177] %v175
    %s181 = scalar_lea.vmem [#allocation0], 56
    %v182 = vld [vmem:[%s181] sm:%s134]
    %s183 = sshll.u32 1, 4
    %s184 = ssub.s32 %s183, 1
    %s185 = smul.addr 4, 7
    %s186 = scalar_lea.vmem %s1, %s185
    %187 = vst [vmem:[%s186] sm:%s184] %v182
    %s188 = scalar_lea.vmem [#allocation0], 64
    %v189 = vld [vmem:[%s188] sm:%s134]
    %s190 = sshll.u32 1, 4
    %s191 = ssub.s32 %s190, 1
    %s192 = smul.addr 4, 8
    %s193 = scalar_lea.vmem %s1, %s192
    %194 = vst [vmem:[%s193] sm:%s191] %v189
    %s195 = scalar_lea.vmem [#allocation0], 72
    %v196 = vld [vmem:[%s195] sm:%s134]
    %s197 = sshll.u32 1, 4
    %s198 = ssub.s32 %s197, 1
    %s199 = smul.addr 4, 9
    %s200 = scalar_lea.vmem %s1, %s199
    %201 = vst [vmem:[%s200] sm:%s198] %v196
    %s202 = scalar_lea.vmem [#allocation0], 80
    %v203 = vld [vmem:[%s202] sm:%s134]
    %s204 = sshll.u32 1, 4
    %s205 = ssub.s32 %s204, 1
    %s206 = smul.addr 4, 10
    %s207 = scalar_lea.vmem %s1, %s206
    %208 = vst [vmem:[%s207] sm:%s205] %v203
    %s209 = scalar_lea.vmem [#allocation0], 88
    %v210 = vld [vmem:[%s209] sm:%s134]
    %s211 = sshll.u32 1, 4
    %s212 = ssub.s32 %s211, 1
    %s213 = smul.addr 4, 11
    %s214 = scalar_lea.vmem %s1, %s213
    %215 = vst [vmem:[%s214] sm:%s212] %v210
    %s216 = scalar_lea.vmem [#allocation0], 96
    %v217 = vld [vmem:[%s216] sm:%s134]
    %s218 = sshll.u32 1, 4
    %s219 = ssub.s32 %s218, 1
    %s220 = smul.addr 4, 12
    %s221 = scalar_lea.vmem %s1, %s220
    %222 = vst [vmem:[%s221] sm:%s219] %v217
    %s223 = scalar_lea.vmem [#allocation0], 104
    %v224 = vld [vmem:[%s223] sm:%s134]
    %s225 = sshll.u32 1, 4
    %s226 = ssub.s32 %s225, 1
    %s227 = smul.addr 4, 13
    %s228 = scalar_lea.vmem %s1, %s227
    %229 = vst [vmem:[%s228] sm:%s226] %v224
    %s230 = scalar_lea.vmem [#allocation0], 112
    %v231 = vld [vmem:[%s230] sm:%s134]
    %s232 = sshll.u32 1, 4
    %s233 = ssub.s32 %s232, 1
    %s234 = smul.addr 4, 14
    %s235 = scalar_lea.vmem %s1, %s234
    %236 = vst [vmem:[%s235] sm:%s233] %v231
    %s237 = scalar_lea.vmem [#allocation0], 120
    %v238 = vld [vmem:[%s237] sm:%s134]
    %s239 = sshll.u32 1, 4
    %s240 = ssub.s32 %s239, 1
    %s241 = smul.addr 4, 15
    %s242 = scalar_lea.vmem %s1, %s241
    %243 = vst [vmem:[%s242] sm:%s240] %v238
    %s244 = scalar_lea.vmem [#allocation0], 128
    %v245 = vld [vmem:[%s244] sm:%s134]
    %s246 = sshll.u32 1, 4
    %s247 = ssub.s32 %s246, 1
    %s248 = smul.addr 4, 16
    %s249 = scalar_lea.vmem %s1, %s248
    %250 = vst [vmem:[%s249] sm:%s247] %v245
    %s251 = scalar_lea.vmem [#allocation0], 136
    %v252 = vld [vmem:[%s251] sm:%s134]
    %s253 = sshll.u32 1, 4
    %s254 = ssub.s32 %s253, 1
    %s255 = smul.addr 4, 17
    %s256 = scalar_lea.vmem %s1, %s255
    %257 = vst [vmem:[%s256] sm:%s254] %v252
    %s258 = scalar_lea.vmem [#allocation0], 144
    %v259 = vld [vmem:[%s258] sm:%s134]
    %s260 = sshll.u32 1, 4
    %s261 = ssub.s32 %s260, 1
    %s262 = smul.addr 4, 18
    %s263 = scalar_lea.vmem %s1, %s262
    %264 = vst [vmem:[%s263] sm:%s261] %v259
    %s265 = scalar_lea.vmem [#allocation0], 152
    %v266 = vld [vmem:[%s265] sm:%s134]
    %s267 = sshll.u32 1, 4
    %s268 = ssub.s32 %s267, 1
    %s269 = smul.addr 4, 19
    %s270 = scalar_lea.vmem %s1, %s269
    %271 = vst [vmem:[%s270] sm:%s268] %v266
    %s272 = scalar_lea.vmem [#allocation0], 160
    %v273 = vld [vmem:[%s272] sm:%s134]
    %s274 = sshll.u32 1, 4
    %s275 = ssub.s32 %s274, 1
    %s276 = smul.addr 4, 20
    %s277 = scalar_lea.vmem %s1, %s276
    %278 = vst [vmem:[%s277] sm:%s275] %v273
    %s279 = scalar_lea.vmem [#allocation0], 168
    %v280 = vld [vmem:[%s279] sm:%s134]
    %s281 = sshll.u32 1, 4
    %s282 = ssub.s32 %s281, 1
    %s283 = smul.addr 4, 21
    %s284 = scalar_lea.vmem %s1, %s283
    %285 = vst [vmem:[%s284] sm:%s282] %v280
    %s286 = scalar_lea.vmem [#allocation0], 176
    %v287 = vld [vmem:[%s286] sm:%s134]
    %s288 = sshll.u32 1, 4
    %s289 = ssub.s32 %s288, 1
    %s290 = smul.addr 4, 22
    %s291 = scalar_lea.vmem %s1, %s290
    %292 = vst [vmem:[%s291] sm:%s289] %v287
    %s293 = scalar_lea.vmem [#allocation0], 184
    %v294 = vld [vmem:[%s293] sm:%s134]
    %s295 = sshll.u32 1, 4
    %s296 = ssub.s32 %s295, 1
    %s297 = smul.addr 4, 23
    %s298 = scalar_lea.vmem %s1, %s297
    %299 = vst [vmem:[%s298] sm:%s296] %v294
    %s300 = scalar_lea.vmem [#allocation0], 192
    %v301 = vld [vmem:[%s300] sm:%s134]
    %s302 = sshll.u32 1, 4
    %s303 = ssub.s32 %s302, 1
    %s304 = smul.addr 4, 24
    %s305 = scalar_lea.vmem %s1, %s304
    %306 = vst [vmem:[%s305] sm:%s303] %v301
    %s307 = scalar_lea.vmem [#allocation0], 200
    %v308 = vld [vmem:[%s307] sm:%s134]
    %s309 = sshll.u32 1, 4
    %s310 = ssub.s32 %s309, 1
    %s311 = smul.addr 4, 25
    %s312 = scalar_lea.vmem %s1, %s311
    %313 = vst [vmem:[%s312] sm:%s310] %v308
    %s314 = scalar_lea.vmem [#allocation0], 208
    %v315 = vld [vmem:[%s314] sm:%s134]
    %s316 = sshll.u32 1, 4
    %s317 = ssub.s32 %s316, 1
    %s318 = smul.addr 4, 26
    %s319 = scalar_lea.vmem %s1, %s318
    %320 = vst [vmem:[%s319] sm:%s317] %v315
    %s321 = scalar_lea.vmem [#allocation0], 216
    %v322 = vld [vmem:[%s321] sm:%s134]
    %s323 = sshll.u32 1, 4
    %s324 = ssub.s32 %s323, 1
    %s325 = smul.addr 4, 27
    %s326 = scalar_lea.vmem %s1, %s325
    %327 = vst [vmem:[%s326] sm:%s324] %v322
    %s328 = scalar_lea.vmem [#allocation0], 224
    %v329 = vld [vmem:[%s328] sm:%s134]
    %s330 = sshll.u32 1, 4
    %s331 = ssub.s32 %s330, 1
    %s332 = smul.addr 4, 28
    %s333 = scalar_lea.vmem %s1, %s332
    %334 = vst [vmem:[%s333] sm:%s331] %v329
    %s335 = scalar_lea.vmem [#allocation0], 232
    %v336 = vld [vmem:[%s335] sm:%s134]
    %s337 = sshll.u32 1, 4
    %s338 = ssub.s32 %s337, 1
    %s339 = smul.addr 4, 29
    %s340 = scalar_lea.vmem %s1, %s339
    %341 = vst [vmem:[%s340] sm:%s338] %v336
    %s342 = scalar_lea.vmem [#allocation0], 240
    %v343 = vld [vmem:[%s342] sm:%s134]
    %s344 = sshll.u32 1, 4
    %s345 = ssub.s32 %s344, 1
    %s346 = smul.addr 4, 30
    %s347 = scalar_lea.vmem %s1, %s346
    %348 = vst [vmem:[%s347] sm:%s345] %v343
    %s349 = scalar_lea.vmem [#allocation0], 248
    %v350 = vld [vmem:[%s349] sm:%s134]
    %s351 = sshll.u32 1, 4
    %s352 = ssub.s32 %s351, 1
    %s353 = smul.addr 4, 31
    %s354 = scalar_lea.vmem %s1, %s353
    %355 = vst [vmem:[%s354] sm:%s352] %v350

// kernel: vq_ar_autoencoder_forward.1
$region0: #{vq_ar_autoencoder_forward.1}
  #allocation0 [shape = 'u32[]', space=smem, size = 0x4, offset = 0x4, fixed_abs, tag = 'smem constant byte address 0x4 - core index']
  #allocation1 [shape = 'u32[144,128]{1,0:T(1,128)}', space=vmem, size = 0x12000, scoped, tag = 'internal scratch']
  %s0 = inlined_call_operand.smem [shape: u32[33], index: -1, kind: input, shape index: {}]
  %s1 = sld [smem:[%s0]]
  %s2 = scalar_lea.smem %s0, 1
  %s3 = sld [smem:[%s2]]
  %s4 = scalar_lea.smem %s0, 2
  %s5 = sld [smem:[%s4]]
  %s6 = scalar_lea.smem %s0, 3
  %s7 = sld [smem:[%s6]]
  %s8 = scalar_lea.smem %s0, 4
  %s9 = sld [smem:[%s8]]
  %s10 = scalar_lea.smem %s0, 5
  %s11 = sld [smem:[%s10]]
  %s12 = scalar_lea.smem %s0, 6
  %s13 = sld [smem:[%s12]]
  %s14 = scalar_lea.smem %s0, 7
  %s15 = sld [smem:[%s14]]
  %s16 = scalar_lea.smem %s0, 8
  %s17 = sld [smem:[%s16]]
  %s18 = scalar_lea.smem %s0, 9
  %s19 = sld [smem:[%s18]]
  %s20 = scalar_lea.smem %s0, 10
  %s21 = sld [smem:[%s20]]
  %s22 = scalar_lea.smem %s0, 11
  %s23 = sld [smem:[%s22]]
  %s24 = scalar_lea.smem %s0, 12
  %s25 = sld [smem:[%s24]]
  %s26 = scalar_lea.smem %s0, 13
  %s27 = sld [smem:[%s26]]
  %s28 = scalar_lea.smem %s0, 14
  %s29 = sld [smem:[%s28]]
  %s30 = scalar_lea.smem %s0, 15
  %s31 = sld [smem:[%s30]]
  %s32 = scalar_lea.smem %s0, 16
  %s33 = sld [smem:[%s32]]
  %s34 = scalar_lea.smem %s0, 17
  %s35 = sld [smem:[%s34]]
  %s36 = scalar_lea.smem %s0, 18
  %s37 = sld [smem:[%s36]]
  %s38 = scalar_lea.smem %s0, 19
  %s39 = sld [smem:[%s38]]
  %s40 = scalar_lea.smem %s0, 20
  %s41 = sld [smem:[%s40]]
  %s42 = scalar_lea.smem %s0, 21
  %s43 = sld [smem:[%s42]]
  %s44 = scalar_lea.smem %s0, 22
  %s45 = sld [smem:[%s44]]
  %s46 = scalar_lea.smem %s0, 23
  %s47 = sld [smem:[%s46]]
  %s48 = scalar_lea.smem %s0, 24
  %s49 = sld [smem:[%s48]]
  %s50 = scalar_lea.smem %s0, 25
  %s51 = sld [smem:[%s50]]
  %s52 = scalar_lea.smem %s0, 26
  %s53 = sld [smem:[%s52]]
  %s54 = scalar_lea.smem %s0, 27
  %s55 = sld [smem:[%s54]]
  %s56 = scalar_lea.smem %s0, 28
  %s57 = sld [smem:[%s56]]
  %s58 = scalar_lea.smem %s0, 29
  %s59 = sld [smem:[%s58]]
  %s60 = scalar_lea.smem %s0, 30
  %s61 = sld [smem:[%s60]]
  %s62 = scalar_lea.smem %s0, 31
  %s63 = sld [smem:[%s62]]
  %s64 = scalar_lea.smem %s0, 32
  %s65 = sld [smem:[%s64]]
  %66 = xla_tuple %s55, %s57, %s59, %s61, %s63, %s65
  %s67 = sld [smem:[#allocation0]]
  $region158: #{vq_ar_autoencoder_forward.1} parent=0
    _
  %s69 = ssub.s32 1, %s67
  %s70 = scalar_select 0, %s69, %s67
  $region1: #{vq_ar_autoencoder_forward.1} parent=0
    #allocation2 [shape = 'u8[512]{0}', space=vmem, size = 0x400, scoped, tag = 'output window, operand 1, single buffered']
    #allocation3 [shape = 's32[1]{0}', space=sflag, size = 0x4, scoped, tag = 'scoped memory for vq_ar_autoencoder_forward.1']
    #allocation4 [shape = 'u8[512]{0}', space=vmem, size = 0x400, scoped, tag = 'output window, operand 2, single buffered']
    #allocation5 [shape = 's32[1]{0}', space=sflag, size = 0x4, scoped, tag = 'scoped memory for vq_ar_autoencoder_forward.1']
    #allocation6 [shape = 'u8[512]{0}', space=vmem, size = 0x400, scoped, tag = 'output window, operand 3, single buffered']
    #allocation7 [shape = 'u8[512]{0}', space=vmem, size = 0x400, scoped, tag = 'output window, operand 4, single buffered']
    #allocation8 [shape = 's32[1]{0}', space=sflag, size = 0x4, scoped, tag = 'scoped memory for vq_ar_autoencoder_forward.1']
    #allocation9 [shape = 'u8[512]{0}', space=vmem, size = 0x400, scoped, tag = 'output window, operand 5, single buffered']
    %71 = vsyncpa [#allocation3], 0
    %72 = vsyncpa [#allocation5], 0
    %73 = vsyncpa [#allocation8], 0
    // Predicated region
    $region2: #{vq_ar_autoencoder_forward.1} parent=1 // pred_check
      _
    $region3: #{vq_ar_autoencoder_forward.1} parent=1 // pred_check_branch
      %75 = sbr.rel (0) target = $region5
    $region4: #{vq_ar_autoencoder_forward.1} parent=1 // pred_region
      _
    $region5: #{vq_ar_autoencoder_forward.1} parent=1 // pred_fallthru
      _
    // Predicated region
    $region6: #{vq_ar_autoencoder_forward.1} parent=1 // pred_check
      _
    $region7: #{vq_ar_autoencoder_forward.1} parent=1 // pred_check_branch
      %77 = sbr.rel (0) target = $region9
    $region8: #{vq_ar_autoencoder_forward.1} parent=1 // pred_region
      _
    $region9: #{vq_ar_autoencoder_forward.1} parent=1 // pred_fallthru
      _
    // Predicated region
    $region10: #{vq_ar_autoencoder_forward.1} parent=1 // pred_check
      _
    $region11: #{vq_ar_autoencoder_forward.1} parent=1 // pred_check_branch
      %79 = sbr.rel (0) target = $region13
    $region12: #{vq_ar_autoencoder_forward.1} parent=1 // pred_region
      _
    $region13: #{vq_ar_autoencoder_forward.1} parent=1 // pred_fallthru
      _
    // Predicated region
    $region14: #{vq_ar_autoencoder_forward.1} parent=1 // pred_check
      _
    $region15: #{vq_ar_autoencoder_forward.1} parent=1 // pred_check_branch
      %81 = sbr.rel (0) target = $region17
    $region16: #{vq_ar_autoencoder_forward.1} parent=1 // pred_region
      _
    $region17: #{vq_ar_autoencoder_forward.1} parent=1 // pred_fallthru
      _
    // Predicated region
    $region18: #{vq_ar_autoencoder_forward.1} parent=1 // pred_check
      _
    $region19: #{vq_ar_autoencoder_forward.1} parent=1 // pred_check_branch
      %83 = sbr.rel (0) target = $region21
    $region20: #{vq_ar_autoencoder_forward.1} parent=1 // pred_region
      _
    $region21: #{vq_ar_autoencoder_forward.1} parent=1 // pred_fallthru
      _
    // Predicated region
    $region22: #{vq_ar_autoencoder_forward.1} parent=1 // pred_check
      _
    $region23: #{vq_ar_autoencoder_forward.1} parent=1 // pred_check_branch
      %85 = sbr.rel (0) target = $region25
    $region24: #{vq_ar_autoencoder_forward.1} parent=1 // pred_region
      _
    $region25: #{vq_ar_autoencoder_forward.1} parent=1 // pred_fallthru
      _
    // Predicated region
    $region26: #{vq_ar_autoencoder_forward.1} parent=1 // pred_check
      _
    $region27: #{vq_ar_autoencoder_forward.1} parent=1 // pred_check_branch
      %87 = sbr.rel (0) target = $region29
    $region28: #{vq_ar_autoencoder_forward.1} parent=1 // pred_region
      _
    $region29: #{vq_ar_autoencoder_forward.1} parent=1 // pred_fallthru
      _
    // Predicated region
    $region30: #{vq_ar_autoencoder_forward.1} parent=1 // pred_check
      _
    $region31: #{vq_ar_autoencoder_forward.1} parent=1 // pred_check_branch
      %89 = sbr.rel (0) target = $region33
    $region32: #{vq_ar_autoencoder_forward.1} parent=1 // pred_region
      _
    $region33: #{vq_ar_autoencoder_forward.1} parent=1 // pred_fallthru
      _
    // Predicated region
    $region34: #{vq_ar_autoencoder_forward.1} parent=1 // pred_check
      _
    $region35: #{vq_ar_autoencoder_forward.1} parent=1 // pred_check_branch
      %91 = sbr.rel (0) target = $region37
    $region36: #{vq_ar_autoencoder_forward.1} parent=1 // pred_region
      _
    $region37: #{vq_ar_autoencoder_forward.1} parent=1 // pred_fallthru
      _
    // Predicated region
    $region38: #{vq_ar_autoencoder_forward.1} parent=1 // pred_check
      _
    $region39: #{vq_ar_autoencoder_forward.1} parent=1 // pred_check_branch
      %93 = sbr.rel (0) target = $region41
    $region40: #{vq_ar_autoencoder_forward.1} parent=1 // pred_region
      _
    $region41: #{vq_ar_autoencoder_forward.1} parent=1 // pred_fallthru
      _
    // Predicated region
    $region42: #{vq_ar_autoencoder_forward.1} parent=1 // pred_check
      _
    $region43: #{vq_ar_autoencoder_forward.1} parent=1 // pred_check_branch
      %95 = sbr.rel (0) target = $region45
    $region44: #{vq_ar_autoencoder_forward.1} parent=1 // pred_region
      _
    $region45: #{vq_ar_autoencoder_forward.1} parent=1 // pred_fallthru
      _
    // Predicated region
    $region46: #{vq_ar_autoencoder_forward.1} parent=1 // pred_check
      _
    $region47: #{vq_ar_autoencoder_forward.1} parent=1 // pred_check_branch
      %97 = sbr.rel (0) target = $region49
    $region48: #{vq_ar_autoencoder_forward.1} parent=1 // pred_region
      _
    $region49: #{vq_ar_autoencoder_forward.1} parent=1 // pred_fallthru
      _
    // Predicated region
    $region50: #{vq_ar_autoencoder_forward.1} parent=1 // pred_check
      _
    $region51: #{vq_ar_autoencoder_forward.1} parent=1 // pred_check_branch
      %99 = sbr.rel (0) target = $region53
    $region52: #{vq_ar_autoencoder_forward.1} parent=1 // pred_region
      _
    $region53: #{vq_ar_autoencoder_forward.1} parent=1 // pred_fallthru
      _
    // Predicated region
    $region54: #{vq_ar_autoencoder_forward.1} parent=1 // pred_check
      _
    $region55: #{vq_ar_autoencoder_forward.1} parent=1 // pred_check_branch
      %101 = sbr.rel (0) target = $region57
    $region56: #{vq_ar_autoencoder_forward.1} parent=1 // pred_region
      _
    $region57: #{vq_ar_autoencoder_forward.1} parent=1 // pred_fallthru
      _
    // Predicated region
    $region58: #{vq_ar_autoencoder_forward.1} parent=1 // pred_check
      _
    $region59: #{vq_ar_autoencoder_forward.1} parent=1 // pred_check_branch
      %103 = sbr.rel (0) target = $region61
    $region60: #{vq_ar_autoencoder_forward.1} parent=1 // pred_region
      _
    $region61: #{vq_ar_autoencoder_forward.1} parent=1 // pred_fallthru
      _
    // Predicated region
    $region62: #{vq_ar_autoencoder_forward.1} parent=1 // pred_check
      _
    $region63: #{vq_ar_autoencoder_forward.1} parent=1 // pred_check_branch
      %105 = sbr.rel (0) target = $region65
    $region64: #{vq_ar_autoencoder_forward.1} parent=1 // pred_region
      _
    $region65: #{vq_ar_autoencoder_forward.1} parent=1 // pred_fallthru
      _
    // Predicated region
    $region66: #{vq_ar_autoencoder_forward.1} parent=1 // pred_check
      _
    $region67: #{vq_ar_autoencoder_forward.1} parent=1 // pred_check_branch
      %107 = sbr.rel (0) target = $region69
    $region68: #{vq_ar_autoencoder_forward.1} parent=1 // pred_region
      _
    $region69: #{vq_ar_autoencoder_forward.1} parent=1 // pred_fallthru
      _
    // Predicated region
    $region70: #{vq_ar_autoencoder_forward.1} parent=1 // pred_check
      _
    $region71: #{vq_ar_autoencoder_forward.1} parent=1 // pred_check_branch
      %109 = sbr.rel (0) target = $region73
    $region72: #{vq_ar_autoencoder_forward.1} parent=1 // pred_region
      _
    $region73: #{vq_ar_autoencoder_forward.1} parent=1 // pred_fallthru
      _
    // Predicated region
    $region74: #{vq_ar_autoencoder_forward.1} parent=1 // pred_check
      _
    $region75: #{vq_ar_autoencoder_forward.1} parent=1 // pred_check_branch
      %111 = sbr.rel (0) target = $region77
    $region76: #{vq_ar_autoencoder_forward.1} parent=1 // pred_region
      _
    $region77: #{vq_ar_autoencoder_forward.1} parent=1 // pred_fallthru
      _
    // Predicated region
    $region78: #{vq_ar_autoencoder_forward.1} parent=1 // pred_check
      _
    $region79: #{vq_ar_autoencoder_forward.1} parent=1 // pred_check_branch
      %113 = sbr.rel (0) target = $region81
    $region80: #{vq_ar_autoencoder_forward.1} parent=1 // pred_region
      _
    $region81: #{vq_ar_autoencoder_forward.1} parent=1 // pred_fallthru
      _
    // Predicated region
    $region82: #{vq_ar_autoencoder_forward.1} parent=1 // pred_check
      _
    $region83: #{vq_ar_autoencoder_forward.1} parent=1 // pred_check_branch
      %115 = sbr.rel (0) target = $region85
    $region84: #{vq_ar_autoencoder_forward.1} parent=1 // pred_region
      _
    $region85: #{vq_ar_autoencoder_forward.1} parent=1 // pred_fallthru
      _
    // Predicated region
    $region86: #{vq_ar_autoencoder_forward.1} parent=1 // pred_check
      _
    $region87: #{vq_ar_autoencoder_forward.1} parent=1 // pred_check_branch
      %117 = sbr.rel (0) target = $region89
    $region88: #{vq_ar_autoencoder_forward.1} parent=1 // pred_region
      _
    $region89: #{vq_ar_autoencoder_forward.1} parent=1 // pred_fallthru
      _
    // Predicated region
    $region90: #{vq_ar_autoencoder_forward.1} parent=1 // pred_check
      _
    $region91: #{vq_ar_autoencoder_forward.1} parent=1 // pred_check_branch
      %119 = sbr.rel (0) target = $region93
    $region92: #{vq_ar_autoencoder_forward.1} parent=1 // pred_region
      _
    $region93: #{vq_ar_autoencoder_forward.1} parent=1 // pred_fallthru
      _
    // Predicated region
    $region94: #{vq_ar_autoencoder_forward.1} parent=1 // pred_check
      _
    $region95: #{vq_ar_autoencoder_forward.1} parent=1 // pred_check_branch
      %121 = sbr.rel (0) target = $region97
    $region96: #{vq_ar_autoencoder_forward.1} parent=1 // pred_region
      _
    $region97: #{vq_ar_autoencoder_forward.1} parent=1 // pred_fallthru
      _
    // Predicated region
    $region98: #{vq_ar_autoencoder_forward.1} parent=1 // pred_check
      _
    $region99: #{vq_ar_autoencoder_forward.1} parent=1 // pred_check_branch
      %123 = sbr.rel (0) target = $region101
    $region100: #{vq_ar_autoencoder_forward.1} parent=1 // pred_region
      _
    $region101: #{vq_ar_autoencoder_forward.1} parent=1 // pred_fallthru
      _
    // Predicated region
    $region102: #{vq_ar_autoencoder_forward.1} parent=1 // pred_check
      _
    $region103: #{vq_ar_autoencoder_forward.1} parent=1 // pred_check_branch
      %125 = sbr.rel (0) target = $region105
    $region104: #{vq_ar_autoencoder_forward.1} parent=1 // pred_region
      _
    $region105: #{vq_ar_autoencoder_forward.1} parent=1 // pred_fallthru
      _
    // Predicated region
    $region106: #{vq_ar_autoencoder_forward.1} parent=1 // pred_check
      _
    $region107: #{vq_ar_autoencoder_forward.1} parent=1 // pred_check_branch
      %127 = sbr.rel (0) target = $region109
    $region108: #{vq_ar_autoencoder_forward.1} parent=1 // pred_region
      _
    $region109: #{vq_ar_autoencoder_forward.1} parent=1 // pred_fallthru
      _
    %v129 = vld [vmem:[%s1] sm:$0xff]
    %v130 = vld [vmem:[%s1 + $0x8] sm:$0xff]
    %v131 = vld [vmem:[%s1 + $0x10] sm:$0xff]
    %v132 = vld [vmem:[%s1 + $0x18] sm:$0xff]
    %v133 = vld [vmem:[%s3] sm:$0xff]
    %v134 = vld [vmem:[%s3 + $0x8] sm:$0xff]
    %v135 = vld [vmem:[%s5] sm:$0x1]
    %v137 = vlaneseq
    %v138 = vshrl.u32 %v137, 7
    %v139 = vsub.s32 0, %v138
    %v140 = vrot.slane %v135, %v139
    %vm142 = vcmask 130048
    %v144 = vsel %vm142, %v129, 0
    %v147 = vsel %vm142, %v130, 0
    %v150 = vsel %vm142, %v131, 0
    %v153 = vsel %vm142, %v132, 0
    %155 = vmatprep.subr.mxu0 0.0
    %156 = vmatpush1.msra.mxu0 0.0
    %157 = vmatprep.subr.mxu0 0.0
    %158 = vmatpush1.msra.mxu0 0.0
    %159 = vmatprep.subr.mxu0 0.0
    %160 = vmatpush1.msra.mxu0 0.0
    %161 = vmatprep.subr.mxu0 0.0
    %162 = vmatpush1.msra.mxu0 0.0
    %163 = vmatprep.subr.mxu0 0.0
    %164 = vmatpush1.msra.mxu0 0.0
    %165 = vmatprep.subr.mxu0 0.0
    %166 = vmatpush1.msra.mxu0 0.0
    %167 = vmatprep.subr.mxu0 0.0
    %168 = vmatpush1.msra.mxu0 0.0
    %169 = vmatprep.subr.mxu0 0.0
    %170 = vmatpush1.msra.mxu0 0.0
    %171 = vmatprep.subr.mxu0 0.0
    %172 = vmatpush1.msra.mxu0 0.0
    %173 = vmatprep.subr.mxu0 0.0
    %174 = vmatpush1.msra.mxu0 0.0
    %175 = vmatprep.subr.mxu0 0.0
    %176 = vmatpush1.msra.mxu0 0.0
    %177 = vmatprep.subr.mxu0 0.0
    %178 = vmatpush1.msra.mxu0 0.0
    %179 = vmatprep.subr.mxu0 0.0
    %180 = vmatpush1.msra.mxu0 0.0
    %181 = vmatprep.subr.mxu0 0.0
    %182 = vmatpush1.msra.mxu0 0.0
    %183 = vmatprep.subr.mxu0 0.0
    %184 = vmatpush1.msra.mxu0 %v134
    %185 = vmatprep.subr.mxu0 0.0
    %186 = vmatpush1.msra.mxu0 %v133
    %187 = vmatprep.subr.mxu0 0.0
    %188 = vmatpush2.msra.mxu0 0.0
    %189 = vmatprep.subr.mxu0 0.0
    %190 = vmatpush2.msra.mxu0 0.0
    %191 = vmatprep.subr.mxu0 0.0
    %192 = vmatpush2.msra.mxu0 0.0
    %193 = vmatprep.subr.mxu0 0.0
    %194 = vmatpush2.msra.mxu0 0.0
    %195 = vmatprep.subr.mxu0 0.0
    %196 = vmatpush2.msra.mxu0 0.0
    %197 = vmatprep.subr.mxu0 0.0
    %198 = vmatpush2.msra.mxu0 0.0
    %199 = vmatprep.subr.mxu0 0.0
    %200 = vmatpush2.msra.mxu0 0.0
    %201 = vmatprep.subr.mxu0 0.0
    %202 = vmatpush2.msra.mxu0 0.0
    %203 = vmatprep.subr.mxu0 0.0
    %204 = vmatpush2.msra.mxu0 0.0
    %205 = vmatprep.subr.mxu0 0.0
    %206 = vmatpush2.msra.mxu0 0.0
    %207 = vmatprep.subr.mxu0 0.0
    %208 = vmatpush2.msra.mxu0 0.0
    %209 = vmatprep.subr.mxu0 0.0
    %210 = vmatpush2.msra.mxu0 0.0
    %211 = vmatprep.subr.mxu0 0.0
    %212 = vmatpush2.msra.mxu0 0.0
    %213 = vmatprep.subr.mxu0 0.0
    %214 = vmatpush2.msra.mxu0 0.0
    %215 = vmatprep.subr.mxu0 0.0
    %216 = vmatpush2.msra.mxu0 0.0
    %217 = vmatprep.subr.mxu0 0.0
    %218 = vmatpush2.msra.mxu0 0.0
    %219 = vmatprep.mubr.f32.mxu0 0.0
    %220 = vmatmul.mubr.f32.gmra.mxu0 %v144
    %v221 = vpop.f32.mrf.mxu0
    %v222 = vadd.f32 %v140, %v221
    %v223 = vpop.f32.mrf.mxu0
    %224 = vmatprep.mubr.f32.mxu0 0.0
    %225 = vmatmul.mubr.f32.gmra.mxu0 %v147
    %v226 = vpop.f32.mrf.mxu0
    %v227 = vadd.f32 %v140, %v226
    %v228 = vpop.f32.mrf.mxu0
    %229 = vmatprep.mubr.f32.mxu0 0.0
    %230 = vmatmul.mubr.f32.gmra.mxu0 %v150
    %v231 = vpop.f32.mrf.mxu0
    %v232 = vadd.f32 %v140, %v231
    %v233 = vpop.f32.mrf.mxu0
    %234 = vmatprep.mubr.f32.mxu0 0.0
    %235 = vmatmul.mubr.f32.gmra.mxu0 %v153
    %v236 = vpop.f32.mrf.mxu0
    %v237 = vadd.f32 %v140, %v236
    %v238 = vpop.f32.mrf.mxu0
    %239 = vdwg.mxu0
    %v240 = vld [vmem:[%s7] sm:$0xff]
    %v241 = vld [vmem:[%s7 + $0x8] sm:$0xff]
    %v242 = vld [vmem:[%s7 + $0x10] sm:$0xff]
    %v243 = vld [vmem:[%s7 + $0x18] sm:$0xff]
    %v244 = vld [vmem:[%s7 + $0x20] sm:$0xff]
    %v245 = vld [vmem:[%s7 + $0x28] sm:$0xff]
    %v246 = vld [vmem:[%s7 + $0x30] sm:$0xff]
    %v247 = vld [vmem:[%s7 + $0x38] sm:$0xff]
    %vm248 = vcmask 261120
    %v250 = vsel %vm248, %v222, 0
    %v253 = vsel %vm248, %v227, 0
    %v256 = vsel %vm248, %v232, 0
    %v259 = vsel %vm248, %v237, 0
    %v262 = vsel %vm248, %v240, 0
    %v265 = vsel %vm248, %v241, 0
    %v268 = vsel %vm248, %v242, 0
    %v271 = vsel %vm248, %v243, 0
    %v274 = vsel %vm248, %v244, 0
    %v277 = vsel %vm248, %v245, 0
    %v280 = vsel %vm248, %v246, 0
    %v283 = vsel %vm248, %v247, 0
    %285 = vmatprep.subr.mxu0 0.0
    %286 = vmatpush1.xpose.msra.mxu0 0.0
    %287 = vmatprep.subr.mxu0 0.0
    %288 = vmatpush1.xpose.msra.mxu0 0.0
    %289 = vmatprep.subr.mxu0 0.0
    %290 = vmatpush1.xpose.msra.mxu0 0.0
    %291 = vmatprep.subr.mxu0 0.0
    %292 = vmatpush1.xpose.msra.mxu0 0.0
    %293 = vmatprep.subr.mxu0 0.0
    %294 = vmatpush1.xpose.msra.mxu0 0.0
    %295 = vmatprep.subr.mxu0 0.0
    %296 = vmatpush1.xpose.msra.mxu0 0.0
    %297 = vmatprep.subr.mxu0 0.0
    %298 = vmatpush1.xpose.msra.mxu0 0.0
    %299 = vmatprep.subr.mxu0 0.0
    %300 = vmatpush1.xpose.msra.mxu0 0.0
    %301 = vmatprep.subr.mxu0 0.0
    %302 = vmatpush1.xpose.msra.mxu0 %v283
    %303 = vmatprep.subr.mxu0 0.0
    %304 = vmatpush1.xpose.msra.mxu0 %v280
    %305 = vmatprep.subr.mxu0 0.0
    %306 = vmatpush1.xpose.msra.mxu0 %v277
    %307 = vmatprep.subr.mxu0 0.0
    %308 = vmatpush1.xpose.msra.mxu0 %v274
    %309 = vmatprep.subr.mxu0 0.0
    %310 = vmatpush1.xpose.msra.mxu0 %v271
    %311 = vmatprep.subr.mxu0 0.0
    %312 = vmatpush1.xpose.msra.mxu0 %v268
    %313 = vmatprep.subr.mxu0 0.0
    %314 = vmatpush1.xpose.msra.mxu0 %v265
    %315 = vmatprep.subr.mxu0 0.0
    %316 = vmatpush1.xpose.msra.mxu0 %v262
    %317 = vmatprep.subr.mxu0 0.0
    %318 = vmatpush2.xpose.msra.mxu0 0.0
    %319 = vmatprep.subr.mxu0 0.0
    %320 = vmatpush2.xpose.msra.mxu0 0.0
    %321 = vmatprep.subr.mxu0 0.0
    %322 = vmatpush2.xpose.msra.mxu0 0.0
    %323 = vmatprep.subr.mxu0 0.0
    %324 = vmatpush2.xpose.msra.mxu0 0.0
    %325 = vmatprep.subr.mxu0 0.0
    %326 = vmatpush2.xpose.msra.mxu0 0.0
    %327 = vmatprep.subr.mxu0 0.0
    %328 = vmatpush2.xpose.msra.mxu0 0.0
    %329 = vmatprep.subr.mxu0 0.0
    %330 = vmatpush2.xpose.msra.mxu0 0.0
    %331 = vmatprep.subr.mxu0 0.0
    %332 = vmatpush2.xpose.msra.mxu0 0.0
    %333 = vmatprep.subr.mxu0 0.0
    %334 = vmatpush2.xpose.msra.mxu0 0.0
    %335 = vmatprep.subr.mxu0 0.0
    %336 = vmatpush2.xpose.msra.mxu0 0.0
    %337 = vmatprep.subr.mxu0 0.0
    %338 = vmatpush2.xpose.msra.mxu0 0.0
    %339 = vmatprep.subr.mxu0 0.0
    %340 = vmatpush2.xpose.msra.mxu0 0.0
    %341 = vmatprep.subr.mxu0 0.0
    %342 = vmatpush2.xpose.msra.mxu0 0.0
    %343 = vmatprep.subr.mxu0 0.0
    %344 = vmatpush2.xpose.msra.mxu0 0.0
    %345 = vmatprep.subr.mxu0 0.0
    %346 = vmatpush2.xpose.msra.mxu0 0.0
    %347 = vmatprep.subr.mxu0 0.0
    %348 = vmatpush2.xpose.msra.mxu0 0.0
    %349 = vmatprep.mubr.f32.mxu0 0.0
    %350 = vmatmul.mubr.f32.gmra.mxu0 %v250
    %v351 = vpop.f32.mrf.mxu0
    %v352 = vadd.f32 0.0, %v351
    %v353 = vpop.f32.mrf.mxu0
    %354 = vmatprep.mubr.f32.mxu0 0.0
    %355 = vmatmul.mubr.f32.gmra.mxu0 %v253
    %v356 = vpop.f32.mrf.mxu0
    %v357 = vadd.f32 0.0, %v356
    %v358 = vpop.f32.mrf.mxu0
    %359 = vmatprep.mubr.f32.mxu0 0.0
    %360 = vmatmul.mubr.f32.gmra.mxu0 %v256
    %v361 = vpop.f32.mrf.mxu0
    %v362 = vadd.f32 0.0, %v361
    %v363 = vpop.f32.mrf.mxu0
    %364 = vmatprep.mubr.f32.mxu0 0.0
    %365 = vmatmul.mubr.f32.gmra.mxu0 %v259
    %v366 = vpop.f32.mrf.mxu0
    %v367 = vadd.f32 0.0, %v366
    %v368 = vpop.f32.mrf.mxu0
    %369 = vdwg.mxu0
    %v370 = vmul.f32 %v222, %v222
    %v371 = vmul.f32 %v227, %v227
    %v372 = vmul.f32 %v232, %v232
    %v373 = vmul.f32 %v237, %v237
    %v374 = vsel %vm248, %v370, 0.0
    %375 = vadd.xlane.f32.xlu0 %v374
    %v376 = vpop.xlane.xlu0 %375
    %v377 = vsel %vm248, %v371, 0.0
    %378 = vadd.xlane.f32.xlu0 %v377
    %v379 = vpop.xlane.xlu0 %378
    %v380 = vsel %vm248, %v372, 0.0
    %381 = vadd.xlane.f32.xlu0 %v380
    %v382 = vpop.xlane.xlu0 %381
    %v383 = vsel %vm248, %v373, 0.0
    %384 = vadd.xlane.f32.xlu0 %v383
    %v385 = vpop.xlane.xlu0 %384
    %v386 = vmul.f32 %v352, 2.0
    %v387 = vmul.f32 %v357, 2.0
    %v388 = vmul.f32 %v362, 2.0
    %v389 = vmul.f32 %v367, 2.0
    %v390 = vsub.f32 %v376, %v386
    %v391 = vsub.f32 %v379, %v387
    %v392 = vsub.f32 %v382, %v388
    %v393 = vsub.f32 %v385, %v389
    %v394 = vld [vmem:[%s9] sm:$0x1]
    %v396 = vlaneseq
    %v397 = vshrl.u32 %v396, 7
    %v398 = vsub.s32 0, %v397
    %v399 = vrot.slane %v394, %v398
    %v401 = vadd.f32 %v390, %v399
    %v402 = vadd.f32 %v391, %v399
    %v403 = vadd.f32 %v392, %v399
    %v404 = vadd.f32 %v393, %v399
    %v405 = vlaneseq
    %v406 = vand.u32 %v405, 127
    %v407 = vcvt.s32.f32 %v406
    %vm408 = vcmask 523264
    %v409 = vsel %vm408, %v401, inf
    %410 = vmin.xlane.f32.xlu0 %v409
    %v411 = vpop.xlane.xlu0 %410
    %v412 = vsel %vm408, %v402, inf
    %413 = vmin.xlane.f32.xlu0 %v412
    %v414 = vpop.xlane.xlu0 %413
    %v415 = vsel %vm408, %v403, inf
    %416 = vmin.xlane.f32.xlu0 %v415
    %v417 = vpop.xlane.xlu0 %416
    %v418 = vsel %vm408, %v404, inf
    %419 = vmin.xlane.f32.xlu0 %v418
    %v420 = vpop.xlane.xlu0 %419
    %vm421 = vcmp.le.f32.partialorder %v401, %v411
    %vm422 = vcmp.le.f32.partialorder %v402, %v414
    %vm423 = vcmp.le.f32.partialorder %v403, %v417
    %vm424 = vcmp.le.f32.partialorder %v404, %v420
    %v425 = vsel %vm421, %v407, 64.0
    %v426 = vsel %vm422, %v407, 64.0
    %v427 = vsel %vm423, %v407, 64.0
    %v428 = vsel %vm424, %v407, 64.0
    %v429 = vsel %vm408, %v425, inf
    %430 = vmin.xlane.f32.xlu0 %v429
    %v431 = vpop.xlane.xlu0 %430
    %v432 = vsel %vm408, %v426, inf
    %433 = vmin.xlane.f32.xlu0 %v432
    %v434 = vpop.xlane.xlu0 %433
    %v435 = vsel %vm408, %v427, inf
    %436 = vmin.xlane.f32.xlu0 %v435
    %v437 = vpop.xlane.xlu0 %436
    %v438 = vsel %vm408, %v428, inf
    %439 = vmin.xlane.f32.xlu0 %v438
    %v440 = vpop.xlane.xlu0 %439
    %vm441 = vcmp.eq.f32.partialorder %v407, %v431
    %vm442 = vcmp.eq.f32.partialorder %v407, %v434
    %vm443 = vcmp.eq.f32.partialorder %v407, %v437
    %vm444 = vcmp.eq.f32.partialorder %v407, %v440
    %v445 = vsel %vm441, 1, 0
    %v446 = vsel %vm442, 1, 0
    %v447 = vsel %vm443, 1, 0
    %v448 = vsel %vm444, 1, 0
    %v449 = vcvt.s32.f32 %v445
    %v450 = vcvt.s32.f32 %v446
    %v451 = vcvt.s32.f32 %v447
    %v452 = vcvt.s32.f32 %v448
    %v454 = vsel %vm408, %v449, 0
    %v457 = vsel %vm408, %v450, 0
    %v460 = vsel %vm408, %v451, 0
    %v463 = vsel %vm408, %v452, 0
    %465 = vmatprep.subr.mxu0 0.0
    %466 = vmatpush1.msra.mxu0 0.0
    %467 = vmatprep.subr.mxu0 0.0
    %468 = vmatpush1.msra.mxu0 0.0
    %469 = vmatprep.subr.mxu0 0.0
    %470 = vmatpush1.msra.mxu0 0.0
    %471 = vmatprep.subr.mxu0 0.0
    %472 = vmatpush1.msra.mxu0 0.0
    %473 = vmatprep.subr.mxu0 0.0
    %474 = vmatpush1.msra.mxu0 0.0
    %475 = vmatprep.subr.mxu0 0.0
    %476 = vmatpush1.msra.mxu0 0.0
    %477 = vmatprep.subr.mxu0 0.0
    %478 = vmatpush1.msra.mxu0 0.0
    %479 = vmatprep.subr.mxu0 0.0
    %480 = vmatpush1.msra.mxu0 0.0
    %481 = vmatprep.subr.mxu0 0.0
    %482 = vmatpush1.msra.mxu0 %v247
    %483 = vmatprep.subr.mxu0 0.0
    %484 = vmatpush1.msra.mxu0 %v246
    %485 = vmatprep.subr.mxu0 0.0
    %486 = vmatpush1.msra.mxu0 %v245
    %487 = vmatprep.subr.mxu0 0.0
    %488 = vmatpush1.msra.mxu0 %v244
    %489 = vmatprep.subr.mxu0 0.0
    %490 = vmatpush1.msra.mxu0 %v243
    %491 = vmatprep.subr.mxu0 0.0
    %492 = vmatpush1.msra.mxu0 %v242
    %493 = vmatprep.subr.mxu0 0.0
    %494 = vmatpush1.msra.mxu0 %v241
    %495 = vmatprep.subr.mxu0 0.0
    %496 = vmatpush1.msra.mxu0 %v240
    %497 = vmatprep.subr.mxu0 0.0
    %498 = vmatpush2.msra.mxu0 0.0
    %499 = vmatprep.subr.mxu0 0.0
    %500 = vmatpush2.msra.mxu0 0.0
    %501 = vmatprep.subr.mxu0 0.0
    %502 = vmatpush2.msra.mxu0 0.0
    %503 = vmatprep.subr.mxu0 0.0
    %504 = vmatpush2.msra.mxu0 0.0
    %505 = vmatprep.subr.mxu0 0.0
    %506 = vmatpush2.msra.mxu0 0.0
    %507 = vmatprep.subr.mxu0 0.0
    %508 = vmatpush2.msra.mxu0 0.0
    %509 = vmatprep.subr.mxu0 0.0
    %510 = vmatpush2.msra.mxu0 0.0
    %511 = vmatprep.subr.mxu0 0.0
    %512 = vmatpush2.msra.mxu0 0.0
    %513 = vmatprep.subr.mxu0 0.0
    %514 = vmatpush2.msra.mxu0 0.0
    %515 = vmatprep.subr.mxu0 0.0
    %516 = vmatpush2.msra.mxu0 0.0
    %517 = vmatprep.subr.mxu0 0.0
    %518 = vmatpush2.msra.mxu0 0.0
    %519 = vmatprep.subr.mxu0 0.0
    %520 = vmatpush2.msra.mxu0 0.0
    %521 = vmatprep.subr.mxu0 0.0
    %522 = vmatpush2.msra.mxu0 0.0
    %523 = vmatprep.subr.mxu0 0.0
    %524 = vmatpush2.msra.mxu0 0.0
    %525 = vmatprep.subr.mxu0 0.0
    %526 = vmatpush2.msra.mxu0 0.0
    %527 = vmatprep.subr.mxu0 0.0
    %528 = vmatpush2.msra.mxu0 0.0
    %529 = vmatprep.mubr.f32.mxu0 0.0
    %530 = vmatmul.mubr.f32.gmra.mxu0 %v454
    %v531 = vpop.f32.mrf.mxu0
    %v532 = vadd.f32 0.0, %v531
    %v533 = vpop.f32.mrf.mxu0
    %534 = vmatprep.mubr.f32.mxu0 0.0
    %535 = vmatmul.mubr.f32.gmra.mxu0 %v457
    %v536 = vpop.f32.mrf.mxu0
    %v537 = vadd.f32 0.0, %v536
    %v538 = vpop.f32.mrf.mxu0
    %539 = vmatprep.mubr.f32.mxu0 0.0
    %540 = vmatmul.mubr.f32.gmra.mxu0 %v460
    %v541 = vpop.f32.mrf.mxu0
    %v542 = vadd.f32 0.0, %v541
    %v543 = vpop.f32.mrf.mxu0
    %544 = vmatprep.mubr.f32.mxu0 0.0
    %545 = vmatmul.mubr.f32.gmra.mxu0 %v463
    %v546 = vpop.f32.mrf.mxu0
    %v547 = vadd.f32 0.0, %v546
    %v548 = vpop.f32.mrf.mxu0
    %549 = vdwg.mxu0
    %v550 = vrsqrt.pop %v376
    %v551 = vmul.f32 %v376, %v550
    %vm552 = vcmp.eq.f32.partialorder %v376, inf
    %v553 = vsel %vm552, %v376, %v551
    %vm554 = vcmp.eq.f32.partialorder %v376, 0.0
    %v555 = vand.u32 %v376, 2147483648
    %v556 = vsel %vm554, %v555, %v553
    %v557 = vrsqrt.pop %v379
    %v558 = vmul.f32 %v379, %v557
    %vm559 = vcmp.eq.f32.partialorder %v379, inf
    %v560 = vsel %vm559, %v379, %v558
    %vm561 = vcmp.eq.f32.partialorder %v379, 0.0
    %v562 = vand.u32 %v379, 2147483648
    %v563 = vsel %vm561, %v562, %v560
    %v564 = vrsqrt.pop %v382
    %v565 = vmul.f32 %v382, %v564
    %vm566 = vcmp.eq.f32.partialorder %v382, inf
    %v567 = vsel %vm566, %v382, %v565
    %vm568 = vcmp.eq.f32.partialorder %v382, 0.0
    %v569 = vand.u32 %v382, 2147483648
    %v570 = vsel %vm568, %v569, %v567
    %v571 = vrsqrt.pop %v385
    %v572 = vmul.f32 %v385, %v571
    %vm573 = vcmp.eq.f32.partialorder %v385, inf
    %v574 = vsel %vm573, %v385, %v572
    %vm575 = vcmp.eq.f32.partialorder %v385, 0.0
    %v576 = vand.u32 %v385, 2147483648
    %v577 = vsel %vm575, %v576, %v574
    %v578 = vmul.f32 %v532, %v532
    %v579 = vmul.f32 %v537, %v537
    %v580 = vmul.f32 %v542, %v542
    %v581 = vmul.f32 %v547, %v547
    %v582 = vsel %vm248, %v578, 0.0
    %583 = vadd.xlane.f32.xlu0 %v582
    %v584 = vpop.xlane.xlu0 %583
    %v585 = vsel %vm248, %v579, 0.0
    %586 = vadd.xlane.f32.xlu0 %v585
    %v587 = vpop.xlane.xlu0 %586
    %v588 = vsel %vm248, %v580, 0.0
    %589 = vadd.xlane.f32.xlu0 %v588
    %v590 = vpop.xlane.xlu0 %589
    %v591 = vsel %vm248, %v581, 0.0
    %592 = vadd.xlane.f32.xlu0 %v591
    %v593 = vpop.xlane.xlu0 %592
    %v594 = vrsqrt.pop %v584
    %v595 = vmul.f32 %v584, %v594
    %vm596 = vcmp.eq.f32.partialorder %v584, inf
    %v597 = vsel %vm596, %v584, %v595
    %vm598 = vcmp.eq.f32.partialorder %v584, 0.0
    %v599 = vand.u32 %v584, 2147483648
    %v600 = vsel %vm598, %v599, %v597
    %v601 = vrsqrt.pop %v587
    %v602 = vmul.f32 %v587, %v601
    %vm603 = vcmp.eq.f32.partialorder %v587, inf
    %v604 = vsel %vm603, %v587, %v602
    %vm605 = vcmp.eq.f32.partialorder %v587, 0.0
    %v606 = vand.u32 %v587, 2147483648
    %v607 = vsel %vm605, %v606, %v604
    %v608 = vrsqrt.pop %v590
    %v609 = vmul.f32 %v590, %v608
    %vm610 = vcmp.eq.f32.partialorder %v590, inf
    %v611 = vsel %vm610, %v590, %v609
    %vm612 = vcmp.eq.f32.partialorder %v590, 0.0
    %v613 = vand.u32 %v590, 2147483648
    %v614 = vsel %vm612, %v613, %v611
    %v615 = vrsqrt.pop %v593
    %v616 = vmul.f32 %v593, %v615
    %vm617 = vcmp.eq.f32.partialorder %v593, inf
    %v618 = vsel %vm617, %v593, %v616
    %vm619 = vcmp.eq.f32.partialorder %v593, 0.0
    %v620 = vand.u32 %v593, 2147483648
    %v621 = vsel %vm619, %v620, %v618
    %v622 = vmax.f32 %v556, 1e-06
    %v623 = vmax.f32 %v563, 1e-06
    %v624 = vmax.f32 %v570, 1e-06
    %v625 = vmax.f32 %v577, 1e-06
    %v626 = vrcp.pop %v622
    %v627 = vmul.f32 %v222, %v626
    %v628 = vrcp.pop %v623
    %v629 = vmul.f32 %v227, %v628
    %v630 = vrcp.pop %v624
    %v631 = vmul.f32 %v232, %v630
    %v632 = vrcp.pop %v625
    %v633 = vmul.f32 %v237, %v632
    %v634 = vmax.f32 %v600, 1e-06
    %v635 = vmax.f32 %v607, 1e-06
    %v636 = vmax.f32 %v614, 1e-06
    %v637 = vmax.f32 %v621, 1e-06
    %v638 = vrcp.pop %v634
    %v639 = vmul.f32 %v532, %v638
    %v640 = vrcp.pop %v635
    %v641 = vmul.f32 %v537, %v640
    %v642 = vrcp.pop %v636
    %v643 = vmul.f32 %v542, %v642
    %v644 = vrcp.pop %v637
    %v645 = vmul.f32 %v547, %v644
    %v646 = vadd.f32 %v627, %v639
    %v647 = vadd.f32 %v629, %v641
    %v648 = vadd.f32 %v631, %v643
    %v649 = vadd.f32 %v633, %v645
    %v650 = vmul.f32 %v646, %v646
    %v651 = vmul.f32 %v647, %v647
    %v652 = vmul.f32 %v648, %v648
    %v653 = vmul.f32 %v649, %v649
    %v654 = vsel %vm248, %v650, 0.0
    %655 = vadd.xlane.f32.xlu0 %v654
    %v656 = vpop.xlane.xlu0 %655
    %v657 = vsel %vm248, %v651, 0.0
    %658 = vadd.xlane.f32.xlu0 %v657
    %v659 = vpop.xlane.xlu0 %658
    %v660 = vsel %vm248, %v652, 0.0
    %661 = vadd.xlane.f32.xlu0 %v660
    %v662 = vpop.xlane.xlu0 %661
    %v663 = vsel %vm248, %v653, 0.0
    %664 = vadd.xlane.f32.xlu0 %v663
    %v665 = vpop.xlane.xlu0 %664
    %v666 = vrsqrt.pop %v656
    %v667 = vmul.f32 %v656, %v666
    %vm668 = vcmp.eq.f32.partialorder %v656, inf
    %v669 = vsel %vm668, %v656, %v667
    %vm670 = vcmp.eq.f32.partialorder %v656, 0.0
    %v671 = vand.u32 %v656, 2147483648
    %v672 = vsel %vm670, %v671, %v669
    %v673 = vrsqrt.pop %v659
    %v674 = vmul.f32 %v659, %v673
    %vm675 = vcmp.eq.f32.partialorder %v659, inf
    %v676 = vsel %vm675, %v659, %v674
    %vm677 = vcmp.eq.f32.partialorder %v659, 0.0
    %v678 = vand.u32 %v659, 2147483648
    %v679 = vsel %vm677, %v678, %v676
    %v680 = vrsqrt.pop %v662
    %v681 = vmul.f32 %v662, %v680
    %vm682 = vcmp.eq.f32.partialorder %v662, inf
    %v683 = vsel %vm682, %v662, %v681
    %vm684 = vcmp.eq.f32.partialorder %v662, 0.0
    %v685 = vand.u32 %v662, 2147483648
    %v686 = vsel %vm684, %v685, %v683
    %v687 = vrsqrt.pop %v665
    %v688 = vmul.f32 %v665, %v687
    %vm689 = vcmp.eq.f32.partialorder %v665, inf
    %v690 = vsel %vm689, %v665, %v688
    %vm691 = vcmp.eq.f32.partialorder %v665, 0.0
    %v692 = vand.u32 %v665, 2147483648
    %v693 = vsel %vm691, %v692, %v690
    %v694 = vmax.f32 %v672, 1e-06
    %v695 = vmax.f32 %v679, 1e-06
    %v696 = vmax.f32 %v686, 1e-06
    %v697 = vmax.f32 %v693, 1e-06
    %v698 = vrcp.pop %v694
    %v699 = vmul.f32 %v646, %v698
    %v700 = vrcp.pop %v695
    %v701 = vmul.f32 %v647, %v700
    %v702 = vrcp.pop %v696
    %v703 = vmul.f32 %v648, %v702
    %v704 = vrcp.pop %v697
    %v705 = vmul.f32 %v649, %v704
    %v706 = vmul.f32 %v222, %v699
    %v707 = vmul.f32 %v227, %v701
    %v708 = vmul.f32 %v232, %v703
    %v709 = vmul.f32 %v237, %v705
    %v710 = vsel %vm248, %v706, 0.0
    %711 = vadd.xlane.f32.xlu0 %v710
    %v712 = vpop.xlane.xlu0 %711
    %v713 = vsel %vm248, %v707, 0.0
    %714 = vadd.xlane.f32.xlu0 %v713
    %v715 = vpop.xlane.xlu0 %714
    %v716 = vsel %vm248, %v708, 0.0
    %717 = vadd.xlane.f32.xlu0 %v716
    %v718 = vpop.xlane.xlu0 %717
    %v719 = vsel %vm248, %v709, 0.0
    %720 = vadd.xlane.f32.xlu0 %v719
    %v721 = vpop.xlane.xlu0 %720
    %v722 = vmul.f32 %v712, 2.0
    %v723 = vmul.f32 %v715, 2.0
    %v724 = vmul.f32 %v718, 2.0
    %v725 = vmul.f32 %v721, 2.0
    %v726 = vmul.f32 %v722, %v699
    %v727 = vmul.f32 %v723, %v701
    %v728 = vmul.f32 %v724, %v703
    %v729 = vmul.f32 %v725, %v705
    %v730 = vsub.f32 %v222, %v726
    %v731 = vsub.f32 %v227, %v727
    %v732 = vsub.f32 %v232, %v728
    %v733 = vsub.f32 %v237, %v729
    %v734 = vmul.f32 %v222, %v627
    %v735 = vmul.f32 %v227, %v629
    %v736 = vmul.f32 %v232, %v631
    %v737 = vmul.f32 %v237, %v633
    %v738 = vsel %vm248, %v734, 0.0
    %739 = vadd.xlane.f32.xlu0 %v738
    %v740 = vpop.xlane.xlu0 %739
    %v741 = vsel %vm248, %v735, 0.0
    %742 = vadd.xlane.f32.xlu0 %v741
    %v743 = vpop.xlane.xlu0 %742
    %v744 = vsel %vm248, %v736, 0.0
    %745 = vadd.xlane.f32.xlu0 %v744
    %v746 = vpop.xlane.xlu0 %745
    %v747 = vsel %vm248, %v737, 0.0
    %748 = vadd.xlane.f32.xlu0 %v747
    %v749 = vpop.xlane.xlu0 %748
    %v750 = vmul.f32 %v740, 2.0
    %v751 = vmul.f32 %v743, 2.0
    %v752 = vmul.f32 %v746, 2.0
    %v753 = vmul.f32 %v749, 2.0
    %v754 = vmul.f32 %v750, %v639
    %v755 = vmul.f32 %v751, %v641
    %v756 = vmul.f32 %v752, %v643
    %v757 = vmul.f32 %v753, %v645
    %v758 = vadd.f32 %v730, %v754
    %v759 = vadd.f32 %v731, %v755
    %v760 = vadd.f32 %v732, %v756
    %v761 = vadd.f32 %v733, %v757
    %v762 = vmul.f32 %v600, %v626
    %v763 = vmul.f32 %v607, %v628
    %v764 = vmul.f32 %v614, %v630
    %v765 = vmul.f32 %v621, %v632
    %v766 = vmul.f32 %v758, %v762
    %v767 = vmul.f32 %v759, %v763
    %v768 = vmul.f32 %v760, %v764
    %v769 = vmul.f32 %v761, %v765
    %v770 = vsub.f32 %v532, %v222
    %v771 = vsub.f32 %v537, %v227
    %v772 = vsub.f32 %v542, %v232
    %v773 = vsub.f32 %v547, %v237
    %v774 = vmul.f32 %v770, %v770
    %v775 = vmul.f32 %v771, %v771
    %v776 = vmul.f32 %v772, %v772
    %v777 = vmul.f32 %v773, %v773
    %v778 = vsel %vm248, %v774, 0.0
    %779 = vadd.xlane.f32.xlu0 %v778
    %v780 = vpop.xlane.xlu0 %779
    %v781 = vsel %vm248, %v775, 0.0
    %782 = vadd.xlane.f32.xlu0 %v781
    %v783 = vpop.xlane.xlu0 %782
    %v784 = vsel %vm248, %v776, 0.0
    %785 = vadd.xlane.f32.xlu0 %v784
    %v786 = vpop.xlane.xlu0 %785
    %v787 = vsel %vm248, %v777, 0.0
    %788 = vadd.xlane.f32.xlu0 %v787
    %v789 = vpop.xlane.xlu0 %788
    %v790 = vadd.f32 %v780, %v783
    %v791 = vadd.f32 %v790, %v786
    %v792 = vadd.f32 %v791, %v789
    %v793 = vrot.slane %v792, 4
    %v794 = vadd.f32 %v792, %v793
    %v795 = vrot.slane %v794, 2
    %v796 = vadd.f32 %v794, %v795
    %v797 = vrot.slane %v796, 1
    %v798 = vadd.f32 %v796, %v797
    %v799 = vmul.f32 %v798, 0.0009765625
    %v800 = vld [vmem:[%s11] sm:$0x1]
    %vm803 = vcmask 1040384
    %v804 = vrot.slane %v766, 7
    %v805 = vrot.slane %v767, 7
    %v806 = vsel %vm803, %v804, %v805
    %v811 = vrot.slane %v768, 7
    %v812 = vrot.slane %v769, 7
    %v813 = vsel %vm803, %v811, %v812
    %v816 = vsel %vm803, %v800, %v804
    %v817 = vsel %vm803, %v800, %v811
    %v818 = vld [vmem:[%s13] sm:$0xff]
    %v819 = vld [vmem:[%s13 + $0x8] sm:$0xff]
    %v820 = vld [vmem:[%s13 + $0x10] sm:$0xff]
    %v821 = vld [vmem:[%s13 + $0x18] sm:$0xff]
    %v822 = vld [vmem:[%s15] sm:$0xff]
    %v823 = vld [vmem:[%s15 + $0x8] sm:$0xff]
    %v824 = vld [vmem:[%s15 + $0x10] sm:$0xff]
    %v825 = vld [vmem:[%s15 + $0x18] sm:$0xff]
    %v826 = vld [vmem:[%s17] sm:$0xf]
    %v827 = vld [vmem:[%s17 + $0x4] sm:$0xf]
    %v828 = vld [vmem:[%s17 + $0x8] sm:$0xf]
    %v829 = vld [vmem:[%s17 + $0xc] sm:$0xf]
    %v830 = vld [vmem:[%s17 + $0x10] sm:$0xf]
    %v831 = vld [vmem:[%s17 + $0x14] sm:$0xf]
    %v832 = vld [vmem:[%s17 + $0x18] sm:$0xf]
    %v833 = vld [vmem:[%s17 + $0x1c] sm:$0xf]
    %v834 = vlaneseq
    %v835 = vshrl.u32 %v834, 7
    %v836 = vadd.s32 %v835, 8
    %v837 = vadd.s32 %v835, 16
    %v838 = vadd.s32 %v835, 24
    %v839 = vadd.s32 %v835, 32
    %v840 = vadd.s32 %v835, 40
    %v841 = vadd.s32 %v835, 48
    %v842 = vadd.s32 %v835, 56
    %v843 = vadd.s32 %v835, 64
    %v844 = vadd.s32 %v835, 72
    %v845 = vadd.s32 %v835, 80
    %v846 = vadd.s32 %v835, 88
    %v847 = vadd.s32 %v835, 96
    %v848 = vadd.s32 %v835, 104
    %v849 = vadd.s32 %v835, 112
    %v850 = vadd.s32 %v835, 120
    %v851 = vshra.s32 %v835, 4
    %v852 = vshra.s32 %v836, 4
    %v853 = vshra.s32 %v837, 4
    %v854 = vshra.s32 %v838, 4
    %v855 = vshra.s32 %v839, 4
    %v856 = vshra.s32 %v840, 4
    %v857 = vshra.s32 %v841, 4
    %v858 = vshra.s32 %v842, 4
    %v859 = vshra.s32 %v843, 4
    %v860 = vshra.s32 %v844, 4
    %v861 = vshra.s32 %v845, 4
    %v862 = vshra.s32 %v846, 4
    %v863 = vshra.s32 %v847, 4
    %v864 = vshra.s32 %v848, 4
    %v865 = vshra.s32 %v849, 4
    %v866 = vshra.s32 %v850, 4
    %v867 = vand.u32 %v835, 15
    %v868 = vand.u32 %v836, 15
    %v869 = vand.u32 %v837, 15
    %v870 = vand.u32 %v838, 15
    %v871 = vand.u32 %v839, 15
    %v872 = vand.u32 %v840, 15
    %v873 = vand.u32 %v841, 15
    %v874 = vand.u32 %v842, 15
    %v875 = vand.u32 %v843, 15
    %v876 = vand.u32 %v844, 15
    %v877 = vand.u32 %v845, 15
    %v878 = vand.u32 %v846, 15
    %v879 = vand.u32 %v847, 15
    %v880 = vand.u32 %v848, 15
    %v881 = vand.u32 %v849, 15
    %v882 = vand.u32 %v850, 15
    %v883 = vshra.s32 %v406, 4
    %v884 = vand.u32 %v406, 15
    %vm885 = vcmp.eq.s32.totalorder %v851, %v883
    %vm886 = vcmp.eq.s32.totalorder %v852, %v883
    %vm887 = vcmp.eq.s32.totalorder %v853, %v883
    %vm888 = vcmp.eq.s32.totalorder %v854, %v883
    %vm889 = vcmp.eq.s32.totalorder %v855, %v883
    %vm890 = vcmp.eq.s32.totalorder %v856, %v883
    %vm891 = vcmp.eq.s32.totalorder %v857, %v883
    %vm892 = vcmp.eq.s32.totalorder %v858, %v883
    %vm893 = vcmp.eq.s32.totalorder %v859, %v883
    %vm894 = vcmp.eq.s32.totalorder %v860, %v883
    %vm895 = vcmp.eq.s32.totalorder %v861, %v883
    %vm896 = vcmp.eq.s32.totalorder %v862, %v883
    %vm897 = vcmp.eq.s32.totalorder %v863, %v883
    %vm898 = vcmp.eq.s32.totalorder %v864, %v883
    %vm899 = vcmp.eq.s32.totalorder %v865, %v883
    %vm900 = vcmp.eq.s32.totalorder %v866, %v883
    %vm901 = vcmp.le.s32.totalorder %v884, %v867
    %vm902 = vcmp.le.s32.totalorder %v884, %v868
    %vm903 = vcmp.le.s32.totalorder %v884, %v869
    %vm904 = vcmp.le.s32.totalorder %v884, %v870
    %vm905 = vcmp.le.s32.totalorder %v884, %v871
    %vm906 = vcmp.le.s32.totalorder %v884, %v872
    %vm907 = vcmp.le.s32.totalorder %v884, %v873
    %vm908 = vcmp.le.s32.totalorder %v884, %v874
    %vm909 = vcmp.le.s32.totalorder %v884, %v875
    %vm910 = vcmp.le.s32.totalorder %v884, %v876
    %vm911 = vcmp.le.s32.totalorder %v884, %v877
    %vm912 = vcmp.le.s32.totalorder %v884, %v878
    %vm913 = vcmp.le.s32.totalorder %v884, %v879
    %vm914 = vcmp.le.s32.totalorder %v884, %v880
    %vm915 = vcmp.le.s32.totalorder %v884, %v881
    %vm916 = vcmp.le.s32.totalorder %v884, %v882
    %vm917 = vmand %vm885, %vm901
    %vm918 = vmand %vm886, %vm902
    %vm919 = vmand %vm887, %vm903
    %vm920 = vmand %vm888, %vm904
    %vm921 = vmand %vm889, %vm905
    %vm922 = vmand %vm890, %vm906
    %vm923 = vmand %vm891, %vm907
    %vm924 = vmand %vm892, %vm908
    %vm925 = vmand %vm893, %vm909
    %vm926 = vmand %vm894, %vm910
    %vm927 = vmand %vm895, %vm911
    %vm928 = vmand %vm896, %vm912
    %vm929 = vmand %vm897, %vm913
    %vm930 = vmand %vm898, %vm914
    %vm931 = vmand %vm899, %vm915
    %vm932 = vmand %vm900, %vm916
    %v933 = vsel %vm917, 0.0, -1e+30
    %v934 = vsel %vm918, 0.0, -1e+30
    %v935 = vsel %vm919, 0.0, -1e+30
    %v936 = vsel %vm920, 0.0, -1e+30
    %v937 = vsel %vm921, 0.0, -1e+30
    %v938 = vsel %vm922, 0.0, -1e+30
    %v939 = vsel %vm923, 0.0, -1e+30
    %v940 = vsel %vm924, 0.0, -1e+30
    %v941 = vsel %vm925, 0.0, -1e+30
    %v942 = vsel %vm926, 0.0, -1e+30
    %v943 = vsel %vm927, 0.0, -1e+30
    %v944 = vsel %vm928, 0.0, -1e+30
    %v945 = vsel %vm929, 0.0, -1e+30
    %v946 = vsel %vm930, 0.0, -1e+30
    %v947 = vsel %vm931, 0.0, -1e+30
    %v948 = vsel %vm932, 0.0, -1e+30
    %v949 = vld [vmem:[%s19] sm:$0x1]
    %v950 = vld [vmem:[%s21] sm:$0x1]
    %v951 = vsel %vm248, %v816, 0.0
    %952 = vadd.xlane.f32.xlu0 %v951
    %v953 = vpop.xlane.xlu0 %952
    %v954 = vsel %vm248, %v806, 0.0
    %955 = vadd.xlane.f32.xlu0 %v954
    %v956 = vpop.xlane.xlu0 %955
    %v957 = vsel %vm248, %v817, 0.0
    %958 = vadd.xlane.f32.xlu0 %v957
    %v959 = vpop.xlane.xlu0 %958
    %v960 = vsel %vm248, %v813, 0.0
    %961 = vadd.xlane.f32.xlu0 %v960
    %v962 = vpop.xlane.xlu0 %961
    %v963 = vrcp.pop 32.0
    %v964 = vmul.f32 %v953, %v963
    %v965 = vmul.f32 %v956, %v963
    %v966 = vmul.f32 %v959, %v963
    %v967 = vmul.f32 %v962, %v963
    %v968 = vsub.f32 %v816, %v964
    %v969 = vsub.f32 %v806, %v965
    %v970 = vsub.f32 %v817, %v966
    %v971 = vsub.f32 %v813, %v967
    %v972 = vmul.f32 %v968, %v968
    %v973 = vmul.f32 %v969, %v969
    %v974 = vmul.f32 %v970, %v970
    %v975 = vmul.f32 %v971, %v971
    %v976 = vsel %vm248, %v972, 0.0
    %977 = vadd.xlane.f32.xlu0 %v976
    %v978 = vpop.xlane.xlu0 %977
    %v979 = vsel %vm248, %v973, 0.0
    %980 = vadd.xlane.f32.xlu0 %v979
    %v981 = vpop.xlane.xlu0 %980
    %v982 = vsel %vm248, %v974, 0.0
    %983 = vadd.xlane.f32.xlu0 %v982
    %v984 = vpop.xlane.xlu0 %983
    %v985 = vsel %vm248, %v975, 0.0
    %986 = vadd.xlane.f32.xlu0 %v985
    %v987 = vpop.xlane.xlu0 %986
    %v988 = vmul.f32 %v978, %v963
    %v989 = vmul.f32 %v981, %v963
    %v990 = vmul.f32 %v984, %v963
    %v991 = vmul.f32 %v987, %v963
    %v992 = vadd.f32 %v988, 1e-05
    %v993 = vadd.f32 %v989, 1e-05
    %v994 = vadd.f32 %v990, 1e-05
    %v995 = vadd.f32 %v991, 1e-05
    %v996 = vrsqrt.pop %v992
    %v997 = vrsqrt.pop %v993
    %v998 = vrsqrt.pop %v994
    %v999 = vrsqrt.pop %v995
    %v1000 = vmul.f32 %v968, %v996
    %v1001 = vmul.f32 %v969, %v997
    %v1002 = vmul.f32 %v970, %v998
    %v1003 = vmul.f32 %v971, %v999
    %v1005 = vlaneseq
    %v1006 = vshrl.u32 %v1005, 7
    %v1007 = vsub.s32 0, %v1006
    %v1008 = vrot.slane %v949, %v1007
    %v1010 = vmul.f32 %v1000, %v1008
    %v1011 = vmul.f32 %v1001, %v1008
    %v1012 = vmul.f32 %v1002, %v1008
    %v1013 = vmul.f32 %v1003, %v1008
    %v1015 = vlaneseq
    %v1016 = vshrl.u32 %v1015, 7
    %v1017 = vsub.s32 0, %v1016
    %v1018 = vrot.slane %v950, %v1017
    %v1020 = vadd.f32 %v1010, %v1018
    %v1021 = vadd.f32 %v1011, %v1018
    %v1022 = vadd.f32 %v1012, %v1018
    %v1023 = vadd.f32 %v1013, %v1018
    %v1024 = vpack.c.bf16 %v1021, %v1020
    %v1025 = vpack.c.bf16 %v1023, %v1022
    %v1026 = vld [vmem:[%s23] sm:$0xf]
    %v1027 = vld [vmem:[%s23 + $0x4] sm:$0xf]
    %v1028 = vld [vmem:[%s23 + $0x8] sm:$0xf]
    %v1029 = vld [vmem:[%s23 + $0xc] sm:$0xf]
    %v1034 = vunpack.c.l.b16 %v1026
    %v1035 = vunpack.c.l.b16 %v1027
    %v1036 = vunpack.c.l.b16 %v1028
    %v1037 = vunpack.c.l.b16 %v1029
    %v1038 = vpack.c.b16 %v1035, %v1034
    %v1039 = vpack.c.b16 %v1037, %v1036
    %v1043 = vsel %vm248, %v1024, 0
    %v1046 = vsel %vm248, %v1025, 0
    %1048 = vmatprep.subr.bf16.mxu0 0
    %1049 = vmatpush1.bf16.msra.mxu0 0
    %1050 = vmatprep.subr.bf16.mxu0 0
    %1051 = vmatpush1.bf16.msra.mxu0 0
    %1052 = vmatprep.subr.bf16.mxu0 0
    %1053 = vmatpush1.bf16.msra.mxu0 0
    %1054 = vmatprep.subr.bf16.mxu0 0
    %1055 = vmatpush1.bf16.msra.mxu0 0
    %1056 = vmatprep.subr.bf16.mxu0 0
    %1057 = vmatpush1.bf16.msra.mxu0 0
    %1058 = vmatprep.subr.bf16.mxu0 0
    %1059 = vmatpush1.bf16.msra.mxu0 0
    %1060 = vmatprep.subr.bf16.mxu0 0
    %1061 = vmatpush1.bf16.msra.mxu0 %v1039
    %1062 = vmatprep.subr.bf16.mxu0 0
    %1063 = vmatpush1.bf16.msra.mxu0 %v1038
    %1064 = vmatprep.subr.bf16.mxu0 0
    %1065 = vmatpush2.bf16.msra.mxu0 0
    %1066 = vmatprep.subr.bf16.mxu0 0
    %1067 = vmatpush2.bf16.msra.mxu0 0
    %1068 = vmatprep.subr.bf16.mxu0 0
    %1069 = vmatpush2.bf16.msra.mxu0 0
    %1070 = vmatprep.subr.bf16.mxu0 0
    %1071 = vmatpush2.bf16.msra.mxu0 0
    %1072 = vmatprep.subr.bf16.mxu0 0
    %1073 = vmatpush2.bf16.msra.mxu0 0
    %1074 = vmatprep.subr.bf16.mxu0 0
    %1075 = vmatpush2.bf16.msra.mxu0 0
    %1076 = vmatprep.subr.bf16.mxu0 0
    %1077 = vmatpush2.bf16.msra.mxu0 0
    %1078 = vmatprep.subr.bf16.mxu0 0
    %1079 = vmatpush2.bf16.msra.mxu0 0
    %1080 = vmatprep.mubr.bf16.mxu0 0
    %1081 = vmatmul.mubr.bf16.gmra.mxu0 %v1043
    %v1082 = vpop.f32.mrf.mxu0
    %v1083 = vadd.f32 0.0, %v1082
    %v1084 = vpop.f32.mrf.mxu0
    %v1085 = vpop.f32.mrf.mxu0
    %v1086 = vadd.f32 0.0, %v1085
    %v1087 = vpop.f32.mrf.mxu0
    %1088 = vmatprep.mubr.bf16.mxu0 0
    %1089 = vmatmul.mubr.bf16.gmra.mxu0 %v1046
    %v1090 = vpop.f32.mrf.mxu0
    %v1091 = vadd.f32 0.0, %v1090
    %v1092 = vpop.f32.mrf.mxu0
    %v1093 = vpop.f32.mrf.mxu0
    %v1094 = vadd.f32 0.0, %v1093
    %v1095 = vpop.f32.mrf.mxu0
    %1096 = vdwg.mxu0
    %v1097 = vld [vmem:[%s25] sm:$0xf]
    %v1098 = vld [vmem:[%s25 + $0x4] sm:$0xf]
    %v1099 = vld [vmem:[%s25 + $0x8] sm:$0xf]
    %v1100 = vld [vmem:[%s25 + $0xc] sm:$0xf]
    %v1105 = vunpack.c.l.b16 %v1097
    %v1106 = vunpack.c.l.b16 %v1098
    %v1107 = vunpack.c.l.b16 %v1099
    %v1108 = vunpack.c.l.b16 %v1100
    %v1109 = vpack.c.b16 %v1106, %v1105
    %v1110 = vpack.c.b16 %v1108, %v1107
    %1113 = vmatprep.subr.bf16.mxu0 0
    %1114 = vmatpush1.bf16.msra.mxu0 0
    %1115 = vmatprep.subr.bf16.mxu0 0
    %1116 = vmatpush1.bf16.msra.mxu0 0
    %1117 = vmatprep.subr.bf16.mxu0 0
    %1118 = vmatpush1.bf16.msra.mxu0 0
    %1119 = vmatprep.subr.bf16.mxu0 0
    %1120 = vmatpush1.bf16.msra.mxu0 0
    %1121 = vmatprep.subr.bf16.mxu0 0
    %1122 = vmatpush1.bf16.msra.mxu0 0
    %1123 = vmatprep.subr.bf16.mxu0 0
    %1124 = vmatpush1.bf16.msra.mxu0 0
    %1125 = vmatprep.subr.bf16.mxu0 0
    %1126 = vmatpush1.bf16.msra.mxu0 %v1110
    %1127 = vmatprep.subr.bf16.mxu0 0
    %1128 = vmatpush1.bf16.msra.mxu0 %v1109
    %1129 = vmatprep.subr.bf16.mxu0 0
    %1130 = vmatpush2.bf16.msra.mxu0 0
    %1131 = vmatprep.subr.bf16.mxu0 0
    %1132 = vmatpush2.bf16.msra.mxu0 0
    %1133 = vmatprep.subr.bf16.mxu0 0
    %1134 = vmatpush2.bf16.msra.mxu0 0
    %1135 = vmatprep.subr.bf16.mxu0 0
    %1136 = vmatpush2.bf16.msra.mxu0 0
    %1137 = vmatprep.subr.bf16.mxu0 0
    %1138 = vmatpush2.bf16.msra.mxu0 0
    %1139 = vmatprep.subr.bf16.mxu0 0
    %1140 = vmatpush2.bf16.msra.mxu0 0
    %1141 = vmatprep.subr.bf16.mxu0 0
    %1142 = vmatpush2.bf16.msra.mxu0 0
    %1143 = vmatprep.subr.bf16.mxu0 0
    %1144 = vmatpush2.bf16.msra.mxu0 0
    %1145 = vmatprep.mubr.bf16.mxu0 0
    %1146 = vmatmul.mubr.bf16.gmra.mxu0 %v1043
    %v1147 = vpop.f32.mrf.mxu0
    %v1148 = vadd.f32 0.0, %v1147
    %v1149 = vpop.f32.mrf.mxu0
    %v1150 = vpop.f32.mrf.mxu0
    %v1151 = vadd.f32 0.0, %v1150
    %v1152 = vpop.f32.mrf.mxu0
    %1153 = vmatprep.mubr.bf16.mxu0 0
    %1154 = vmatmul.mubr.bf16.gmra.mxu0 %v1046
    %v1155 = vpop.f32.mrf.mxu0
    %v1156 = vadd.f32 0.0, %v1155
    %v1157 = vpop.f32.mrf.mxu0
    %v1158 = vpop.f32.mrf.mxu0
    %v1159 = vadd.f32 0.0, %v1158
    %v1160 = vpop.f32.mrf.mxu0
    %1161 = vdwg.mxu0
    %v1162 = vld [vmem:[%s27] sm:$0xf]
    %v1163 = vld [vmem:[%s27 + $0x4] sm:$0xf]
    %v1164 = vld [vmem:[%s27 + $0x8] sm:$0xf]
    %v1165 = vld [vmem:[%s27 + $0xc] sm:$0xf]
    %v1170 = vunpack.c.l.b16 %v1162
    %v1171 = vunpack.c.l.b16 %v1163
    %v1172 = vunpack.c.l.b16 %v1164
    %v1173 = vunpack.c.l.b16 %v1165
    %v1174 = vpack.c.b16 %v1171, %v1170
    %v1175 = vpack.c.b16 %v1173, %v1172
    %1178 = vmatprep.subr.bf16.mxu0 0
    %1179 = vmatpush1.bf16.msra.mxu0 0
    %1180 = vmatprep.subr.bf16.mxu0 0
    %1181 = vmatpush1.bf16.msra.mxu0 0
    %1182 = vmatprep.subr.bf16.mxu0 0
    %1183 = vmatpush1.bf16.msra.mxu0 0
    %1184 = vmatprep.subr.bf16.mxu0 0
    %1185 = vmatpush1.bf16.msra.mxu0 0
    %1186 = vmatprep.subr.bf16.mxu0 0
    %1187 = vmatpush1.bf16.msra.mxu0 0
    %1188 = vmatprep.subr.bf16.mxu0 0
    %1189 = vmatpush1.bf16.msra.mxu0 0
    %1190 = vmatprep.subr.bf16.mxu0 0
    %1191 = vmatpush1.bf16.msra.mxu0 %v1175
    %1192 = vmatprep.subr.bf16.mxu0 0
    %1193 = vmatpush1.bf16.msra.mxu0 %v1174
    %1194 = vmatprep.subr.bf16.mxu0 0
    %1195 = vmatpush2.bf16.msra.mxu0 0
    %1196 = vmatprep.subr.bf16.mxu0 0
    %1197 = vmatpush2.bf16.msra.mxu0 0
    %1198 = vmatprep.subr.bf16.mxu0 0
    %1199 = vmatpush2.bf16.msra.mxu0 0
    %1200 = vmatprep.subr.bf16.mxu0 0
    %1201 = vmatpush2.bf16.msra.mxu0 0
    %1202 = vmatprep.subr.bf16.mxu0 0
    %1203 = vmatpush2.bf16.msra.mxu0 0
    %1204 = vmatprep.subr.bf16.mxu0 0
    %1205 = vmatpush2.bf16.msra.mxu0 0
    %1206 = vmatprep.subr.bf16.mxu0 0
    %1207 = vmatpush2.bf16.msra.mxu0 0
    %1208 = vmatprep.subr.bf16.mxu0 0
    %1209 = vmatpush2.bf16.msra.mxu0 0
    %1210 = vmatprep.mubr.bf16.mxu0 0
    %1211 = vmatmul.mubr.bf16.gmra.mxu0 %v1043
    %v1212 = vpop.f32.mrf.mxu0
    %v1213 = vadd.f32 0.0, %v1212
    %v1214 = vpop.f32.mrf.mxu0
    %v1215 = vpop.f32.mrf.mxu0
    %v1216 = vadd.f32 0.0, %v1215
    %v1217 = vpop.f32.mrf.mxu0
    %1218 = vmatprep.mubr.bf16.mxu0 0
    %1219 = vmatmul.mubr.bf16.gmra.mxu0 %v1046
    %v1220 = vpop.f32.mrf.mxu0
    %v1221 = vadd.f32 0.0, %v1220
    %v1222 = vpop.f32.mrf.mxu0
    %v1223 = vpop.f32.mrf.mxu0
    %v1224 = vadd.f32 0.0, %v1223
    %v1225 = vpop.f32.mrf.mxu0
    %1226 = vdwg.mxu0
    %v1227 = vmul.f32 %v1083, %v818
    %v1228 = vmul.f32 %v1086, %v819
    %v1229 = vmul.f32 %v1091, %v820
    %v1230 = vmul.f32 %v1094, %v821
    %v1231 = vpack.c.bf16 %v1086, %v1083
    %v1232 = vpack.c.bf16 %v1094, %v1091
    %v1241 = vunpack.c.l.b16 %v826
    %v1242 = vunpack.c.l.b16 %v827
    %v1243 = vunpack.c.l.b16 %v828
    %v1244 = vunpack.c.l.b16 %v829
    %v1245 = vunpack.c.l.b16 %v830
    %v1246 = vunpack.c.l.b16 %v831
    %v1247 = vunpack.c.l.b16 %v832
    %v1248 = vunpack.c.l.b16 %v833
    %v1249 = vpack.c.b16 %v1242, %v1241
    %v1250 = vpack.c.b16 %v1244, %v1243
    %v1251 = vpack.c.b16 %v1246, %v1245
    %v1252 = vpack.c.b16 %v1248, %v1247
    %v1258 = vsel %vm408, %v1231, 0
    %v1261 = vsel %vm408, %v1232, 0
    %1263 = vmatprep.subr.bf16.mxu0 0
    %1264 = vmatpush1.bf16.msra.mxu0 0
    %1265 = vmatprep.subr.bf16.mxu0 0
    %1266 = vmatpush1.bf16.msra.mxu0 0
    %1267 = vmatprep.subr.bf16.mxu0 0
    %1268 = vmatpush1.bf16.msra.mxu0 0
    %1269 = vmatprep.subr.bf16.mxu0 0
    %1270 = vmatpush1.bf16.msra.mxu0 0
    %1271 = vmatprep.subr.bf16.mxu0 0
    %1272 = vmatpush1.bf16.msra.mxu0 %v1252
    %1273 = vmatprep.subr.bf16.mxu0 0
    %1274 = vmatpush1.bf16.msra.mxu0 %v1251
    %1275 = vmatprep.subr.bf16.mxu0 0
    %1276 = vmatpush1.bf16.msra.mxu0 %v1250
    %1277 = vmatprep.subr.bf16.mxu0 0
    %1278 = vmatpush1.bf16.msra.mxu0 %v1249
    %1279 = vmatprep.subr.bf16.mxu0 0
    %1280 = vmatpush2.bf16.msra.mxu0 0
    %1281 = vmatprep.subr.bf16.mxu0 0
    %1282 = vmatpush2.bf16.msra.mxu0 0
    %1283 = vmatprep.subr.bf16.mxu0 0
    %1284 = vmatpush2.bf16.msra.mxu0 0
    %1285 = vmatprep.subr.bf16.mxu0 0
    %1286 = vmatpush2.bf16.msra.mxu0 0
    %1287 = vmatprep.subr.bf16.mxu0 0
    %1288 = vmatpush2.bf16.msra.mxu0 0
    %1289 = vmatprep.subr.bf16.mxu0 0
    %1290 = vmatpush2.bf16.msra.mxu0 0
    %1291 = vmatprep.subr.bf16.mxu0 0
    %1292 = vmatpush2.bf16.msra.mxu0 0
    %1293 = vmatprep.subr.bf16.mxu0 0
    %1294 = vmatpush2.bf16.msra.mxu0 0
    %1295 = vmatprep.mubr.bf16.mxu0 0
    %1296 = vmatmul.mubr.bf16.gmra.mxu0 %v1258
    %v1297 = vpop.f32.mrf.mxu0
    %v1298 = vadd.f32 0.0, %v1297
    %v1299 = vpop.f32.mrf.mxu0
    %v1300 = vpop.f32.mrf.mxu0
    %v1301 = vadd.f32 0.0, %v1300
    %v1302 = vpop.f32.mrf.mxu0
    %1303 = vmatprep.mubr.bf16.mxu0 0
    %1304 = vmatmul.mubr.bf16.gmra.mxu0 %v1261
    %v1305 = vpop.f32.mrf.mxu0
    %v1306 = vadd.f32 0.0, %v1305
    %v1307 = vpop.f32.mrf.mxu0
    %v1308 = vpop.f32.mrf.mxu0
    %v1309 = vadd.f32 0.0, %v1308
    %v1310 = vpop.f32.mrf.mxu0
    %1311 = vdwg.mxu0
    %v1312 = vmul.f32 %v1298, %v822
    %v1313 = vmul.f32 %v1301, %v823
    %v1314 = vmul.f32 %v1306, %v824
    %v1315 = vmul.f32 %v1309, %v825
    %v1316 = vadd.f32 %v1227, %v1312
    %v1317 = vadd.f32 %v1228, %v1313
    %v1318 = vadd.f32 %v1229, %v1314
    %v1319 = vadd.f32 %v1230, %v1315
    %v1320 = vmul.f32 %v1316, 0.25
    %v1321 = vmul.f32 %v1317, 0.25
    %v1322 = vmul.f32 %v1318, 0.25
    %v1323 = vmul.f32 %v1319, 0.25
    %v1324 = vmul.f32 %v1148, %v818
    %v1325 = vmul.f32 %v1151, %v819
    %v1326 = vmul.f32 %v1156, %v820
    %v1327 = vmul.f32 %v1159, %v821
    %v1328 = vpack.c.bf16 %v1151, %v1148
    %v1329 = vpack.c.bf16 %v1159, %v1156
    %v1331 = vsel %vm408, %v1328, 0
    %v1334 = vsel %vm408, %v1329, 0
    %1336 = vmatprep.subr.bf16.mxu0 0
    %1337 = vmatpush1.bf16.msra.mxu0 0
    %1338 = vmatprep.subr.bf16.mxu0 0
    %1339 = vmatpush1.bf16.msra.mxu0 0
    %1340 = vmatprep.subr.bf16.mxu0 0
    %1341 = vmatpush1.bf16.msra.mxu0 0
    %1342 = vmatprep.subr.bf16.mxu0 0
    %1343 = vmatpush1.bf16.msra.mxu0 0
    %1344 = vmatprep.subr.bf16.mxu0 0
    %1345 = vmatpush1.bf16.msra.mxu0 %v1252
    %1346 = vmatprep.subr.bf16.mxu0 0
    %1347 = vmatpush1.bf16.msra.mxu0 %v1251
    %1348 = vmatprep.subr.bf16.mxu0 0
    %1349 = vmatpush1.bf16.msra.mxu0 %v1250
    %1350 = vmatprep.subr.bf16.mxu0 0
    %1351 = vmatpush1.bf16.msra.mxu0 %v1249
    %1352 = vmatprep.subr.bf16.mxu0 0
    %1353 = vmatpush2.bf16.msra.mxu0 0
    %1354 = vmatprep.subr.bf16.mxu0 0
    %1355 = vmatpush2.bf16.msra.mxu0 0
    %1356 = vmatprep.subr.bf16.mxu0 0
    %1357 = vmatpush2.bf16.msra.mxu0 0
    %1358 = vmatprep.subr.bf16.mxu0 0
    %1359 = vmatpush2.bf16.msra.mxu0 0
    %1360 = vmatprep.subr.bf16.mxu0 0
    %1361 = vmatpush2.bf16.msra.mxu0 0
    %1362 = vmatprep.subr.bf16.mxu0 0
    %1363 = vmatpush2.bf16.msra.mxu0 0
    %1364 = vmatprep.subr.bf16.mxu0 0
    %1365 = vmatpush2.bf16.msra.mxu0 0
    %1366 = vmatprep.subr.bf16.mxu0 0
    %1367 = vmatpush2.bf16.msra.mxu0 0
    %1368 = vmatprep.mubr.bf16.mxu0 0
    %1369 = vmatmul.mubr.bf16.gmra.mxu0 %v1331
    %v1370 = vpop.f32.mrf.mxu0
    %v1371 = vadd.f32 0.0, %v1370
    %v1372 = vpop.f32.mrf.mxu0
    %v1373 = vpop.f32.mrf.mxu0
    %v1374 = vadd.f32 0.0, %v1373
    %v1375 = vpop.f32.mrf.mxu0
    %1376 = vmatprep.mubr.bf16.mxu0 0
    %1377 = vmatmul.mubr.bf16.gmra.mxu0 %v1334
    %v1378 = vpop.f32.mrf.mxu0
    %v1379 = vadd.f32 0.0, %v1378
    %v1380 = vpop.f32.mrf.mxu0
    %v1381 = vpop.f32.mrf.mxu0
    %v1382 = vadd.f32 0.0, %v1381
    %v1383 = vpop.f32.mrf.mxu0
    %1384 = vdwg.mxu0
    %v1385 = vmul.f32 %v1371, %v822
    %v1386 = vmul.f32 %v1374, %v823
    %v1387 = vmul.f32 %v1379, %v824
    %v1388 = vmul.f32 %v1382, %v825
    %v1389 = vadd.f32 %v1324, %v1385
    %v1390 = vadd.f32 %v1325, %v1386
    %v1391 = vadd.f32 %v1326, %v1387
    %v1392 = vadd.f32 %v1327, %v1388
    %1397 = vrot.lane.b32.xlu0 %v1320, 112
    %v1398 = vpop.permute.xlu0 %1397
    %1399 = vrot.lane.b32.xlu0 %v1321, 112
    %v1400 = vpop.permute.xlu0 %1399
    %1401 = vrot.lane.b32.xlu0 %v1322, 112
    %v1402 = vpop.permute.xlu0 %1401
    %1403 = vrot.lane.b32.xlu0 %v1323, 112
    %v1404 = vpop.permute.xlu0 %1403
    %1409 = vrot.lane.b32.xlu0 %v1320, 96
    %v1410 = vpop.permute.xlu0 %1409
    %1411 = vrot.lane.b32.xlu0 %v1321, 96
    %v1412 = vpop.permute.xlu0 %1411
    %1413 = vrot.lane.b32.xlu0 %v1322, 96
    %v1414 = vpop.permute.xlu0 %1413
    %1415 = vrot.lane.b32.xlu0 %v1323, 96
    %v1416 = vpop.permute.xlu0 %1415
    %1421 = vrot.lane.b32.xlu0 %v1320, 80
    %v1422 = vpop.permute.xlu0 %1421
    %1423 = vrot.lane.b32.xlu0 %v1321, 80
    %v1424 = vpop.permute.xlu0 %1423
    %1425 = vrot.lane.b32.xlu0 %v1322, 80
    %v1426 = vpop.permute.xlu0 %1425
    %1427 = vrot.lane.b32.xlu0 %v1323, 80
    %v1428 = vpop.permute.xlu0 %1427
    %v1433 = vpack.c.bf16 %v1321, %v1320
    %v1434 = vpack.c.bf16 %v1323, %v1322
    %v1435 = vpack.c.bf16 %v1400, %v1398
    %v1436 = vpack.c.bf16 %v1404, %v1402
    %v1437 = vpack.c.bf16 %v1412, %v1410
    %v1438 = vpack.c.bf16 %v1416, %v1414
    %v1439 = vpack.c.bf16 %v1424, %v1422
    %v1440 = vpack.c.bf16 %v1428, %v1426
    %1445 = vrot.lane.b32.xlu0 %v1389, 112
    %v1446 = vpop.permute.xlu0 %1445
    %1447 = vrot.lane.b32.xlu0 %v1390, 112
    %v1448 = vpop.permute.xlu0 %1447
    %1449 = vrot.lane.b32.xlu0 %v1391, 112
    %v1450 = vpop.permute.xlu0 %1449
    %1451 = vrot.lane.b32.xlu0 %v1392, 112
    %v1452 = vpop.permute.xlu0 %1451
    %1457 = vrot.lane.b32.xlu0 %v1389, 96
    %v1458 = vpop.permute.xlu0 %1457
    %1459 = vrot.lane.b32.xlu0 %v1390, 96
    %v1460 = vpop.permute.xlu0 %1459
    %1461 = vrot.lane.b32.xlu0 %v1391, 96
    %v1462 = vpop.permute.xlu0 %1461
    %1463 = vrot.lane.b32.xlu0 %v1392, 96
    %v1464 = vpop.permute.xlu0 %1463
    %1469 = vrot.lane.b32.xlu0 %v1389, 80
    %v1470 = vpop.permute.xlu0 %1469
    %1471 = vrot.lane.b32.xlu0 %v1390, 80
    %v1472 = vpop.permute.xlu0 %1471
    %1473 = vrot.lane.b32.xlu0 %v1391, 80
    %v1474 = vpop.permute.xlu0 %1473
    %1475 = vrot.lane.b32.xlu0 %v1392, 80
    %v1476 = vpop.permute.xlu0 %1475
    %v1481 = vpack.c.bf16 %v1390, %v1389
    %v1482 = vpack.c.bf16 %v1392, %v1391
    %v1483 = vpack.c.bf16 %v1448, %v1446
    %v1484 = vpack.c.bf16 %v1452, %v1450
    %v1485 = vpack.c.bf16 %v1460, %v1458
    %v1486 = vpack.c.bf16 %v1464, %v1462
    %v1487 = vpack.c.bf16 %v1472, %v1470
    %v1488 = vpack.c.bf16 %v1476, %v1474
    %1493 = vrot.lane.b32.xlu0 %v1213, 112
    %v1494 = vpop.permute.xlu0 %1493
    %1495 = vrot.lane.b32.xlu0 %v1216, 112
    %v1496 = vpop.permute.xlu0 %1495
    %1497 = vrot.lane.b32.xlu0 %v1221, 112
    %v1498 = vpop.permute.xlu0 %1497
    %1499 = vrot.lane.b32.xlu0 %v1224, 112
    %v1500 = vpop.permute.xlu0 %1499
    %1505 = vrot.lane.b32.xlu0 %v1213, 96
    %v1506 = vpop.permute.xlu0 %1505
    %1507 = vrot.lane.b32.xlu0 %v1216, 96
    %v1508 = vpop.permute.xlu0 %1507
    %1509 = vrot.lane.b32.xlu0 %v1221, 96
    %v1510 = vpop.permute.xlu0 %1509
    %1511 = vrot.lane.b32.xlu0 %v1224, 96
    %v1512 = vpop.permute.xlu0 %1511
    %1517 = vrot.lane.b32.xlu0 %v1213, 80
    %v1518 = vpop.permute.xlu0 %1517
    %1519 = vrot.lane.b32.xlu0 %v1216, 80
    %v1520 = vpop.permute.xlu0 %1519
    %1521 = vrot.lane.b32.xlu0 %v1221, 80
    %v1522 = vpop.permute.xlu0 %1521
    %1523 = vrot.lane.b32.xlu0 %v1224, 80
    %v1524 = vpop.permute.xlu0 %1523
    %v1529 = vpack.c.bf16 %v1216, %v1213
    %v1530 = vpack.c.bf16 %v1224, %v1221
    %v1531 = vpack.c.bf16 %v1496, %v1494
    %v1532 = vpack.c.bf16 %v1500, %v1498
    %v1533 = vpack.c.bf16 %v1508, %v1506
    %v1534 = vpack.c.bf16 %v1512, %v1510
    %v1535 = vpack.c.bf16 %v1520, %v1518
    %v1536 = vpack.c.bf16 %v1524, %v1522
    %v1538 = vsel %vm142, %v1433, 0
    %v1541 = vsel %vm142, %v1434, 0
    %v1544 = vsel %vm142, %v1435, 0
    %v1547 = vsel %vm142, %v1436, 0
    %v1550 = vsel %vm142, %v1437, 0
    %v1553 = vsel %vm142, %v1438, 0
    %v1556 = vsel %vm142, %v1439, 0
    %v1559 = vsel %vm142, %v1440, 0
    %v1562 = vsel %vm142, %v1481, 0
    %v1565 = vsel %vm142, %v1482, 0
    %v1568 = vsel %vm142, %v1483, 0
    %v1571 = vsel %vm142, %v1484, 0
    %v1574 = vsel %vm142, %v1485, 0
    %v1577 = vsel %vm142, %v1486, 0
    %v1580 = vsel %vm142, %v1487, 0
    %v1583 = vsel %vm142, %v1488, 0
    %1585 = vmatprep.subr.bf16.mxu0 0
    %1586 = vmatpush1.bf16.xpose.msra.mxu0 %v1583
    %1587 = vmatprep.subr.bf16.mxu0 0
    %1588 = vmatpush1.bf16.xpose.msra.mxu0 %v1580
    %1589 = vmatprep.subr.bf16.mxu0 0
    %1590 = vmatpush1.bf16.xpose.msra.mxu0 %v1577
    %1591 = vmatprep.subr.bf16.mxu0 0
    %1592 = vmatpush1.bf16.xpose.msra.mxu0 %v1574
    %1593 = vmatprep.subr.bf16.mxu0 0
    %1594 = vmatpush1.bf16.xpose.msra.mxu0 %v1571
    %1595 = vmatprep.subr.bf16.mxu0 0
    %1596 = vmatpush1.bf16.xpose.msra.mxu0 %v1568
    %1597 = vmatprep.subr.bf16.mxu0 0
    %1598 = vmatpush1.bf16.xpose.msra.mxu0 %v1565
    %1599 = vmatprep.subr.bf16.mxu0 0
    %1600 = vmatpush1.bf16.xpose.msra.mxu0 %v1562
    %1601 = vmatprep.subr.bf16.mxu0 0
    %1602 = vmatpush2.bf16.xpose.msra.mxu0 0
    %1603 = vmatprep.subr.bf16.mxu0 0
    %1604 = vmatpush2.bf16.xpose.msra.mxu0 0
    %1605 = vmatprep.subr.bf16.mxu0 0
    %1606 = vmatpush2.bf16.xpose.msra.mxu0 0
    %1607 = vmatprep.subr.bf16.mxu0 0
    %1608 = vmatpush2.bf16.xpose.msra.mxu0 0
    %1609 = vmatprep.subr.bf16.mxu0 0
    %1610 = vmatpush2.bf16.xpose.msra.mxu0 0
    %1611 = vmatprep.subr.bf16.mxu0 0
    %1612 = vmatpush2.bf16.xpose.msra.mxu0 0
    %1613 = vmatprep.subr.bf16.mxu0 0
    %1614 = vmatpush2.bf16.xpose.msra.mxu0 0
    %1615 = vmatprep.subr.bf16.mxu0 0
    %1616 = vmatpush2.bf16.xpose.msra.mxu0 0
    %1617 = vmatprep.mubr.bf16.mxu0 0
    %1618 = vmatmul.mubr.bf16.gmra.mxu0 %v1538
    %v1619 = vpop.f32.mrf.mxu0
    %v1620 = vadd.f32 %v933, %v1619
    %v1621 = vpop.f32.mrf.mxu0
    %v1622 = vpop.f32.mrf.mxu0
    %v1623 = vadd.f32 %v934, %v1622
    %v1624 = vpop.f32.mrf.mxu0
    %1625 = vmatprep.mubr.bf16.mxu0 0
    %1626 = vmatmul.mubr.bf16.gmra.mxu0 %v1541
    %v1627 = vpop.f32.mrf.mxu0
    %v1628 = vadd.f32 %v935, %v1627
    %v1629 = vpop.f32.mrf.mxu0
    %v1630 = vpop.f32.mrf.mxu0
    %v1631 = vadd.f32 %v936, %v1630
    %v1632 = vpop.f32.mrf.mxu0
    %1633 = vmatprep.mubr.bf16.mxu0 0
    %1634 = vmatmul.mubr.bf16.gmra.mxu0 %v1544
    %v1635 = vpop.f32.mrf.mxu0
    %v1636 = vadd.f32 %v937, %v1635
    %v1637 = vpop.f32.mrf.mxu0
    %v1638 = vpop.f32.mrf.mxu0
    %v1639 = vadd.f32 %v938, %v1638
    %v1640 = vpop.f32.mrf.mxu0
    %1641 = vmatprep.mubr.bf16.mxu0 0
    %1642 = vmatmul.mubr.bf16.gmra.mxu0 %v1547
    %v1643 = vpop.f32.mrf.mxu0
    %v1644 = vadd.f32 %v939, %v1643
    %v1645 = vpop.f32.mrf.mxu0
    %v1646 = vpop.f32.mrf.mxu0
    %v1647 = vadd.f32 %v940, %v1646
    %v1648 = vpop.f32.mrf.mxu0
    %1649 = vmatprep.mubr.bf16.mxu0 0
    %1650 = vmatmul.mubr.bf16.gmra.mxu0 %v1550
    %v1651 = vpop.f32.mrf.mxu0
    %v1652 = vadd.f32 %v941, %v1651
    %v1653 = vpop.f32.mrf.mxu0
    %v1654 = vpop.f32.mrf.mxu0
    %v1655 = vadd.f32 %v942, %v1654
    %v1656 = vpop.f32.mrf.mxu0
    %1657 = vmatprep.mubr.bf16.mxu0 0
    %1658 = vmatmul.mubr.bf16.gmra.mxu0 %v1553
    %v1659 = vpop.f32.mrf.mxu0
    %v1660 = vadd.f32 %v943, %v1659
    %v1661 = vpop.f32.mrf.mxu0
    %v1662 = vpop.f32.mrf.mxu0
    %v1663 = vadd.f32 %v944, %v1662
    %v1664 = vpop.f32.mrf.mxu0
    %1665 = vmatprep.mubr.bf16.mxu0 0
    %1666 = vmatmul.mubr.bf16.gmra.mxu0 %v1556
    %v1667 = vpop.f32.mrf.mxu0
    %v1668 = vadd.f32 %v945, %v1667
    %v1669 = vpop.f32.mrf.mxu0
    %v1670 = vpop.f32.mrf.mxu0
    %v1671 = vadd.f32 %v946, %v1670
    %v1672 = vpop.f32.mrf.mxu0
    %1673 = vmatprep.mubr.bf16.mxu0 0
    %1674 = vmatmul.mubr.bf16.gmra.mxu0 %v1559
    %v1675 = vpop.f32.mrf.mxu0
    %v1676 = vadd.f32 %v947, %v1675
    %v1677 = vpop.f32.mrf.mxu0
    %v1678 = vpop.f32.mrf.mxu0
    %v1679 = vadd.f32 %v948, %v1678
    %v1680 = vpop.f32.mrf.mxu0
    %1681 = vdwg.mxu0
    %1682 = vmax.xlane.f32.xlu0 %v1620
    %v1683 = vpop.xlane.xlu0 %1682
    %1684 = vmax.xlane.f32.xlu0 %v1623
    %v1685 = vpop.xlane.xlu0 %1684
    %1686 = vmax.xlane.f32.xlu0 %v1628
    %v1687 = vpop.xlane.xlu0 %1686
    %1688 = vmax.xlane.f32.xlu0 %v1631
    %v1689 = vpop.xlane.xlu0 %1688
    %1690 = vmax.xlane.f32.xlu0 %v1636
    %v1691 = vpop.xlane.xlu0 %1690
    %1692 = vmax.xlane.f32.xlu0 %v1639
    %v1693 = vpop.xlane.xlu0 %1692
    %1694 = vmax.xlane.f32.xlu0 %v1644
    %v1695 = vpop.xlane.xlu0 %1694
    %1696 = vmax.xlane.f32.xlu0 %v1647
    %v1697 = vpop.xlane.xlu0 %1696
    %1698 = vmax.xlane.f32.xlu0 %v1652
    %v1699 = vpop.xlane.xlu0 %1698
    %1700 = vmax.xlane.f32.xlu0 %v1655
    %v1701 = vpop.xlane.xlu0 %1700
    %1702 = vmax.xlane.f32.xlu0 %v1660
    %v1703 = vpop.xlane.xlu0 %1702
    %1704 = vmax.xlane.f32.xlu0 %v1663
    %v1705 = vpop.xlane.xlu0 %1704
    %1706 = vmax.xlane.f32.xlu0 %v1668
    %v1707 = vpop.xlane.xlu0 %1706
    %1708 = vmax.xlane.f32.xlu0 %v1671
    %v1709 = vpop.xlane.xlu0 %1708
    %1710 = vmax.xlane.f32.xlu0 %v1676
    %v1711 = vpop.xlane.xlu0 %1710
    %1712 = vmax.xlane.f32.xlu0 %v1679
    %v1713 = vpop.xlane.xlu0 %1712
    %v1714 = vsub.f32 %v1620, %v1683
    %v1715 = vsub.f32 %v1623, %v1685
    %v1716 = vsub.f32 %v1628, %v1687
    %v1717 = vsub.f32 %v1631, %v1689
    %v1718 = vsub.f32 %v1636, %v1691
    %v1719 = vsub.f32 %v1639, %v1693
    %v1720 = vsub.f32 %v1644, %v1695
    %v1721 = vsub.f32 %v1647, %v1697
    %v1722 = vsub.f32 %v1652, %v1699
    %v1723 = vsub.f32 %v1655, %v1701
    %v1724 = vsub.f32 %v1660, %v1703
    %v1725 = vsub.f32 %v1663, %v1705
    %v1726 = vsub.f32 %v1668, %v1707
    %v1727 = vsub.f32 %v1671, %v1709
    %v1728 = vsub.f32 %v1676, %v1711
    %v1729 = vsub.f32 %v1679, %v1713
    %v1730 = vmul.f32 %v1714, 1.442695
    %v1731 = vpow.pop %v1730
    %v1732 = vmul.f32 %v1715, 1.442695
    %v1733 = vpow.pop %v1732
    %v1734 = vmul.f32 %v1716, 1.442695
    %v1735 = vpow.pop %v1734
    %v1736 = vmul.f32 %v1717, 1.442695
    %v1737 = vpow.pop %v1736
    %v1738 = vmul.f32 %v1718, 1.442695
    %v1739 = vpow.pop %v1738
    %v1740 = vmul.f32 %v1719, 1.442695
    %v1741 = vpow.pop %v1740
    %v1742 = vmul.f32 %v1720, 1.442695
    %v1743 = vpow.pop %v1742
    %v1744 = vmul.f32 %v1721, 1.442695
    %v1745 = vpow.pop %v1744
    %v1746 = vmul.f32 %v1722, 1.442695
    %v1747 = vpow.pop %v1746
    %v1748 = vmul.f32 %v1723, 1.442695
    %v1749 = vpow.pop %v1748
    %v1750 = vmul.f32 %v1724, 1.442695
    %v1751 = vpow.pop %v1750
    %v1752 = vmul.f32 %v1725, 1.442695
    %v1753 = vpow.pop %v1752
    %v1754 = vmul.f32 %v1726, 1.442695
    %v1755 = vpow.pop %v1754
    %v1756 = vmul.f32 %v1727, 1.442695
    %v1757 = vpow.pop %v1756
    %v1758 = vmul.f32 %v1728, 1.442695
    %v1759 = vpow.pop %v1758
    %v1760 = vmul.f32 %v1729, 1.442695
    %v1761 = vpow.pop %v1760
    %1762 = vadd.xlane.f32.xlu0 %v1731
    %v1763 = vpop.xlane.xlu0 %1762
    %1764 = vadd.xlane.f32.xlu0 %v1733
    %v1765 = vpop.xlane.xlu0 %1764
    %1766 = vadd.xlane.f32.xlu0 %v1735
    %v1767 = vpop.xlane.xlu0 %1766
    %1768 = vadd.xlane.f32.xlu0 %v1737
    %v1769 = vpop.xlane.xlu0 %1768
    %1770 = vadd.xlane.f32.xlu0 %v1739
    %v1771 = vpop.xlane.xlu0 %1770
    %1772 = vadd.xlane.f32.xlu0 %v1741
    %v1773 = vpop.xlane.xlu0 %1772
    %1774 = vadd.xlane.f32.xlu0 %v1743
    %v1775 = vpop.xlane.xlu0 %1774
    %1776 = vadd.xlane.f32.xlu0 %v1745
    %v1777 = vpop.xlane.xlu0 %1776
    %1778 = vadd.xlane.f32.xlu0 %v1747
    %v1779 = vpop.xlane.xlu0 %1778
    %1780 = vadd.xlane.f32.xlu0 %v1749
    %v1781 = vpop.xlane.xlu0 %1780
    %1782 = vadd.xlane.f32.xlu0 %v1751
    %v1783 = vpop.xlane.xlu0 %1782
    %1784 = vadd.xlane.f32.xlu0 %v1753
    %v1785 = vpop.xlane.xlu0 %1784
    %1786 = vadd.xlane.f32.xlu0 %v1755
    %v1787 = vpop.xlane.xlu0 %1786
    %1788 = vadd.xlane.f32.xlu0 %v1757
    %v1789 = vpop.xlane.xlu0 %1788
    %1790 = vadd.xlane.f32.xlu0 %v1759
    %v1791 = vpop.xlane.xlu0 %1790
    %1792 = vadd.xlane.f32.xlu0 %v1761
    %v1793 = vpop.xlane.xlu0 %1792
    %v1794 = vrcp.pop %v1763
    %v1795 = vrcp.pop %v1765
    %v1796 = vrcp.pop %v1767
    %v1797 = vrcp.pop %v1769
    %v1798 = vrcp.pop %v1771
    %v1799 = vrcp.pop %v1773
    %v1800 = vrcp.pop %v1775
    %v1801 = vrcp.pop %v1777
    %v1802 = vrcp.pop %v1779
    %v1803 = vrcp.pop %v1781
    %v1804 = vrcp.pop %v1783
    %v1805 = vrcp.pop %v1785
    %v1806 = vrcp.pop %v1787
    %v1807 = vrcp.pop %v1789
    %v1808 = vrcp.pop %v1791
    %v1809 = vrcp.pop %v1793
    %v1810 = vmul.f32 %v1731, %v1794
    %v1811 = vmul.f32 %v1733, %v1795
    %v1812 = vmul.f32 %v1735, %v1796
    %v1813 = vmul.f32 %v1737, %v1797
    %v1814 = vmul.f32 %v1739, %v1798
    %v1815 = vmul.f32 %v1741, %v1799
    %v1816 = vmul.f32 %v1743, %v1800
    %v1817 = vmul.f32 %v1745, %v1801
    %v1818 = vmul.f32 %v1747, %v1802
    %v1819 = vmul.f32 %v1749, %v1803
    %v1820 = vmul.f32 %v1751, %v1804
    %v1821 = vmul.f32 %v1753, %v1805
    %v1822 = vmul.f32 %v1755, %v1806
    %v1823 = vmul.f32 %v1757, %v1807
    %v1824 = vmul.f32 %v1759, %v1808
    %v1825 = vmul.f32 %v1761, %v1809
    %v1826 = vpack.c.bf16 %v1811, %v1810
    %v1827 = vpack.c.bf16 %v1813, %v1812
    %v1828 = vpack.c.bf16 %v1815, %v1814
    %v1829 = vpack.c.bf16 %v1817, %v1816
    %v1830 = vpack.c.bf16 %v1819, %v1818
    %v1831 = vpack.c.bf16 %v1821, %v1820
    %v1832 = vpack.c.bf16 %v1823, %v1822
    %v1833 = vpack.c.bf16 %v1825, %v1824
    %1834 = vmatprep.subr.bf16.mxu0 0
    %1835 = vmatpush1.bf16.msra.mxu0 %v1536
    %1836 = vmatprep.subr.bf16.mxu0 0
    %1837 = vmatpush1.bf16.msra.mxu0 %v1535
    %1838 = vmatprep.subr.bf16.mxu0 0
    %1839 = vmatpush1.bf16.msra.mxu0 %v1534
    %1840 = vmatprep.subr.bf16.mxu0 0
    %1841 = vmatpush1.bf16.msra.mxu0 %v1533
    %1842 = vmatprep.subr.bf16.mxu0 0
    %1843 = vmatpush1.bf16.msra.mxu0 %v1532
    %1844 = vmatprep.subr.bf16.mxu0 0
    %1845 = vmatpush1.bf16.msra.mxu0 %v1531
    %1846 = vmatprep.subr.bf16.mxu0 0
    %1847 = vmatpush1.bf16.msra.mxu0 %v1530
    %1848 = vmatprep.subr.bf16.mxu0 0
    %1849 = vmatpush1.bf16.msra.mxu0 %v1529
    %1850 = vmatprep.subr.bf16.mxu0 0
    %1851 = vmatpush2.bf16.msra.mxu0 0
    %1852 = vmatprep.subr.bf16.mxu0 0
    %1853 = vmatpush2.bf16.msra.mxu0 0
    %1854 = vmatprep.subr.bf16.mxu0 0
    %1855 = vmatpush2.bf16.msra.mxu0 0
    %1856 = vmatprep.subr.bf16.mxu0 0
    %1857 = vmatpush2.bf16.msra.mxu0 0
    %1858 = vmatprep.subr.bf16.mxu0 0
    %1859 = vmatpush2.bf16.msra.mxu0 0
    %1860 = vmatprep.subr.bf16.mxu0 0
    %1861 = vmatpush2.bf16.msra.mxu0 0
    %1862 = vmatprep.subr.bf16.mxu0 0
    %1863 = vmatpush2.bf16.msra.mxu0 0
    %1864 = vmatprep.subr.bf16.mxu0 0
    %1865 = vmatpush2.bf16.msra.mxu0 0
    %1866 = vmatprep.mubr.bf16.mxu0 0
    %1867 = vmatmul.mubr.bf16.gmra.mxu0 %v1826
    %v1868 = vpop.f32.mrf.mxu0
    %v1869 = vadd.f32 0.0, %v1868
    %v1870 = vpop.f32.mrf.mxu0
    %v1871 = vpop.f32.mrf.mxu0
    %v1872 = vadd.f32 0.0, %v1871
    %v1873 = vpop.f32.mrf.mxu0
    %1874 = vmatprep.mubr.bf16.mxu0 0
    %1875 = vmatmul.mubr.bf16.gmra.mxu0 %v1827
    %v1876 = vpop.f32.mrf.mxu0
    %v1877 = vadd.f32 0.0, %v1876
    %v1878 = vpop.f32.mrf.mxu0
    %v1879 = vpop.f32.mrf.mxu0
    %v1880 = vadd.f32 0.0, %v1879
    %v1881 = vpop.f32.mrf.mxu0
    %1882 = vmatprep.mubr.bf16.mxu0 0
    %1883 = vmatmul.mubr.bf16.gmra.mxu0 %v1828
    %v1884 = vpop.f32.mrf.mxu0
    %v1885 = vadd.f32 0.0, %v1884
    %v1886 = vpop.f32.mrf.mxu0
    %v1887 = vpop.f32.mrf.mxu0
    %v1888 = vadd.f32 0.0, %v1887
    %v1889 = vpop.f32.mrf.mxu0
    %1890 = vmatprep.mubr.bf16.mxu0 0
    %1891 = vmatmul.mubr.bf16.gmra.mxu0 %v1829
    %v1892 = vpop.f32.mrf.mxu0
    %v1893 = vadd.f32 0.0, %v1892
    %v1894 = vpop.f32.mrf.mxu0
    %v1895 = vpop.f32.mrf.mxu0
    %v1896 = vadd.f32 0.0, %v1895
    %v1897 = vpop.f32.mrf.mxu0
    %1898 = vmatprep.mubr.bf16.mxu0 0
    %1899 = vmatmul.mubr.bf16.gmra.mxu0 %v1830
    %v1900 = vpop.f32.mrf.mxu0
    %v1901 = vadd.f32 0.0, %v1900
    %v1902 = vpop.f32.mrf.mxu0
    %v1903 = vpop.f32.mrf.mxu0
    %v1904 = vadd.f32 0.0, %v1903
    %v1905 = vpop.f32.mrf.mxu0
    %1906 = vmatprep.mubr.bf16.mxu0 0
    %1907 = vmatmul.mubr.bf16.gmra.mxu0 %v1831
    %v1908 = vpop.f32.mrf.mxu0
    %v1909 = vadd.f32 0.0, %v1908
    %v1910 = vpop.f32.mrf.mxu0
    %v1911 = vpop.f32.mrf.mxu0
    %v1912 = vadd.f32 0.0, %v1911
    %v1913 = vpop.f32.mrf.mxu0
    %1914 = vmatprep.mubr.bf16.mxu0 0
    %1915 = vmatmul.mubr.bf16.gmra.mxu0 %v1832
    %v1916 = vpop.f32.mrf.mxu0
    %v1917 = vadd.f32 0.0, %v1916
    %v1918 = vpop.f32.mrf.mxu0
    %v1919 = vpop.f32.mrf.mxu0
    %v1920 = vadd.f32 0.0, %v1919
    %v1921 = vpop.f32.mrf.mxu0
    %1922 = vmatprep.mubr.bf16.mxu0 0
    %1923 = vmatmul.mubr.bf16.gmra.mxu0 %v1833
    %v1924 = vpop.f32.mrf.mxu0
    %v1925 = vadd.f32 0.0, %v1924
    %v1926 = vpop.f32.mrf.mxu0
    %v1927 = vpop.f32.mrf.mxu0
    %v1928 = vadd.f32 0.0, %v1927
    %v1929 = vpop.f32.mrf.mxu0
    %1930 = vdwg.mxu0
    %1935 = vrot.lane.b32.xlu0 %v1885, 16
    %v1936 = vpop.permute.xlu0 %1935
    %1937 = vrot.lane.b32.xlu0 %v1888, 16
    %v1938 = vpop.permute.xlu0 %1937
    %1939 = vrot.lane.b32.xlu0 %v1893, 16
    %v1940 = vpop.permute.xlu0 %1939
    %1941 = vrot.lane.b32.xlu0 %v1896, 16
    %v1942 = vpop.permute.xlu0 %1941
    %1951 = vrot.lane.b32.xlu0 %v1901, 32
    %v1952 = vpop.permute.xlu0 %1951
    %1953 = vrot.lane.b32.xlu0 %v1904, 32
    %v1954 = vpop.permute.xlu0 %1953
    %1955 = vrot.lane.b32.xlu0 %v1909, 32
    %v1956 = vpop.permute.xlu0 %1955
    %1957 = vrot.lane.b32.xlu0 %v1912, 32
    %v1958 = vpop.permute.xlu0 %1957
    %1967 = vrot.lane.b32.xlu0 %v1917, 48
    %v1968 = vpop.permute.xlu0 %1967
    %1969 = vrot.lane.b32.xlu0 %v1920, 48
    %v1970 = vpop.permute.xlu0 %1969
    %1971 = vrot.lane.b32.xlu0 %v1925, 48
    %v1972 = vpop.permute.xlu0 %1971
    %1973 = vrot.lane.b32.xlu0 %v1928, 48
    %v1974 = vpop.permute.xlu0 %1973
    %v1979 = vsel %vm142, %v1869, %v1936
    %v1980 = vsel %vm142, %v1872, %v1938
    %v1981 = vsel %vm142, %v1877, %v1940
    %v1982 = vsel %vm142, %v1880, %v1942
    %v1983 = vsel %vm248, %v1979, %v1952
    %v1984 = vsel %vm248, %v1980, %v1954
    %v1985 = vsel %vm248, %v1981, %v1956
    %v1986 = vsel %vm248, %v1982, %v1958
    %vm1987 = vcmask 392192
    %v1988 = vsel %vm1987, %v1983, %v1968
    %v1989 = vsel %vm1987, %v1984, %v1970
    %v1990 = vsel %vm1987, %v1985, %v1972
    %v1991 = vsel %vm1987, %v1986, %v1974
    %v1992 = vpack.c.bf16 %v1989, %v1988
    %v1993 = vpack.c.bf16 %v1991, %v1990
    %v1994 = vld [vmem:[%s29] sm:$0xf]
    %v1995 = vld [vmem:[%s29 + $0x4] sm:$0xf]
    %v1996 = vld [vmem:[%s29 + $0x8] sm:$0xf]
    %v1997 = vld [vmem:[%s29 + $0xc] sm:$0xf]
    %v1998 = vld [vmem:[%s29 + $0x10] sm:$0xf]
    %v1999 = vld [vmem:[%s29 + $0x14] sm:$0xf]
    %v2000 = vld [vmem:[%s29 + $0x18] sm:$0xf]
    %v2001 = vld [vmem:[%s29 + $0x1c] sm:$0xf]
    %v2010 = vunpack.c.l.b16 %v1994
    %v2011 = vunpack.c.l.b16 %v1995
    %v2012 = vunpack.c.l.b16 %v1996
    %v2013 = vunpack.c.l.b16 %v1997
    %v2014 = vunpack.c.l.b16 %v1998
    %v2015 = vunpack.c.l.b16 %v1999
    %v2016 = vunpack.c.l.b16 %v2000
    %v2017 = vunpack.c.l.b16 %v2001
    %v2018 = vpack.c.b16 %v2011, %v2010
    %v2019 = vpack.c.b16 %v2013, %v2012
    %v2020 = vpack.c.b16 %v2015, %v2014
    %v2021 = vpack.c.b16 %v2017, %v2016
    %v2027 = vsel %vm408, %v1992, 0
    %v2030 = vsel %vm408, %v1993, 0
    %2032 = vmatprep.subr.bf16.mxu0 0
    %2033 = vmatpush1.bf16.msra.mxu0 0
    %2034 = vmatprep.subr.bf16.mxu0 0
    %2035 = vmatpush1.bf16.msra.mxu0 0
    %2036 = vmatprep.subr.bf16.mxu0 0
    %2037 = vmatpush1.bf16.msra.mxu0 0
    %2038 = vmatprep.subr.bf16.mxu0 0
    %2039 = vmatpush1.bf16.msra.mxu0 0
    %2040 = vmatprep.subr.bf16.mxu0 0
    %2041 = vmatpush1.bf16.msra.mxu0 %v2021
    %2042 = vmatprep.subr.bf16.mxu0 0
    %2043 = vmatpush1.bf16.msra.mxu0 %v2020
    %2044 = vmatprep.subr.bf16.mxu0 0
    %2045 = vmatpush1.bf16.msra.mxu0 %v2019
    %2046 = vmatprep.subr.bf16.mxu0 0
    %2047 = vmatpush1.bf16.msra.mxu0 %v2018
    %2048 = vmatprep.subr.bf16.mxu0 0
    %2049 = vmatpush2.bf16.msra.mxu0 0
    %2050 = vmatprep.subr.bf16.mxu0 0
    %2051 = vmatpush2.bf16.msra.mxu0 0
    %2052 = vmatprep.subr.bf16.mxu0 0
    %2053 = vmatpush2.bf16.msra.mxu0 0
    %2054 = vmatprep.subr.bf16.mxu0 0
    %2055 = vmatpush2.bf16.msra.mxu0 0
    %2056 = vmatprep.subr.bf16.mxu0 0
    %2057 = vmatpush2.bf16.msra.mxu0 0
    %2058 = vmatprep.subr.bf16.mxu0 0
    %2059 = vmatpush2.bf16.msra.mxu0 0
    %2060 = vmatprep.subr.bf16.mxu0 0
    %2061 = vmatpush2.bf16.msra.mxu0 0
    %2062 = vmatprep.subr.bf16.mxu0 0
    %2063 = vmatpush2.bf16.msra.mxu0 0
    %2064 = vmatprep.mubr.bf16.mxu0 0
    %2065 = vmatmul.mubr.bf16.gmra.mxu0 %v2027
    %v2066 = vpop.f32.mrf.mxu0
    %v2067 = vadd.f32 0.0, %v2066
    %v2068 = vpop.f32.mrf.mxu0
    %v2069 = vpop.f32.mrf.mxu0
    %v2070 = vadd.f32 0.0, %v2069
    %v2071 = vpop.f32.mrf.mxu0
    %2072 = vmatprep.mubr.bf16.mxu0 0
    %2073 = vmatmul.mubr.bf16.gmra.mxu0 %v2030
    %v2074 = vpop.f32.mrf.mxu0
    %v2075 = vadd.f32 0.0, %v2074
    %v2076 = vpop.f32.mrf.mxu0
    %v2077 = vpop.f32.mrf.mxu0
    %v2078 = vadd.f32 0.0, %v2077
    %v2079 = vpop.f32.mrf.mxu0
    %2080 = vdwg.mxu0
    %v2081 = vadd.f32 %v816, %v2067
    %v2082 = vadd.f32 %v806, %v2070
    %v2083 = vadd.f32 %v817, %v2075
    %v2084 = vadd.f32 %v813, %v2078
    %v2085 = vld [vmem:[%s31] sm:$0x1]
    %v2086 = vld [vmem:[%s33] sm:$0x1]
    %v2087 = vsel %vm248, %v2081, 0.0
    %2088 = vadd.xlane.f32.xlu0 %v2087
    %v2089 = vpop.xlane.xlu0 %2088
    %v2090 = vsel %vm248, %v2082, 0.0
    %2091 = vadd.xlane.f32.xlu0 %v2090
    %v2092 = vpop.xlane.xlu0 %2091
    %v2093 = vsel %vm248, %v2083, 0.0
    %2094 = vadd.xlane.f32.xlu0 %v2093
    %v2095 = vpop.xlane.xlu0 %2094
    %v2096 = vsel %vm248, %v2084, 0.0
    %2097 = vadd.xlane.f32.xlu0 %v2096
    %v2098 = vpop.xlane.xlu0 %2097
    %v2099 = vmul.f32 %v2089, %v963
    %v2100 = vmul.f32 %v2092, %v963
    %v2101 = vmul.f32 %v2095, %v963
    %v2102 = vmul.f32 %v2098, %v963
    %v2103 = vsub.f32 %v2081, %v2099
    %v2104 = vsub.f32 %v2082, %v2100
    %v2105 = vsub.f32 %v2083, %v2101
    %v2106 = vsub.f32 %v2084, %v2102
    %v2107 = vmul.f32 %v2103, %v2103
    %v2108 = vmul.f32 %v2104, %v2104
    %v2109 = vmul.f32 %v2105, %v2105
    %v2110 = vmul.f32 %v2106, %v2106
    %v2111 = vsel %vm248, %v2107, 0.0
    %2112 = vadd.xlane.f32.xlu0 %v2111
    %v2113 = vpop.xlane.xlu0 %2112
    %v2114 = vsel %vm248, %v2108, 0.0
    %2115 = vadd.xlane.f32.xlu0 %v2114
    %v2116 = vpop.xlane.xlu0 %2115
    %v2117 = vsel %vm248, %v2109, 0.0
    %2118 = vadd.xlane.f32.xlu0 %v2117
    %v2119 = vpop.xlane.xlu0 %2118
    %v2120 = vsel %vm248, %v2110, 0.0
    %2121 = vadd.xlane.f32.xlu0 %v2120
    %v2122 = vpop.xlane.xlu0 %2121
    %v2123 = vmul.f32 %v2113, %v963
    %v2124 = vmul.f32 %v2116, %v963
    %v2125 = vmul.f32 %v2119, %v963
    %v2126 = vmul.f32 %v2122, %v963
    %v2127 = vadd.f32 %v2123, 1e-05
    %v2128 = vadd.f32 %v2124, 1e-05
    %v2129 = vadd.f32 %v2125, 1e-05
    %v2130 = vadd.f32 %v2126, 1e-05
    %v2131 = vrsqrt.pop %v2127
    %v2132 = vrsqrt.pop %v2128
    %v2133 = vrsqrt.pop %v2129
    %v2134 = vrsqrt.pop %v2130
    %v2135 = vmul.f32 %v2103, %v2131
    %v2136 = vmul.f32 %v2104, %v2132
    %v2137 = vmul.f32 %v2105, %v2133
    %v2138 = vmul.f32 %v2106, %v2134
    %v2140 = vlaneseq
    %v2141 = vshrl.u32 %v2140, 7
    %v2142 = vsub.s32 0, %v2141
    %v2143 = vrot.slane %v2085, %v2142
    %v2145 = vmul.f32 %v2135, %v2143
    %v2146 = vmul.f32 %v2136, %v2143
    %v2147 = vmul.f32 %v2137, %v2143
    %v2148 = vmul.f32 %v2138, %v2143
    %v2150 = vlaneseq
    %v2151 = vshrl.u32 %v2150, 7
    %v2152 = vsub.s32 0, %v2151
    %v2153 = vrot.slane %v2086, %v2152
    %v2155 = vadd.f32 %v2145, %v2153
    %v2156 = vadd.f32 %v2146, %v2153
    %v2157 = vadd.f32 %v2147, %v2153
    %v2158 = vadd.f32 %v2148, %v2153
    %v2159 = vpack.c.bf16 %v2156, %v2155
    %v2160 = vpack.c.bf16 %v2158, %v2157
    %v2161 = vld [vmem:[%s35] sm:$0xf]
    %v2162 = vld [vmem:[%s35 + $0x4] sm:$0xf]
    %v2163 = vld [vmem:[%s35 + $0x8] sm:$0xf]
    %v2164 = vld [vmem:[%s35 + $0xc] sm:$0xf]
    %v2165 = vld [vmem:[%s37] sm:$0x1]
    %v2167 = vlaneseq
    %v2168 = vshrl.u32 %v2167, 7
    %v2169 = vsub.s32 0, %v2168
    %v2170 = vrot.slane %v2165, %v2169
    %v2176 = vunpack.c.l.b16 %v2161
    %v2177 = vunpack.c.l.b16 %v2162
    %v2178 = vunpack.c.l.b16 %v2163
    %v2179 = vunpack.c.l.b16 %v2164
    %v2180 = vpack.c.b16 %v2177, %v2176
    %v2181 = vpack.c.b16 %v2179, %v2178
    %v2185 = vsel %vm248, %v2159, 0
    %v2188 = vsel %vm248, %v2160, 0
    %2190 = vmatprep.subr.bf16.mxu0 0
    %2191 = vmatpush1.bf16.msra.mxu0 0
    %2192 = vmatprep.subr.bf16.mxu0 0
    %2193 = vmatpush1.bf16.msra.mxu0 0
    %2194 = vmatprep.subr.bf16.mxu0 0
    %2195 = vmatpush1.bf16.msra.mxu0 0
    %2196 = vmatprep.subr.bf16.mxu0 0
    %2197 = vmatpush1.bf16.msra.mxu0 0
    %2198 = vmatprep.subr.bf16.mxu0 0
    %2199 = vmatpush1.bf16.msra.mxu0 0
    %2200 = vmatprep.subr.bf16.mxu0 0
    %2201 = vmatpush1.bf16.msra.mxu0 0
    %2202 = vmatprep.subr.bf16.mxu0 0
    %2203 = vmatpush1.bf16.msra.mxu0 %v2181
    %2204 = vmatprep.subr.bf16.mxu0 0
    %2205 = vmatpush1.bf16.msra.mxu0 %v2180
    %2206 = vmatprep.subr.bf16.mxu0 0
    %2207 = vmatpush2.bf16.msra.mxu0 0
    %2208 = vmatprep.subr.bf16.mxu0 0
    %2209 = vmatpush2.bf16.msra.mxu0 0
    %2210 = vmatprep.subr.bf16.mxu0 0
    %2211 = vmatpush2.bf16.msra.mxu0 0
    %2212 = vmatprep.subr.bf16.mxu0 0
    %2213 = vmatpush2.bf16.msra.mxu0 0
    %2214 = vmatprep.subr.bf16.mxu0 0
    %2215 = vmatpush2.bf16.msra.mxu0 0
    %2216 = vmatprep.subr.bf16.mxu0 0
    %2217 = vmatpush2.bf16.msra.mxu0 0
    %2218 = vmatprep.subr.bf16.mxu0 0
    %2219 = vmatpush2.bf16.msra.mxu0 0
    %2220 = vmatprep.subr.bf16.mxu0 0
    %2221 = vmatpush2.bf16.msra.mxu0 0
    %2222 = vmatprep.mubr.bf16.mxu0 0
    %2223 = vmatmul.mubr.bf16.gmra.mxu0 %v2185
    %v2224 = vpop.f32.mrf.mxu0
    %v2225 = vadd.f32 %v2170, %v2224
    %v2226 = vpop.f32.mrf.mxu0
    %v2227 = vpop.f32.mrf.mxu0
    %v2228 = vadd.f32 %v2170, %v2227
    %v2229 = vpop.f32.mrf.mxu0
    %2230 = vmatprep.mubr.bf16.mxu0 0
    %2231 = vmatmul.mubr.bf16.gmra.mxu0 %v2188
    %v2232 = vpop.f32.mrf.mxu0
    %v2233 = vadd.f32 %v2170, %v2232
    %v2234 = vpop.f32.mrf.mxu0
    %v2235 = vpop.f32.mrf.mxu0
    %v2236 = vadd.f32 %v2170, %v2235
    %v2237 = vpop.f32.mrf.mxu0
    %2238 = vdwg.mxu0
    %v2239 = vmul.f32 %v2225, 0.5
    %v2240 = vmul.f32 %v2228, 0.5
    %v2241 = vmul.f32 %v2233, 0.5
    %v2242 = vmul.f32 %v2236, 0.5
    %v2243 = vmul.f32 %v2225, 0.70710677
    %v2244 = vmul.f32 %v2228, 0.70710677
    %v2245 = vmul.f32 %v2233, 0.70710677
    %v2246 = vmul.f32 %v2236, 0.70710677
    %vm2247 = vcmp.ge.f32.partialorder %v2243, 0.0
    %vm2248 = vcmp.ge.f32.partialorder %v2244, 0.0
    %vm2249 = vcmp.ge.f32.partialorder %v2245, 0.0
    %vm2250 = vcmp.ge.f32.partialorder %v2246, 0.0
    %v2251 = vsel %vm2247, 1.0, -1.0
    %v2252 = vsel %vm2248, 1.0, -1.0
    %v2253 = vsel %vm2249, 1.0, -1.0
    %v2254 = vsel %vm2250, 1.0, -1.0
    %v2255 = vand.u32 2147483647, %v2243
    %v2256 = vand.u32 2147483647, %v2244
    %v2257 = vand.u32 2147483647, %v2245
    %v2258 = vand.u32 2147483647, %v2246
    %v2259 = vmul.f32 %v2255, 0.3275911
    %v2260 = vmul.f32 %v2256, 0.3275911
    %v2261 = vmul.f32 %v2257, 0.3275911
    %v2262 = vmul.f32 %v2258, 0.3275911
    %v2263 = vadd.f32 %v2259, 1.0
    %v2264 = vadd.f32 %v2260, 1.0
    %v2265 = vadd.f32 %v2261, 1.0
    %v2266 = vadd.f32 %v2262, 1.0
    %v2267 = vrcp.pop %v2263
    %v2268 = vmul.f32 1.0, %v2267
    %v2269 = vrcp.pop %v2264
    %v2270 = vmul.f32 1.0, %v2269
    %v2271 = vrcp.pop %v2265
    %v2272 = vmul.f32 1.0, %v2271
    %v2273 = vrcp.pop %v2266
    %v2274 = vmul.f32 1.0, %v2273
    %v2275 = vmul.f32 %v2268, 1.0614054
    %v2276 = vmul.f32 %v2270, 1.0614054
    %v2277 = vmul.f32 %v2272, 1.0614054
    %v2278 = vmul.f32 %v2274, 1.0614054
    %v2279 = vadd.f32 %v2275, -1.4531521
    %v2280 = vadd.f32 %v2276, -1.4531521
    %v2281 = vadd.f32 %v2277, -1.4531521
    %v2282 = vadd.f32 %v2278, -1.4531521
    %v2283 = vmul.f32 %v2279, %v2268
    %v2284 = vmul.f32 %v2280, %v2270
    %v2285 = vmul.f32 %v2281, %v2272
    %v2286 = vmul.f32 %v2282, %v2274
    %v2287 = vadd.f32 %v2283, 1.4214138
    %v2288 = vadd.f32 %v2284, 1.4214138
    %v2289 = vadd.f32 %v2285, 1.4214138
    %v2290 = vadd.f32 %v2286, 1.4214138
    %v2291 = vmul.f32 %v2287, %v2268
    %v2292 = vmul.f32 %v2288, %v2270
    %v2293 = vmul.f32 %v2289, %v2272
    %v2294 = vmul.f32 %v2290, %v2274
    %v2295 = vadd.f32 %v2291, -0.28449672
    %v2296 = vadd.f32 %v2292, -0.28449672
    %v2297 = vadd.f32 %v2293, -0.28449672
    %v2298 = vadd.f32 %v2294, -0.28449672
    %v2299 = vmul.f32 %v2295, %v2268
    %v2300 = vmul.f32 %v2296, %v2270
    %v2301 = vmul.f32 %v2297, %v2272
    %v2302 = vmul.f32 %v2298, %v2274
    %v2303 = vadd.f32 %v2299, 0.2548296
    %v2304 = vadd.f32 %v2300, 0.2548296
    %v2305 = vadd.f32 %v2301, 0.2548296
    %v2306 = vadd.f32 %v2302, 0.2548296
    %v2307 = vmul.f32 %v2303, %v2268
    %v2308 = vmul.f32 %v2304, %v2270
    %v2309 = vmul.f32 %v2305, %v2272
    %v2310 = vmul.f32 %v2306, %v2274
    %v2311 = vsub.f32 0.0, %v2255
    %v2312 = vsub.f32 0.0, %v2256
    %v2313 = vsub.f32 0.0, %v2257
    %v2314 = vsub.f32 0.0, %v2258
    %v2315 = vmul.f32 %v2311, %v2255
    %v2316 = vmul.f32 %v2312, %v2256
    %v2317 = vmul.f32 %v2313, %v2257
    %v2318 = vmul.f32 %v2314, %v2258
    %v2319 = vmul.f32 %v2315, 1.442695
    %v2320 = vpow.pop %v2319
    %v2321 = vmul.f32 %v2316, 1.442695
    %v2322 = vpow.pop %v2321
    %v2323 = vmul.f32 %v2317, 1.442695
    %v2324 = vpow.pop %v2323
    %v2325 = vmul.f32 %v2318, 1.442695
    %v2326 = vpow.pop %v2325
    %v2327 = vmul.f32 %v2307, %v2320
    %v2328 = vmul.f32 %v2308, %v2322
    %v2329 = vmul.f32 %v2309, %v2324
    %v2330 = vmul.f32 %v2310, %v2326
    %v2331 = vsub.f32 1.0, %v2327
    %v2332 = vsub.f32 1.0, %v2328
    %v2333 = vsub.f32 1.0, %v2329
    %v2334 = vsub.f32 1.0, %v2330
    %v2335 = vmul.f32 %v2251, %v2331
    %v2336 = vmul.f32 %v2252, %v2332
    %v2337 = vmul.f32 %v2253, %v2333
    %v2338 = vmul.f32 %v2254, %v2334
    %v2339 = vadd.f32 %v2335, 1.0
    %v2340 = vadd.f32 %v2336, 1.0
    %v2341 = vadd.f32 %v2337, 1.0
    %v2342 = vadd.f32 %v2338, 1.0
    %v2343 = vmul.f32 %v2239, %v2339
    %v2344 = vmul.f32 %v2240, %v2340
    %v2345 = vmul.f32 %v2241, %v2341
    %v2346 = vmul.f32 %v2242, %v2342
    %v2347 = vpack.c.bf16 %v2344, %v2343
    %v2348 = vpack.c.bf16 %v2346, %v2345
    %v2349 = vld [vmem:[%s39] sm:$0xf]
    %v2350 = vld [vmem:[%s39 + $0x4] sm:$0xf]
    %v2351 = vld [vmem:[%s39 + $0x8] sm:$0xf]
    %v2352 = vld [vmem:[%s39 + $0xc] sm:$0xf]
    %v2353 = vld [vmem:[%s39 + $0x10] sm:$0xf]
    %v2354 = vld [vmem:[%s39 + $0x14] sm:$0xf]
    %v2355 = vld [vmem:[%s39 + $0x18] sm:$0xf]
    %v2356 = vld [vmem:[%s39 + $0x1c] sm:$0xf]
    %v2357 = vld [vmem:[%s39 + $0x20] sm:$0xf]
    %v2358 = vld [vmem:[%s39 + $0x24] sm:$0xf]
    %v2359 = vld [vmem:[%s39 + $0x28] sm:$0xf]
    %v2360 = vld [vmem:[%s39 + $0x2c] sm:$0xf]
    %v2361 = vld [vmem:[%s39 + $0x30] sm:$0xf]
    %v2362 = vld [vmem:[%s39 + $0x34] sm:$0xf]
    %v2363 = vld [vmem:[%s39 + $0x38] sm:$0xf]
    %v2364 = vld [vmem:[%s39 + $0x3c] sm:$0xf]
    %v2381 = vunpack.c.l.b16 %v2349
    %v2382 = vunpack.c.l.b16 %v2350
    %v2383 = vunpack.c.l.b16 %v2351
    %v2384 = vunpack.c.l.b16 %v2352
    %v2385 = vunpack.c.l.b16 %v2353
    %v2386 = vunpack.c.l.b16 %v2354
    %v2387 = vunpack.c.l.b16 %v2355
    %v2388 = vunpack.c.l.b16 %v2356
    %v2389 = vunpack.c.l.b16 %v2357
    %v2390 = vunpack.c.l.b16 %v2358
    %v2391 = vunpack.c.l.b16 %v2359
    %v2392 = vunpack.c.l.b16 %v2360
    %v2393 = vunpack.c.l.b16 %v2361
    %v2394 = vunpack.c.l.b16 %v2362
    %v2395 = vunpack.c.l.b16 %v2363
    %v2396 = vunpack.c.l.b16 %v2364
    %v2397 = vpack.c.b16 %v2382, %v2381
    %v2398 = vpack.c.b16 %v2384, %v2383
    %v2399 = vpack.c.b16 %v2386, %v2385
    %v2400 = vpack.c.b16 %v2388, %v2387
    %v2401 = vpack.c.b16 %v2390, %v2389
    %v2402 = vpack.c.b16 %v2392, %v2391
    %v2403 = vpack.c.b16 %v2394, %v2393
    %v2404 = vpack.c.b16 %v2396, %v2395
    %2413 = vmatprep.subr.bf16.mxu0 0
    %2414 = vmatpush1.bf16.msra.mxu0 %v2404
    %2415 = vmatprep.subr.bf16.mxu0 0
    %2416 = vmatpush1.bf16.msra.mxu0 %v2403
    %2417 = vmatprep.subr.bf16.mxu0 0
    %2418 = vmatpush1.bf16.msra.mxu0 %v2402
    %2419 = vmatprep.subr.bf16.mxu0 0
    %2420 = vmatpush1.bf16.msra.mxu0 %v2401
    %2421 = vmatprep.subr.bf16.mxu0 0
    %2422 = vmatpush1.bf16.msra.mxu0 %v2400
    %2423 = vmatprep.subr.bf16.mxu0 0
    %2424 = vmatpush1.bf16.msra.mxu0 %v2399
    %2425 = vmatprep.subr.bf16.mxu0 0
    %2426 = vmatpush1.bf16.msra.mxu0 %v2398
    %2427 = vmatprep.subr.bf16.mxu0 0
    %2428 = vmatpush1.bf16.msra.mxu0 %v2397
    %2429 = vmatprep.subr.bf16.mxu0 0
    %2430 = vmatpush2.bf16.msra.mxu0 0
    %2431 = vmatprep.subr.bf16.mxu0 0
    %2432 = vmatpush2.bf16.msra.mxu0 0
    %2433 = vmatprep.subr.bf16.mxu0 0
    %2434 = vmatpush2.bf16.msra.mxu0 0
    %2435 = vmatprep.subr.bf16.mxu0 0
    %2436 = vmatpush2.bf16.msra.mxu0 0
    %2437 = vmatprep.subr.bf16.mxu0 0
    %2438 = vmatpush2.bf16.msra.mxu0 0
    %2439 = vmatprep.subr.bf16.mxu0 0
    %2440 = vmatpush2.bf16.msra.mxu0 0
    %2441 = vmatprep.subr.bf16.mxu0 0
    %2442 = vmatpush2.bf16.msra.mxu0 0
    %2443 = vmatprep.subr.bf16.mxu0 0
    %2444 = vmatpush2.bf16.msra.mxu0 0
    %2445 = vmatprep.mubr.bf16.mxu0 0
    %2446 = vmatmul.mubr.bf16.gmra.mxu0 %v2347
    %v2447 = vpop.f32.mrf.mxu0
    %v2448 = vadd.f32 0.0, %v2447
    %v2449 = vpop.f32.mrf.mxu0
    %v2450 = vpop.f32.mrf.mxu0
    %v2451 = vadd.f32 0.0, %v2450
    %v2452 = vpop.f32.mrf.mxu0
    %2453 = vmatprep.mubr.bf16.mxu0 0
    %2454 = vmatmul.mubr.bf16.gmra.mxu0 %v2348
    %v2455 = vpop.f32.mrf.mxu0
    %v2456 = vadd.f32 0.0, %v2455
    %v2457 = vpop.f32.mrf.mxu0
    %v2458 = vpop.f32.mrf.mxu0
    %v2459 = vadd.f32 0.0, %v2458
    %v2460 = vpop.f32.mrf.mxu0
    %2461 = vdwg.mxu0
    %v2462 = vadd.f32 %v2081, %v2448
    %v2463 = vadd.f32 %v2082, %v2451
    %v2464 = vadd.f32 %v2083, %v2456
    %v2465 = vadd.f32 %v2084, %v2459
    %v2466 = vld [vmem:[%s41] sm:$0x1]
    %v2468 = vlaneseq
    %v2469 = vshrl.u32 %v2468, 7
    %v2470 = vsub.s32 0, %v2469
    %v2471 = vrot.slane %v2466, %v2470
    %v2473 = vadd.f32 %v2462, %v2471
    %v2474 = vadd.f32 %v2463, %v2471
    %v2475 = vadd.f32 %v2464, %v2471
    %v2476 = vadd.f32 %v2465, %v2471
    %s2477 = scalar_lea.vmem %s19, 1
    %v2478 = vld [vmem:[%s2477] sm:$0x1]
    %s2479 = scalar_lea.vmem %s21, 1
    %v2480 = vld [vmem:[%s2479] sm:$0x1]
    %v2481 = vsel %vm248, %v2473, 0.0
    %2482 = vadd.xlane.f32.xlu0 %v2481
    %v2483 = vpop.xlane.xlu0 %2482
    %v2484 = vsel %vm248, %v2474, 0.0
    %2485 = vadd.xlane.f32.xlu0 %v2484
    %v2486 = vpop.xlane.xlu0 %2485
    %v2487 = vsel %vm248, %v2475, 0.0
    %2488 = vadd.xlane.f32.xlu0 %v2487
    %v2489 = vpop.xlane.xlu0 %2488
    %v2490 = vsel %vm248, %v2476, 0.0
    %2491 = vadd.xlane.f32.xlu0 %v2490
    %v2492 = vpop.xlane.xlu0 %2491
    %v2493 = vmul.f32 %v2483, %v963
    %v2494 = vmul.f32 %v2486, %v963
    %v2495 = vmul.f32 %v2489, %v963
    %v2496 = vmul.f32 %v2492, %v963
    %v2497 = vsub.f32 %v2473, %v2493
    %v2498 = vsub.f32 %v2474, %v2494
    %v2499 = vsub.f32 %v2475, %v2495
    %v2500 = vsub.f32 %v2476, %v2496
    %v2501 = vmul.f32 %v2497, %v2497
    %v2502 = vmul.f32 %v2498, %v2498
    %v2503 = vmul.f32 %v2499, %v2499
    %v2504 = vmul.f32 %v2500, %v2500
    %v2505 = vsel %vm248, %v2501, 0.0
    %2506 = vadd.xlane.f32.xlu0 %v2505
    %v2507 = vpop.xlane.xlu0 %2506
    %v2508 = vsel %vm248, %v2502, 0.0
    %2509 = vadd.xlane.f32.xlu0 %v2508
    %v2510 = vpop.xlane.xlu0 %2509
    %v2511 = vsel %vm248, %v2503, 0.0
    %2512 = vadd.xlane.f32.xlu0 %v2511
    %v2513 = vpop.xlane.xlu0 %2512
    %v2514 = vsel %vm248, %v2504, 0.0
    %2515 = vadd.xlane.f32.xlu0 %v2514
    %v2516 = vpop.xlane.xlu0 %2515
    %v2517 = vmul.f32 %v2507, %v963
    %v2518 = vmul.f32 %v2510, %v963
    %v2519 = vmul.f32 %v2513, %v963
    %v2520 = vmul.f32 %v2516, %v963
    %v2521 = vadd.f32 %v2517, 1e-05
    %v2522 = vadd.f32 %v2518, 1e-05
    %v2523 = vadd.f32 %v2519, 1e-05
    %v2524 = vadd.f32 %v2520, 1e-05
    %v2525 = vrsqrt.pop %v2521
    %v2526 = vrsqrt.pop %v2522
    %v2527 = vrsqrt.pop %v2523
    %v2528 = vrsqrt.pop %v2524
    %v2529 = vmul.f32 %v2497, %v2525
    %v2530 = vmul.f32 %v2498, %v2526
    %v2531 = vmul.f32 %v2499, %v2527
    %v2532 = vmul.f32 %v2500, %v2528
    %v2534 = vlaneseq
    %v2535 = vshrl.u32 %v2534, 7
    %v2536 = vsub.s32 0, %v2535
    %v2537 = vrot.slane %v2478, %v2536
    %v2539 = vmul.f32 %v2529, %v2537
    %v2540 = vmul.f32 %v2530, %v2537
    %v2541 = vmul.f32 %v2531, %v2537
    %v2542 = vmul.f32 %v2532, %v2537
    %v2544 = vlaneseq
    %v2545 = vshrl.u32 %v2544, 7
    %v2546 = vsub.s32 0, %v2545
    %v2547 = vrot.slane %v2480, %v2546
    %v2549 = vadd.f32 %v2539, %v2547
    %v2550 = vadd.f32 %v2540, %v2547
    %v2551 = vadd.f32 %v2541, %v2547
    %v2552 = vadd.f32 %v2542, %v2547
    %v2553 = vpack.c.bf16 %v2550, %v2549
    %v2554 = vpack.c.bf16 %v2552, %v2551
    %s2555 = scalar_lea.vmem %s23, 16
    %v2556 = vld [vmem:[%s2555] sm:$0xf]
    %v2557 = vld [vmem:[%s2555 + $0x4] sm:$0xf]
    %v2558 = vld [vmem:[%s2555 + $0x8] sm:$0xf]
    %v2559 = vld [vmem:[%s2555 + $0xc] sm:$0xf]
    %v2564 = vunpack.c.l.b16 %v2556
    %v2565 = vunpack.c.l.b16 %v2557
    %v2566 = vunpack.c.l.b16 %v2558
    %v2567 = vunpack.c.l.b16 %v2559
    %v2568 = vpack.c.b16 %v2565, %v2564
    %v2569 = vpack.c.b16 %v2567, %v2566
    %v2573 = vsel %vm248, %v2553, 0
    %v2576 = vsel %vm248, %v2554, 0
    %2578 = vmatprep.subr.bf16.mxu0 0
    %2579 = vmatpush1.bf16.msra.mxu0 0
    %2580 = vmatprep.subr.bf16.mxu0 0
    %2581 = vmatpush1.bf16.msra.mxu0 0
    %2582 = vmatprep.subr.bf16.mxu0 0
    %2583 = vmatpush1.bf16.msra.mxu0 0
    %2584 = vmatprep.subr.bf16.mxu0 0
    %2585 = vmatpush1.bf16.msra.mxu0 0
    %2586 = vmatprep.subr.bf16.mxu0 0
    %2587 = vmatpush1.bf16.msra.mxu0 0
    %2588 = vmatprep.subr.bf16.mxu0 0
    %2589 = vmatpush1.bf16.msra.mxu0 0
    %2590 = vmatprep.subr.bf16.mxu0 0
    %2591 = vmatpush1.bf16.msra.mxu0 %v2569
    %2592 = vmatprep.subr.bf16.mxu0 0
    %2593 = vmatpush1.bf16.msra.mxu0 %v2568
    %2594 = vmatprep.subr.bf16.mxu0 0
    %2595 = vmatpush2.bf16.msra.mxu0 0
    %2596 = vmatprep.subr.bf16.mxu0 0
    %2597 = vmatpush2.bf16.msra.mxu0 0
    %2598 = vmatprep.subr.bf16.mxu0 0
    %2599 = vmatpush2.bf16.msra.mxu0 0
    %2600 = vmatprep.subr.bf16.mxu0 0
    %2601 = vmatpush2.bf16.msra.mxu0 0
    %2602 = vmatprep.subr.bf16.mxu0 0
    %2603 = vmatpush2.bf16.msra.mxu0 0
    %2604 = vmatprep.subr.bf16.mxu0 0
    %2605 = vmatpush2.bf16.msra.mxu0 0
    %2606 = vmatprep.subr.bf16.mxu0 0
    %2607 = vmatpush2.bf16.msra.mxu0 0
    %2608 = vmatprep.subr.bf16.mxu0 0
    %2609 = vmatpush2.bf16.msra.mxu0 0
    %2610 = vmatprep.mubr.bf16.mxu0 0
    %2611 = vmatmul.mubr.bf16.gmra.mxu0 %v2573
    %v2612 = vpop.f32.mrf.mxu0
    %v2613 = vadd.f32 0.0, %v2612
    %v2614 = vpop.f32.mrf.mxu0
    %v2615 = vpop.f32.mrf.mxu0
    %v2616 = vadd.f32 0.0, %v2615
    %v2617 = vpop.f32.mrf.mxu0
    %2618 = vmatprep.mubr.bf16.mxu0 0
    %2619 = vmatmul.mubr.bf16.gmra.mxu0 %v2576
    %v2620 = vpop.f32.mrf.mxu0
    %v2621 = vadd.f32 0.0, %v2620
    %v2622 = vpop.f32.mrf.mxu0
    %v2623 = vpop.f32.mrf.mxu0
    %v2624 = vadd.f32 0.0, %v2623
    %v2625 = vpop.f32.mrf.mxu0
    %2626 = vdwg.mxu0
    %s2627 = scalar_lea.vmem %s25, 16
    %v2628 = vld [vmem:[%s2627] sm:$0xf]
    %v2629 = vld [vmem:[%s2627 + $0x4] sm:$0xf]
    %v2630 = vld [vmem:[%s2627 + $0x8] sm:$0xf]
    %v2631 = vld [vmem:[%s2627 + $0xc] sm:$0xf]
    %v2636 = vunpack.c.l.b16 %v2628
    %v2637 = vunpack.c.l.b16 %v2629
    %v2638 = vunpack.c.l.b16 %v2630
    %v2639 = vunpack.c.l.b16 %v2631
    %v2640 = vpack.c.b16 %v2637, %v2636
    %v2641 = vpack.c.b16 %v2639, %v2638
    %2644 = vmatprep.subr.bf16.mxu0 0
    %2645 = vmatpush1.bf16.msra.mxu0 0
    %2646 = vmatprep.subr.bf16.mxu0 0
    %2647 = vmatpush1.bf16.msra.mxu0 0
    %2648 = vmatprep.subr.bf16.mxu0 0
    %2649 = vmatpush1.bf16.msra.mxu0 0
    %2650 = vmatprep.subr.bf16.mxu0 0
    %2651 = vmatpush1.bf16.msra.mxu0 0
    %2652 = vmatprep.subr.bf16.mxu0 0
    %2653 = vmatpush1.bf16.msra.mxu0 0
    %2654 = vmatprep.subr.bf16.mxu0 0
    %2655 = vmatpush1.bf16.msra.mxu0 0
    %2656 = vmatprep.subr.bf16.mxu0 0
    %2657 = vmatpush1.bf16.msra.mxu0 %v2641
    %2658 = vmatprep.subr.bf16.mxu0 0
    %2659 = vmatpush1.bf16.msra.mxu0 %v2640
    %2660 = vmatprep.subr.bf16.mxu0 0
    %2661 = vmatpush2.bf16.msra.mxu0 0
    %2662 = vmatprep.subr.bf16.mxu0 0
    %2663 = vmatpush2.bf16.msra.mxu0 0
    %2664 = vmatprep.subr.bf16.mxu0 0
    %2665 = vmatpush2.bf16.msra.mxu0 0
    %2666 = vmatprep.subr.bf16.mxu0 0
    %2667 = vmatpush2.bf16.msra.mxu0 0
    %2668 = vmatprep.subr.bf16.mxu0 0
    %2669 = vmatpush2.bf16.msra.mxu0 0
    %2670 = vmatprep.subr.bf16.mxu0 0
    %2671 = vmatpush2.bf16.msra.mxu0 0
    %2672 = vmatprep.subr.bf16.mxu0 0
    %2673 = vmatpush2.bf16.msra.mxu0 0
    %2674 = vmatprep.subr.bf16.mxu0 0
    %2675 = vmatpush2.bf16.msra.mxu0 0
    %2676 = vmatprep.mubr.bf16.mxu0 0
    %2677 = vmatmul.mubr.bf16.gmra.mxu0 %v2573
    %v2678 = vpop.f32.mrf.mxu0
    %v2679 = vadd.f32 0.0, %v2678
    %v2680 = vpop.f32.mrf.mxu0
    %v2681 = vpop.f32.mrf.mxu0
    %v2682 = vadd.f32 0.0, %v2681
    %v2683 = vpop.f32.mrf.mxu0
    %2684 = vmatprep.mubr.bf16.mxu0 0
    %2685 = vmatmul.mubr.bf16.gmra.mxu0 %v2576
    %v2686 = vpop.f32.mrf.mxu0
    %v2687 = vadd.f32 0.0, %v2686
    %v2688 = vpop.f32.mrf.mxu0
    %v2689 = vpop.f32.mrf.mxu0
    %v2690 = vadd.f32 0.0, %v2689
    %v2691 = vpop.f32.mrf.mxu0
    %2692 = vdwg.mxu0
    %s2693 = scalar_lea.vmem %s27, 16
    %v2694 = vld [vmem:[%s2693] sm:$0xf]
    %v2695 = vld [vmem:[%s2693 + $0x4] sm:$0xf]
    %v2696 = vld [vmem:[%s2693 + $0x8] sm:$0xf]
    %v2697 = vld [vmem:[%s2693 + $0xc] sm:$0xf]
    %v2702 = vunpack.c.l.b16 %v2694
    %v2703 = vunpack.c.l.b16 %v2695
    %v2704 = vunpack.c.l.b16 %v2696
    %v2705 = vunpack.c.l.b16 %v2697
    %v2706 = vpack.c.b16 %v2703, %v2702
    %v2707 = vpack.c.b16 %v2705, %v2704
    %2710 = vmatprep.subr.bf16.mxu0 0
    %2711 = vmatpush1.bf16.msra.mxu0 0
    %2712 = vmatprep.subr.bf16.mxu0 0
    %2713 = vmatpush1.bf16.msra.mxu0 0
    %2714 = vmatprep.subr.bf16.mxu0 0
    %2715 = vmatpush1.bf16.msra.mxu0 0
    %2716 = vmatprep.subr.bf16.mxu0 0
    %2717 = vmatpush1.bf16.msra.mxu0 0
    %2718 = vmatprep.subr.bf16.mxu0 0
    %2719 = vmatpush1.bf16.msra.mxu0 0
    %2720 = vmatprep.subr.bf16.mxu0 0
    %2721 = vmatpush1.bf16.msra.mxu0 0
    %2722 = vmatprep.subr.bf16.mxu0 0
    %2723 = vmatpush1.bf16.msra.mxu0 %v2707
    %2724 = vmatprep.subr.bf16.mxu0 0
    %2725 = vmatpush1.bf16.msra.mxu0 %v2706
    %2726 = vmatprep.subr.bf16.mxu0 0
    %2727 = vmatpush2.bf16.msra.mxu0 0
    %2728 = vmatprep.subr.bf16.mxu0 0
    %2729 = vmatpush2.bf16.msra.mxu0 0
    %2730 = vmatprep.subr.bf16.mxu0 0
    %2731 = vmatpush2.bf16.msra.mxu0 0
    %2732 = vmatprep.subr.bf16.mxu0 0
    %2733 = vmatpush2.bf16.msra.mxu0 0
    %2734 = vmatprep.subr.bf16.mxu0 0
    %2735 = vmatpush2.bf16.msra.mxu0 0
    %2736 = vmatprep.subr.bf16.mxu0 0
    %2737 = vmatpush2.bf16.msra.mxu0 0
    %2738 = vmatprep.subr.bf16.mxu0 0
    %2739 = vmatpush2.bf16.msra.mxu0 0
    %2740 = vmatprep.subr.bf16.mxu0 0
    %2741 = vmatpush2.bf16.msra.mxu0 0
    %2742 = vmatprep.mubr.bf16.mxu0 0
    %2743 = vmatmul.mubr.bf16.gmra.mxu0 %v2573
    %v2744 = vpop.f32.mrf.mxu0
    %v2745 = vadd.f32 0.0, %v2744
    %v2746 = vpop.f32.mrf.mxu0
    %v2747 = vpop.f32.mrf.mxu0
    %v2748 = vadd.f32 0.0, %v2747
    %v2749 = vpop.f32.mrf.mxu0
    %2750 = vmatprep.mubr.bf16.mxu0 0
    %2751 = vmatmul.mubr.bf16.gmra.mxu0 %v2576
    %v2752 = vpop.f32.mrf.mxu0
    %v2753 = vadd.f32 0.0, %v2752
    %v2754 = vpop.f32.mrf.mxu0
    %v2755 = vpop.f32.mrf.mxu0
    %v2756 = vadd.f32 0.0, %v2755
    %v2757 = vpop.f32.mrf.mxu0
    %2758 = vdwg.mxu0
    %v2759 = vmul.f32 %v2613, %v818
    %v2760 = vmul.f32 %v2616, %v819
    %v2761 = vmul.f32 %v2621, %v820
    %v2762 = vmul.f32 %v2624, %v821
    %v2763 = vpack.c.bf16 %v2616, %v2613
    %v2764 = vpack.c.bf16 %v2624, %v2621
    %v2766 = vsel %vm408, %v2763, 0
    %v2769 = vsel %vm408, %v2764, 0
    %2771 = vmatprep.subr.bf16.mxu0 0
    %2772 = vmatpush1.bf16.msra.mxu0 0
    %2773 = vmatprep.subr.bf16.mxu0 0
    %2774 = vmatpush1.bf16.msra.mxu0 0
    %2775 = vmatprep.subr.bf16.mxu0 0
    %2776 = vmatpush1.bf16.msra.mxu0 0
    %2777 = vmatprep.subr.bf16.mxu0 0
    %2778 = vmatpush1.bf16.msra.mxu0 0
    %2779 = vmatprep.subr.bf16.mxu0 0
    %2780 = vmatpush1.bf16.msra.mxu0 %v1252
    %2781 = vmatprep.subr.bf16.mxu0 0
    %2782 = vmatpush1.bf16.msra.mxu0 %v1251
    %2783 = vmatprep.subr.bf16.mxu0 0
    %2784 = vmatpush1.bf16.msra.mxu0 %v1250
    %2785 = vmatprep.subr.bf16.mxu0 0
    %2786 = vmatpush1.bf16.msra.mxu0 %v1249
    %2787 = vmatprep.subr.bf16.mxu0 0
    %2788 = vmatpush2.bf16.msra.mxu0 0
    %2789 = vmatprep.subr.bf16.mxu0 0
    %2790 = vmatpush2.bf16.msra.mxu0 0
    %2791 = vmatprep.subr.bf16.mxu0 0
    %2792 = vmatpush2.bf16.msra.mxu0 0
    %2793 = vmatprep.subr.bf16.mxu0 0
    %2794 = vmatpush2.bf16.msra.mxu0 0
    %2795 = vmatprep.subr.bf16.mxu0 0
    %2796 = vmatpush2.bf16.msra.mxu0 0
    %2797 = vmatprep.subr.bf16.mxu0 0
    %2798 = vmatpush2.bf16.msra.mxu0 0
    %2799 = vmatprep.subr.bf16.mxu0 0
    %2800 = vmatpush2.bf16.msra.mxu0 0
    %2801 = vmatprep.subr.bf16.mxu0 0
    %2802 = vmatpush2.bf16.msra.mxu0 0
    %2803 = vmatprep.mubr.bf16.mxu0 0
    %2804 = vmatmul.mubr.bf16.gmra.mxu0 %v2766
    %v2805 = vpop.f32.mrf.mxu0
    %v2806 = vadd.f32 0.0, %v2805
    %v2807 = vpop.f32.mrf.mxu0
    %v2808 = vpop.f32.mrf.mxu0
    %v2809 = vadd.f32 0.0, %v2808
    %v2810 = vpop.f32.mrf.mxu0
    %2811 = vmatprep.mubr.bf16.mxu0 0
    %2812 = vmatmul.mubr.bf16.gmra.mxu0 %v2769
    %v2813 = vpop.f32.mrf.mxu0
    %v2814 = vadd.f32 0.0, %v2813
    %v2815 = vpop.f32.mrf.mxu0
    %v2816 = vpop.f32.mrf.mxu0
    %v2817 = vadd.f32 0.0, %v2816
    %v2818 = vpop.f32.mrf.mxu0
    %2819 = vdwg.mxu0
    %v2820 = vmul.f32 %v2806, %v822
    %v2821 = vmul.f32 %v2809, %v823
    %v2822 = vmul.f32 %v2814, %v824
    %v2823 = vmul.f32 %v2817, %v825
    %v2824 = vadd.f32 %v2759, %v2820
    %v2825 = vadd.f32 %v2760, %v2821
    %v2826 = vadd.f32 %v2761, %v2822
    %v2827 = vadd.f32 %v2762, %v2823
    %v2828 = vmul.f32 %v2824, 0.25
    %v2829 = vmul.f32 %v2825, 0.25
    %v2830 = vmul.f32 %v2826, 0.25
    %v2831 = vmul.f32 %v2827, 0.25
    %v2832 = vmul.f32 %v2679, %v818
    %v2833 = vmul.f32 %v2682, %v819
    %v2834 = vmul.f32 %v2687, %v820
    %v2835 = vmul.f32 %v2690, %v821
    %v2836 = vpack.c.bf16 %v2682, %v2679
    %v2837 = vpack.c.bf16 %v2690, %v2687
    %v2839 = vsel %vm408, %v2836, 0
    %v2842 = vsel %vm408, %v2837, 0
    %2844 = vmatprep.subr.bf16.mxu0 0
    %2845 = vmatpush1.bf16.msra.mxu0 0
    %2846 = vmatprep.subr.bf16.mxu0 0
    %2847 = vmatpush1.bf16.msra.mxu0 0
    %2848 = vmatprep.subr.bf16.mxu0 0
    %2849 = vmatpush1.bf16.msra.mxu0 0
    %2850 = vmatprep.subr.bf16.mxu0 0
    %2851 = vmatpush1.bf16.msra.mxu0 0
    %2852 = vmatprep.subr.bf16.mxu0 0
    %2853 = vmatpush1.bf16.msra.mxu0 %v1252
    %2854 = vmatprep.subr.bf16.mxu0 0
    %2855 = vmatpush1.bf16.msra.mxu0 %v1251
    %2856 = vmatprep.subr.bf16.mxu0 0
    %2857 = vmatpush1.bf16.msra.mxu0 %v1250
    %2858 = vmatprep.subr.bf16.mxu0 0
    %2859 = vmatpush1.bf16.msra.mxu0 %v1249
    %2860 = vmatprep.subr.bf16.mxu0 0
    %2861 = vmatpush2.bf16.msra.mxu0 0
    %2862 = vmatprep.subr.bf16.mxu0 0
    %2863 = vmatpush2.bf16.msra.mxu0 0
    %2864 = vmatprep.subr.bf16.mxu0 0
    %2865 = vmatpush2.bf16.msra.mxu0 0
    %2866 = vmatprep.subr.bf16.mxu0 0
    %2867 = vmatpush2.bf16.msra.mxu0 0
    %2868 = vmatprep.subr.bf16.mxu0 0
    %2869 = vmatpush2.bf16.msra.mxu0 0
    %2870 = vmatprep.subr.bf16.mxu0 0
    %2871 = vmatpush2.bf16.msra.mxu0 0
    %2872 = vmatprep.subr.bf16.mxu0 0
    %2873 = vmatpush2.bf16.msra.mxu0 0
    %2874 = vmatprep.subr.bf16.mxu0 0
    %2875 = vmatpush2.bf16.msra.mxu0 0
    %2876 = vmatprep.mubr.bf16.mxu0 0
    %2877 = vmatmul.mubr.bf16.gmra.mxu0 %v2839
    %v2878 = vpop.f32.mrf.mxu0
    %v2879 = vadd.f32 0.0, %v2878
    %v2880 = vpop.f32.mrf.mxu0
    %v2881 = vpop.f32.mrf.mxu0
    %v2882 = vadd.f32 0.0, %v2881
    %v2883 = vpop.f32.mrf.mxu0
    %2884 = vmatprep.mubr.bf16.mxu0 0
    %2885 = vmatmul.mubr.bf16.gmra.mxu0 %v2842
    %v2886 = vpop.f32.mrf.mxu0
    %v2887 = vadd.f32 0.0, %v2886
    %v2888 = vpop.f32.mrf.mxu0
    %v2889 = vpop.f32.mrf.mxu0
    %v2890 = vadd.f32 0.0, %v2889
    %v2891 = vpop.f32.mrf.mxu0
    %2892 = vdwg.mxu0
    %v2893 = vmul.f32 %v2879, %v822
    %v2894 = vmul.f32 %v2882, %v823
    %v2895 = vmul.f32 %v2887, %v824
    %v2896 = vmul.f32 %v2890, %v825
    %v2897 = vadd.f32 %v2832, %v2893
    %v2898 = vadd.f32 %v2833, %v2894
    %v2899 = vadd.f32 %v2834, %v2895
    %v2900 = vadd.f32 %v2835, %v2896
    %2905 = vrot.lane.b32.xlu0 %v2828, 112
    %v2906 = vpop.permute.xlu0 %2905
    %2907 = vrot.lane.b32.xlu0 %v2829, 112
    %v2908 = vpop.permute.xlu0 %2907
    %2909 = vrot.lane.b32.xlu0 %v2830, 112
    %v2910 = vpop.permute.xlu0 %2909
    %2911 = vrot.lane.b32.xlu0 %v2831, 112
    %v2912 = vpop.permute.xlu0 %2911
    %2917 = vrot.lane.b32.xlu0 %v2828, 96
    %v2918 = vpop.permute.xlu0 %2917
    %2919 = vrot.lane.b32.xlu0 %v2829, 96
    %v2920 = vpop.permute.xlu0 %2919
    %2921 = vrot.lane.b32.xlu0 %v2830, 96
    %v2922 = vpop.permute.xlu0 %2921
    %2923 = vrot.lane.b32.xlu0 %v2831, 96
    %v2924 = vpop.permute.xlu0 %2923
    %2929 = vrot.lane.b32.xlu0 %v2828, 80
    %v2930 = vpop.permute.xlu0 %2929
    %2931 = vrot.lane.b32.xlu0 %v2829, 80
    %v2932 = vpop.permute.xlu0 %2931
    %2933 = vrot.lane.b32.xlu0 %v2830, 80
    %v2934 = vpop.permute.xlu0 %2933
    %2935 = vrot.lane.b32.xlu0 %v2831, 80
    %v2936 = vpop.permute.xlu0 %2935
    %v2941 = vpack.c.bf16 %v2829, %v2828
    %v2942 = vpack.c.bf16 %v2831, %v2830
    %v2943 = vpack.c.bf16 %v2908, %v2906
    %v2944 = vpack.c.bf16 %v2912, %v2910
    %v2945 = vpack.c.bf16 %v2920, %v2918
    %v2946 = vpack.c.bf16 %v2924, %v2922
    %v2947 = vpack.c.bf16 %v2932, %v2930
    %v2948 = vpack.c.bf16 %v2936, %v2934
    %2953 = vrot.lane.b32.xlu0 %v2897, 112
    %v2954 = vpop.permute.xlu0 %2953
    %2955 = vrot.lane.b32.xlu0 %v2898, 112
    %v2956 = vpop.permute.xlu0 %2955
    %2957 = vrot.lane.b32.xlu0 %v2899, 112
    %v2958 = vpop.permute.xlu0 %2957
    %2959 = vrot.lane.b32.xlu0 %v2900, 112
    %v2960 = vpop.permute.xlu0 %2959
    %2965 = vrot.lane.b32.xlu0 %v2897, 96
    %v2966 = vpop.permute.xlu0 %2965
    %2967 = vrot.lane.b32.xlu0 %v2898, 96
    %v2968 = vpop.permute.xlu0 %2967
    %2969 = vrot.lane.b32.xlu0 %v2899, 96
    %v2970 = vpop.permute.xlu0 %2969
    %2971 = vrot.lane.b32.xlu0 %v2900, 96
    %v2972 = vpop.permute.xlu0 %2971
    %2977 = vrot.lane.b32.xlu0 %v2897, 80
    %v2978 = vpop.permute.xlu0 %2977
    %2979 = vrot.lane.b32.xlu0 %v2898, 80
    %v2980 = vpop.permute.xlu0 %2979
    %2981 = vrot.lane.b32.xlu0 %v2899, 80
    %v2982 = vpop.permute.xlu0 %2981
    %2983 = vrot.lane.b32.xlu0 %v2900, 80
    %v2984 = vpop.permute.xlu0 %2983
    %v2989 = vpack.c.bf16 %v2898, %v2897
    %v2990 = vpack.c.bf16 %v2900, %v2899
    %v2991 = vpack.c.bf16 %v2956, %v2954
    %v2992 = vpack.c.bf16 %v2960, %v2958
    %v2993 = vpack.c.bf16 %v2968, %v2966
    %v2994 = vpack.c.bf16 %v2972, %v2970
    %v2995 = vpack.c.bf16 %v2980, %v2978
    %v2996 = vpack.c.bf16 %v2984, %v2982
    %3001 = vrot.lane.b32.xlu0 %v2745, 112
    %v3002 = vpop.permute.xlu0 %3001
    %3003 = vrot.lane.b32.xlu0 %v2748, 112
    %v3004 = vpop.permute.xlu0 %3003
    %3005 = vrot.lane.b32.xlu0 %v2753, 112
    %v3006 = vpop.permute.xlu0 %3005
    %3007 = vrot.lane.b32.xlu0 %v2756, 112
    %v3008 = vpop.permute.xlu0 %3007
    %3013 = vrot.lane.b32.xlu0 %v2745, 96
    %v3014 = vpop.permute.xlu0 %3013
    %3015 = vrot.lane.b32.xlu0 %v2748, 96
    %v3016 = vpop.permute.xlu0 %3015
    %3017 = vrot.lane.b32.xlu0 %v2753, 96
    %v3018 = vpop.permute.xlu0 %3017
    %3019 = vrot.lane.b32.xlu0 %v2756, 96
    %v3020 = vpop.permute.xlu0 %3019
    %3025 = vrot.lane.b32.xlu0 %v2745, 80
    %v3026 = vpop.permute.xlu0 %3025
    %3027 = vrot.lane.b32.xlu0 %v2748, 80
    %v3028 = vpop.permute.xlu0 %3027
    %3029 = vrot.lane.b32.xlu0 %v2753, 80
    %v3030 = vpop.permute.xlu0 %3029
    %3031 = vrot.lane.b32.xlu0 %v2756, 80
    %v3032 = vpop.permute.xlu0 %3031
    %v3037 = vpack.c.bf16 %v2748, %v2745
    %v3038 = vpack.c.bf16 %v2756, %v2753
    %v3039 = vpack.c.bf16 %v3004, %v3002
    %v3040 = vpack.c.bf16 %v3008, %v3006
    %v3041 = vpack.c.bf16 %v3016, %v3014
    %v3042 = vpack.c.bf16 %v3020, %v3018
    %v3043 = vpack.c.bf16 %v3028, %v3026
    %v3044 = vpack.c.bf16 %v3032, %v3030
    %v3046 = vsel %vm142, %v2941, 0
    %v3049 = vsel %vm142, %v2942, 0
    %v3052 = vsel %vm142, %v2943, 0
    %v3055 = vsel %vm142, %v2944, 0
    %v3058 = vsel %vm142, %v2945, 0
    %v3061 = vsel %vm142, %v2946, 0
    %v3064 = vsel %vm142, %v2947, 0
    %v3067 = vsel %vm142, %v2948, 0
    %v3070 = vsel %vm142, %v2989, 0
    %v3073 = vsel %vm142, %v2990, 0
    %v3076 = vsel %vm142, %v2991, 0
    %v3079 = vsel %vm142, %v2992, 0
    %v3082 = vsel %vm142, %v2993, 0
    %v3085 = vsel %vm142, %v2994, 0
    %v3088 = vsel %vm142, %v2995, 0
    %v3091 = vsel %vm142, %v2996, 0
    %3093 = vmatprep.subr.bf16.mxu0 0
    %3094 = vmatpush1.bf16.xpose.msra.mxu0 %v3091
    %3095 = vmatprep.subr.bf16.mxu0 0
    %3096 = vmatpush1.bf16.xpose.msra.mxu0 %v3088
    %3097 = vmatprep.subr.bf16.mxu0 0
    %3098 = vmatpush1.bf16.xpose.msra.mxu0 %v3085
    %3099 = vmatprep.subr.bf16.mxu0 0
    %3100 = vmatpush1.bf16.xpose.msra.mxu0 %v3082
    %3101 = vmatprep.subr.bf16.mxu0 0
    %3102 = vmatpush1.bf16.xpose.msra.mxu0 %v3079
    %3103 = vmatprep.subr.bf16.mxu0 0
    %3104 = vmatpush1.bf16.xpose.msra.mxu0 %v3076
    %3105 = vmatprep.subr.bf16.mxu0 0
    %3106 = vmatpush1.bf16.xpose.msra.mxu0 %v3073
    %3107 = vmatprep.subr.bf16.mxu0 0
    %3108 = vmatpush1.bf16.xpose.msra.mxu0 %v3070
    %3109 = vmatprep.subr.bf16.mxu0 0
    %3110 = vmatpush2.bf16.xpose.msra.mxu0 0
    %3111 = vmatprep.subr.bf16.mxu0 0
    %3112 = vmatpush2.bf16.xpose.msra.mxu0 0
    %3113 = vmatprep.subr.bf16.mxu0 0
    %3114 = vmatpush2.bf16.xpose.msra.mxu0 0
    %3115 = vmatprep.subr.bf16.mxu0 0
    %3116 = vmatpush2.bf16.xpose.msra.mxu0 0
    %3117 = vmatprep.subr.bf16.mxu0 0
    %3118 = vmatpush2.bf16.xpose.msra.mxu0 0
    %3119 = vmatprep.subr.bf16.mxu0 0
    %3120 = vmatpush2.bf16.xpose.msra.mxu0 0
    %3121 = vmatprep.subr.bf16.mxu0 0
    %3122 = vmatpush2.bf16.xpose.msra.mxu0 0
    %3123 = vmatprep.subr.bf16.mxu0 0
    %3124 = vmatpush2.bf16.xpose.msra.mxu0 0
    %3125 = vmatprep.mubr.bf16.mxu0 0
    %3126 = vmatmul.mubr.bf16.gmra.mxu0 %v3046
    %v3127 = vpop.f32.mrf.mxu0
    %v3128 = vadd.f32 %v933, %v3127
    %v3129 = vpop.f32.mrf.mxu0
    %v3130 = vpop.f32.mrf.mxu0
    %v3131 = vadd.f32 %v934, %v3130
    %v3132 = vpop.f32.mrf.mxu0
    %3133 = vmatprep.mubr.bf16.mxu0 0
    %3134 = vmatmul.mubr.bf16.gmra.mxu0 %v3049
    %v3135 = vpop.f32.mrf.mxu0
    %v3136 = vadd.f32 %v935, %v3135
    %v3137 = vpop.f32.mrf.mxu0
    %v3138 = vpop.f32.mrf.mxu0
    %v3139 = vadd.f32 %v936, %v3138
    %v3140 = vpop.f32.mrf.mxu0
    %3141 = vmatprep.mubr.bf16.mxu0 0
    %3142 = vmatmul.mubr.bf16.gmra.mxu0 %v3052
    %v3143 = vpop.f32.mrf.mxu0
    %v3144 = vadd.f32 %v937, %v3143
    %v3145 = vpop.f32.mrf.mxu0
    %v3146 = vpop.f32.mrf.mxu0
    %v3147 = vadd.f32 %v938, %v3146
    %v3148 = vpop.f32.mrf.mxu0
    %3149 = vmatprep.mubr.bf16.mxu0 0
    %3150 = vmatmul.mubr.bf16.gmra.mxu0 %v3055
    %v3151 = vpop.f32.mrf.mxu0
    %v3152 = vadd.f32 %v939, %v3151
    %v3153 = vpop.f32.mrf.mxu0
    %v3154 = vpop.f32.mrf.mxu0
    %v3155 = vadd.f32 %v940, %v3154
    %v3156 = vpop.f32.mrf.mxu0
    %3157 = vmatprep.mubr.bf16.mxu0 0
    %3158 = vmatmul.mubr.bf16.gmra.mxu0 %v3058
    %v3159 = vpop.f32.mrf.mxu0
    %v3160 = vadd.f32 %v941, %v3159
    %v3161 = vpop.f32.mrf.mxu0
    %v3162 = vpop.f32.mrf.mxu0
    %v3163 = vadd.f32 %v942, %v3162
    %v3164 = vpop.f32.mrf.mxu0
    %3165 = vmatprep.mubr.bf16.mxu0 0
    %3166 = vmatmul.mubr.bf16.gmra.mxu0 %v3061
    %v3167 = vpop.f32.mrf.mxu0
    %v3168 = vadd.f32 %v943, %v3167
    %v3169 = vpop.f32.mrf.mxu0
    %v3170 = vpop.f32.mrf.mxu0
    %v3171 = vadd.f32 %v944, %v3170
    %v3172 = vpop.f32.mrf.mxu0
    %3173 = vmatprep.mubr.bf16.mxu0 0
    %3174 = vmatmul.mubr.bf16.gmra.mxu0 %v3064
    %v3175 = vpop.f32.mrf.mxu0
    %v3176 = vadd.f32 %v945, %v3175
    %v3177 = vpop.f32.mrf.mxu0
    %v3178 = vpop.f32.mrf.mxu0
    %v3179 = vadd.f32 %v946, %v3178
    %v3180 = vpop.f32.mrf.mxu0
    %3181 = vmatprep.mubr.bf16.mxu0 0
    %3182 = vmatmul.mubr.bf16.gmra.mxu0 %v3067
    %v3183 = vpop.f32.mrf.mxu0
    %v3184 = vadd.f32 %v947, %v3183
    %v3185 = vpop.f32.mrf.mxu0
    %v3186 = vpop.f32.mrf.mxu0
    %v3187 = vadd.f32 %v948, %v3186
    %v3188 = vpop.f32.mrf.mxu0
    %3189 = vdwg.mxu0
    %3190 = vmax.xlane.f32.xlu0 %v3128
    %v3191 = vpop.xlane.xlu0 %3190
    %3192 = vmax.xlane.f32.xlu0 %v3131
    %v3193 = vpop.xlane.xlu0 %3192
    %3194 = vmax.xlane.f32.xlu0 %v3136
    %v3195 = vpop.xlane.xlu0 %3194
    %3196 = vmax.xlane.f32.xlu0 %v3139
    %v3197 = vpop.xlane.xlu0 %3196
    %3198 = vmax.xlane.f32.xlu0 %v3144
    %v3199 = vpop.xlane.xlu0 %3198
    %3200 = vmax.xlane.f32.xlu0 %v3147
    %v3201 = vpop.xlane.xlu0 %3200
    %3202 = vmax.xlane.f32.xlu0 %v3152
    %v3203 = vpop.xlane.xlu0 %3202
    %3204 = vmax.xlane.f32.xlu0 %v3155
    %v3205 = vpop.xlane.xlu0 %3204
    %3206 = vmax.xlane.f32.xlu0 %v3160
    %v3207 = vpop.xlane.xlu0 %3206
    %3208 = vmax.xlane.f32.xlu0 %v3163
    %v3209 = vpop.xlane.xlu0 %3208
    %3210 = vmax.xlane.f32.xlu0 %v3168
    %v3211 = vpop.xlane.xlu0 %3210
    %3212 = vmax.xlane.f32.xlu0 %v3171
    %v3213 = vpop.xlane.xlu0 %3212
    %3214 = vmax.xlane.f32.xlu0 %v3176
    %v3215 = vpop.xlane.xlu0 %3214
    %3216 = vmax.xlane.f32.xlu0 %v3179
    %v3217 = vpop.xlane.xlu0 %3216
    %3218 = vmax.xlane.f32.xlu0 %v3184
    %v3219 = vpop.xlane.xlu0 %3218
    %3220 = vmax.xlane.f32.xlu0 %v3187
    %v3221 = vpop.xlane.xlu0 %3220
    %v3222 = vsub.f32 %v3128, %v3191
    %v3223 = vsub.f32 %v3131, %v3193
    %v3224 = vsub.f32 %v3136, %v3195
    %v3225 = vsub.f32 %v3139, %v3197
    %v3226 = vsub.f32 %v3144, %v3199
    %v3227 = vsub.f32 %v3147, %v3201
    %v3228 = vsub.f32 %v3152, %v3203
    %v3229 = vsub.f32 %v3155, %v3205
    %v3230 = vsub.f32 %v3160, %v3207
    %v3231 = vsub.f32 %v3163, %v3209
    %v3232 = vsub.f32 %v3168, %v3211
    %v3233 = vsub.f32 %v3171, %v3213
    %v3234 = vsub.f32 %v3176, %v3215
    %v3235 = vsub.f32 %v3179, %v3217
    %v3236 = vsub.f32 %v3184, %v3219
    %v3237 = vsub.f32 %v3187, %v3221
    %v3238 = vmul.f32 %v3222, 1.442695
    %v3239 = vpow.pop %v3238
    %v3240 = vmul.f32 %v3223, 1.442695
    %v3241 = vpow.pop %v3240
    %v3242 = vmul.f32 %v3224, 1.442695
    %v3243 = vpow.pop %v3242
    %v3244 = vmul.f32 %v3225, 1.442695
    %v3245 = vpow.pop %v3244
    %v3246 = vmul.f32 %v3226, 1.442695
    %v3247 = vpow.pop %v3246
    %v3248 = vmul.f32 %v3227, 1.442695
    %v3249 = vpow.pop %v3248
    %v3250 = vmul.f32 %v3228, 1.442695
    %v3251 = vpow.pop %v3250
    %v3252 = vmul.f32 %v3229, 1.442695
    %v3253 = vpow.pop %v3252
    %v3254 = vmul.f32 %v3230, 1.442695
    %v3255 = vpow.pop %v3254
    %v3256 = vmul.f32 %v3231, 1.442695
    %v3257 = vpow.pop %v3256
    %v3258 = vmul.f32 %v3232, 1.442695
    %v3259 = vpow.pop %v3258
    %v3260 = vmul.f32 %v3233, 1.442695
    %v3261 = vpow.pop %v3260
    %v3262 = vmul.f32 %v3234, 1.442695
    %v3263 = vpow.pop %v3262
    %v3264 = vmul.f32 %v3235, 1.442695
    %v3265 = vpow.pop %v3264
    %v3266 = vmul.f32 %v3236, 1.442695
    %v3267 = vpow.pop %v3266
    %v3268 = vmul.f32 %v3237, 1.442695
    %v3269 = vpow.pop %v3268
    %3270 = vadd.xlane.f32.xlu0 %v3239
    %v3271 = vpop.xlane.xlu0 %3270
    %3272 = vadd.xlane.f32.xlu0 %v3241
    %v3273 = vpop.xlane.xlu0 %3272
    %3274 = vadd.xlane.f32.xlu0 %v3243
    %v3275 = vpop.xlane.xlu0 %3274
    %3276 = vadd.xlane.f32.xlu0 %v3245
    %v3277 = vpop.xlane.xlu0 %3276
    %3278 = vadd.xlane.f32.xlu0 %v3247
    %v3279 = vpop.xlane.xlu0 %3278
    %3280 = vadd.xlane.f32.xlu0 %v3249
    %v3281 = vpop.xlane.xlu0 %3280
    %3282 = vadd.xlane.f32.xlu0 %v3251
    %v3283 = vpop.xlane.xlu0 %3282
    %3284 = vadd.xlane.f32.xlu0 %v3253
    %v3285 = vpop.xlane.xlu0 %3284
    %3286 = vadd.xlane.f32.xlu0 %v3255
    %v3287 = vpop.xlane.xlu0 %3286
    %3288 = vadd.xlane.f32.xlu0 %v3257
    %v3289 = vpop.xlane.xlu0 %3288
    %3290 = vadd.xlane.f32.xlu0 %v3259
    %v3291 = vpop.xlane.xlu0 %3290
    %3292 = vadd.xlane.f32.xlu0 %v3261
    %v3293 = vpop.xlane.xlu0 %3292
    %3294 = vadd.xlane.f32.xlu0 %v3263
    %v3295 = vpop.xlane.xlu0 %3294
    %3296 = vadd.xlane.f32.xlu0 %v3265
    %v3297 = vpop.xlane.xlu0 %3296
    %3298 = vadd.xlane.f32.xlu0 %v3267
    %v3299 = vpop.xlane.xlu0 %3298
    %3300 = vadd.xlane.f32.xlu0 %v3269
    %v3301 = vpop.xlane.xlu0 %3300
    %v3302 = vrcp.pop %v3271
    %v3303 = vrcp.pop %v3273
    %v3304 = vrcp.pop %v3275
    %v3305 = vrcp.pop %v3277
    %v3306 = vrcp.pop %v3279
    %v3307 = vrcp.pop %v3281
    %v3308 = vrcp.pop %v3283
    %v3309 = vrcp.pop %v3285
    %v3310 = vrcp.pop %v3287
    %v3311 = vrcp.pop %v3289
    %v3312 = vrcp.pop %v3291
    %v3313 = vrcp.pop %v3293
    %v3314 = vrcp.pop %v3295
    %v3315 = vrcp.pop %v3297
    %v3316 = vrcp.pop %v3299
    %v3317 = vrcp.pop %v3301
    %v3318 = vmul.f32 %v3239, %v3302
    %v3319 = vmul.f32 %v3241, %v3303
    %v3320 = vmul.f32 %v3243, %v3304
    %v3321 = vmul.f32 %v3245, %v3305
    %v3322 = vmul.f32 %v3247, %v3306
    %v3323 = vmul.f32 %v3249, %v3307
    %v3324 = vmul.f32 %v3251, %v3308
    %v3325 = vmul.f32 %v3253, %v3309
    %v3326 = vmul.f32 %v3255, %v3310
    %v3327 = vmul.f32 %v3257, %v3311
    %v3328 = vmul.f32 %v3259, %v3312
    %v3329 = vmul.f32 %v3261, %v3313
    %v3330 = vmul.f32 %v3263, %v3314
    %v3331 = vmul.f32 %v3265, %v3315
    %v3332 = vmul.f32 %v3267, %v3316
    %v3333 = vmul.f32 %v3269, %v3317
    %v3334 = vpack.c.bf16 %v3319, %v3318
    %v3335 = vpack.c.bf16 %v3321, %v3320
    %v3336 = vpack.c.bf16 %v3323, %v3322
    %v3337 = vpack.c.bf16 %v3325, %v3324
    %v3338 = vpack.c.bf16 %v3327, %v3326
    %v3339 = vpack.c.bf16 %v3329, %v3328
    %v3340 = vpack.c.bf16 %v3331, %v3330
    %v3341 = vpack.c.bf16 %v3333, %v3332
    %3342 = vmatprep.subr.bf16.mxu0 0
    %3343 = vmatpush1.bf16.msra.mxu0 %v3044
    %3344 = vmatprep.subr.bf16.mxu0 0
    %3345 = vmatpush1.bf16.msra.mxu0 %v3043
    %3346 = vmatprep.subr.bf16.mxu0 0
    %3347 = vmatpush1.bf16.msra.mxu0 %v3042
    %3348 = vmatprep.subr.bf16.mxu0 0
    %3349 = vmatpush1.bf16.msra.mxu0 %v3041
    %3350 = vmatprep.subr.bf16.mxu0 0
    %3351 = vmatpush1.bf16.msra.mxu0 %v3040
    %3352 = vmatprep.subr.bf16.mxu0 0
    %3353 = vmatpush1.bf16.msra.mxu0 %v3039
    %3354 = vmatprep.subr.bf16.mxu0 0
    %3355 = vmatpush1.bf16.msra.mxu0 %v3038
    %3356 = vmatprep.subr.bf16.mxu0 0
    %3357 = vmatpush1.bf16.msra.mxu0 %v3037
    %3358 = vmatprep.subr.bf16.mxu0 0
    %3359 = vmatpush2.bf16.msra.mxu0 0
    %3360 = vmatprep.subr.bf16.mxu0 0
    %3361 = vmatpush2.bf16.msra.mxu0 0
    %3362 = vmatprep.subr.bf16.mxu0 0
    %3363 = vmatpush2.bf16.msra.mxu0 0
    %3364 = vmatprep.subr.bf16.mxu0 0
    %3365 = vmatpush2.bf16.msra.mxu0 0
    %3366 = vmatprep.subr.bf16.mxu0 0
    %3367 = vmatpush2.bf16.msra.mxu0 0
    %3368 = vmatprep.subr.bf16.mxu0 0
    %3369 = vmatpush2.bf16.msra.mxu0 0
    %3370 = vmatprep.subr.bf16.mxu0 0
    %3371 = vmatpush2.bf16.msra.mxu0 0
    %3372 = vmatprep.subr.bf16.mxu0 0
    %3373 = vmatpush2.bf16.msra.mxu0 0
    %3374 = vmatprep.mubr.bf16.mxu0 0
    %3375 = vmatmul.mubr.bf16.gmra.mxu0 %v3334
    %v3376 = vpop.f32.mrf.mxu0
    %v3377 = vadd.f32 0.0, %v3376
    %v3378 = vpop.f32.mrf.mxu0
    %v3379 = vpop.f32.mrf.mxu0
    %v3380 = vadd.f32 0.0, %v3379
    %v3381 = vpop.f32.mrf.mxu0
    %3382 = vmatprep.mubr.bf16.mxu0 0
    %3383 = vmatmul.mubr.bf16.gmra.mxu0 %v3335
    %v3384 = vpop.f32.mrf.mxu0
    %v3385 = vadd.f32 0.0, %v3384
    %v3386 = vpop.f32.mrf.mxu0
    %v3387 = vpop.f32.mrf.mxu0
    %v3388 = vadd.f32 0.0, %v3387
    %v3389 = vpop.f32.mrf.mxu0
    %3390 = vmatprep.mubr.bf16.mxu0 0
    %3391 = vmatmul.mubr.bf16.gmra.mxu0 %v3336
    %v3392 = vpop.f32.mrf.mxu0
    %v3393 = vadd.f32 0.0, %v3392
    %v3394 = vpop.f32.mrf.mxu0
    %v3395 = vpop.f32.mrf.mxu0
    %v3396 = vadd.f32 0.0, %v3395
    %v3397 = vpop.f32.mrf.mxu0
    %3398 = vmatprep.mubr.bf16.mxu0 0
    %3399 = vmatmul.mubr.bf16.gmra.mxu0 %v3337
    %v3400 = vpop.f32.mrf.mxu0
    %v3401 = vadd.f32 0.0, %v3400
    %v3402 = vpop.f32.mrf.mxu0
    %v3403 = vpop.f32.mrf.mxu0
    %v3404 = vadd.f32 0.0, %v3403
    %v3405 = vpop.f32.mrf.mxu0
    %3406 = vmatprep.mubr.bf16.mxu0 0
    %3407 = vmatmul.mubr.bf16.gmra.mxu0 %v3338
    %v3408 = vpop.f32.mrf.mxu0
    %v3409 = vadd.f32 0.0, %v3408
    %v3410 = vpop.f32.mrf.mxu0
    %v3411 = vpop.f32.mrf.mxu0
    %v3412 = vadd.f32 0.0, %v3411
    %v3413 = vpop.f32.mrf.mxu0
    %3414 = vmatprep.mubr.bf16.mxu0 0
    %3415 = vmatmul.mubr.bf16.gmra.mxu0 %v3339
    %v3416 = vpop.f32.mrf.mxu0
    %v3417 = vadd.f32 0.0, %v3416
    %v3418 = vpop.f32.mrf.mxu0
    %v3419 = vpop.f32.mrf.mxu0
    %v3420 = vadd.f32 0.0, %v3419
    %v3421 = vpop.f32.mrf.mxu0
    %3422 = vmatprep.mubr.bf16.mxu0 0
    %3423 = vmatmul.mubr.bf16.gmra.mxu0 %v3340
    %v3424 = vpop.f32.mrf.mxu0
    %v3425 = vadd.f32 0.0, %v3424
    %v3426 = vpop.f32.mrf.mxu0
    %v3427 = vpop.f32.mrf.mxu0
    %v3428 = vadd.f32 0.0, %v3427
    %v3429 = vpop.f32.mrf.mxu0
    %3430 = vmatprep.mubr.bf16.mxu0 0
    %3431 = vmatmul.mubr.bf16.gmra.mxu0 %v3341
    %v3432 = vpop.f32.mrf.mxu0
    %v3433 = vadd.f32 0.0, %v3432
    %v3434 = vpop.f32.mrf.mxu0
    %v3435 = vpop.f32.mrf.mxu0
    %v3436 = vadd.f32 0.0, %v3435
    %v3437 = vpop.f32.mrf.mxu0
    %3438 = vdwg.mxu0
    %3443 = vrot.lane.b32.xlu0 %v3393, 16
    %v3444 = vpop.permute.xlu0 %3443
    %3445 = vrot.lane.b32.xlu0 %v3396, 16
    %v3446 = vpop.permute.xlu0 %3445
    %3447 = vrot.lane.b32.xlu0 %v3401, 16
    %v3448 = vpop.permute.xlu0 %3447
    %3449 = vrot.lane.b32.xlu0 %v3404, 16
    %v3450 = vpop.permute.xlu0 %3449
    %3459 = vrot.lane.b32.xlu0 %v3409, 32
    %v3460 = vpop.permute.xlu0 %3459
    %3461 = vrot.lane.b32.xlu0 %v3412, 32
    %v3462 = vpop.permute.xlu0 %3461
    %3463 = vrot.lane.b32.xlu0 %v3417, 32
    %v3464 = vpop.permute.xlu0 %3463
    %3465 = vrot.lane.b32.xlu0 %v3420, 32
    %v3466 = vpop.permute.xlu0 %3465
    %3475 = vrot.lane.b32.xlu0 %v3425, 48
    %v3476 = vpop.permute.xlu0 %3475
    %3477 = vrot.lane.b32.xlu0 %v3428, 48
    %v3478 = vpop.permute.xlu0 %3477
    %3479 = vrot.lane.b32.xlu0 %v3433, 48
    %v3480 = vpop.permute.xlu0 %3479
    %3481 = vrot.lane.b32.xlu0 %v3436, 48
    %v3482 = vpop.permute.xlu0 %3481
    %v3487 = vsel %vm142, %v3377, %v3444
    %v3488 = vsel %vm142, %v3380, %v3446
    %v3489 = vsel %vm142, %v3385, %v3448
    %v3490 = vsel %vm142, %v3388, %v3450
    %v3491 = vsel %vm248, %v3487, %v3460
    %v3492 = vsel %vm248, %v3488, %v3462
    %v3493 = vsel %vm248, %v3489, %v3464
    %v3494 = vsel %vm248, %v3490, %v3466
    %v3495 = vsel %vm1987, %v3491, %v3476
    %v3496 = vsel %vm1987, %v3492, %v3478
    %v3497 = vsel %vm1987, %v3493, %v3480
    %v3498 = vsel %vm1987, %v3494, %v3482
    %v3499 = vpack.c.bf16 %v3496, %v3495
    %v3500 = vpack.c.bf16 %v3498, %v3497
    %s3501 = scalar_lea.vmem %s29, 32
    %v3502 = vld [vmem:[%s3501] sm:$0xf]
    %v3503 = vld [vmem:[%s3501 + $0x4] sm:$0xf]
    %v3504 = vld [vmem:[%s3501 + $0x8] sm:$0xf]
    %v3505 = vld [vmem:[%s3501 + $0xc] sm:$0xf]
    %v3506 = vld [vmem:[%s3501 + $0x10] sm:$0xf]
    %v3507 = vld [vmem:[%s3501 + $0x14] sm:$0xf]
    %v3508 = vld [vmem:[%s3501 + $0x18] sm:$0xf]
    %v3509 = vld [vmem:[%s3501 + $0x1c] sm:$0xf]
    %v3518 = vunpack.c.l.b16 %v3502
    %v3519 = vunpack.c.l.b16 %v3503
    %v3520 = vunpack.c.l.b16 %v3504
    %v3521 = vunpack.c.l.b16 %v3505
    %v3522 = vunpack.c.l.b16 %v3506
    %v3523 = vunpack.c.l.b16 %v3507
    %v3524 = vunpack.c.l.b16 %v3508
    %v3525 = vunpack.c.l.b16 %v3509
    %v3526 = vpack.c.b16 %v3519, %v3518
    %v3527 = vpack.c.b16 %v3521, %v3520
    %v3528 = vpack.c.b16 %v3523, %v3522
    %v3529 = vpack.c.b16 %v3525, %v3524
    %v3535 = vsel %vm408, %v3499, 0
    %v3538 = vsel %vm408, %v3500, 0
    %3540 = vmatprep.subr.bf16.mxu0 0
    %3541 = vmatpush1.bf16.msra.mxu0 0
    %3542 = vmatprep.subr.bf16.mxu0 0
    %3543 = vmatpush1.bf16.msra.mxu0 0
    %3544 = vmatprep.subr.bf16.mxu0 0
    %3545 = vmatpush1.bf16.msra.mxu0 0
    %3546 = vmatprep.subr.bf16.mxu0 0
    %3547 = vmatpush1.bf16.msra.mxu0 0
    %3548 = vmatprep.subr.bf16.mxu0 0
    %3549 = vmatpush1.bf16.msra.mxu0 %v3529
    %3550 = vmatprep.subr.bf16.mxu0 0
    %3551 = vmatpush1.bf16.msra.mxu0 %v3528
    %3552 = vmatprep.subr.bf16.mxu0 0
    %3553 = vmatpush1.bf16.msra.mxu0 %v3527
    %3554 = vmatprep.subr.bf16.mxu0 0
    %3555 = vmatpush1.bf16.msra.mxu0 %v3526
    %3556 = vmatprep.subr.bf16.mxu0 0
    %3557 = vmatpush2.bf16.msra.mxu0 0
    %3558 = vmatprep.subr.bf16.mxu0 0
    %3559 = vmatpush2.bf16.msra.mxu0 0
    %3560 = vmatprep.subr.bf16.mxu0 0
    %3561 = vmatpush2.bf16.msra.mxu0 0
    %3562 = vmatprep.subr.bf16.mxu0 0
    %3563 = vmatpush2.bf16.msra.mxu0 0
    %3564 = vmatprep.subr.bf16.mxu0 0
    %3565 = vmatpush2.bf16.msra.mxu0 0
    %3566 = vmatprep.subr.bf16.mxu0 0
    %3567 = vmatpush2.bf16.msra.mxu0 0
    %3568 = vmatprep.subr.bf16.mxu0 0
    %3569 = vmatpush2.bf16.msra.mxu0 0
    %3570 = vmatprep.subr.bf16.mxu0 0
    %3571 = vmatpush2.bf16.msra.mxu0 0
    %3572 = vmatprep.mubr.bf16.mxu0 0
    %3573 = vmatmul.mubr.bf16.gmra.mxu0 %v3535
    %v3574 = vpop.f32.mrf.mxu0
    %v3575 = vadd.f32 0.0, %v3574
    %v3576 = vpop.f32.mrf.mxu0
    %v3577 = vpop.f32.mrf.mxu0
    %v3578 = vadd.f32 0.0, %v3577
    %v3579 = vpop.f32.mrf.mxu0
    %3580 = vmatprep.mubr.bf16.mxu0 0
    %3581 = vmatmul.mubr.bf16.gmra.mxu0 %v3538
    %v3582 = vpop.f32.mrf.mxu0
    %v3583 = vadd.f32 0.0, %v3582
    %v3584 = vpop.f32.mrf.mxu0
    %v3585 = vpop.f32.mrf.mxu0
    %v3586 = vadd.f32 0.0, %v3585
    %v3587 = vpop.f32.mrf.mxu0
    %3588 = vdwg.mxu0
    %v3589 = vadd.f32 %v2473, %v3575
    %v3590 = vadd.f32 %v2474, %v3578
    %v3591 = vadd.f32 %v2475, %v3583
    %v3592 = vadd.f32 %v2476, %v3586
    %s3593 = scalar_lea.vmem %s31, 1
    %v3594 = vld [vmem:[%s3593] sm:$0x1]
    %s3595 = scalar_lea.vmem %s33, 1
    %v3596 = vld [vmem:[%s3595] sm:$0x1]
    %v3597 = vsel %vm248, %v3589, 0.0
    %3598 = vadd.xlane.f32.xlu0 %v3597
    %v3599 = vpop.xlane.xlu0 %3598
    %v3600 = vsel %vm248, %v3590, 0.0
    %3601 = vadd.xlane.f32.xlu0 %v3600
    %v3602 = vpop.xlane.xlu0 %3601
    %v3603 = vsel %vm248, %v3591, 0.0
    %3604 = vadd.xlane.f32.xlu0 %v3603
    %v3605 = vpop.xlane.xlu0 %3604
    %v3606 = vsel %vm248, %v3592, 0.0
    %3607 = vadd.xlane.f32.xlu0 %v3606
    %v3608 = vpop.xlane.xlu0 %3607
    %v3609 = vmul.f32 %v3599, %v963
    %v3610 = vmul.f32 %v3602, %v963
    %v3611 = vmul.f32 %v3605, %v963
    %v3612 = vmul.f32 %v3608, %v963
    %v3613 = vsub.f32 %v3589, %v3609
    %v3614 = vsub.f32 %v3590, %v3610
    %v3615 = vsub.f32 %v3591, %v3611
    %v3616 = vsub.f32 %v3592, %v3612
    %v3617 = vmul.f32 %v3613, %v3613
    %v3618 = vmul.f32 %v3614, %v3614
    %v3619 = vmul.f32 %v3615, %v3615
    %v3620 = vmul.f32 %v3616, %v3616
    %v3621 = vsel %vm248, %v3617, 0.0
    %3622 = vadd.xlane.f32.xlu0 %v3621
    %v3623 = vpop.xlane.xlu0 %3622
    %v3624 = vsel %vm248, %v3618, 0.0
    %3625 = vadd.xlane.f32.xlu0 %v3624
    %v3626 = vpop.xlane.xlu0 %3625
    %v3627 = vsel %vm248, %v3619, 0.0
    %3628 = vadd.xlane.f32.xlu0 %v3627
    %v3629 = vpop.xlane.xlu0 %3628
    %v3630 = vsel %vm248, %v3620, 0.0
    %3631 = vadd.xlane.f32.xlu0 %v3630
    %v3632 = vpop.xlane.xlu0 %3631
    %v3633 = vmul.f32 %v3623, %v963
    %v3634 = vmul.f32 %v3626, %v963
    %v3635 = vmul.f32 %v3629, %v963
    %v3636 = vmul.f32 %v3632, %v963
    %v3637 = vadd.f32 %v3633, 1e-05
    %v3638 = vadd.f32 %v3634, 1e-05
    %v3639 = vadd.f32 %v3635, 1e-05
    %v3640 = vadd.f32 %v3636, 1e-05
    %v3641 = vrsqrt.pop %v3637
    %v3642 = vrsqrt.pop %v3638
    %v3643 = vrsqrt.pop %v3639
    %v3644 = vrsqrt.pop %v3640
    %v3645 = vmul.f32 %v3613, %v3641
    %v3646 = vmul.f32 %v3614, %v3642
    %v3647 = vmul.f32 %v3615, %v3643
    %v3648 = vmul.f32 %v3616, %v3644
    %v3650 = vlaneseq
    %v3651 = vshrl.u32 %v3650, 7
    %v3652 = vsub.s32 0, %v3651
    %v3653 = vrot.slane %v3594, %v3652
    %v3655 = vmul.f32 %v3645, %v3653
    %v3656 = vmul.f32 %v3646, %v3653
    %v3657 = vmul.f32 %v3647, %v3653
    %v3658 = vmul.f32 %v3648, %v3653
    %v3660 = vlaneseq
    %v3661 = vshrl.u32 %v3660, 7
    %v3662 = vsub.s32 0, %v3661
    %v3663 = vrot.slane %v3596, %v3662
    %v3665 = vadd.f32 %v3655, %v3663
    %v3666 = vadd.f32 %v3656, %v3663
    %v3667 = vadd.f32 %v3657, %v3663
    %v3668 = vadd.f32 %v3658, %v3663
    %v3669 = vpack.c.bf16 %v3666, %v3665
    %v3670 = vpack.c.bf16 %v3668, %v3667
    %s3671 = scalar_lea.vmem %s35, 16
    %v3672 = vld [vmem:[%s3671] sm:$0xf]
    %v3673 = vld [vmem:[%s3671 + $0x4] sm:$0xf]
    %v3674 = vld [vmem:[%s3671 + $0x8] sm:$0xf]
    %v3675 = vld [vmem:[%s3671 + $0xc] sm:$0xf]
    %s3676 = scalar_lea.vmem %s37, 1
    %v3677 = vld [vmem:[%s3676] sm:$0x1]
    %v3679 = vlaneseq
    %v3680 = vshrl.u32 %v3679, 7
    %v3681 = vsub.s32 0, %v3680
    %v3682 = vrot.slane %v3677, %v3681
    %v3688 = vunpack.c.l.b16 %v3672
    %v3689 = vunpack.c.l.b16 %v3673
    %v3690 = vunpack.c.l.b16 %v3674
    %v3691 = vunpack.c.l.b16 %v3675
    %v3692 = vpack.c.b16 %v3689, %v3688
    %v3693 = vpack.c.b16 %v3691, %v3690
    %v3697 = vsel %vm248, %v3669, 0
    %v3700 = vsel %vm248, %v3670, 0
    %3702 = vmatprep.subr.bf16.mxu0 0
    %3703 = vmatpush1.bf16.msra.mxu0 0
    %3704 = vmatprep.subr.bf16.mxu0 0
    %3705 = vmatpush1.bf16.msra.mxu0 0
    %3706 = vmatprep.subr.bf16.mxu0 0
    %3707 = vmatpush1.bf16.msra.mxu0 0
    %3708 = vmatprep.subr.bf16.mxu0 0
    %3709 = vmatpush1.bf16.msra.mxu0 0
    %3710 = vmatprep.subr.bf16.mxu0 0
    %3711 = vmatpush1.bf16.msra.mxu0 0
    %3712 = vmatprep.subr.bf16.mxu0 0
    %3713 = vmatpush1.bf16.msra.mxu0 0
    %3714 = vmatprep.subr.bf16.mxu0 0
    %3715 = vmatpush1.bf16.msra.mxu0 %v3693
    %3716 = vmatprep.subr.bf16.mxu0 0
    %3717 = vmatpush1.bf16.msra.mxu0 %v3692
    %3718 = vmatprep.subr.bf16.mxu0 0
    %3719 = vmatpush2.bf16.msra.mxu0 0
    %3720 = vmatprep.subr.bf16.mxu0 0
    %3721 = vmatpush2.bf16.msra.mxu0 0
    %3722 = vmatprep.subr.bf16.mxu0 0
    %3723 = vmatpush2.bf16.msra.mxu0 0
    %3724 = vmatprep.subr.bf16.mxu0 0
    %3725 = vmatpush2.bf16.msra.mxu0 0
    %3726 = vmatprep.subr.bf16.mxu0 0
    %3727 = vmatpush2.bf16.msra.mxu0 0
    %3728 = vmatprep.subr.bf16.mxu0 0
    %3729 = vmatpush2.bf16.msra.mxu0 0
    %3730 = vmatprep.subr.bf16.mxu0 0
    %3731 = vmatpush2.bf16.msra.mxu0 0
    %3732 = vmatprep.subr.bf16.mxu0 0
    %3733 = vmatpush2.bf16.msra.mxu0 0
    %3734 = vmatprep.mubr.bf16.mxu0 0
    %3735 = vmatmul.mubr.bf16.gmra.mxu0 %v3697
    %v3736 = vpop.f32.mrf.mxu0
    %v3737 = vadd.f32 %v3682, %v3736
    %v3738 = vpop.f32.mrf.mxu0
    %v3739 = vpop.f32.mrf.mxu0
    %v3740 = vadd.f32 %v3682, %v3739
    %v3741 = vpop.f32.mrf.mxu0
    %3742 = vmatprep.mubr.bf16.mxu0 0
    %3743 = vmatmul.mubr.bf16.gmra.mxu0 %v3700
    %v3744 = vpop.f32.mrf.mxu0
    %v3745 = vadd.f32 %v3682, %v3744
    %v3746 = vpop.f32.mrf.mxu0
    %v3747 = vpop.f32.mrf.mxu0
    %v3748 = vadd.f32 %v3682, %v3747
    %v3749 = vpop.f32.mrf.mxu0
    %3750 = vdwg.mxu0
    %v3751 = vmul.f32 %v3737, 0.5
    %v3752 = vmul.f32 %v3740, 0.5
    %v3753 = vmul.f32 %v3745, 0.5
    %v3754 = vmul.f32 %v3748, 0.5
    %v3755 = vmul.f32 %v3737, 0.70710677
    %v3756 = vmul.f32 %v3740, 0.70710677
    %v3757 = vmul.f32 %v3745, 0.70710677
    %v3758 = vmul.f32 %v3748, 0.70710677
    %vm3759 = vcmp.ge.f32.partialorder %v3755, 0.0
    %vm3760 = vcmp.ge.f32.partialorder %v3756, 0.0
    %vm3761 = vcmp.ge.f32.partialorder %v3757, 0.0
    %vm3762 = vcmp.ge.f32.partialorder %v3758, 0.0
    %v3763 = vsel %vm3759, 1.0, -1.0
    %v3764 = vsel %vm3760, 1.0, -1.0
    %v3765 = vsel %vm3761, 1.0, -1.0
    %v3766 = vsel %vm3762, 1.0, -1.0
    %v3767 = vand.u32 2147483647, %v3755
    %v3768 = vand.u32 2147483647, %v3756
    %v3769 = vand.u32 2147483647, %v3757
    %v3770 = vand.u32 2147483647, %v3758
    %v3771 = vmul.f32 %v3767, 0.3275911
    %v3772 = vmul.f32 %v3768, 0.3275911
    %v3773 = vmul.f32 %v3769, 0.3275911
    %v3774 = vmul.f32 %v3770, 0.3275911
    %v3775 = vadd.f32 %v3771, 1.0
    %v3776 = vadd.f32 %v3772, 1.0
    %v3777 = vadd.f32 %v3773, 1.0
    %v3778 = vadd.f32 %v3774, 1.0
    %v3779 = vrcp.pop %v3775
    %v3780 = vmul.f32 1.0, %v3779
    %v3781 = vrcp.pop %v3776
    %v3782 = vmul.f32 1.0, %v3781
    %v3783 = vrcp.pop %v3777
    %v3784 = vmul.f32 1.0, %v3783
    %v3785 = vrcp.pop %v3778
    %v3786 = vmul.f32 1.0, %v3785
    %v3787 = vmul.f32 %v3780, 1.0614054
    %v3788 = vmul.f32 %v3782, 1.0614054
    %v3789 = vmul.f32 %v3784, 1.0614054
    %v3790 = vmul.f32 %v3786, 1.0614054
    %v3791 = vadd.f32 %v3787, -1.4531521
    %v3792 = vadd.f32 %v3788, -1.4531521
    %v3793 = vadd.f32 %v3789, -1.4531521
    %v3794 = vadd.f32 %v3790, -1.4531521
    %v3795 = vmul.f32 %v3791, %v3780
    %v3796 = vmul.f32 %v3792, %v3782
    %v3797 = vmul.f32 %v3793, %v3784
    %v3798 = vmul.f32 %v3794, %v3786
    %v3799 = vadd.f32 %v3795, 1.4214138
    %v3800 = vadd.f32 %v3796, 1.4214138
    %v3801 = vadd.f32 %v3797, 1.4214138
    %v3802 = vadd.f32 %v3798, 1.4214138
    %v3803 = vmul.f32 %v3799, %v3780
    %v3804 = vmul.f32 %v3800, %v3782
    %v3805 = vmul.f32 %v3801, %v3784
    %v3806 = vmul.f32 %v3802, %v3786
    %v3807 = vadd.f32 %v3803, -0.28449672
    %v3808 = vadd.f32 %v3804, -0.28449672
    %v3809 = vadd.f32 %v3805, -0.28449672
    %v3810 = vadd.f32 %v3806, -0.28449672
    %v3811 = vmul.f32 %v3807, %v3780
    %v3812 = vmul.f32 %v3808, %v3782
    %v3813 = vmul.f32 %v3809, %v3784
    %v3814 = vmul.f32 %v3810, %v3786
    %v3815 = vadd.f32 %v3811, 0.2548296
    %v3816 = vadd.f32 %v3812, 0.2548296
    %v3817 = vadd.f32 %v3813, 0.2548296
    %v3818 = vadd.f32 %v3814, 0.2548296
    %v3819 = vmul.f32 %v3815, %v3780
    %v3820 = vmul.f32 %v3816, %v3782
    %v3821 = vmul.f32 %v3817, %v3784
    %v3822 = vmul.f32 %v3818, %v3786
    %v3823 = vsub.f32 0.0, %v3767
    %v3824 = vsub.f32 0.0, %v3768
    %v3825 = vsub.f32 0.0, %v3769
    %v3826 = vsub.f32 0.0, %v3770
    %v3827 = vmul.f32 %v3823, %v3767
    %v3828 = vmul.f32 %v3824, %v3768
    %v3829 = vmul.f32 %v3825, %v3769
    %v3830 = vmul.f32 %v3826, %v3770
    %v3831 = vmul.f32 %v3827, 1.442695
    %v3832 = vpow.pop %v3831
    %v3833 = vmul.f32 %v3828, 1.442695
    %v3834 = vpow.pop %v3833
    %v3835 = vmul.f32 %v3829, 1.442695
    %v3836 = vpow.pop %v3835
    %v3837 = vmul.f32 %v3830, 1.442695
    %v3838 = vpow.pop %v3837
    %v3839 = vmul.f32 %v3819, %v3832
    %v3840 = vmul.f32 %v3820, %v3834
    %v3841 = vmul.f32 %v3821, %v3836
    %v3842 = vmul.f32 %v3822, %v3838
    %v3843 = vsub.f32 1.0, %v3839
    %v3844 = vsub.f32 1.0, %v3840
    %v3845 = vsub.f32 1.0, %v3841
    %v3846 = vsub.f32 1.0, %v3842
    %v3847 = vmul.f32 %v3763, %v3843
    %v3848 = vmul.f32 %v3764, %v3844
    %v3849 = vmul.f32 %v3765, %v3845
    %v3850 = vmul.f32 %v3766, %v3846
    %v3851 = vadd.f32 %v3847, 1.0
    %v3852 = vadd.f32 %v3848, 1.0
    %v3853 = vadd.f32 %v3849, 1.0
    %v3854 = vadd.f32 %v3850, 1.0
    %v3855 = vmul.f32 %v3751, %v3851
    %v3856 = vmul.f32 %v3752, %v3852
    %v3857 = vmul.f32 %v3753, %v3853
    %v3858 = vmul.f32 %v3754, %v3854
    %v3859 = vpack.c.bf16 %v3856, %v3855
    %v3860 = vpack.c.bf16 %v3858, %v3857
    %s3861 = scalar_lea.vmem %s39, 64
    %v3862 = vld [vmem:[%s3861] sm:$0xf]
    %v3863 = vld [vmem:[%s3861 + $0x4] sm:$0xf]
    %v3864 = vld [vmem:[%s3861 + $0x8] sm:$0xf]
    %v3865 = vld [vmem:[%s3861 + $0xc] sm:$0xf]
    %v3866 = vld [vmem:[%s3861 + $0x10] sm:$0xf]
    %v3867 = vld [vmem:[%s3861 + $0x14] sm:$0xf]
    %v3868 = vld [vmem:[%s3861 + $0x18] sm:$0xf]
    %v3869 = vld [vmem:[%s3861 + $0x1c] sm:$0xf]
    %v3870 = vld [vmem:[%s3861 + $0x20] sm:$0xf]
    %v3871 = vld [vmem:[%s3861 + $0x24] sm:$0xf]
    %v3872 = vld [vmem:[%s3861 + $0x28] sm:$0xf]
    %v3873 = vld [vmem:[%s3861 + $0x2c] sm:$0xf]
    %v3874 = vld [vmem:[%s3861 + $0x30] sm:$0xf]
    %v3875 = vld [vmem:[%s3861 + $0x34] sm:$0xf]
    %v3876 = vld [vmem:[%s3861 + $0x38] sm:$0xf]
    %v3877 = vld [vmem:[%s3861 + $0x3c] sm:$0xf]
    %v3894 = vunpack.c.l.b16 %v3862
    %v3895 = vunpack.c.l.b16 %v3863
    %v3896 = vunpack.c.l.b16 %v3864
    %v3897 = vunpack.c.l.b16 %v3865
    %v3898 = vunpack.c.l.b16 %v3866
    %v3899 = vunpack.c.l.b16 %v3867
    %v3900 = vunpack.c.l.b16 %v3868
    %v3901 = vunpack.c.l.b16 %v3869
    %v3902 = vunpack.c.l.b16 %v3870
    %v3903 = vunpack.c.l.b16 %v3871
    %v3904 = vunpack.c.l.b16 %v3872
    %v3905 = vunpack.c.l.b16 %v3873
    %v3906 = vunpack.c.l.b16 %v3874
    %v3907 = vunpack.c.l.b16 %v3875
    %v3908 = vunpack.c.l.b16 %v3876
    %v3909 = vunpack.c.l.b16 %v3877
    %v3910 = vpack.c.b16 %v3895, %v3894
    %v3911 = vpack.c.b16 %v3897, %v3896
    %v3912 = vpack.c.b16 %v3899, %v3898
    %v3913 = vpack.c.b16 %v3901, %v3900
    %v3914 = vpack.c.b16 %v3903, %v3902
    %v3915 = vpack.c.b16 %v3905, %v3904
    %v3916 = vpack.c.b16 %v3907, %v3906
    %v3917 = vpack.c.b16 %v3909, %v3908
    %3926 = vmatprep.subr.bf16.mxu0 0
    %3927 = vmatpush1.bf16.msra.mxu0 %v3917
    %3928 = vmatprep.subr.bf16.mxu0 0
    %3929 = vmatpush1.bf16.msra.mxu0 %v3916
    %3930 = vmatprep.subr.bf16.mxu0 0
    %3931 = vmatpush1.bf16.msra.mxu0 %v3915
    %3932 = vmatprep.subr.bf16.mxu0 0
    %3933 = vmatpush1.bf16.msra.mxu0 %v3914
    %3934 = vmatprep.subr.bf16.mxu0 0
    %3935 = vmatpush1.bf16.msra.mxu0 %v3913
    %3936 = vmatprep.subr.bf16.mxu0 0
    %3937 = vmatpush1.bf16.msra.mxu0 %v3912
    %3938 = vmatprep.subr.bf16.mxu0 0
    %3939 = vmatpush1.bf16.msra.mxu0 %v3911
    %3940 = vmatprep.subr.bf16.mxu0 0
    %3941 = vmatpush1.bf16.msra.mxu0 %v3910
    %3942 = vmatprep.subr.bf16.mxu0 0
    %3943 = vmatpush2.bf16.msra.mxu0 0
    %3944 = vmatprep.subr.bf16.mxu0 0
    %3945 = vmatpush2.bf16.msra.mxu0 0
    %3946 = vmatprep.subr.bf16.mxu0 0
    %3947 = vmatpush2.bf16.msra.mxu0 0
    %3948 = vmatprep.subr.bf16.mxu0 0
    %3949 = vmatpush2.bf16.msra.mxu0 0
    %3950 = vmatprep.subr.bf16.mxu0 0
    %3951 = vmatpush2.bf16.msra.mxu0 0
    %3952 = vmatprep.subr.bf16.mxu0 0
    %3953 = vmatpush2.bf16.msra.mxu0 0
    %3954 = vmatprep.subr.bf16.mxu0 0
    %3955 = vmatpush2.bf16.msra.mxu0 0
    %3956 = vmatprep.subr.bf16.mxu0 0
    %3957 = vmatpush2.bf16.msra.mxu0 0
    %3958 = vmatprep.mubr.bf16.mxu0 0
    %3959 = vmatmul.mubr.bf16.gmra.mxu0 %v3859
    %v3960 = vpop.f32.mrf.mxu0
    %v3961 = vadd.f32 0.0, %v3960
    %v3962 = vpop.f32.mrf.mxu0
    %v3963 = vpop.f32.mrf.mxu0
    %v3964 = vadd.f32 0.0, %v3963
    %v3965 = vpop.f32.mrf.mxu0
    %3966 = vmatprep.mubr.bf16.mxu0 0
    %3967 = vmatmul.mubr.bf16.gmra.mxu0 %v3860
    %v3968 = vpop.f32.mrf.mxu0
    %v3969 = vadd.f32 0.0, %v3968
    %v3970 = vpop.f32.mrf.mxu0
    %v3971 = vpop.f32.mrf.mxu0
    %v3972 = vadd.f32 0.0, %v3971
    %v3973 = vpop.f32.mrf.mxu0
    %3974 = vdwg.mxu0
    %v3975 = vadd.f32 %v3589, %v3961
    %v3976 = vadd.f32 %v3590, %v3964
    %v3977 = vadd.f32 %v3591, %v3969
    %v3978 = vadd.f32 %v3592, %v3972
    %s3979 = scalar_lea.vmem %s41, 1
    %v3980 = vld [vmem:[%s3979] sm:$0x1]
    %v3982 = vlaneseq
    %v3983 = vshrl.u32 %v3982, 7
    %v3984 = vsub.s32 0, %v3983
    %v3985 = vrot.slane %v3980, %v3984
    %v3987 = vadd.f32 %v3975, %v3985
    %v3988 = vadd.f32 %v3976, %v3985
    %v3989 = vadd.f32 %v3977, %v3985
    %v3990 = vadd.f32 %v3978, %v3985
    %v3991 = vld [vmem:[%s43] sm:$0x1]
    %v3992 = vld [vmem:[%s45] sm:$0x1]
    %v3993 = vsel %vm248, %v3987, 0.0
    %3994 = vadd.xlane.f32.xlu0 %v3993
    %v3995 = vpop.xlane.xlu0 %3994
    %v3996 = vsel %vm248, %v3988, 0.0
    %3997 = vadd.xlane.f32.xlu0 %v3996
    %v3998 = vpop.xlane.xlu0 %3997
    %v3999 = vsel %vm248, %v3989, 0.0
    %4000 = vadd.xlane.f32.xlu0 %v3999
    %v4001 = vpop.xlane.xlu0 %4000
    %v4002 = vsel %vm248, %v3990, 0.0
    %4003 = vadd.xlane.f32.xlu0 %v4002
    %v4004 = vpop.xlane.xlu0 %4003
    %v4005 = vmul.f32 %v3995, %v963
    %v4006 = vmul.f32 %v3998, %v963
    %v4007 = vmul.f32 %v4001, %v963
    %v4008 = vmul.f32 %v4004, %v963
    %v4009 = vsub.f32 %v3987, %v4005
    %v4010 = vsub.f32 %v3988, %v4006
    %v4011 = vsub.f32 %v3989, %v4007
    %v4012 = vsub.f32 %v3990, %v4008
    %v4013 = vmul.f32 %v4009, %v4009
    %v4014 = vmul.f32 %v4010, %v4010
    %v4015 = vmul.f32 %v4011, %v4011
    %v4016 = vmul.f32 %v4012, %v4012
    %v4017 = vsel %vm248, %v4013, 0.0
    %4018 = vadd.xlane.f32.xlu0 %v4017
    %v4019 = vpop.xlane.xlu0 %4018
    %v4020 = vsel %vm248, %v4014, 0.0
    %4021 = vadd.xlane.f32.xlu0 %v4020
    %v4022 = vpop.xlane.xlu0 %4021
    %v4023 = vsel %vm248, %v4015, 0.0
    %4024 = vadd.xlane.f32.xlu0 %v4023
    %v4025 = vpop.xlane.xlu0 %4024
    %v4026 = vsel %vm248, %v4016, 0.0
    %4027 = vadd.xlane.f32.xlu0 %v4026
    %v4028 = vpop.xlane.xlu0 %4027
    %v4029 = vmul.f32 %v4019, %v963
    %v4030 = vmul.f32 %v4022, %v963
    %v4031 = vmul.f32 %v4025, %v963
    %v4032 = vmul.f32 %v4028, %v963
    %v4033 = vadd.f32 %v4029, 1e-05
    %v4034 = vadd.f32 %v4030, 1e-05
    %v4035 = vadd.f32 %v4031, 1e-05
    %v4036 = vadd.f32 %v4032, 1e-05
    %v4037 = vrsqrt.pop %v4033
    %v4038 = vrsqrt.pop %v4034
    %v4039 = vrsqrt.pop %v4035
    %v4040 = vrsqrt.pop %v4036
    %v4041 = vmul.f32 %v4009, %v4037
    %v4042 = vmul.f32 %v4010, %v4038
    %v4043 = vmul.f32 %v4011, %v4039
    %v4044 = vmul.f32 %v4012, %v4040
    %v4046 = vlaneseq
    %v4047 = vshrl.u32 %v4046, 7
    %v4048 = vsub.s32 0, %v4047
    %v4049 = vrot.slane %v3991, %v4048
    %v4051 = vmul.f32 %v4041, %v4049
    %v4052 = vmul.f32 %v4042, %v4049
    %v4053 = vmul.f32 %v4043, %v4049
    %v4054 = vmul.f32 %v4044, %v4049
    %v4056 = vlaneseq
    %v4057 = vshrl.u32 %v4056, 7
    %v4058 = vsub.s32 0, %v4057
    %v4059 = vrot.slane %v3992, %v4058
    %v4061 = vadd.f32 %v4051, %v4059
    %v4062 = vadd.f32 %v4052, %v4059
    %v4063 = vadd.f32 %v4053, %v4059
    %v4064 = vadd.f32 %v4054, %v4059
    %v4065 = vpack.c.bf16 %v4062, %v4061
    %v4066 = vpack.c.bf16 %v4064, %v4063
    %v4067 = vld [vmem:[%s47] sm:$0xf]
    %v4068 = vld [vmem:[%s47 + $0x4] sm:$0xf]
    %v4069 = vld [vmem:[%s47 + $0x8] sm:$0xf]
    %v4070 = vld [vmem:[%s47 + $0xc] sm:$0xf]
    %v4071 = vld [vmem:[%s49] sm:$0x1]
    %v4073 = vlaneseq
    %v4074 = vshrl.u32 %v4073, 7
    %v4075 = vsub.s32 0, %v4074
    %v4076 = vrot.slane %v4071, %v4075
    %v4082 = vunpack.c.l.b16 %v4067
    %v4083 = vunpack.c.l.b16 %v4068
    %v4084 = vunpack.c.l.b16 %v4069
    %v4085 = vunpack.c.l.b16 %v4070
    %v4086 = vpack.c.b16 %v4083, %v4082
    %v4087 = vpack.c.b16 %v4085, %v4084
    %v4091 = vsel %vm248, %v4065, 0
    %v4094 = vsel %vm248, %v4066, 0
    %4096 = vmatprep.subr.bf16.mxu0 0
    %4097 = vmatpush1.bf16.msra.mxu0 0
    %4098 = vmatprep.subr.bf16.mxu0 0
    %4099 = vmatpush1.bf16.msra.mxu0 0
    %4100 = vmatprep.subr.bf16.mxu0 0
    %4101 = vmatpush1.bf16.msra.mxu0 0
    %4102 = vmatprep.subr.bf16.mxu0 0
    %4103 = vmatpush1.bf16.msra.mxu0 0
    %4104 = vmatprep.subr.bf16.mxu0 0
    %4105 = vmatpush1.bf16.msra.mxu0 0
    %4106 = vmatprep.subr.bf16.mxu0 0
    %4107 = vmatpush1.bf16.msra.mxu0 0
    %4108 = vmatprep.subr.bf16.mxu0 0
    %4109 = vmatpush1.bf16.msra.mxu0 %v4087
    %4110 = vmatprep.subr.bf16.mxu0 0
    %4111 = vmatpush1.bf16.msra.mxu0 %v4086
    %4112 = vmatprep.subr.bf16.mxu0 0
    %4113 = vmatpush2.bf16.msra.mxu0 0
    %4114 = vmatprep.subr.bf16.mxu0 0
    %4115 = vmatpush2.bf16.msra.mxu0 0
    %4116 = vmatprep.subr.bf16.mxu0 0
    %4117 = vmatpush2.bf16.msra.mxu0 0
    %4118 = vmatprep.subr.bf16.mxu0 0
    %4119 = vmatpush2.bf16.msra.mxu0 0
    %4120 = vmatprep.subr.bf16.mxu0 0
    %4121 = vmatpush2.bf16.msra.mxu0 0
    %4122 = vmatprep.subr.bf16.mxu0 0
    %4123 = vmatpush2.bf16.msra.mxu0 0
    %4124 = vmatprep.subr.bf16.mxu0 0
    %4125 = vmatpush2.bf16.msra.mxu0 0
    %4126 = vmatprep.subr.bf16.mxu0 0
    %4127 = vmatpush2.bf16.msra.mxu0 0
    %4128 = vmatprep.mubr.bf16.mxu0 0
    %4129 = vmatmul.mubr.bf16.gmra.mxu0 %v4091
    %v4130 = vpop.f32.mrf.mxu0
    %v4131 = vadd.f32 %v4076, %v4130
    %v4132 = vpop.f32.mrf.mxu0
    %v4133 = vpop.f32.mrf.mxu0
    %v4134 = vadd.f32 %v4076, %v4133
    %v4135 = vpop.f32.mrf.mxu0
    %4136 = vmatprep.mubr.bf16.mxu0 0
    %4137 = vmatmul.mubr.bf16.gmra.mxu0 %v4094
    %v4138 = vpop.f32.mrf.mxu0
    %v4139 = vadd.f32 %v4076, %v4138
    %v4140 = vpop.f32.mrf.mxu0
    %v4141 = vpop.f32.mrf.mxu0
    %v4142 = vadd.f32 %v4076, %v4141
    %v4143 = vpop.f32.mrf.mxu0
    %4144 = vdwg.mxu0
    %v4146 = vsel %vm248, %v4131, 0
    %v4149 = vsel %vm248, %v4134, 0
    %v4152 = vsel %vm248, %v4139, 0
    %v4155 = vsel %vm248, %v4142, 0
    %4157 = vmatprep.subr.mxu0 0.0
    %4158 = vmatpush1.xpose.msra.mxu0 0.0
    %4159 = vmatprep.subr.mxu0 0.0
    %4160 = vmatpush1.xpose.msra.mxu0 0.0
    %4161 = vmatprep.subr.mxu0 0.0
    %4162 = vmatpush1.xpose.msra.mxu0 0.0
    %4163 = vmatprep.subr.mxu0 0.0
    %4164 = vmatpush1.xpose.msra.mxu0 0.0
    %4165 = vmatprep.subr.mxu0 0.0
    %4166 = vmatpush1.xpose.msra.mxu0 0.0
    %4167 = vmatprep.subr.mxu0 0.0
    %4168 = vmatpush1.xpose.msra.mxu0 0.0
    %4169 = vmatprep.subr.mxu0 0.0
    %4170 = vmatpush1.xpose.msra.mxu0 0.0
    %4171 = vmatprep.subr.mxu0 0.0
    %4172 = vmatpush1.xpose.msra.mxu0 0.0
    %4173 = vmatprep.subr.mxu0 0.0
    %4174 = vmatpush1.xpose.msra.mxu0 %v283
    %4175 = vmatprep.subr.mxu0 0.0
    %4176 = vmatpush1.xpose.msra.mxu0 %v280
    %4177 = vmatprep.subr.mxu0 0.0
    %4178 = vmatpush1.xpose.msra.mxu0 %v277
    %4179 = vmatprep.subr.mxu0 0.0
    %4180 = vmatpush1.xpose.msra.mxu0 %v274
    %4181 = vmatprep.subr.mxu0 0.0
    %4182 = vmatpush1.xpose.msra.mxu0 %v271
    %4183 = vmatprep.subr.mxu0 0.0
    %4184 = vmatpush1.xpose.msra.mxu0 %v268
    %4185 = vmatprep.subr.mxu0 0.0
    %4186 = vmatpush1.xpose.msra.mxu0 %v265
    %4187 = vmatprep.subr.mxu0 0.0
    %4188 = vmatpush1.xpose.msra.mxu0 %v262
    %4189 = vmatprep.subr.mxu0 0.0
    %4190 = vmatpush2.xpose.msra.mxu0 0.0
    %4191 = vmatprep.subr.mxu0 0.0
    %4192 = vmatpush2.xpose.msra.mxu0 0.0
    %4193 = vmatprep.subr.mxu0 0.0
    %4194 = vmatpush2.xpose.msra.mxu0 0.0
    %4195 = vmatprep.subr.mxu0 0.0
    %4196 = vmatpush2.xpose.msra.mxu0 0.0
    %4197 = vmatprep.subr.mxu0 0.0
    %4198 = vmatpush2.xpose.msra.mxu0 0.0
    %4199 = vmatprep.subr.mxu0 0.0
    %4200 = vmatpush2.xpose.msra.mxu0 0.0
    %4201 = vmatprep.subr.mxu0 0.0
    %4202 = vmatpush2.xpose.msra.mxu0 0.0
    %4203 = vmatprep.subr.mxu0 0.0
    %4204 = vmatpush2.xpose.msra.mxu0 0.0
    %4205 = vmatprep.subr.mxu0 0.0
    %4206 = vmatpush2.xpose.msra.mxu0 0.0
    %4207 = vmatprep.subr.mxu0 0.0
    %4208 = vmatpush2.xpose.msra.mxu0 0.0
    %4209 = vmatprep.subr.mxu0 0.0
    %4210 = vmatpush2.xpose.msra.mxu0 0.0
    %4211 = vmatprep.subr.mxu0 0.0
    %4212 = vmatpush2.xpose.msra.mxu0 0.0
    %4213 = vmatprep.subr.mxu0 0.0
    %4214 = vmatpush2.xpose.msra.mxu0 0.0
    %4215 = vmatprep.subr.mxu0 0.0
    %4216 = vmatpush2.xpose.msra.mxu0 0.0
    %4217 = vmatprep.subr.mxu0 0.0
    %4218 = vmatpush2.xpose.msra.mxu0 0.0
    %4219 = vmatprep.subr.mxu0 0.0
    %4220 = vmatpush2.xpose.msra.mxu0 0.0
    %4221 = vmatprep.mubr.f32.mxu0 0.0
    %4222 = vmatmul.mubr.f32.gmra.mxu0 %v4146
    %v4223 = vpop.f32.mrf.mxu0
    %v4224 = vadd.f32 0.0, %v4223
    %v4225 = vpop.f32.mrf.mxu0
    %4226 = vmatprep.mubr.f32.mxu0 0.0
    %4227 = vmatmul.mubr.f32.gmra.mxu0 %v4149
    %v4228 = vpop.f32.mrf.mxu0
    %v4229 = vadd.f32 0.0, %v4228
    %v4230 = vpop.f32.mrf.mxu0
    %4231 = vmatprep.mubr.f32.mxu0 0.0
    %4232 = vmatmul.mubr.f32.gmra.mxu0 %v4152
    %v4233 = vpop.f32.mrf.mxu0
    %v4234 = vadd.f32 0.0, %v4233
    %v4235 = vpop.f32.mrf.mxu0
    %4236 = vmatprep.mubr.f32.mxu0 0.0
    %4237 = vmatmul.mubr.f32.gmra.mxu0 %v4155
    %v4238 = vpop.f32.mrf.mxu0
    %v4239 = vadd.f32 0.0, %v4238
    %v4240 = vpop.f32.mrf.mxu0
    %4241 = vdwg.mxu0
    %v4242 = vmul.f32 %v4131, %v4131
    %v4243 = vmul.f32 %v4134, %v4134
    %v4244 = vmul.f32 %v4139, %v4139
    %v4245 = vmul.f32 %v4142, %v4142
    %v4246 = vsel %vm248, %v4242, 0.0
    %4247 = vadd.xlane.f32.xlu0 %v4246
    %v4248 = vpop.xlane.xlu0 %4247
    %v4249 = vsel %vm248, %v4243, 0.0
    %4250 = vadd.xlane.f32.xlu0 %v4249
    %v4251 = vpop.xlane.xlu0 %4250
    %v4252 = vsel %vm248, %v4244, 0.0
    %4253 = vadd.xlane.f32.xlu0 %v4252
    %v4254 = vpop.xlane.xlu0 %4253
    %v4255 = vsel %vm248, %v4245, 0.0
    %4256 = vadd.xlane.f32.xlu0 %v4255
    %v4257 = vpop.xlane.xlu0 %4256
    %v4258 = vmul.f32 %v4224, 2.0
    %v4259 = vmul.f32 %v4229, 2.0
    %v4260 = vmul.f32 %v4234, 2.0
    %v4261 = vmul.f32 %v4239, 2.0
    %v4262 = vsub.f32 %v4248, %v4258
    %v4263 = vsub.f32 %v4251, %v4259
    %v4264 = vsub.f32 %v4254, %v4260
    %v4265 = vsub.f32 %v4257, %v4261
    %v4266 = vadd.f32 %v4262, %v399
    %v4267 = vadd.f32 %v4263, %v399
    %v4268 = vadd.f32 %v4264, %v399
    %v4269 = vadd.f32 %v4265, %v399
    %v4270 = vmax.f32 %v4266, 0.0
    %v4271 = vmax.f32 %v4267, 0.0
    %v4272 = vmax.f32 %v4268, 0.0
    %v4273 = vmax.f32 %v4269, 0.0
    %v4274 = vrsqrt.pop %v4270
    %v4275 = vmul.f32 %v4270, %v4274
    %vm4276 = vcmp.eq.f32.partialorder %v4270, inf
    %v4277 = vsel %vm4276, %v4270, %v4275
    %vm4278 = vcmp.eq.f32.partialorder %v4270, 0.0
    %v4279 = vand.u32 %v4270, 2147483648
    %v4280 = vsel %vm4278, %v4279, %v4277
    %v4281 = vrsqrt.pop %v4271
    %v4282 = vmul.f32 %v4271, %v4281
    %vm4283 = vcmp.eq.f32.partialorder %v4271, inf
    %v4284 = vsel %vm4283, %v4271, %v4282
    %vm4285 = vcmp.eq.f32.partialorder %v4271, 0.0
    %v4286 = vand.u32 %v4271, 2147483648
    %v4287 = vsel %vm4285, %v4286, %v4284
    %v4288 = vrsqrt.pop %v4272
    %v4289 = vmul.f32 %v4272, %v4288
    %vm4290 = vcmp.eq.f32.partialorder %v4272, inf
    %v4291 = vsel %vm4290, %v4272, %v4289
    %vm4292 = vcmp.eq.f32.partialorder %v4272, 0.0
    %v4293 = vand.u32 %v4272, 2147483648
    %v4294 = vsel %vm4292, %v4293, %v4291
    %v4295 = vrsqrt.pop %v4273
    %v4296 = vmul.f32 %v4273, %v4295
    %vm4297 = vcmp.eq.f32.partialorder %v4273, inf
    %v4298 = vsel %vm4297, %v4273, %v4296
    %vm4299 = vcmp.eq.f32.partialorder %v4273, 0.0
    %v4300 = vand.u32 %v4273, 2147483648
    %v4301 = vsel %vm4299, %v4300, %v4298
    %v4302 = vsub.f32 0.0, %v4280
    %v4303 = vsub.f32 0.0, %v4287
    %v4304 = vsub.f32 0.0, %v4294
    %v4305 = vsub.f32 0.0, %v4301
    %v4306 = vsel %vm408, %v4302, -inf
    %4307 = vmax.xlane.f32.xlu0 %v4306
    %v4308 = vpop.xlane.xlu0 %4307
    %v4309 = vsel %vm408, %v4303, -inf
    %4310 = vmax.xlane.f32.xlu0 %v4309
    %v4311 = vpop.xlane.xlu0 %4310
    %v4312 = vsel %vm408, %v4304, -inf
    %4313 = vmax.xlane.f32.xlu0 %v4312
    %v4314 = vpop.xlane.xlu0 %4313
    %v4315 = vsel %vm408, %v4305, -inf
    %4316 = vmax.xlane.f32.xlu0 %v4315
    %v4317 = vpop.xlane.xlu0 %4316
    %v4318 = vsub.f32 %v4302, %v4308
    %v4319 = vsub.f32 %v4303, %v4311
    %v4320 = vsub.f32 %v4304, %v4314
    %v4321 = vsub.f32 %v4305, %v4317
    %v4322 = vmul.f32 %v4318, 1.442695
    %v4323 = vpow.pop %v4322
    %v4324 = vmul.f32 %v4319, 1.442695
    %v4325 = vpow.pop %v4324
    %v4326 = vmul.f32 %v4320, 1.442695
    %v4327 = vpow.pop %v4326
    %v4328 = vmul.f32 %v4321, 1.442695
    %v4329 = vpow.pop %v4328
    %v4330 = vsel %vm408, %v4323, 0.0
    %4331 = vadd.xlane.f32.xlu0 %v4330
    %v4332 = vpop.xlane.xlu0 %4331
    %v4333 = vsel %vm408, %v4325, 0.0
    %4334 = vadd.xlane.f32.xlu0 %v4333
    %v4335 = vpop.xlane.xlu0 %4334
    %v4336 = vsel %vm408, %v4327, 0.0
    %4337 = vadd.xlane.f32.xlu0 %v4336
    %v4338 = vpop.xlane.xlu0 %4337
    %v4339 = vsel %vm408, %v4329, 0.0
    %4340 = vadd.xlane.f32.xlu0 %v4339
    %v4341 = vpop.xlane.xlu0 %4340
    %v4342 = vlog2.pop %v4332
    %v4343 = vmul.f32 %v4342, 0.6931472
    %v4344 = vlog2.pop %v4335
    %v4345 = vmul.f32 %v4344, 0.6931472
    %v4346 = vlog2.pop %v4338
    %v4347 = vmul.f32 %v4346, 0.6931472
    %v4348 = vlog2.pop %v4341
    %v4349 = vmul.f32 %v4348, 0.6931472
    %v4350 = vadd.f32 %v4343, %v4308
    %v4351 = vadd.f32 %v4345, %v4311
    %v4352 = vadd.f32 %v4347, %v4314
    %v4353 = vadd.f32 %v4349, %v4317
    %v4354 = vmul.f32 %v449, %v4302
    %v4355 = vmul.f32 %v450, %v4303
    %v4356 = vmul.f32 %v451, %v4304
    %v4357 = vmul.f32 %v452, %v4305
    %v4358 = vsel %vm408, %v4354, 0.0
    %4359 = vadd.xlane.f32.xlu0 %v4358
    %v4360 = vpop.xlane.xlu0 %4359
    %v4361 = vsel %vm408, %v4355, 0.0
    %4362 = vadd.xlane.f32.xlu0 %v4361
    %v4363 = vpop.xlane.xlu0 %4362
    %v4364 = vsel %vm408, %v4356, 0.0
    %4365 = vadd.xlane.f32.xlu0 %v4364
    %v4366 = vpop.xlane.xlu0 %4365
    %v4367 = vsel %vm408, %v4357, 0.0
    %4368 = vadd.xlane.f32.xlu0 %v4367
    %v4369 = vpop.xlane.xlu0 %4368
    %v4370 = vsub.f32 %v4350, %v4360
    %v4371 = vsub.f32 %v4351, %v4363
    %v4372 = vsub.f32 %v4352, %v4366
    %v4373 = vsub.f32 %v4353, %v4369
    %v4374 = vadd.f32 %v4370, %v4371
    %v4375 = vadd.f32 %v4374, %v4372
    %v4376 = vadd.f32 %v4375, %v4373
    %v4377 = vrot.slane %v4376, 4
    %v4378 = vadd.f32 %v4376, %v4377
    %v4379 = vrot.slane %v4378, 2
    %v4380 = vadd.f32 %v4378, %v4379
    %v4381 = vrot.slane %v4380, 1
    %v4382 = vadd.f32 %v4380, %v4381
    %v4383 = vmul.f32 %v4382, 0.03125
    %v4384 = vrsqrt.pop %v4248
    %v4385 = vmul.f32 %v4248, %v4384
    %vm4386 = vcmp.eq.f32.partialorder %v4248, inf
    %v4387 = vsel %vm4386, %v4248, %v4385
    %vm4388 = vcmp.eq.f32.partialorder %v4248, 0.0
    %v4389 = vand.u32 %v4248, 2147483648
    %v4390 = vsel %vm4388, %v4389, %v4387
    %v4391 = vrsqrt.pop %v4251
    %v4392 = vmul.f32 %v4251, %v4391
    %vm4393 = vcmp.eq.f32.partialorder %v4251, inf
    %v4394 = vsel %vm4393, %v4251, %v4392
    %vm4395 = vcmp.eq.f32.partialorder %v4251, 0.0
    %v4396 = vand.u32 %v4251, 2147483648
    %v4397 = vsel %vm4395, %v4396, %v4394
    %v4398 = vrsqrt.pop %v4254
    %v4399 = vmul.f32 %v4254, %v4398
    %vm4400 = vcmp.eq.f32.partialorder %v4254, inf
    %v4401 = vsel %vm4400, %v4254, %v4399
    %vm4402 = vcmp.eq.f32.partialorder %v4254, 0.0
    %v4403 = vand.u32 %v4254, 2147483648
    %v4404 = vsel %vm4402, %v4403, %v4401
    %v4405 = vrsqrt.pop %v4257
    %v4406 = vmul.f32 %v4257, %v4405
    %vm4407 = vcmp.eq.f32.partialorder %v4257, inf
    %v4408 = vsel %vm4407, %v4257, %v4406
    %vm4409 = vcmp.eq.f32.partialorder %v4257, 0.0
    %v4410 = vand.u32 %v4257, 2147483648
    %v4411 = vsel %vm4409, %v4410, %v4408
    %v4412 = vmax.f32 %v4390, 1e-06
    %v4413 = vmax.f32 %v4397, 1e-06
    %v4414 = vmax.f32 %v4404, 1e-06
    %v4415 = vmax.f32 %v4411, 1e-06
    %v4416 = vrcp.pop %v4412
    %v4417 = vmul.f32 %v4131, %v4416
    %v4418 = vrcp.pop %v4413
    %v4419 = vmul.f32 %v4134, %v4418
    %v4420 = vrcp.pop %v4414
    %v4421 = vmul.f32 %v4139, %v4420
    %v4422 = vrcp.pop %v4415
    %v4423 = vmul.f32 %v4142, %v4422
    %v4424 = vadd.f32 %v4417, %v639
    %v4425 = vadd.f32 %v4419, %v641
    %v4426 = vadd.f32 %v4421, %v643
    %v4427 = vadd.f32 %v4423, %v645
    %v4428 = vmul.f32 %v4424, %v4424
    %v4429 = vmul.f32 %v4425, %v4425
    %v4430 = vmul.f32 %v4426, %v4426
    %v4431 = vmul.f32 %v4427, %v4427
    %v4432 = vsel %vm248, %v4428, 0.0
    %4433 = vadd.xlane.f32.xlu0 %v4432
    %v4434 = vpop.xlane.xlu0 %4433
    %v4435 = vsel %vm248, %v4429, 0.0
    %4436 = vadd.xlane.f32.xlu0 %v4435
    %v4437 = vpop.xlane.xlu0 %4436
    %v4438 = vsel %vm248, %v4430, 0.0
    %4439 = vadd.xlane.f32.xlu0 %v4438
    %v4440 = vpop.xlane.xlu0 %4439
    %v4441 = vsel %vm248, %v4431, 0.0
    %4442 = vadd.xlane.f32.xlu0 %v4441
    %v4443 = vpop.xlane.xlu0 %4442
    %v4444 = vrsqrt.pop %v4434
    %v4445 = vmul.f32 %v4434, %v4444
    %vm4446 = vcmp.eq.f32.partialorder %v4434, inf
    %v4447 = vsel %vm4446, %v4434, %v4445
    %vm4448 = vcmp.eq.f32.partialorder %v4434, 0.0
    %v4449 = vand.u32 %v4434, 2147483648
    %v4450 = vsel %vm4448, %v4449, %v4447
    %v4451 = vrsqrt.pop %v4437
    %v4452 = vmul.f32 %v4437, %v4451
    %vm4453 = vcmp.eq.f32.partialorder %v4437, inf
    %v4454 = vsel %vm4453, %v4437, %v4452
    %vm4455 = vcmp.eq.f32.partialorder %v4437, 0.0
    %v4456 = vand.u32 %v4437, 2147483648
    %v4457 = vsel %vm4455, %v4456, %v4454
    %v4458 = vrsqrt.pop %v4440
    %v4459 = vmul.f32 %v4440, %v4458
    %vm4460 = vcmp.eq.f32.partialorder %v4440, inf
    %v4461 = vsel %vm4460, %v4440, %v4459
    %vm4462 = vcmp.eq.f32.partialorder %v4440, 0.0
    %v4463 = vand.u32 %v4440, 2147483648
    %v4464 = vsel %vm4462, %v4463, %v4461
    %v4465 = vrsqrt.pop %v4443
    %v4466 = vmul.f32 %v4443, %v4465
    %vm4467 = vcmp.eq.f32.partialorder %v4443, inf
    %v4468 = vsel %vm4467, %v4443, %v4466
    %vm4469 = vcmp.eq.f32.partialorder %v4443, 0.0
    %v4470 = vand.u32 %v4443, 2147483648
    %v4471 = vsel %vm4469, %v4470, %v4468
    %v4472 = vmax.f32 %v4450, 1e-06
    %v4473 = vmax.f32 %v4457, 1e-06
    %v4474 = vmax.f32 %v4464, 1e-06
    %v4475 = vmax.f32 %v4471, 1e-06
    %v4476 = vrcp.pop %v4472
    %v4477 = vmul.f32 %v4424, %v4476
    %v4478 = vrcp.pop %v4473
    %v4479 = vmul.f32 %v4425, %v4478
    %v4480 = vrcp.pop %v4474
    %v4481 = vmul.f32 %v4426, %v4480
    %v4482 = vrcp.pop %v4475
    %v4483 = vmul.f32 %v4427, %v4482
    %v4484 = vmul.f32 %v4131, %v4477
    %v4485 = vmul.f32 %v4134, %v4479
    %v4486 = vmul.f32 %v4139, %v4481
    %v4487 = vmul.f32 %v4142, %v4483
    %v4488 = vsel %vm248, %v4484, 0.0
    %4489 = vadd.xlane.f32.xlu0 %v4488
    %v4490 = vpop.xlane.xlu0 %4489
    %v4491 = vsel %vm248, %v4485, 0.0
    %4492 = vadd.xlane.f32.xlu0 %v4491
    %v4493 = vpop.xlane.xlu0 %4492
    %v4494 = vsel %vm248, %v4486, 0.0
    %4495 = vadd.xlane.f32.xlu0 %v4494
    %v4496 = vpop.xlane.xlu0 %4495
    %v4497 = vsel %vm248, %v4487, 0.0
    %4498 = vadd.xlane.f32.xlu0 %v4497
    %v4499 = vpop.xlane.xlu0 %4498
    %v4500 = vmul.f32 %v4490, 2.0
    %v4501 = vmul.f32 %v4493, 2.0
    %v4502 = vmul.f32 %v4496, 2.0
    %v4503 = vmul.f32 %v4499, 2.0
    %v4504 = vmul.f32 %v4500, %v4477
    %v4505 = vmul.f32 %v4501, %v4479
    %v4506 = vmul.f32 %v4502, %v4481
    %v4507 = vmul.f32 %v4503, %v4483
    %v4508 = vsub.f32 %v4131, %v4504
    %v4509 = vsub.f32 %v4134, %v4505
    %v4510 = vsub.f32 %v4139, %v4506
    %v4511 = vsub.f32 %v4142, %v4507
    %v4512 = vmul.f32 %v4131, %v4417
    %v4513 = vmul.f32 %v4134, %v4419
    %v4514 = vmul.f32 %v4139, %v4421
    %v4515 = vmul.f32 %v4142, %v4423
    %v4516 = vsel %vm248, %v4512, 0.0
    %4517 = vadd.xlane.f32.xlu0 %v4516
    %v4518 = vpop.xlane.xlu0 %4517
    %v4519 = vsel %vm248, %v4513, 0.0
    %4520 = vadd.xlane.f32.xlu0 %v4519
    %v4521 = vpop.xlane.xlu0 %4520
    %v4522 = vsel %vm248, %v4514, 0.0
    %4523 = vadd.xlane.f32.xlu0 %v4522
    %v4524 = vpop.xlane.xlu0 %4523
    %v4525 = vsel %vm248, %v4515, 0.0
    %4526 = vadd.xlane.f32.xlu0 %v4525
    %v4527 = vpop.xlane.xlu0 %4526
    %v4528 = vmul.f32 %v4518, 2.0
    %v4529 = vmul.f32 %v4521, 2.0
    %v4530 = vmul.f32 %v4524, 2.0
    %v4531 = vmul.f32 %v4527, 2.0
    %v4532 = vmul.f32 %v4528, %v639
    %v4533 = vmul.f32 %v4529, %v641
    %v4534 = vmul.f32 %v4530, %v643
    %v4535 = vmul.f32 %v4531, %v645
    %v4536 = vadd.f32 %v4508, %v4532
    %v4537 = vadd.f32 %v4509, %v4533
    %v4538 = vadd.f32 %v4510, %v4534
    %v4539 = vadd.f32 %v4511, %v4535
    %v4540 = vmul.f32 %v600, %v4416
    %v4541 = vmul.f32 %v607, %v4418
    %v4542 = vmul.f32 %v614, %v4420
    %v4543 = vmul.f32 %v621, %v4422
    %v4544 = vmul.f32 %v4536, %v4540
    %v4545 = vmul.f32 %v4537, %v4541
    %v4546 = vmul.f32 %v4538, %v4542
    %v4547 = vmul.f32 %v4539, %v4543
    %v4548 = vld [vmem:[%s51] sm:$0xff]
    %v4549 = vld [vmem:[%s51 + $0x8] sm:$0xff]
    %v4550 = vld [vmem:[%s51 + $0x10] sm:$0xff]
    %v4551 = vld [vmem:[%s51 + $0x18] sm:$0xff]
    %v4552 = vld [vmem:[%s53] sm:$0x1]
    %v4554 = vlaneseq
    %v4555 = vshrl.u32 %v4554, 7
    %v4556 = vsub.s32 0, %v4555
    %v4557 = vrot.slane %v4552, %v4556
    %v4560 = vsel %vm248, %v4544, 0
    %v4563 = vsel %vm248, %v4545, 0
    %v4566 = vsel %vm248, %v4546, 0
    %v4569 = vsel %vm248, %v4547, 0
    %4571 = vmatprep.subr.mxu0 0.0
    %4572 = vmatpush1.msra.mxu0 0.0
    %4573 = vmatprep.subr.mxu0 0.0
    %4574 = vmatpush1.msra.mxu0 0.0
    %4575 = vmatprep.subr.mxu0 0.0
    %4576 = vmatpush1.msra.mxu0 0.0
    %4577 = vmatprep.subr.mxu0 0.0
    %4578 = vmatpush1.msra.mxu0 0.0
    %4579 = vmatprep.subr.mxu0 0.0
    %4580 = vmatpush1.msra.mxu0 0.0
    %4581 = vmatprep.subr.mxu0 0.0
    %4582 = vmatpush1.msra.mxu0 0.0
    %4583 = vmatprep.subr.mxu0 0.0
    %4584 = vmatpush1.msra.mxu0 0.0
    %4585 = vmatprep.subr.mxu0 0.0
    %4586 = vmatpush1.msra.mxu0 0.0
    %4587 = vmatprep.subr.mxu0 0.0
    %4588 = vmatpush1.msra.mxu0 0.0
    %4589 = vmatprep.subr.mxu0 0.0
    %4590 = vmatpush1.msra.mxu0 0.0
    %4591 = vmatprep.subr.mxu0 0.0
    %4592 = vmatpush1.msra.mxu0 0.0
    %4593 = vmatprep.subr.mxu0 0.0
    %4594 = vmatpush1.msra.mxu0 0.0
    %4595 = vmatprep.subr.mxu0 0.0
    %4596 = vmatpush1.msra.mxu0 %v4551
    %4597 = vmatprep.subr.mxu0 0.0
    %4598 = vmatpush1.msra.mxu0 %v4550
    %4599 = vmatprep.subr.mxu0 0.0
    %4600 = vmatpush1.msra.mxu0 %v4549
    %4601 = vmatprep.subr.mxu0 0.0
    %4602 = vmatpush1.msra.mxu0 %v4548
    %4603 = vmatprep.subr.mxu0 0.0
    %4604 = vmatpush2.msra.mxu0 0.0
    %4605 = vmatprep.subr.mxu0 0.0
    %4606 = vmatpush2.msra.mxu0 0.0
    %4607 = vmatprep.subr.mxu0 0.0
    %4608 = vmatpush2.msra.mxu0 0.0
    %4609 = vmatprep.subr.mxu0 0.0
    %4610 = vmatpush2.msra.mxu0 0.0
    %4611 = vmatprep.subr.mxu0 0.0
    %4612 = vmatpush2.msra.mxu0 0.0
    %4613 = vmatprep.subr.mxu0 0.0
    %4614 = vmatpush2.msra.mxu0 0.0
    %4615 = vmatprep.subr.mxu0 0.0
    %4616 = vmatpush2.msra.mxu0 0.0
    %4617 = vmatprep.subr.mxu0 0.0
    %4618 = vmatpush2.msra.mxu0 0.0
    %4619 = vmatprep.subr.mxu0 0.0
    %4620 = vmatpush2.msra.mxu0 0.0
    %4621 = vmatprep.subr.mxu0 0.0
    %4622 = vmatpush2.msra.mxu0 0.0
    %4623 = vmatprep.subr.mxu0 0.0
    %4624 = vmatpush2.msra.mxu0 0.0
    %4625 = vmatprep.subr.mxu0 0.0
    %4626 = vmatpush2.msra.mxu0 0.0
    %4627 = vmatprep.subr.mxu0 0.0
    %4628 = vmatpush2.msra.mxu0 0.0
    %4629 = vmatprep.subr.mxu0 0.0
    %4630 = vmatpush2.msra.mxu0 0.0
    %4631 = vmatprep.subr.mxu0 0.0
    %4632 = vmatpush2.msra.mxu0 0.0
    %4633 = vmatprep.subr.mxu0 0.0
    %4634 = vmatpush2.msra.mxu0 0.0
    %4635 = vmatprep.mubr.f32.mxu0 0.0
    %4636 = vmatmul.mubr.f32.gmra.mxu0 %v4560
    %v4637 = vpop.f32.mrf.mxu0
    %v4638 = vadd.f32 %v4557, %v4637
    %v4639 = vpop.f32.mrf.mxu0
    %4640 = vmatprep.mubr.f32.mxu0 0.0
    %4641 = vmatmul.mubr.f32.gmra.mxu0 %v4563
    %v4642 = vpop.f32.mrf.mxu0
    %v4643 = vadd.f32 %v4557, %v4642
    %v4644 = vpop.f32.mrf.mxu0
    %4645 = vmatprep.mubr.f32.mxu0 0.0
    %4646 = vmatmul.mubr.f32.gmra.mxu0 %v4566
    %v4647 = vpop.f32.mrf.mxu0
    %v4648 = vadd.f32 %v4557, %v4647
    %v4649 = vpop.f32.mrf.mxu0
    %4650 = vmatprep.mubr.f32.mxu0 0.0
    %4651 = vmatmul.mubr.f32.gmra.mxu0 %v4569
    %v4652 = vpop.f32.mrf.mxu0
    %v4653 = vadd.f32 %v4557, %v4652
    %v4654 = vpop.f32.mrf.mxu0
    %4655 = vdwg.mxu0
    %v4656 = vsub.f32 %v4638, %v129
    %v4657 = vsub.f32 %v4643, %v130
    %v4658 = vsub.f32 %v4648, %v131
    %v4659 = vsub.f32 %v4653, %v132
    %v4660 = vmul.f32 %v4656, %v4656
    %v4661 = vmul.f32 %v4657, %v4657
    %v4662 = vmul.f32 %v4658, %v4658
    %v4663 = vmul.f32 %v4659, %v4659
    %v4664 = vmul.f32 %v4660, 0.25
    %v4665 = vmul.f32 %v4661, 0.25
    %v4666 = vmul.f32 %v4662, 0.25
    %v4667 = vmul.f32 %v4663, 0.25
    %v4668 = vsel %vm142, %v4664, 0.0
    %4669 = vadd.xlane.f32.xlu0 %v4668
    %v4670 = vpop.xlane.xlu0 %4669
    %v4671 = vsel %vm142, %v4665, 0.0
    %4672 = vadd.xlane.f32.xlu0 %v4671
    %v4673 = vpop.xlane.xlu0 %4672
    %v4674 = vsel %vm142, %v4666, 0.0
    %4675 = vadd.xlane.f32.xlu0 %v4674
    %v4676 = vpop.xlane.xlu0 %4675
    %v4677 = vsel %vm142, %v4667, 0.0
    %4678 = vadd.xlane.f32.xlu0 %v4677
    %v4679 = vpop.xlane.xlu0 %4678
    %v4680 = vadd.f32 %v4670, %v4673
    %v4681 = vadd.f32 %v4680, %v4676
    %v4682 = vadd.f32 %v4681, %v4679
    %v4683 = vrot.slane %v4682, 4
    %v4684 = vadd.f32 %v4682, %v4683
    %v4685 = vrot.slane %v4684, 2
    %v4686 = vadd.f32 %v4684, %v4685
    %v4687 = vrot.slane %v4686, 1
    %v4688 = vadd.f32 %v4686, %v4687
    %v4689 = vmul.f32 %v4688, 0.001953125
    %v4690 = vsub.f32 %v4131, %v766
    %v4691 = vsub.f32 %v4134, %v767
    %v4692 = vsub.f32 %v4139, %v768
    %v4693 = vsub.f32 %v4142, %v769
    %v4694 = vmul.f32 %v4690, %v4690
    %v4695 = vmul.f32 %v4691, %v4691
    %v4696 = vmul.f32 %v4692, %v4692
    %v4697 = vmul.f32 %v4693, %v4693
    %v4698 = vsel %vm248, %v4694, 0.0
    %4699 = vadd.xlane.f32.xlu0 %v4698
    %v4700 = vpop.xlane.xlu0 %4699
    %v4701 = vsel %vm248, %v4695, 0.0
    %4702 = vadd.xlane.f32.xlu0 %v4701
    %v4703 = vpop.xlane.xlu0 %4702
    %v4704 = vsel %vm248, %v4696, 0.0
    %4705 = vadd.xlane.f32.xlu0 %v4704
    %v4706 = vpop.xlane.xlu0 %4705
    %v4707 = vsel %vm248, %v4697, 0.0
    %4708 = vadd.xlane.f32.xlu0 %v4707
    %v4709 = vpop.xlane.xlu0 %4708
    %v4710 = vadd.f32 %v4700, %v4703
    %v4711 = vadd.f32 %v4710, %v4706
    %v4712 = vadd.f32 %v4711, %v4709
    %v4713 = vrot.slane %v4712, 4
    %v4714 = vadd.f32 %v4712, %v4713
    %v4715 = vrot.slane %v4714, 2
    %v4716 = vadd.f32 %v4714, %v4715
    %v4717 = vrot.slane %v4716, 1
    %v4718 = vadd.f32 %v4716, %v4717
    %v4719 = vmul.f32 %v4718, 0.0009765625
    %v4720 = vadd.f32 %v4383, %v4689
    %v4721 = vadd.f32 %v4720, %v799
    %v4722 = vadd.f32 %v4721, %v4719
    %4723 = vst.msk [vmem:[%s55] sm:$0xff] %vm142, %v4638
    %4724 = vst.msk [vmem:[%s55 + $0x8] sm:$0xff] %vm142, %v4643
    %4725 = vst.msk [vmem:[%s55 + $0x10] sm:$0xff] %vm142, %v4648
    %4726 = vst.msk [vmem:[%s55 + $0x18] sm:$0xff] %vm142, %v4653
    %vm4727 = vcmask 0
    %4728 = vst.msk [vmem:[#allocation2] sm:$0x1] %vm4727, %v4722
    %4729 = vst.msk [vmem:[#allocation4] sm:$0x1] %vm4727, %v4383
    %4730 = vst.msk [vmem:[#allocation6] sm:$0x1] %vm4727, %v4689
    %4731 = vst.msk [vmem:[#allocation7] sm:$0x1] %vm4727, %v799
    %4732 = vst.msk [vmem:[#allocation9] sm:$0x1] %vm4727, %v4719
    // Predicated region
    $region110: #{vq_ar_autoencoder_forward.1} parent=1 // pred_check
      _
    $region111: #{vq_ar_autoencoder_forward.1} parent=1 // pred_check_branch
      %4734 = sbr.rel (0) target = $region113
    $region112: #{vq_ar_autoencoder_forward.1} parent=1 // pred_region
      _
    $region113: #{vq_ar_autoencoder_forward.1} parent=1 // pred_fallthru
      _
    // Predicated region
    $region114: #{vq_ar_autoencoder_forward.1} parent=1 // pred_check
      _
    $region115: #{vq_ar_autoencoder_forward.1} parent=1 // pred_check_branch
      %4736 = sbr.rel (0) target = $region117
    $region116: #{vq_ar_autoencoder_forward.1} parent=1 // pred_region
      %s4738 = ssub.s32 16, 16
      %4739 = vsyncadd [#allocation3], %s4738
      %s4741 = sshll.u32 [#allocation2], 4
      %s4742 = int_to_ptr.vmem [resolvable:$true] %s4741
      %4744 = dma.vmem_to_hbm [thread:$0]  %s4742, 16, %s57, [#allocation3]
    $region117: #{vq_ar_autoencoder_forward.1} parent=1 // pred_fallthru
      _
    // Predicated region
    $region118: #{vq_ar_autoencoder_forward.1} parent=1 // pred_check
      _
    $region119: #{vq_ar_autoencoder_forward.1} parent=1 // pred_check_branch
      %4746 = sbr.rel (0) target = $region121
    $region120: #{vq_ar_autoencoder_forward.1} parent=1 // pred_region
      %s4748 = ssub.s32 16, 16
      %4749 = vsyncadd [#allocation5], %s4748
      %s4751 = sshll.u32 [#allocation4], 4
      %s4752 = int_to_ptr.vmem [resolvable:$true] %s4751
      %4754 = dma.vmem_to_hbm [thread:$0]  %s4752, 16, %s59, [#allocation5]
    $region121: #{vq_ar_autoencoder_forward.1} parent=1 // pred_fallthru
      _
    // Predicated region
    $region122: #{vq_ar_autoencoder_forward.1} parent=1 // pred_check
      _
    $region123: #{vq_ar_autoencoder_forward.1} parent=1 // pred_check_branch
      %4756 = sbr.rel (0) target = $region125
    $region124: #{vq_ar_autoencoder_forward.1} parent=1 // pred_region
      %s4758 = ssub.s32 16, 16
      %4759 = vsyncadd [#allocation5], %s4758
      %s4761 = sshll.u32 [#allocation6], 4
      %s4762 = int_to_ptr.vmem [resolvable:$true] %s4761
      %4764 = dma.vmem_to_hbm [thread:$0]  %s4762, 16, %s61, [#allocation5]
    $region125: #{vq_ar_autoencoder_forward.1} parent=1 // pred_fallthru
      _
    // Predicated region
    $region126: #{vq_ar_autoencoder_forward.1} parent=1 // pred_check
      _
    $region127: #{vq_ar_autoencoder_forward.1} parent=1 // pred_check_branch
      %4766 = sbr.rel (0) target = $region129
    $region128: #{vq_ar_autoencoder_forward.1} parent=1 // pred_region
      %s4768 = ssub.s32 16, 16
      %4769 = vsyncadd [#allocation8], %s4768
      %s4771 = sshll.u32 [#allocation7], 4
      %s4772 = int_to_ptr.vmem [resolvable:$true] %s4771
      %4774 = dma.vmem_to_hbm [thread:$0]  %s4772, 16, %s63, [#allocation8]
    $region129: #{vq_ar_autoencoder_forward.1} parent=1 // pred_fallthru
      _
    // Predicated region
    $region130: #{vq_ar_autoencoder_forward.1} parent=1 // pred_check
      _
    $region131: #{vq_ar_autoencoder_forward.1} parent=1 // pred_check_branch
      %4776 = sbr.rel (0) target = $region133
    $region132: #{vq_ar_autoencoder_forward.1} parent=1 // pred_region
      %s4778 = ssub.s32 16, 16
      %4779 = vsyncadd [#allocation8], %s4778
      %s4781 = sshll.u32 [#allocation9], 4
      %s4782 = int_to_ptr.vmem [resolvable:$true] %s4781
      %4784 = dma.vmem_to_hbm [thread:$0]  %s4782, 16, %s65, [#allocation8]
    $region133: #{vq_ar_autoencoder_forward.1} parent=1 // pred_fallthru
      _
    // Predicated region
    $region134: #{vq_ar_autoencoder_forward.1} parent=1 // pred_check
      _
    $region135: #{vq_ar_autoencoder_forward.1} parent=1 // pred_check_branch
      %4786 = sbr.rel (0) target = $region137
    $region136: #{vq_ar_autoencoder_forward.1} parent=1 // pred_region
      _
    $region137: #{vq_ar_autoencoder_forward.1} parent=1 // pred_fallthru
      _
    // Predicated region
    $region138: #{vq_ar_autoencoder_forward.1} parent=1 // pred_check
      _
    $region139: #{vq_ar_autoencoder_forward.1} parent=1 // pred_check_branch
      %4788 = sbr.rel (0) target = $region141
    $region140: #{vq_ar_autoencoder_forward.1} parent=1 // pred_region
      %4789 = dma.done [#allocation3], 16
    $region141: #{vq_ar_autoencoder_forward.1} parent=1 // pred_fallthru
      _
    // Predicated region
    $region142: #{vq_ar_autoencoder_forward.1} parent=1 // pred_check
      _
    $region143: #{vq_ar_autoencoder_forward.1} parent=1 // pred_check_branch
      %4791 = sbr.rel (0) target = $region145
    $region144: #{vq_ar_autoencoder_forward.1} parent=1 // pred_region
      %4792 = dma.done [#allocation5], 16
    $region145: #{vq_ar_autoencoder_forward.1} parent=1 // pred_fallthru
      _
    // Predicated region
    $region146: #{vq_ar_autoencoder_forward.1} parent=1 // pred_check
      _
    $region147: #{vq_ar_autoencoder_forward.1} parent=1 // pred_check_branch
      %4794 = sbr.rel (0) target = $region149
    $region148: #{vq_ar_autoencoder_forward.1} parent=1 // pred_region
      %4795 = dma.done [#allocation5], 16
    $region149: #{vq_ar_autoencoder_forward.1} parent=1 // pred_fallthru
      _
    // Predicated region
    $region150: #{vq_ar_autoencoder_forward.1} parent=1 // pred_check
      _
    $region151: #{vq_ar_autoencoder_forward.1} parent=1 // pred_check_branch
      %4797 = sbr.rel (0) target = $region153
    $region152: #{vq_ar_autoencoder_forward.1} parent=1 // pred_region
      %4798 = dma.done [#allocation8], 16
    $region153: #{vq_ar_autoencoder_forward.1} parent=1 // pred_fallthru
      _
    // Predicated region
    $region154: #{vq_ar_autoencoder_forward.1} parent=1 // pred_check
      _
    $region155: #{vq_ar_autoencoder_forward.1} parent=1 // pred_check_branch
      %4800 = sbr.rel (0) target = $region157
    $region156: #{vq_ar_autoencoder_forward.1} parent=1 // pred_region
      %4801 = dma.done [#allocation8], 16
    $region157: #{vq_ar_autoencoder_forward.1} parent=1 // pred_fallthru
      _
    %4802 = vsyncpa [#allocation3], 1
    %4803 = vsyncpa [#allocation5], 1
    %4804 = vsyncpa [#allocation8], 1

</llo_original>
